<compile_context>
chip_gen: v5e
topology: v5e:2x2
jax: 0.10.0
libtpu: 0.0.40
codegen_flags: <defaults>
</compile_context>

<pallas_src>
import functools

import jax
import jax.numpy as jnp
import numpy as np
from jax import lax
from jax.experimental import pallas as pl
from jax.experimental.pallas import tpu as pltpu

BN_EPS = 1e-5
LANE = 128


# ---------------------------------------------------------------------------
# In-kernel helpers
# ---------------------------------------------------------------------------
def _mish_fast(x):
    """mish(x) = x * tanh(softplus(x)) with one exp + one approx reciprocal.

    With t = exp(min(x, 20)): tanh(log1p(t)) = (t*t + 2t) / (t*t + 2t + 2).
    The x > 20 passthrough matches torch's softplus threshold=20.
    """
    t = jnp.exp(jnp.minimum(x, 20.0))
    u = t * t + 2.0 * t
    y = x * u * pl.reciprocal(u + 2.0, approx=True)
    return jnp.where(x > 20.0, x, y)


# ---------------------------------------------------------------------------
# Kernels
# ---------------------------------------------------------------------------
def _pointwise_stage_kernel(rows_valid, tr, has_partial, apply_act,
                            x_ref, sc_ref, sh_ref, w_ref,
                            out_ref, stats_ref):
    """[optional BN-affine + Mish] -> 1x1 conv (MXU matmul) -> per-tile stats.

    Grid: row tiles ("parallel").  Each tile writes its own (1, 2, C) stats
    block = [channel sum, tile-centered sum of squares]; the wrapper combines
    tiles with Chan's parallel-variance formula (no resident accumulator, no
    E[x^2]-E[x]^2 cancellation).  Stats use the f32 matmul result; the stored
    activation is bf16.
    """
    x = x_ref[...].astype(jnp.float32)
    if apply_act:
        x = _mish_fast(x * sc_ref[...] + sh_ref[...])
    h = jnp.dot(x.astype(jnp.bfloat16), w_ref[...],
                preferred_element_type=jnp.float32)
    out_ref[...] = h.astype(out_ref.dtype)

    if has_partial:
        # Only traced when the row count does not divide evenly.
        i = pl.program_id(0)
        valid = jnp.maximum(jnp.minimum(rows_valid - i * tr, tr), 1)
        mask = lax.broadcasted_iota(jnp.int32, (tr, 1), 0) < valid
        hm = jnp.where(mask, h, 0.0)
        s = jnp.sum(hm, axis=0, keepdims=True)
        d = jnp.where(mask, h - s / valid.astype(jnp.float32), 0.0)
    else:
        s = jnp.sum(h, axis=0, keepdims=True)
        d = h - s * (1.0 / tr)
    stats_ref[0, 0:1, :] = s
    stats_ref[0, 1:2, :] = jnp.sum(d * d, axis=0, keepdims=True)


def _conv3x3_stage_kernel(h_sp, w_sp,
                          x_ref, sc_ref, sh_ref, w_ref,
                          out_ref, stats_ref, pad_scr):
    """BN1-affine + Mish -> 3x3 conv (pad=1) as 9 accumulating MXU dots -> stats.

    Grid: one image per step ("parallel").  The bf16 (H+2, W+2, C) padded
    scratch is zeroed every step (keeps the halo border zero and keeps the
    grid axis safely parallel across cores); no im2col buffer is materialized.
    """
    cp = x_ref.shape[-1]
    cout = w_ref.shape[-1]
    hw = h_sp * w_sp

    pad_scr[...] = jnp.zeros(pad_scr.shape, pad_scr.dtype)
    y = _mish_fast(x_ref[0].astype(jnp.float32) * sc_ref[...] + sh_ref[...])
    pad_scr[1:h_sp + 1, 1:w_sp + 1, :] = (
        y.reshape(h_sp, w_sp, cp).astype(pad_scr.dtype))

    acc = jnp.zeros((hw, cout), jnp.float32)
    for dy in range(3):
        for dx in range(3):
            patch = pad_scr[dy:dy + h_sp, dx:dx + w_sp, :].reshape(hw, cp)
            acc = acc + jnp.dot(patch, w_ref[dy * 3 + dx],
                                preferred_element_type=jnp.float32)
    out_ref[0] = acc.astype(out_ref.dtype)

    s = jnp.sum(acc, axis=0, keepdims=True)
    d = acc - s * (1.0 / hw)
    stats_ref[0, 0:1, :] = s
    stats_ref[0, 1:2, :] = jnp.sum(d * d, axis=0, keepdims=True)


def _bn_mish_kernel(x_ref, sc_ref, sh_ref, o_ref):
    """Final BN-affine + Mish; lane-dense 128-wide stores."""
    y = _mish_fast(x_ref[...].astype(jnp.float32) * sc_ref[...] + sh_ref[...])
    o_ref[...] = y.astype(o_ref.dtype)


# ---------------------------------------------------------------------------
# Wrapper
# ---------------------------------------------------------------------------
def _round_up(x, m):
    return ((x + m - 1) // m) * m


def _pad_axes(a, targets):
    pads = [(0, t - s) for s, t in zip(a.shape, targets)]
    if all(p == (0, 0) for p in pads):
        return a
    return jnp.pad(a, pads)


def _affine_from_tile_stats(stats, counts, gamma_p, beta_p, total):
    """Chan's parallel combine of per-tile (sum, centered sumsq) -> BN affine."""
    s = stats[:, 0, :]                       # (T, C) per-tile channel sums
    q = stats[:, 1, :]                       # (T, C) per-tile centered sumsq
    mean = jnp.sum(s, axis=0, keepdims=True) / total
    m_k = s / counts
    m2 = jnp.sum(q + counts * jnp.square(m_k - mean), axis=0, keepdims=True)
    var = jnp.maximum(m2 / total, 0.0)       # biased variance (train-mode BN)
    scale = gamma_p * lax.rsqrt(var + BN_EPS)
    shift = beta_p - mean * scale
    return scale, shift


def _cparams(sem, working_bytes):
    # Explicit VMEM budget: double-buffered tiles + weights + headroom, kept
    # well under v7x's 64 MiB physical VMEM (128 MiB on v5e/v6e).
    budget = int(min(48 * 2**20, max(16 * 2**20, 4 * working_bytes)))
    return pltpu.CompilerParams(dimension_semantics=sem,
                                vmem_limit_bytes=budget)


def tucker_forward(x_nhwc, params, stride=1, tile_rows=1024):
    """Runs the fused Tucker block.  x_nhwc: (N, H, W, C1) float32."""
    if stride != 1:
        # conv1 is 1x1, so its stride is plain spatial subsampling (JAX glue).
        x_nhwc = x_nhwc[:, ::stride, ::stride, :]
    n, h, w, c1 = x_nhwc.shape
    sc1 = params["w1"].shape[-1]
    ec2 = params["w2"].shape[-1]
    c2 = params["w3"].shape[-1]

    # Pad every channel dim to the 128-lane width (lane-dense vregs, MXU feed).
    c1p, sc1p, ec2p, c2p = [_round_up(c, LANE) for c in (c1, sc1, ec2, c2)]

    rows = n * h * w
    hw = h * w
    rows_pad = _round_up(rows, 8)
    # Largest row tile (multiple of 8) dividing rows_pad and <= tile_rows, so
    # stage outputs feed the next pallas_call with no repacking copies.
    tr = 8
    cap = max(8, min(tile_rows, rows_pad))
    for cand in range(cap - cap % 8, 7, -8):
        if rows_pad % cand == 0:
            tr = cand
            break
    n_tiles = rows_pad // tr
    has_partial = rows_pad != rows

    # --- weight / BN-param prep (conv biases dropped: cancelled by train BN) --
    w1p = _pad_axes(params["w1"], (c1p, sc1p)).astype(jnp.bfloat16)
    w2p = _pad_axes(params["w2"], (3, 3, sc1p, ec2p))
    w2p = w2p.reshape(9, sc1p, ec2p).astype(jnp.bfloat16)
    w3p = _pad_axes(params["w3"], (ec2p, c2p)).astype(jnp.bfloat16)
    g1, be1 = _pad_axes(params["g1"], (1, sc1p)), _pad_axes(params["be1"], (1, sc1p))
    g2, be2 = _pad_axes(params["g2"], (1, ec2p)), _pad_axes(params["be2"], (1, ec2p))
    g3, be3 = _pad_axes(params["g3"], (1, c2p)), _pad_axes(params["be3"], (1, c2p))

    last_rows = rows - (n_tiles - 1) * tr
    counts_rows = jnp.asarray([tr] * (n_tiles - 1) + [last_rows],
                              jnp.float32).reshape(n_tiles, 1)
    counts_img = jnp.full((n, 1), float(hw), jnp.float32)

    def pointwise_stage(x_in, scale, shift, wmat, cin_p, cout_p, apply_act):
        in_bytes = tr * cin_p * x_in.dtype.itemsize
        tile_bytes = in_bytes + tr * cout_p * 6 + wmat.size * 2
        return pl.pallas_call(
            functools.partial(_pointwise_stage_kernel, rows, tr, has_partial,
                              apply_act),
            out_shape=(jax.ShapeDtypeStruct((rows_pad, cout_p), jnp.bfloat16),
                       jax.ShapeDtypeStruct((n_tiles, 2, cout_p), jnp.float32)),
            grid_spec=pltpu.PrefetchScalarGridSpec(
                num_scalar_prefetch=0,
                grid=(n_tiles,),
                in_specs=[pl.BlockSpec((tr, cin_p), lambda i: (i, 0)),
                          pl.BlockSpec((1, cin_p), lambda i: (0, 0)),
                          pl.BlockSpec((1, cin_p), lambda i: (0, 0)),
                          pl.BlockSpec(wmat.shape, lambda i: (0, 0))],
                out_specs=(pl.BlockSpec((tr, cout_p), lambda i: (i, 0)),
                           pl.BlockSpec((1, 2, cout_p), lambda i: (i, 0, 0)))),
            compiler_params=_cparams(("parallel",), tile_bytes),
            cost_estimate=pl.CostEstimate(
                flops=2 * rows_pad * cin_p * cout_p,
                transcendentals=(rows_pad * cin_p) if apply_act else 0,
                bytes_accessed=(rows_pad * (cin_p * x_in.dtype.itemsize
                                            + cout_p * 2) + wmat.size * 2)),
        )(x_in, scale, shift, wmat)

    # ---- stage 1: conv1 (1x1) + BN1 partial statistics -----------------------
    x_flat = _pad_axes(x_nhwc.reshape(rows, c1), (rows_pad, c1p))
    zero_c1 = jnp.zeros((1, c1p), jnp.float32)       # unused (apply_act=False)
    h1, st1 = pointwise_stage(x_flat, zero_c1, zero_c1, w1p, c1p, sc1p,
                              apply_act=False)
    sc1v, sh1v = _affine_from_tile_stats(st1, counts_rows, g1, be1, rows)

    # ---- stage 2: BN1+Mish -> conv2 (3x3, pad=1) + BN2 partial statistics ----
    h1_img = (h1 if not has_partial else h1[:rows]).reshape(n, hw, sc1p)
    img_bytes = (hw * (sc1p + ec2p) * 2 + hw * ec2p * 4 + w2p.size * 2
                 + (h + 2) * (w + 2) * sc1p * 2)
    h2_img, st2 = pl.pallas_call(
        functools.partial(_conv3x3_stage_kernel, h, w),
        out_shape=(jax.ShapeDtypeStruct((n, hw, ec2p), jnp.bfloat16),
                   jax.ShapeDtypeStruct((n, 2, ec2p), jnp.float32)),
        grid_spec=pltpu.PrefetchScalarGridSpec(
            num_scalar_prefetch=0,
            grid=(n,),
            in_specs=[pl.BlockSpec((1, hw, sc1p), lambda b: (b, 0, 0)),
                      pl.BlockSpec((1, sc1p), lambda b: (0, 0)),
                      pl.BlockSpec((1, sc1p), lambda b: (0, 0)),
                      pl.BlockSpec((9, sc1p, ec2p), lambda b: (0, 0, 0))],
            out_specs=(pl.BlockSpec((1, hw, ec2p), lambda b: (b, 0, 0)),
                       pl.BlockSpec((1, 2, ec2p), lambda b: (b, 0, 0))),
            scratch_shapes=[pltpu.VMEM((h + 2, w + 2, sc1p), jnp.bfloat16)]),
        compiler_params=_cparams(("parallel",), img_bytes),
        cost_estimate=pl.CostEstimate(
            flops=2 * n * hw * 9 * sc1p * ec2p,
            transcendentals=n * hw * sc1p,
            bytes_accessed=n * hw * (sc1p + ec2p) * 2 + w2p.size * 2),
    )(h1_img, sc1v, sh1v, w2p)
    sc2v, sh2v = _affine_from_tile_stats(st2, counts_img, g2, be2, rows)

    # ---- stage 3: BN2+Mish -> conv3 (1x1) + BN3 partial statistics -----------
    h2_flat = h2_img.reshape(rows, ec2p)
    if has_partial:
        h2_flat = jnp.pad(h2_flat, ((0, rows_pad - rows), (0, 0)))
    h3, st3 = pointwise_stage(h2_flat, sc2v, sh2v, w3p, ec2p, c2p,
                              apply_act=True)
    sc3v, sh3v = _affine_from_tile_stats(st3, counts_rows, g3, be3, rows)

    # ---- stage 4: BN3+Mish (lane-dense 128-wide f32 output) -------------------
    out_flat = pl.pallas_call(
        _bn_mish_kernel,
        out_shape=jax.ShapeDtypeStruct((rows_pad, c2p), jnp.float32),
        grid_spec=pltpu.PrefetchScalarGridSpec(
            num_scalar_prefetch=0,
            grid=(n_tiles,),
            in_specs=[pl.BlockSpec((tr, c2p), lambda i: (i, 0)),
                      pl.BlockSpec((1, c2p), lambda i: (0, 0)),
                      pl.BlockSpec((1, c2p), lambda i: (0, 0))],
            out_specs=pl.BlockSpec((tr, c2p), lambda i: (i, 0))),
        compiler_params=_cparams(("parallel",), tr * c2p * 6),
        cost_estimate=pl.CostEstimate(
            flops=4 * rows_pad * c2p,
            transcendentals=rows_pad * c2p,
            bytes_accessed=rows_pad * c2p * 6),
    )(h3, sc3v, sh3v)

    return out_flat[:rows, :c2].reshape(n, h, w, c2)


# ---------------------------------------------------------------------------
# Parameters + pure-JAX reference (same math as the PyTorch forward)
# ---------------------------------------------------------------------------
def init_params(key, c1, c2, k=3, s=0.25, e=0.25):
    """Deterministic synthetic parameters (shapes per the PyTorch __init__)."""
    sc1 = int(s * c1)
    ec2 = int(e * c2)
    ks = jax.random.split(key, 12)

    def nrm(kk, shape, scale):
        return scale * jax.random.normal(kk, shape, jnp.float32)

    return dict(
        # conv weights stored pre-transposed for NHWC matmuls:
        w1=nrm(ks[0], (c1, sc1), 0.2),          # torch (sc1, c1, 1, 1) -> (c1, sc1)
        b1=nrm(ks[1], (1, sc1), 0.1),           # used only by the reference
        g1=1.0 + nrm(ks[2], (1, sc1), 0.1),
        be1=nrm(ks[3], (1, sc1), 0.1),
        w2=nrm(ks[4], (k, k, sc1, ec2), 0.2),   # torch (ec2, sc1, 3, 3) -> HWIO
        b2=nrm(ks[5], (1, ec2), 0.1),
        g2=1.0 + nrm(ks[6], (1, ec2), 0.1),
        be2=nrm(ks[7], (1, ec2), 0.1),
        w3=nrm(ks[8], (ec2, c2), 0.2),          # torch (c2, ec2, 1, 1) -> (ec2, c2)
        b3=nrm(ks[9], (1, c2), 0.1),
        g3=1.0 + nrm(ks[10], (1, c2), 0.1),
        be3=nrm(ks[11], (1, c2), 0.1),
    )


def _softplus_ref(x):
    # matches torch.nn.functional.softplus(beta=1, threshold=20)
    return jnp.where(x > 20.0, x, jnp.log1p(jnp.exp(jnp.minimum(x, 20.0))))


def _mish_ref(x):
    return x * jnp.tanh(_softplus_ref(x))


def reference(x_nhwc, p, stride=1):
    """Pure-JAX reference (same math as the PyTorch forward, f32 throughout)."""
    if stride != 1:
        x_nhwc = x_nhwc[:, ::stride, ::stride, :]

    def bn(hh, g, b):
        mean = jnp.mean(hh, axis=(0, 1, 2), keepdims=True)
        var = jnp.mean(jnp.square(hh - mean), axis=(0, 1, 2), keepdims=True)
        return ((hh - mean) / jnp.sqrt(var + BN_EPS)
                * g.reshape(1, 1, 1, -1) + b.reshape(1, 1, 1, -1))

    h1 = jnp.einsum("nhwc,cd->nhwd", x_nhwc, p["w1"]) + p["b1"].reshape(1, 1, 1, -1)
    h1 = _mish_ref(bn(h1, p["g1"], p["be1"]))
    h2 = lax.conv_general_dilated(
        h1, p["w2"], (1, 1), "SAME",
        dimension_numbers=("NHWC", "HWIO", "NHWC")) + p["b2"].reshape(1, 1, 1, -1)
    h2 = _mish_ref(bn(h2, p["g2"], p["be2"]))
    h3 = jnp.einsum("nhwc,cd->nhwd", h2, p["w3"]) + p["b3"].reshape(1, 1, 1, -1)
    h3 = _mish_ref(bn(h3, p["g3"], p["be3"]))
    return h3


if __name__ == "__main__":
    # Small shapes consistent with the module: c1=16, c2=32 => sc1=4, ec2=8.
    N, C1, C2, H, W = 2, 16, 32, 16, 16
    key = jax.random.PRNGKey(0)
    kx, kp = jax.random.split(key)

    x_nchw = jax.random.normal(kx, (N, C1, H, W), jnp.float32)   # PyTorch layout
    x_nhwc = jnp.transpose(x_nchw, (0, 2, 3, 1))                 # kernel layout
    params = init_params(kp, C1, C2)

    ref = jax.block_until_ready(reference(x_nhwc, params))

    # Default (production) tiling: a single 512-row tile here.
    fwd = jax.jit(functools.partial(tucker_forward, stride=1))
    out = jax.block_until_ready(fwd(x_nhwc, params))
    assert out.shape == (N, H, W, C2)
    # bf16 MXU operands + bf16 inter-stage activations + approx reciprocal in
    # Mish -> slightly loose tolerance vs the pure-f32 reference.
    np.testing.assert_allclose(np.asarray(out), np.asarray(ref),
                               rtol=4e-2, atol=4e-2)

    # Small row tile: exercises the multi-tile BN-stat combine path.
    fwd_small = jax.jit(functools.partial(tucker_forward, stride=1,
                                          tile_rows=128))
    out2 = jax.block_until_ready(fwd_small(x_nhwc, params))
    np.testing.assert_allclose(np.asarray(out2), np.asarray(ref),
                               rtol=4e-2, atol=4e-2)

    print("KERNEL_OK")
</pallas_src>

<mosaic_0001>
module attributes {stable_mosaic.version = 11 : i64} {
  func.func @_pointwise_stage_kernel(%arg0: i32, %arg1: memref<512x128xf32, #tpu.memory_space<vmem>>, %arg2: memref<1x128xf32, #tpu.memory_space<vmem>>, %arg3: memref<1x128xf32, #tpu.memory_space<vmem>>, %arg4: memref<128x128xbf16, #tpu.memory_space<vmem>>, %arg5: memref<512x128xbf16, #tpu.memory_space<vmem>>, %arg6: memref<1x2x128xf32, #tpu.memory_space<vmem>>) attributes {dimension_semantics = [#tpu.dimension_semantics<parallel>], iteration_bounds = array<i64: 1>, scalar_prefetch = 0 : i64, scratch_operands = 0 : i64, tpu.core_type = #tpu.core_type<tc>, window_params = [{transform_indices = @transform_0, window_bounds = array<i64: 512, 128>}, {pipeline_mode = #tpu.pipeline_mode<synchronous>, transform_indices = @transform_1, window_bounds = array<i64: 1, 128>}, {pipeline_mode = #tpu.pipeline_mode<synchronous>, transform_indices = @transform_2, window_bounds = array<i64: 1, 128>}, {pipeline_mode = #tpu.pipeline_mode<synchronous>, transform_indices = @transform_3, window_bounds = array<i64: 128, 128>}, {transform_indices = @transform_4, window_bounds = array<i64: 512, 128>}, {transform_indices = @transform_5, window_bounds = array<i64: 1, 2, 128>}]} {
    %c0 = arith.constant 0 : index
    %c0_0 = arith.constant 0 : index
    %0 = vector.load %arg1[%c0, %c0_0] : memref<512x128xf32, #tpu.memory_space<vmem>>, vector<512x128xf32>
    %1 = arith.truncf %0 : vector<512x128xf32> to vector<512x128xbf16>
    %c0_1 = arith.constant 0 : index
    %c0_2 = arith.constant 0 : index
    %2 = vector.load %arg4[%c0_1, %c0_2] : memref<128x128xbf16, #tpu.memory_space<vmem>>, vector<128x128xbf16>
    %cst = arith.constant dense<0.000000e+00> : vector<512x128xf32>
    %3 = tpu.matmul %1, %2, %cst {dimension_numbers = #tpu.dot_dimension_numbers<[1], [0], [0], [1], [0, 0, 1, 1], [], []>} : vector<512x128xbf16>, vector<128x128xbf16>, vector<512x128xf32> -> vector<512x128xf32>
    %4 = arith.truncf %3 : vector<512x128xf32> to vector<512x128xbf16>
    %c0_3 = arith.constant 0 : index
    %c0_4 = arith.constant 0 : index
    %5 = vector.load %arg5[%c0_3, %c0_4] : memref<512x128xbf16, #tpu.memory_space<vmem>>, vector<512x128xbf16>
    tpu.vector_store %arg5[%c0_3, %c0_4], %4 {strides = array<i32>} : memref<512x128xbf16, #tpu.memory_space<vmem>>, vector<512x128xbf16>,
    %cst_5 = arith.constant dense<0.000000e+00> : vector<128xf32>
    %6 = vector.multi_reduction <add>, %3, %cst_5 [0] : vector<512x128xf32> to vector<128xf32>
    %7 = vector.shape_cast %6 : vector<128xf32> to vector<1x128xf32>
    %cst_6 = arith.constant 0.001953125 : f32
    %8 = vector.broadcast %cst_6 : f32 to vector<1x128xf32>
    %9 = arith.mulf %7, %8 : vector<1x128xf32>
    %10 = vector.broadcast %9 : vector<1x128xf32> to vector<512x128xf32>
    %11 = arith.subf %3, %10 : vector<512x128xf32>
    %c0_7 = arith.constant 0 : index
    %c0_8 = arith.constant 0 : index
    %c0_9 = arith.constant 0 : index
    %12 = vector.load %arg6[%c0_7, %c0_8, %c0_9] : memref<1x2x128xf32, #tpu.memory_space<vmem>>, vector<1x1x128xf32>
    %13 = vector.shape_cast %12 : vector<1x1x128xf32> to vector<1x128xf32>
    %14 = vector.shape_cast %7 : vector<1x128xf32> to vector<1x1x128xf32>
    tpu.vector_store %arg6[%c0_7, %c0_8, %c0_9], %14 {strides = array<i32>} : memref<1x2x128xf32, #tpu.memory_space<vmem>>, vector<1x1x128xf32>,
    %15 = arith.mulf %11, %11 : vector<512x128xf32>
    %cst_10 = arith.constant dense<0.000000e+00> : vector<128xf32>
    %16 = vector.multi_reduction <add>, %15, %cst_10 [0] : vector<512x128xf32> to vector<128xf32>
    %17 = vector.shape_cast %16 : vector<128xf32> to vector<1x128xf32>
    %c0_11 = arith.constant 0 : index
    %c1 = arith.constant 1 : index
    %c0_12 = arith.constant 0 : index
    %18 = vector.load %arg6[%c0_11, %c1, %c0_12] : memref<1x2x128xf32, #tpu.memory_space<vmem>>, vector<1x1x128xf32>
    %19 = vector.shape_cast %18 : vector<1x1x128xf32> to vector<1x128xf32>
    %20 = vector.shape_cast %17 : vector<1x128xf32> to vector<1x1x128xf32>
    tpu.vector_store %arg6[%c0_11, %c1, %c0_12], %20 {strides = array<i32>} : memref<1x2x128xf32, #tpu.memory_space<vmem>>, vector<1x1x128xf32>,
    return
  }
  func.func @transform_0(%arg0: i32) -> (i32, i32) {
    %c0_i32 = arith.constant 0 : i32
    %c0_i32_0 = arith.constant 0 : i32
    return %arg0, %c0_i32 : i32, i32
  }
  func.func @transform_1(%arg0: i32) -> (i32, i32) {
    %c0_i32 = arith.constant 0 : i32
    %c0_i32_0 = arith.constant 0 : i32
    %c0_i32_1 = arith.constant 0 : i32
    return %c0_i32, %c0_i32_0 : i32, i32
  }
  func.func @transform_2(%arg0: i32) -> (i32, i32) {
    %c0_i32 = arith.constant 0 : i32
    %c0_i32_0 = arith.constant 0 : i32
    %c0_i32_1 = arith.constant 0 : i32
    return %c0_i32, %c0_i32_0 : i32, i32
  }
  func.func @transform_3(%arg0: i32) -> (i32, i32) {
    %c0_i32 = arith.constant 0 : i32
    %c0_i32_0 = arith.constant 0 : i32
    %c0_i32_1 = arith.constant 0 : i32
    return %c0_i32, %c0_i32_0 : i32, i32
  }
  func.func @transform_4(%arg0: i32) -> (i32, i32) {
    %c0_i32 = arith.constant 0 : i32
    %c0_i32_0 = arith.constant 0 : i32
    return %arg0, %c0_i32 : i32, i32
  }
  func.func @transform_5(%arg0: i32) -> (i32, i32, i32) {
    %c0_i32 = arith.constant 0 : i32
    %c0_i32_0 = arith.constant 0 : i32
    %c0_i32_1 = arith.constant 0 : i32
    return %arg0, %c0_i32, %c0_i32_0 : i32, i32, i32
  }
}

module attributes {stable_mosaic.version = 11 : i64} {
  func.func @_conv3x3_stage_kernel(%arg0: i32, %arg1: memref<1x256x128xbf16, #tpu.memory_space<vmem>>, %arg2: memref<1x128xf32, #tpu.memory_space<vmem>>, %arg3: memref<1x128xf32, #tpu.memory_space<vmem>>, %arg4: memref<9x128x128xbf16, #tpu.memory_space<vmem>>, %arg5: memref<1x256x128xbf16, #tpu.memory_space<vmem>>, %arg6: memref<1x2x128xf32, #tpu.memory_space<vmem>>, %arg7: memref<18x18x128xbf16, #tpu.memory_space<vmem>>) attributes {dimension_semantics = [#tpu.dimension_semantics<parallel>], iteration_bounds = array<i64: 2>, scalar_prefetch = 0 : i64, scratch_operands = 1 : i64, tpu.core_type = #tpu.core_type<tc>, window_params = [{transform_indices = @transform_0, window_bounds = array<i64: 1, 256, 128>}, {pipeline_mode = #tpu.pipeline_mode<synchronous>, transform_indices = @transform_1, window_bounds = array<i64: 1, 128>}, {pipeline_mode = #tpu.pipeline_mode<synchronous>, transform_indices = @transform_2, window_bounds = array<i64: 1, 128>}, {pipeline_mode = #tpu.pipeline_mode<synchronous>, transform_indices = @transform_3, window_bounds = array<i64: 9, 128, 128>}, {transform_indices = @transform_4, window_bounds = array<i64: 1, 256, 128>}, {transform_indices = @transform_5, window_bounds = array<i64: 1, 2, 128>}]} {
    %cst = arith.constant 0.000000e+00 : bf16
    %0 = vector.broadcast %cst : bf16 to vector<18x18x128xbf16>
    %c0 = arith.constant 0 : index
    %c0_0 = arith.constant 0 : index
    %c0_1 = arith.constant 0 : index
    %1 = vector.load %arg7[%c0, %c0_0, %c0_1] : memref<18x18x128xbf16, #tpu.memory_space<vmem>>, vector<18x18x128xbf16>
    tpu.vector_store %arg7[%c0, %c0_0, %c0_1], %0 {strides = array<i32>} : memref<18x18x128xbf16, #tpu.memory_space<vmem>>, vector<18x18x128xbf16>,
    %c0_2 = arith.constant 0 : index
    %c0_3 = arith.constant 0 : index
    %c0_4 = arith.constant 0 : index
    %2 = vector.load %arg1[%c0_2, %c0_3, %c0_4] : memref<1x256x128xbf16, #tpu.memory_space<vmem>>, vector<1x256x128xbf16>
    %3 = vector.shape_cast %2 : vector<1x256x128xbf16> to vector<256x128xbf16>
    %4 = arith.extf %3 : vector<256x128xbf16> to vector<256x128xf32>
    %c0_5 = arith.constant 0 : index
    %c0_6 = arith.constant 0 : index
    %5 = vector.load %arg2[%c0_5, %c0_6] : memref<1x128xf32, #tpu.memory_space<vmem>>, vector<1x128xf32>
    %6 = vector.broadcast %5 : vector<1x128xf32> to vector<256x128xf32>
    %7 = arith.mulf %4, %6 : vector<256x128xf32>
    %c0_7 = arith.constant 0 : index
    %c0_8 = arith.constant 0 : index
    %8 = vector.load %arg3[%c0_7, %c0_8] : memref<1x128xf32, #tpu.memory_space<vmem>>, vector<1x128xf32>
    %9 = vector.broadcast %8 : vector<1x128xf32> to vector<256x128xf32>
    %10 = arith.addf %7, %9 : vector<256x128xf32>
    %cst_9 = arith.constant 2.000000e+01 : f32
    %11 = vector.broadcast %cst_9 : f32 to vector<256x128xf32>
    %12 = arith.minimumf %10, %11 : vector<256x128xf32>
    %13 = math.exp %12 : vector<256x128xf32>
    %14 = arith.mulf %13, %13 : vector<256x128xf32>
    %cst_10 = arith.constant 2.000000e+00 : f32
    %15 = vector.broadcast %cst_10 : f32 to vector<256x128xf32>
    %16 = arith.mulf %15, %13 : vector<256x128xf32>
    %17 = arith.addf %14, %16 : vector<256x128xf32>
    %18 = arith.mulf %10, %17 : vector<256x128xf32>
    %cst_11 = arith.constant 2.000000e+00 : f32
    %19 = vector.broadcast %cst_11 : f32 to vector<256x128xf32>
    %20 = arith.addf %17, %19 : vector<256x128xf32>
    %21 = tpu.reciprocal %20 {approx = true} : vector<256x128xf32> -> vector<256x128xf32>
    %22 = arith.mulf %18, %21 : vector<256x128xf32>
    %cst_12 = arith.constant 2.000000e+01 : f32
    %23 = vector.broadcast %cst_12 : f32 to vector<256x128xf32>
    %24 = arith.cmpf ogt, %10, %23 : vector<256x128xf32>
    %25 = arith.select %24, %10, %22 : vector<256x128xi1>, vector<256x128xf32>
    %26 = vector.shape_cast %25 : vector<256x128xf32> to vector<16x16x128xf32>
    %27 = arith.truncf %26 : vector<16x16x128xf32> to vector<16x16x128xbf16>
    %c1 = arith.constant 1 : index
    %c1_13 = arith.constant 1 : index
    %c0_14 = arith.constant 0 : index
    %28 = vector.load %arg7[%c1, %c1_13, %c0_14] : memref<18x18x128xbf16, #tpu.memory_space<vmem>>, vector<16x16x128xbf16>
    tpu.vector_store %arg7[%c1, %c1_13, %c0_14], %27 {strides = array<i32>} : memref<18x18x128xbf16, #tpu.memory_space<vmem>>, vector<16x16x128xbf16>,
    %cst_15 = arith.constant 0.000000e+00 : f32
    %29 = vector.broadcast %cst_15 : f32 to vector<256x128xf32>
    %c0_16 = arith.constant 0 : index
    %c0_17 = arith.constant 0 : index
    %c0_18 = arith.constant 0 : index
    %30 = vector.load %arg7[%c0_16, %c0_17, %c0_18] : memref<18x18x128xbf16, #tpu.memory_space<vmem>>, vector<16x16x128xbf16>
    %31 = vector.shape_cast %30 : vector<16x16x128xbf16> to vector<256x128xbf16>
    %c0_19 = arith.constant 0 : index
    %c0_20 = arith.constant 0 : index
    %c0_21 = arith.constant 0 : index
    %32 = vector.load %arg4[%c0_19, %c0_20, %c0_21] : memref<9x128x128xbf16, #tpu.memory_space<vmem>>, vector<1x128x128xbf16>
    %33 = vector.shape_cast %32 : vector<1x128x128xbf16> to vector<128x128xbf16>
    %cst_22 = arith.constant dense<0.000000e+00> : vector<256x128xf32>
    %34 = tpu.matmul %31, %33, %cst_22 {dimension_numbers = #tpu.dot_dimension_numbers<[1], [0], [0], [1], [0, 0, 1, 1], [], []>} : vector<256x128xbf16>, vector<128x128xbf16>, vector<256x128xf32> -> vector<256x128xf32>
    %35 = arith.addf %29, %34 : vector<256x128xf32>
    %c0_23 = arith.constant 0 : index
    %c1_24 = arith.constant 1 : index
    %c0_25 = arith.constant 0 : index
    %36 = vector.load %arg7[%c0_23, %c1_24, %c0_25] : memref<18x18x128xbf16, #tpu.memory_space<vmem>>, vector<16x16x128xbf16>
    %37 = vector.shape_cast %36 : vector<16x16x128xbf16> to vector<256x128xbf16>
    %c1_26 = arith.constant 1 : index
    %c0_27 = arith.constant 0 : index
    %c0_28 = arith.constant 0 : index
    %38 = vector.load %arg4[%c1_26, %c0_27, %c0_28] : memref<9x128x128xbf16, #tpu.memory_space<vmem>>, vector<1x128x128xbf16>
    %39 = vector.shape_cast %38 : vector<1x128x128xbf16> to vector<128x128xbf16>
    %cst_29 = arith.constant dense<0.000000e+00> : vector<256x128xf32>
    %40 = tpu.matmul %37, %39, %cst_29 {dimension_numbers = #tpu.dot_dimension_numbers<[1], [0], [0], [1], [0, 0, 1, 1], [], []>} : vector<256x128xbf16>, vector<128x128xbf16>, vector<256x128xf32> -> vector<256x128xf32>
    %41 = arith.addf %35, %40 : vector<256x128xf32>
    %c0_30 = arith.constant 0 : index
    %c2 = arith.constant 2 : index
    %c0_31 = arith.constant 0 : index
    %42 = vector.load %arg7[%c0_30, %c2, %c0_31] : memref<18x18x128xbf16, #tpu.memory_space<vmem>>, vector<16x16x128xbf16>
    %43 = vector.shape_cast %42 : vector<16x16x128xbf16> to vector<256x128xbf16>
    %c2_32 = arith.constant 2 : index
    %c0_33 = arith.constant 0 : index
    %c0_34 = arith.constant 0 : index
    %44 = vector.load %arg4[%c2_32, %c0_33, %c0_34] : memref<9x128x128xbf16, #tpu.memory_space<vmem>>, vector<1x128x128xbf16>
    %45 = vector.shape_cast %44 : vector<1x128x128xbf16> to vector<128x128xbf16>
    %cst_35 = arith.constant dense<0.000000e+00> : vector<256x128xf32>
    %46 = tpu.matmul %43, %45, %cst_35 {dimension_numbers = #tpu.dot_dimension_numbers<[1], [0], [0], [1], [0, 0, 1, 1], [], []>} : vector<256x128xbf16>, vector<128x128xbf16>, vector<256x128xf32> -> vector<256x128xf32>
    %47 = arith.addf %41, %46 : vector<256x128xf32>
    %c1_36 = arith.constant 1 : index
    %c0_37 = arith.constant 0 : index
    %c0_38 = arith.constant 0 : index
    %48 = vector.load %arg7[%c1_36, %c0_37, %c0_38] : memref<18x18x128xbf16, #tpu.memory_space<vmem>>, vector<16x16x128xbf16>
    %49 = vector.shape_cast %48 : vector<16x16x128xbf16> to vector<256x128xbf16>
    %c3 = arith.constant 3 : index
    %c0_39 = arith.constant 0 : index
    %c0_40 = arith.constant 0 : index
    %50 = vector.load %arg4[%c3, %c0_39, %c0_40] : memref<9x128x128xbf16, #tpu.memory_space<vmem>>, vector<1x128x128xbf16>
    %51 = vector.shape_cast %50 : vector<1x128x128xbf16> to vector<128x128xbf16>
    %cst_41 = arith.constant dense<0.000000e+00> : vector<256x128xf32>
    %52 = tpu.matmul %49, %51, %cst_41 {dimension_numbers = #tpu.dot_dimension_numbers<[1], [0], [0], [1], [0, 0, 1, 1], [], []>} : vector<256x128xbf16>, vector<128x128xbf16>, vector<256x128xf32> -> vector<256x128xf32>
    %53 = arith.addf %47, %52 : vector<256x128xf32>
    %c1_42 = arith.constant 1 : index
    %c1_43 = arith.constant 1 : index
    %c0_44 = arith.constant 0 : index
    %54 = vector.load %arg7[%c1_42, %c1_43, %c0_44] : memref<18x18x128xbf16, #tpu.memory_space<vmem>>, vector<16x16x128xbf16>
    %55 = vector.shape_cast %54 : vector<16x16x128xbf16> to vector<256x128xbf16>
    %c4 = arith.constant 4 : index
    %c0_45 = arith.constant 0 : index
    %c0_46 = arith.constant 0 : index
    %56 = vector.load %arg4[%c4, %c0_45, %c0_46] : memref<9x128x128xbf16, #tpu.memory_space<vmem>>, vector<1x128x128xbf16>
    %57 = vector.shape_cast %56 : vector<1x128x128xbf16> to vector<128x128xbf16>
    %cst_47 = arith.constant dense<0.000000e+00> : vector<256x128xf32>
    %58 = tpu.matmul %55, %57, %cst_47 {dimension_numbers = #tpu.dot_dimension_numbers<[1], [0], [0], [1], [0, 0, 1, 1], [], []>} : vector<256x128xbf16>, vector<128x128xbf16>, vector<256x128xf32> -> vector<256x128xf32>
    %59 = arith.addf %53, %58 : vector<256x128xf32>
    %c1_48 = arith.constant 1 : index
    %c2_49 = arith.constant 2 : index
    %c0_50 = arith.constant 0 : index
    %60 = vector.load %arg7[%c1_48, %c2_49, %c0_50] : memref<18x18x128xbf16, #tpu.memory_space<vmem>>, vector<16x16x128xbf16>
    %61 = vector.shape_cast %60 : vector<16x16x128xbf16> to vector<256x128xbf16>
    %c5 = arith.constant 5 : index
    %c0_51 = arith.constant 0 : index
    %c0_52 = arith.constant 0 : index
    %62 = vector.load %arg4[%c5, %c0_51, %c0_52] : memref<9x128x128xbf16, #tpu.memory_space<vmem>>, vector<1x128x128xbf16>
    %63 = vector.shape_cast %62 : vector<1x128x128xbf16> to vector<128x128xbf16>
    %cst_53 = arith.constant dense<0.000000e+00> : vector<256x128xf32>
    %64 = tpu.matmul %61, %63, %cst_53 {dimension_numbers = #tpu.dot_dimension_numbers<[1], [0], [0], [1], [0, 0, 1, 1], [], []>} : vector<256x128xbf16>, vector<128x128xbf16>, vector<256x128xf32> -> vector<256x128xf32>
    %65 = arith.addf %59, %64 : vector<256x128xf32>
    %c2_54 = arith.constant 2 : index
    %c0_55 = arith.constant 0 : index
    %c0_56 = arith.constant 0 : index
    %66 = vector.load %arg7[%c2_54, %c0_55, %c0_56] : memref<18x18x128xbf16, #tpu.memory_space<vmem>>, vector<16x16x128xbf16>
    %67 = vector.shape_cast %66 : vector<16x16x128xbf16> to vector<256x128xbf16>
    %c6 = arith.constant 6 : index
    %c0_57 = arith.constant 0 : index
    %c0_58 = arith.constant 0 : index
    %68 = vector.load %arg4[%c6, %c0_57, %c0_58] : memref<9x128x128xbf16, #tpu.memory_space<vmem>>, vector<1x128x128xbf16>
    %69 = vector.shape_cast %68 : vector<1x128x128xbf16> to vector<128x128xbf16>
    %cst_59 = arith.constant dense<0.000000e+00> : vector<256x128xf32>
    %70 = tpu.matmul %67, %69, %cst_59 {dimension_numbers = #tpu.dot_dimension_numbers<[1], [0], [0], [1], [0, 0, 1, 1], [], []>} : vector<256x128xbf16>, vector<128x128xbf16>, vector<256x128xf32> -> vector<256x128xf32>
    %71 = arith.addf %65, %70 : vector<256x128xf32>
    %c2_60 = arith.constant 2 : index
    %c1_61 = arith.constant 1 : index
    %c0_62 = arith.constant 0 : index
    %72 = vector.load %arg7[%c2_60, %c1_61, %c0_62] : memref<18x18x128xbf16, #tpu.memory_space<vmem>>, vector<16x16x128xbf16>
    %73 = vector.shape_cast %72 : vector<16x16x128xbf16> to vector<256x128xbf16>
    %c7 = arith.constant 7 : index
    %c0_63 = arith.constant 0 : index
    %c0_64 = arith.constant 0 : index
    %74 = vector.load %arg4[%c7, %c0_63, %c0_64] : memref<9x128x128xbf16, #tpu.memory_space<vmem>>, vector<1x128x128xbf16>
    %75 = vector.shape_cast %74 : vector<1x128x128xbf16> to vector<128x128xbf16>
    %cst_65 = arith.constant dense<0.000000e+00> : vector<256x128xf32>
    %76 = tpu.matmul %73, %75, %cst_65 {dimension_numbers = #tpu.dot_dimension_numbers<[1], [0], [0], [1], [0, 0, 1, 1], [], []>} : vector<256x128xbf16>, vector<128x128xbf16>, vector<256x128xf32> -> vector<256x128xf32>
    %77 = arith.addf %71, %76 : vector<256x128xf32>
    %c2_66 = arith.constant 2 : index
    %c2_67 = arith.constant 2 : index
    %c0_68 = arith.constant 0 : index
    %78 = vector.load %arg7[%c2_66, %c2_67, %c0_68] : memref<18x18x128xbf16, #tpu.memory_space<vmem>>, vector<16x16x128xbf16>
    %79 = vector.shape_cast %78 : vector<16x16x128xbf16> to vector<256x128xbf16>
    %c8 = arith.constant 8 : index
    %c0_69 = arith.constant 0 : index
    %c0_70 = arith.constant 0 : index
    %80 = vector.load %arg4[%c8, %c0_69, %c0_70] : memref<9x128x128xbf16, #tpu.memory_space<vmem>>, vector<1x128x128xbf16>
    %81 = vector.shape_cast %80 : vector<1x128x128xbf16> to vector<128x128xbf16>
    %cst_71 = arith.constant dense<0.000000e+00> : vector<256x128xf32>
    %82 = tpu.matmul %79, %81, %cst_71 {dimension_numbers = #tpu.dot_dimension_numbers<[1], [0], [0], [1], [0, 0, 1, 1], [], []>} : vector<256x128xbf16>, vector<128x128xbf16>, vector<256x128xf32> -> vector<256x128xf32>
    %83 = arith.addf %77, %82 : vector<256x128xf32>
    %84 = arith.truncf %83 : vector<256x128xf32> to vector<256x128xbf16>
    %c0_72 = arith.constant 0 : index
    %c0_73 = arith.constant 0 : index
    %c0_74 = arith.constant 0 : index
    %85 = vector.load %arg5[%c0_72, %c0_73, %c0_74] : memref<1x256x128xbf16, #tpu.memory_space<vmem>>, vector<1x256x128xbf16>
    %86 = vector.shape_cast %85 : vector<1x256x128xbf16> to vector<256x128xbf16>
    %87 = vector.shape_cast %84 : vector<256x128xbf16> to vector<1x256x128xbf16>
    tpu.vector_store %arg5[%c0_72, %c0_73, %c0_74], %87 {strides = array<i32>} : memref<1x256x128xbf16, #tpu.memory_space<vmem>>, vector<1x256x128xbf16>,
    %cst_75 = arith.constant dense<0.000000e+00> : vector<128xf32>
    %88 = vector.multi_reduction <add>, %83, %cst_75 [0] : vector<256x128xf32> to vector<128xf32>
    %89 = vector.shape_cast %88 : vector<128xf32> to vector<1x128xf32>
    %cst_76 = arith.constant 3.906250e-03 : f32
    %90 = vector.broadcast %cst_76 : f32 to vector<1x128xf32>
    %91 = arith.mulf %89, %90 : vector<1x128xf32>
    %92 = vector.broadcast %91 : vector<1x128xf32> to vector<256x128xf32>
    %93 = arith.subf %83, %92 : vector<256x128xf32>
    %c0_77 = arith.constant 0 : index
    %c0_78 = arith.constant 0 : index
    %c0_79 = arith.constant 0 : index
    %94 = vector.load %arg6[%c0_77, %c0_78, %c0_79] : memref<1x2x128xf32, #tpu.memory_space<vmem>>, vector<1x1x128xf32>
    %95 = vector.shape_cast %94 : vector<1x1x128xf32> to vector<1x128xf32>
    %96 = vector.shape_cast %89 : vector<1x128xf32> to vector<1x1x128xf32>
    tpu.vector_store %arg6[%c0_77, %c0_78, %c0_79], %96 {strides = array<i32>} : memref<1x2x128xf32, #tpu.memory_space<vmem>>, vector<1x1x128xf32>,
    %97 = arith.mulf %93, %93 : vector<256x128xf32>
    %cst_80 = arith.constant dense<0.000000e+00> : vector<128xf32>
    %98 = vector.multi_reduction <add>, %97, %cst_80 [0] : vector<256x128xf32> to vector<128xf32>
    %99 = vector.shape_cast %98 : vector<128xf32> to vector<1x128xf32>
    %c0_81 = arith.constant 0 : index
    %c1_82 = arith.constant 1 : index
    %c0_83 = arith.constant 0 : index
    %100 = vector.load %arg6[%c0_81, %c1_82, %c0_83] : memref<1x2x128xf32, #tpu.memory_space<vmem>>, vector<1x1x128xf32>
    %101 = vector.shape_cast %100 : vector<1x1x128xf32> to vector<1x128xf32>
    %102 = vector.shape_cast %99 : vector<1x128xf32> to vector<1x1x128xf32>
    tpu.vector_store %arg6[%c0_81, %c1_82, %c0_83], %102 {strides = array<i32>} : memref<1x2x128xf32, #tpu.memory_space<vmem>>, vector<1x1x128xf32>,
    return
  }
  func.func @transform_0(%arg0: i32) -> (i32, i32, i32) {
    %c0_i32 = arith.constant 0 : i32
    %c0_i32_0 = arith.constant 0 : i32
    %c0_i32_1 = arith.constant 0 : i32
    return %arg0, %c0_i32, %c0_i32_0 : i32, i32, i32
  }
  func.func @transform_1(%arg0: i32) -> (i32, i32) {
    %c0_i32 = arith.constant 0 : i32
    %c0_i32_0 = arith.constant 0 : i32
    %c0_i32_1 = arith.constant 0 : i32
    return %c0_i32, %c0_i32_0 : i32, i32
  }
  func.func @transform_2(%arg0: i32) -> (i32, i32) {
    %c0_i32 = arith.constant 0 : i32
    %c0_i32_0 = arith.constant 0 : i32
    %c0_i32_1 = arith.constant 0 : i32
    return %c0_i32, %c0_i32_0 : i32, i32
  }
  func.func @transform_3(%arg0: i32) -> (i32, i32, i32) {
    %c0_i32 = arith.constant 0 : i32
    %c0_i32_0 = arith.constant 0 : i32
    %c0_i32_1 = arith.constant 0 : i32
    %c0_i32_2 = arith.constant 0 : i32
    return %c0_i32, %c0_i32_0, %c0_i32_1 : i32, i32, i32
  }
  func.func @transform_4(%arg0: i32) -> (i32, i32, i32) {
    %c0_i32 = arith.constant 0 : i32
    %c0_i32_0 = arith.constant 0 : i32
    %c0_i32_1 = arith.constant 0 : i32
    return %arg0, %c0_i32, %c0_i32_0 : i32, i32, i32
  }
  func.func @transform_5(%arg0: i32) -> (i32, i32, i32) {
    %c0_i32 = arith.constant 0 : i32
    %c0_i32_0 = arith.constant 0 : i32
    %c0_i32_1 = arith.constant 0 : i32
    return %arg0, %c0_i32, %c0_i32_0 : i32, i32, i32
  }
}

module attributes {stable_mosaic.version = 11 : i64} {
  func.func @_pointwise_stage_kernel(%arg0: i32, %arg1: memref<512x128xbf16, #tpu.memory_space<vmem>>, %arg2: memref<1x128xf32, #tpu.memory_space<vmem>>, %arg3: memref<1x128xf32, #tpu.memory_space<vmem>>, %arg4: memref<128x128xbf16, #tpu.memory_space<vmem>>, %arg5: memref<512x128xbf16, #tpu.memory_space<vmem>>, %arg6: memref<1x2x128xf32, #tpu.memory_space<vmem>>) attributes {dimension_semantics = [#tpu.dimension_semantics<parallel>], iteration_bounds = array<i64: 1>, scalar_prefetch = 0 : i64, scratch_operands = 0 : i64, tpu.core_type = #tpu.core_type<tc>, window_params = [{transform_indices = @transform_0, window_bounds = array<i64: 512, 128>}, {pipeline_mode = #tpu.pipeline_mode<synchronous>, transform_indices = @transform_1, window_bounds = array<i64: 1, 128>}, {pipeline_mode = #tpu.pipeline_mode<synchronous>, transform_indices = @transform_2, window_bounds = array<i64: 1, 128>}, {pipeline_mode = #tpu.pipeline_mode<synchronous>, transform_indices = @transform_3, window_bounds = array<i64: 128, 128>}, {transform_indices = @transform_4, window_bounds = array<i64: 512, 128>}, {transform_indices = @transform_5, window_bounds = array<i64: 1, 2, 128>}]} {
    %c0 = arith.constant 0 : index
    %c0_0 = arith.constant 0 : index
    %0 = vector.load %arg1[%c0, %c0_0] : memref<512x128xbf16, #tpu.memory_space<vmem>>, vector<512x128xbf16>
    %1 = arith.extf %0 : vector<512x128xbf16> to vector<512x128xf32>
    %c0_1 = arith.constant 0 : index
    %c0_2 = arith.constant 0 : index
    %2 = vector.load %arg2[%c0_1, %c0_2] : memref<1x128xf32, #tpu.memory_space<vmem>>, vector<1x128xf32>
    %3 = vector.broadcast %2 : vector<1x128xf32> to vector<512x128xf32>
    %4 = arith.mulf %1, %3 : vector<512x128xf32>
    %c0_3 = arith.constant 0 : index
    %c0_4 = arith.constant 0 : index
    %5 = vector.load %arg3[%c0_3, %c0_4] : memref<1x128xf32, #tpu.memory_space<vmem>>, vector<1x128xf32>
    %6 = vector.broadcast %5 : vector<1x128xf32> to vector<512x128xf32>
    %7 = arith.addf %4, %6 : vector<512x128xf32>
    %cst = arith.constant 2.000000e+01 : f32
    %8 = vector.broadcast %cst : f32 to vector<512x128xf32>
    %9 = arith.minimumf %7, %8 : vector<512x128xf32>
    %10 = math.exp %9 : vector<512x128xf32>
    %11 = arith.mulf %10, %10 : vector<512x128xf32>
    %cst_5 = arith.constant 2.000000e+00 : f32
    %12 = vector.broadcast %cst_5 : f32 to vector<512x128xf32>
    %13 = arith.mulf %12, %10 : vector<512x128xf32>
    %14 = arith.addf %11, %13 : vector<512x128xf32>
    %15 = arith.mulf %7, %14 : vector<512x128xf32>
    %cst_6 = arith.constant 2.000000e+00 : f32
    %16 = vector.broadcast %cst_6 : f32 to vector<512x128xf32>
    %17 = arith.addf %14, %16 : vector<512x128xf32>
    %18 = tpu.reciprocal %17 {approx = true} : vector<512x128xf32> -> vector<512x128xf32>
    %19 = arith.mulf %15, %18 : vector<512x128xf32>
    %cst_7 = arith.constant 2.000000e+01 : f32
    %20 = vector.broadcast %cst_7 : f32 to vector<512x128xf32>
    %21 = arith.cmpf ogt, %7, %20 : vector<512x128xf32>
    %22 = arith.select %21, %7, %19 : vector<512x128xi1>, vector<512x128xf32>
    %23 = arith.truncf %22 : vector<512x128xf32> to vector<512x128xbf16>
    %c0_8 = arith.constant 0 : index
    %c0_9 = arith.constant 0 : index
    %24 = vector.load %arg4[%c0_8, %c0_9] : memref<128x128xbf16, #tpu.memory_space<vmem>>, vector<128x128xbf16>
    %cst_10 = arith.constant dense<0.000000e+00> : vector<512x128xf32>
    %25 = tpu.matmul %23, %24, %cst_10 {dimension_numbers = #tpu.dot_dimension_numbers<[1], [0], [0], [1], [0, 0, 1, 1], [], []>} : vector<512x128xbf16>, vector<128x128xbf16>, vector<512x128xf32> -> vector<512x128xf32>
    %26 = arith.truncf %25 : vector<512x128xf32> to vector<512x128xbf16>
    %c0_11 = arith.constant 0 : index
    %c0_12 = arith.constant 0 : index
    %27 = vector.load %arg5[%c0_11, %c0_12] : memref<512x128xbf16, #tpu.memory_space<vmem>>, vector<512x128xbf16>
    tpu.vector_store %arg5[%c0_11, %c0_12], %26 {strides = array<i32>} : memref<512x128xbf16, #tpu.memory_space<vmem>>, vector<512x128xbf16>,
    %cst_13 = arith.constant dense<0.000000e+00> : vector<128xf32>
    %28 = vector.multi_reduction <add>, %25, %cst_13 [0] : vector<512x128xf32> to vector<128xf32>
    %29 = vector.shape_cast %28 : vector<128xf32> to vector<1x128xf32>
    %cst_14 = arith.constant 0.001953125 : f32
    %30 = vector.broadcast %cst_14 : f32 to vector<1x128xf32>
    %31 = arith.mulf %29, %30 : vector<1x128xf32>
    %32 = vector.broadcast %31 : vector<1x128xf32> to vector<512x128xf32>
    %33 = arith.subf %25, %32 : vector<512x128xf32>
    %c0_15 = arith.constant 0 : index
    %c0_16 = arith.constant 0 : index
    %c0_17 = arith.constant 0 : index
    %34 = vector.load %arg6[%c0_15, %c0_16, %c0_17] : memref<1x2x128xf32, #tpu.memory_space<vmem>>, vector<1x1x128xf32>
    %35 = vector.shape_cast %34 : vector<1x1x128xf32> to vector<1x128xf32>
    %36 = vector.shape_cast %29 : vector<1x128xf32> to vector<1x1x128xf32>
    tpu.vector_store %arg6[%c0_15, %c0_16, %c0_17], %36 {strides = array<i32>} : memref<1x2x128xf32, #tpu.memory_space<vmem>>, vector<1x1x128xf32>,
    %37 = arith.mulf %33, %33 : vector<512x128xf32>
    %cst_18 = arith.constant dense<0.000000e+00> : vector<128xf32>
    %38 = vector.multi_reduction <add>, %37, %cst_18 [0] : vector<512x128xf32> to vector<128xf32>
    %39 = vector.shape_cast %38 : vector<128xf32> to vector<1x128xf32>
    %c0_19 = arith.constant 0 : index
    %c1 = arith.constant 1 : index
    %c0_20 = arith.constant 0 : index
    %40 = vector.load %arg6[%c0_19, %c1, %c0_20] : memref<1x2x128xf32, #tpu.memory_space<vmem>>, vector<1x1x128xf32>
    %41 = vector.shape_cast %40 : vector<1x1x128xf32> to vector<1x128xf32>
    %42 = vector.shape_cast %39 : vector<1x128xf32> to vector<1x1x128xf32>
    tpu.vector_store %arg6[%c0_19, %c1, %c0_20], %42 {strides = array<i32>} : memref<1x2x128xf32, #tpu.memory_space<vmem>>, vector<1x1x128xf32>,
    return
  }
  func.func @transform_0(%arg0: i32) -> (i32, i32) {
    %c0_i32 = arith.constant 0 : i32
    %c0_i32_0 = arith.constant 0 : i32
    return %arg0, %c0_i32 : i32, i32
  }
  func.func @transform_1(%arg0: i32) -> (i32, i32) {
    %c0_i32 = arith.constant 0 : i32
    %c0_i32_0 = arith.constant 0 : i32
    %c0_i32_1 = arith.constant 0 : i32
    return %c0_i32, %c0_i32_0 : i32, i32
  }
  func.func @transform_2(%arg0: i32) -> (i32, i32) {
    %c0_i32 = arith.constant 0 : i32
    %c0_i32_0 = arith.constant 0 : i32
    %c0_i32_1 = arith.constant 0 : i32
    return %c0_i32, %c0_i32_0 : i32, i32
  }
  func.func @transform_3(%arg0: i32) -> (i32, i32) {
    %c0_i32 = arith.constant 0 : i32
    %c0_i32_0 = arith.constant 0 : i32
    %c0_i32_1 = arith.constant 0 : i32
    return %c0_i32, %c0_i32_0 : i32, i32
  }
  func.func @transform_4(%arg0: i32) -> (i32, i32) {
    %c0_i32 = arith.constant 0 : i32
    %c0_i32_0 = arith.constant 0 : i32
    return %arg0, %c0_i32 : i32, i32
  }
  func.func @transform_5(%arg0: i32) -> (i32, i32, i32) {
    %c0_i32 = arith.constant 0 : i32
    %c0_i32_0 = arith.constant 0 : i32
    %c0_i32_1 = arith.constant 0 : i32
    return %arg0, %c0_i32, %c0_i32_0 : i32, i32, i32
  }
}

module attributes {stable_mosaic.version = 11 : i64} {
  func.func @_bn_mish_kernel(%arg0: i32, %arg1: memref<512x128xbf16, #tpu.memory_space<vmem>>, %arg2: memref<1x128xf32, #tpu.memory_space<vmem>>, %arg3: memref<1x128xf32, #tpu.memory_space<vmem>>, %arg4: memref<512x128xf32, #tpu.memory_space<vmem>>) attributes {dimension_semantics = [#tpu.dimension_semantics<parallel>], iteration_bounds = array<i64: 1>, scalar_prefetch = 0 : i64, scratch_operands = 0 : i64, tpu.core_type = #tpu.core_type<tc>, window_params = [{transform_indices = @transform_0, window_bounds = array<i64: 512, 128>}, {pipeline_mode = #tpu.pipeline_mode<synchronous>, transform_indices = @transform_1, window_bounds = array<i64: 1, 128>}, {pipeline_mode = #tpu.pipeline_mode<synchronous>, transform_indices = @transform_2, window_bounds = array<i64: 1, 128>}, {transform_indices = @transform_3, window_bounds = array<i64: 512, 128>}]} {
    %c0 = arith.constant 0 : index
    %c0_0 = arith.constant 0 : index
    %0 = vector.load %arg1[%c0, %c0_0] : memref<512x128xbf16, #tpu.memory_space<vmem>>, vector<512x128xbf16>
    %1 = arith.extf %0 : vector<512x128xbf16> to vector<512x128xf32>
    %c0_1 = arith.constant 0 : index
    %c0_2 = arith.constant 0 : index
    %2 = vector.load %arg2[%c0_1, %c0_2] : memref<1x128xf32, #tpu.memory_space<vmem>>, vector<1x128xf32>
    %3 = vector.broadcast %2 : vector<1x128xf32> to vector<512x128xf32>
    %4 = arith.mulf %1, %3 : vector<512x128xf32>
    %c0_3 = arith.constant 0 : index
    %c0_4 = arith.constant 0 : index
    %5 = vector.load %arg3[%c0_3, %c0_4] : memref<1x128xf32, #tpu.memory_space<vmem>>, vector<1x128xf32>
    %6 = vector.broadcast %5 : vector<1x128xf32> to vector<512x128xf32>
    %7 = arith.addf %4, %6 : vector<512x128xf32>
    %cst = arith.constant 2.000000e+01 : f32
    %8 = vector.broadcast %cst : f32 to vector<512x128xf32>
    %9 = arith.minimumf %7, %8 : vector<512x128xf32>
    %10 = math.exp %9 : vector<512x128xf32>
    %11 = arith.mulf %10, %10 : vector<512x128xf32>
    %cst_5 = arith.constant 2.000000e+00 : f32
    %12 = vector.broadcast %cst_5 : f32 to vector<512x128xf32>
    %13 = arith.mulf %12, %10 : vector<512x128xf32>
    %14 = arith.addf %11, %13 : vector<512x128xf32>
    %15 = arith.mulf %7, %14 : vector<512x128xf32>
    %cst_6 = arith.constant 2.000000e+00 : f32
    %16 = vector.broadcast %cst_6 : f32 to vector<512x128xf32>
    %17 = arith.addf %14, %16 : vector<512x128xf32>
    %18 = tpu.reciprocal %17 {approx = true} : vector<512x128xf32> -> vector<512x128xf32>
    %19 = arith.mulf %15, %18 : vector<512x128xf32>
    %cst_7 = arith.constant 2.000000e+01 : f32
    %20 = vector.broadcast %cst_7 : f32 to vector<512x128xf32>
    %21 = arith.cmpf ogt, %7, %20 : vector<512x128xf32>
    %22 = arith.select %21, %7, %19 : vector<512x128xi1>, vector<512x128xf32>
    %c0_8 = arith.constant 0 : index
    %c0_9 = arith.constant 0 : index
    %23 = vector.load %arg4[%c0_8, %c0_9] : memref<512x128xf32, #tpu.memory_space<vmem>>, vector<512x128xf32>
    tpu.vector_store %arg4[%c0_8, %c0_9], %22 {strides = array<i32>} : memref<512x128xf32, #tpu.memory_space<vmem>>, vector<512x128xf32>,
    return
  }
  func.func @transform_0(%arg0: i32) -> (i32, i32) {
    %c0_i32 = arith.constant 0 : i32
    %c0_i32_0 = arith.constant 0 : i32
    return %arg0, %c0_i32 : i32, i32
  }
  func.func @transform_1(%arg0: i32) -> (i32, i32) {
    %c0_i32 = arith.constant 0 : i32
    %c0_i32_0 = arith.constant 0 : i32
    %c0_i32_1 = arith.constant 0 : i32
    return %c0_i32, %c0_i32_0 : i32, i32
  }
  func.func @transform_2(%arg0: i32) -> (i32, i32) {
    %c0_i32 = arith.constant 0 : i32
    %c0_i32_0 = arith.constant 0 : i32
    %c0_i32_1 = arith.constant 0 : i32
    return %c0_i32, %c0_i32_0 : i32, i32
  }
  func.func @transform_3(%arg0: i32) -> (i32, i32) {
    %c0_i32 = arith.constant 0 : i32
    %c0_i32_0 = arith.constant 0 : i32
    return %arg0, %c0_i32 : i32, i32
  }
}

</mosaic_0001>

<llo_original>
// kernel: tucker_forward.4
$region0: #{tucker_forward.4}
  #allocation0 [shape = 'u32[]', space=smem, size = 0x4, offset = 0x4, fixed_abs, tag = 'smem constant byte address 0x4 - core index']
  #allocation1 [shape = 'u32[72,128]{1,0:T(1,128)}', space=vmem, size = 0x9000, scoped, tag = 'internal scratch']
  %s0 = inlined_call_operand.vmem [shape: f32[512,128], index: 0, kind: input, shape index: {}]
  %s1 = inlined_call_operand.vmem [shape: f32[1,128], index: 1, kind: input, shape index: {}, may-alias: {1,2}]
  %s2 = inlined_call_operand.vmem [shape: f32[1,128], index: 2, kind: input, shape index: {}, may-alias: {1,2}]
  %s3 = inlined_call_operand.vmem [shape: bf16[128,128], index: 3, kind: input, shape index: {}]
  %s4 = inlined_call_operand.vmem [shape: bf16[512,128], index: 4, kind: output, shape index: {0}]
  %s5 = inlined_call_operand.vmem [shape: f32[1,2,128], index: 5, kind: output, shape index: {1}]
  %6 = xla_tuple %s4, %s5
  %s7 = sld [smem:[#allocation0]]
  $region34: #{tucker_forward.4} parent=0
    _
  %s9 = ssub.s32 1, %s7
  %s10 = scalar_select 0, %s9, %s7
  // Predicated region
  $region2: #{tucker_forward.4} parent=0 // pred_check
    _
  $region3: #{tucker_forward.4} parent=0 // pred_check_branch
    %12 = sbr.rel (0) target = $region5
  $region4: #{tucker_forward.4} parent=0 // pred_region
    _
  $region5: #{tucker_forward.4} parent=0 // pred_fallthru
    _
  // Predicated region
  $region6: #{tucker_forward.4} parent=0 // pred_check
    _
  $region7: #{tucker_forward.4} parent=0 // pred_check_branch
    %14 = sbr.rel (0) target = $region9
  $region8: #{tucker_forward.4} parent=0 // pred_region
    _
  $region9: #{tucker_forward.4} parent=0 // pred_fallthru
    _
  // Predicated region
  $region10: #{tucker_forward.4} parent=0 // pred_check
    _
  $region11: #{tucker_forward.4} parent=0 // pred_check_branch
    %16 = sbr.rel (0) target = $region13
  $region12: #{tucker_forward.4} parent=0 // pred_region
    _
  $region13: #{tucker_forward.4} parent=0 // pred_fallthru
    _
  // Predicated region
  $region14: #{tucker_forward.4} parent=0 // pred_check
    _
  $region15: #{tucker_forward.4} parent=0 // pred_check_branch
    %18 = sbr.rel (0) target = $region17
  $region16: #{tucker_forward.4} parent=0 // pred_region
    _
  $region17: #{tucker_forward.4} parent=0 // pred_fallthru
    _
  %v19 = vld [vmem:[%s0] sm:$0xff]
  %v20 = vld [vmem:[%s0 + $0x8] sm:$0xff]
  %v21 = vld [vmem:[%s0 + $0x10] sm:$0xff]
  %v22 = vld [vmem:[%s0 + $0x18] sm:$0xff]
  %v23 = vld [vmem:[%s0 + $0x20] sm:$0xff]
  %v24 = vld [vmem:[%s0 + $0x28] sm:$0xff]
  %v25 = vld [vmem:[%s0 + $0x30] sm:$0xff]
  %v26 = vld [vmem:[%s0 + $0x38] sm:$0xff]
  %v27 = vld [vmem:[%s0 + $0x40] sm:$0xff]
  %v28 = vld [vmem:[%s0 + $0x48] sm:$0xff]
  %v29 = vld [vmem:[%s0 + $0x50] sm:$0xff]
  %v30 = vld [vmem:[%s0 + $0x58] sm:$0xff]
  %v31 = vld [vmem:[%s0 + $0x60] sm:$0xff]
  %v32 = vld [vmem:[%s0 + $0x68] sm:$0xff]
  %v33 = vld [vmem:[%s0 + $0x70] sm:$0xff]
  %v34 = vld [vmem:[%s0 + $0x78] sm:$0xff]
  %v35 = vld [vmem:[%s0 + $0x80] sm:$0xff]
  %v36 = vld [vmem:[%s0 + $0x88] sm:$0xff]
  %v37 = vld [vmem:[%s0 + $0x90] sm:$0xff]
  %v38 = vld [vmem:[%s0 + $0x98] sm:$0xff]
  %v39 = vld [vmem:[%s0 + $0xa0] sm:$0xff]
  %v40 = vld [vmem:[%s0 + $0xa8] sm:$0xff]
  %v41 = vld [vmem:[%s0 + $0xb0] sm:$0xff]
  %v42 = vld [vmem:[%s0 + $0xb8] sm:$0xff]
  %v43 = vld [vmem:[%s0 + $0xc0] sm:$0xff]
  %v44 = vld [vmem:[%s0 + $0xc8] sm:$0xff]
  %v45 = vld [vmem:[%s0 + $0xd0] sm:$0xff]
  %v46 = vld [vmem:[%s0 + $0xd8] sm:$0xff]
  %v47 = vld [vmem:[%s0 + $0xe0] sm:$0xff]
  %v48 = vld [vmem:[%s0 + $0xe8] sm:$0xff]
  %v49 = vld [vmem:[%s0 + $0xf0] sm:$0xff]
  %v50 = vld [vmem:[%s0 + $0xf8] sm:$0xff]
  %v51 = vld [vmem:[%s0 + $0x100] sm:$0xff]
  %v52 = vld [vmem:[%s0 + $0x108] sm:$0xff]
  %v53 = vld [vmem:[%s0 + $0x110] sm:$0xff]
  %v54 = vld [vmem:[%s0 + $0x118] sm:$0xff]
  %v55 = vld [vmem:[%s0 + $0x120] sm:$0xff]
  %v56 = vld [vmem:[%s0 + $0x128] sm:$0xff]
  %v57 = vld [vmem:[%s0 + $0x130] sm:$0xff]
  %v58 = vld [vmem:[%s0 + $0x138] sm:$0xff]
  %v59 = vld [vmem:[%s0 + $0x140] sm:$0xff]
  %v60 = vld [vmem:[%s0 + $0x148] sm:$0xff]
  %v61 = vld [vmem:[%s0 + $0x150] sm:$0xff]
  %v62 = vld [vmem:[%s0 + $0x158] sm:$0xff]
  %v63 = vld [vmem:[%s0 + $0x160] sm:$0xff]
  %v64 = vld [vmem:[%s0 + $0x168] sm:$0xff]
  %v65 = vld [vmem:[%s0 + $0x170] sm:$0xff]
  %v66 = vld [vmem:[%s0 + $0x178] sm:$0xff]
  %v67 = vld [vmem:[%s0 + $0x180] sm:$0xff]
  %v68 = vld [vmem:[%s0 + $0x188] sm:$0xff]
  %v69 = vld [vmem:[%s0 + $0x190] sm:$0xff]
  %v70 = vld [vmem:[%s0 + $0x198] sm:$0xff]
  %v71 = vld [vmem:[%s0 + $0x1a0] sm:$0xff]
  %v72 = vld [vmem:[%s0 + $0x1a8] sm:$0xff]
  %v73 = vld [vmem:[%s0 + $0x1b0] sm:$0xff]
  %v74 = vld [vmem:[%s0 + $0x1b8] sm:$0xff]
  %v75 = vld [vmem:[%s0 + $0x1c0] sm:$0xff]
  %v76 = vld [vmem:[%s0 + $0x1c8] sm:$0xff]
  %v77 = vld [vmem:[%s0 + $0x1d0] sm:$0xff]
  %v78 = vld [vmem:[%s0 + $0x1d8] sm:$0xff]
  %v79 = vld [vmem:[%s0 + $0x1e0] sm:$0xff]
  %v80 = vld [vmem:[%s0 + $0x1e8] sm:$0xff]
  %v81 = vld [vmem:[%s0 + $0x1f0] sm:$0xff]
  %v82 = vld [vmem:[%s0 + $0x1f8] sm:$0xff]
  %v83 = vpack.c.bf16 %v20, %v19
  %v84 = vpack.c.bf16 %v22, %v21
  %v85 = vpack.c.bf16 %v24, %v23
  %v86 = vpack.c.bf16 %v26, %v25
  %v87 = vpack.c.bf16 %v28, %v27
  %v88 = vpack.c.bf16 %v30, %v29
  %v89 = vpack.c.bf16 %v32, %v31
  %v90 = vpack.c.bf16 %v34, %v33
  %v91 = vpack.c.bf16 %v36, %v35
  %v92 = vpack.c.bf16 %v38, %v37
  %v93 = vpack.c.bf16 %v40, %v39
  %v94 = vpack.c.bf16 %v42, %v41
  %v95 = vpack.c.bf16 %v44, %v43
  %v96 = vpack.c.bf16 %v46, %v45
  %v97 = vpack.c.bf16 %v48, %v47
  %v98 = vpack.c.bf16 %v50, %v49
  %v99 = vpack.c.bf16 %v52, %v51
  %v100 = vpack.c.bf16 %v54, %v53
  %v101 = vpack.c.bf16 %v56, %v55
  %v102 = vpack.c.bf16 %v58, %v57
  %v103 = vpack.c.bf16 %v60, %v59
  %v104 = vpack.c.bf16 %v62, %v61
  %v105 = vpack.c.bf16 %v64, %v63
  %v106 = vpack.c.bf16 %v66, %v65
  %v107 = vpack.c.bf16 %v68, %v67
  %v108 = vpack.c.bf16 %v70, %v69
  %v109 = vpack.c.bf16 %v72, %v71
  %v110 = vpack.c.bf16 %v74, %v73
  %v111 = vpack.c.bf16 %v76, %v75
  %v112 = vpack.c.bf16 %v78, %v77
  %v113 = vpack.c.bf16 %v80, %v79
  %v114 = vpack.c.bf16 %v82, %v81
  %v115 = vld [vmem:[%s3] sm:$0xf]
  %v116 = vld [vmem:[%s3 + $0x4] sm:$0xf]
  %v117 = vld [vmem:[%s3 + $0x8] sm:$0xf]
  %v118 = vld [vmem:[%s3 + $0xc] sm:$0xf]
  %v119 = vld [vmem:[%s3 + $0x10] sm:$0xf]
  %v120 = vld [vmem:[%s3 + $0x14] sm:$0xf]
  %v121 = vld [vmem:[%s3 + $0x18] sm:$0xf]
  %v122 = vld [vmem:[%s3 + $0x1c] sm:$0xf]
  %v123 = vld [vmem:[%s3 + $0x20] sm:$0xf]
  %v124 = vld [vmem:[%s3 + $0x24] sm:$0xf]
  %v125 = vld [vmem:[%s3 + $0x28] sm:$0xf]
  %v126 = vld [vmem:[%s3 + $0x2c] sm:$0xf]
  %v127 = vld [vmem:[%s3 + $0x30] sm:$0xf]
  %v128 = vld [vmem:[%s3 + $0x34] sm:$0xf]
  %v129 = vld [vmem:[%s3 + $0x38] sm:$0xf]
  %v130 = vld [vmem:[%s3 + $0x3c] sm:$0xf]
  %v147 = vunpack.c.l.b16 %v115
  %v148 = vunpack.c.l.b16 %v116
  %v149 = vunpack.c.l.b16 %v117
  %v150 = vunpack.c.l.b16 %v118
  %v151 = vunpack.c.l.b16 %v119
  %v152 = vunpack.c.l.b16 %v120
  %v153 = vunpack.c.l.b16 %v121
  %v154 = vunpack.c.l.b16 %v122
  %v155 = vunpack.c.l.b16 %v123
  %v156 = vunpack.c.l.b16 %v124
  %v157 = vunpack.c.l.b16 %v125
  %v158 = vunpack.c.l.b16 %v126
  %v159 = vunpack.c.l.b16 %v127
  %v160 = vunpack.c.l.b16 %v128
  %v161 = vunpack.c.l.b16 %v129
  %v162 = vunpack.c.l.b16 %v130
  %v163 = vpack.c.b16 %v148, %v147
  %v164 = vpack.c.b16 %v150, %v149
  %v165 = vpack.c.b16 %v152, %v151
  %v166 = vpack.c.b16 %v154, %v153
  %v167 = vpack.c.b16 %v156, %v155
  %v168 = vpack.c.b16 %v158, %v157
  %v169 = vpack.c.b16 %v160, %v159
  %v170 = vpack.c.b16 %v162, %v161
  %179 = vmatpush.bf16.msra.mxu0 %v170
  %180 = vmatpush.bf16.msra.mxu0 %v169
  %181 = vmatpush.bf16.msra.mxu0 %v168
  %182 = vmatpush.bf16.msra.mxu0 %v167
  %183 = vmatpush.bf16.msra.mxu0 %v166
  %184 = vmatpush.bf16.msra.mxu0 %v165
  %185 = vmatpush.bf16.msra.mxu0 %v164
  %186 = vmatpush.bf16.msra.mxu0 %v163
  %187 = vmatmul.bf16.gmra.mxu0 %v83
  %v188 = vpop.f32.mrf.mxu0
  %v189 = vadd.f32 0.0, %v188
  %v190 = vpop.f32.mrf.mxu0
  %v191 = vadd.f32 0.0, %v190
  %192 = vmatmul.bf16.gmra.mxu0 %v84
  %v193 = vpop.f32.mrf.mxu0
  %v194 = vadd.f32 0.0, %v193
  %v195 = vpop.f32.mrf.mxu0
  %v196 = vadd.f32 0.0, %v195
  %197 = vmatmul.bf16.gmra.mxu0 %v85
  %v198 = vpop.f32.mrf.mxu0
  %v199 = vadd.f32 0.0, %v198
  %v200 = vpop.f32.mrf.mxu0
  %v201 = vadd.f32 0.0, %v200
  %202 = vmatmul.bf16.gmra.mxu0 %v86
  %v203 = vpop.f32.mrf.mxu0
  %v204 = vadd.f32 0.0, %v203
  %v205 = vpop.f32.mrf.mxu0
  %v206 = vadd.f32 0.0, %v205
  %207 = vmatmul.bf16.gmra.mxu0 %v87
  %v208 = vpop.f32.mrf.mxu0
  %v209 = vadd.f32 0.0, %v208
  %v210 = vpop.f32.mrf.mxu0
  %v211 = vadd.f32 0.0, %v210
  %212 = vmatmul.bf16.gmra.mxu0 %v88
  %v213 = vpop.f32.mrf.mxu0
  %v214 = vadd.f32 0.0, %v213
  %v215 = vpop.f32.mrf.mxu0
  %v216 = vadd.f32 0.0, %v215
  %217 = vmatmul.bf16.gmra.mxu0 %v89
  %v218 = vpop.f32.mrf.mxu0
  %v219 = vadd.f32 0.0, %v218
  %v220 = vpop.f32.mrf.mxu0
  %v221 = vadd.f32 0.0, %v220
  %222 = vmatmul.bf16.gmra.mxu0 %v90
  %v223 = vpop.f32.mrf.mxu0
  %v224 = vadd.f32 0.0, %v223
  %v225 = vpop.f32.mrf.mxu0
  %v226 = vadd.f32 0.0, %v225
  %227 = vmatmul.bf16.gmra.mxu0 %v91
  %v228 = vpop.f32.mrf.mxu0
  %v229 = vadd.f32 0.0, %v228
  %v230 = vpop.f32.mrf.mxu0
  %v231 = vadd.f32 0.0, %v230
  %232 = vmatmul.bf16.gmra.mxu0 %v92
  %v233 = vpop.f32.mrf.mxu0
  %v234 = vadd.f32 0.0, %v233
  %v235 = vpop.f32.mrf.mxu0
  %v236 = vadd.f32 0.0, %v235
  %237 = vmatmul.bf16.gmra.mxu0 %v93
  %v238 = vpop.f32.mrf.mxu0
  %v239 = vadd.f32 0.0, %v238
  %v240 = vpop.f32.mrf.mxu0
  %v241 = vadd.f32 0.0, %v240
  %242 = vmatmul.bf16.gmra.mxu0 %v94
  %v243 = vpop.f32.mrf.mxu0
  %v244 = vadd.f32 0.0, %v243
  %v245 = vpop.f32.mrf.mxu0
  %v246 = vadd.f32 0.0, %v245
  %247 = vmatmul.bf16.gmra.mxu0 %v95
  %v248 = vpop.f32.mrf.mxu0
  %v249 = vadd.f32 0.0, %v248
  %v250 = vpop.f32.mrf.mxu0
  %v251 = vadd.f32 0.0, %v250
  %252 = vmatmul.bf16.gmra.mxu0 %v96
  %v253 = vpop.f32.mrf.mxu0
  %v254 = vadd.f32 0.0, %v253
  %v255 = vpop.f32.mrf.mxu0
  %v256 = vadd.f32 0.0, %v255
  %257 = vmatmul.bf16.gmra.mxu0 %v97
  %v258 = vpop.f32.mrf.mxu0
  %v259 = vadd.f32 0.0, %v258
  %v260 = vpop.f32.mrf.mxu0
  %v261 = vadd.f32 0.0, %v260
  %262 = vmatmul.bf16.gmra.mxu0 %v98
  %v263 = vpop.f32.mrf.mxu0
  %v264 = vadd.f32 0.0, %v263
  %v265 = vpop.f32.mrf.mxu0
  %v266 = vadd.f32 0.0, %v265
  %267 = vmatmul.bf16.gmra.mxu0 %v99
  %v268 = vpop.f32.mrf.mxu0
  %v269 = vadd.f32 0.0, %v268
  %v270 = vpop.f32.mrf.mxu0
  %v271 = vadd.f32 0.0, %v270
  %272 = vmatmul.bf16.gmra.mxu0 %v100
  %v273 = vpop.f32.mrf.mxu0
  %v274 = vadd.f32 0.0, %v273
  %v275 = vpop.f32.mrf.mxu0
  %v276 = vadd.f32 0.0, %v275
  %277 = vmatmul.bf16.gmra.mxu0 %v101
  %v278 = vpop.f32.mrf.mxu0
  %v279 = vadd.f32 0.0, %v278
  %v280 = vpop.f32.mrf.mxu0
  %v281 = vadd.f32 0.0, %v280
  %282 = vmatmul.bf16.gmra.mxu0 %v102
  %v283 = vpop.f32.mrf.mxu0
  %v284 = vadd.f32 0.0, %v283
  %v285 = vpop.f32.mrf.mxu0
  %v286 = vadd.f32 0.0, %v285
  %287 = vmatmul.bf16.gmra.mxu0 %v103
  %v288 = vpop.f32.mrf.mxu0
  %v289 = vadd.f32 0.0, %v288
  %v290 = vpop.f32.mrf.mxu0
  %v291 = vadd.f32 0.0, %v290
  %292 = vmatmul.bf16.gmra.mxu0 %v104
  %v293 = vpop.f32.mrf.mxu0
  %v294 = vadd.f32 0.0, %v293
  %v295 = vpop.f32.mrf.mxu0
  %v296 = vadd.f32 0.0, %v295
  %297 = vmatmul.bf16.gmra.mxu0 %v105
  %v298 = vpop.f32.mrf.mxu0
  %v299 = vadd.f32 0.0, %v298
  %v300 = vpop.f32.mrf.mxu0
  %v301 = vadd.f32 0.0, %v300
  %302 = vmatmul.bf16.gmra.mxu0 %v106
  %v303 = vpop.f32.mrf.mxu0
  %v304 = vadd.f32 0.0, %v303
  %v305 = vpop.f32.mrf.mxu0
  %v306 = vadd.f32 0.0, %v305
  %307 = vmatmul.bf16.gmra.mxu0 %v107
  %v308 = vpop.f32.mrf.mxu0
  %v309 = vadd.f32 0.0, %v308
  %v310 = vpop.f32.mrf.mxu0
  %v311 = vadd.f32 0.0, %v310
  %312 = vmatmul.bf16.gmra.mxu0 %v108
  %v313 = vpop.f32.mrf.mxu0
  %v314 = vadd.f32 0.0, %v313
  %v315 = vpop.f32.mrf.mxu0
  %v316 = vadd.f32 0.0, %v315
  %317 = vmatmul.bf16.gmra.mxu0 %v109
  %v318 = vpop.f32.mrf.mxu0
  %v319 = vadd.f32 0.0, %v318
  %v320 = vpop.f32.mrf.mxu0
  %v321 = vadd.f32 0.0, %v320
  %322 = vmatmul.bf16.gmra.mxu0 %v110
  %v323 = vpop.f32.mrf.mxu0
  %v324 = vadd.f32 0.0, %v323
  %v325 = vpop.f32.mrf.mxu0
  %v326 = vadd.f32 0.0, %v325
  %327 = vmatmul.bf16.gmra.mxu0 %v111
  %v328 = vpop.f32.mrf.mxu0
  %v329 = vadd.f32 0.0, %v328
  %v330 = vpop.f32.mrf.mxu0
  %v331 = vadd.f32 0.0, %v330
  %332 = vmatmul.bf16.gmra.mxu0 %v112
  %v333 = vpop.f32.mrf.mxu0
  %v334 = vadd.f32 0.0, %v333
  %v335 = vpop.f32.mrf.mxu0
  %v336 = vadd.f32 0.0, %v335
  %337 = vmatmul.bf16.gmra.mxu0 %v113
  %v338 = vpop.f32.mrf.mxu0
  %v339 = vadd.f32 0.0, %v338
  %v340 = vpop.f32.mrf.mxu0
  %v341 = vadd.f32 0.0, %v340
  %342 = vmatmul.bf16.gmra.mxu0 %v114
  %v343 = vpop.f32.mrf.mxu0
  %v344 = vadd.f32 0.0, %v343
  %v345 = vpop.f32.mrf.mxu0
  %v346 = vadd.f32 0.0, %v345
  %347 = vdwg.mxu0
  %v348 = vpack.c.bf16 %v189, %v189
  %v349 = vpack.c.bf16 %v191, %v191
  %v350 = vpack.c.bf16 %v194, %v194
  %v351 = vpack.c.bf16 %v196, %v196
  %v352 = vpack.c.bf16 %v199, %v199
  %v353 = vpack.c.bf16 %v201, %v201
  %v354 = vpack.c.bf16 %v204, %v204
  %v355 = vpack.c.bf16 %v206, %v206
  %v356 = vpack.c.bf16 %v209, %v209
  %v357 = vpack.c.bf16 %v211, %v211
  %v358 = vpack.c.bf16 %v214, %v214
  %v359 = vpack.c.bf16 %v216, %v216
  %v360 = vpack.c.bf16 %v219, %v219
  %v361 = vpack.c.bf16 %v221, %v221
  %v362 = vpack.c.bf16 %v224, %v224
  %v363 = vpack.c.bf16 %v226, %v226
  %v364 = vpack.c.bf16 %v229, %v229
  %v365 = vpack.c.bf16 %v231, %v231
  %v366 = vpack.c.bf16 %v234, %v234
  %v367 = vpack.c.bf16 %v236, %v236
  %v368 = vpack.c.bf16 %v239, %v239
  %v369 = vpack.c.bf16 %v241, %v241
  %v370 = vpack.c.bf16 %v244, %v244
  %v371 = vpack.c.bf16 %v246, %v246
  %v372 = vpack.c.bf16 %v249, %v249
  %v373 = vpack.c.bf16 %v251, %v251
  %v374 = vpack.c.bf16 %v254, %v254
  %v375 = vpack.c.bf16 %v256, %v256
  %v376 = vpack.c.bf16 %v259, %v259
  %v377 = vpack.c.bf16 %v261, %v261
  %v378 = vpack.c.bf16 %v264, %v264
  %v379 = vpack.c.bf16 %v266, %v266
  %v380 = vpack.c.bf16 %v269, %v269
  %v381 = vpack.c.bf16 %v271, %v271
  %v382 = vpack.c.bf16 %v274, %v274
  %v383 = vpack.c.bf16 %v276, %v276
  %v384 = vpack.c.bf16 %v279, %v279
  %v385 = vpack.c.bf16 %v281, %v281
  %v386 = vpack.c.bf16 %v284, %v284
  %v387 = vpack.c.bf16 %v286, %v286
  %v388 = vpack.c.bf16 %v289, %v289
  %v389 = vpack.c.bf16 %v291, %v291
  %v390 = vpack.c.bf16 %v294, %v294
  %v391 = vpack.c.bf16 %v296, %v296
  %v392 = vpack.c.bf16 %v299, %v299
  %v393 = vpack.c.bf16 %v301, %v301
  %v394 = vpack.c.bf16 %v304, %v304
  %v395 = vpack.c.bf16 %v306, %v306
  %v396 = vpack.c.bf16 %v309, %v309
  %v397 = vpack.c.bf16 %v311, %v311
  %v398 = vpack.c.bf16 %v314, %v314
  %v399 = vpack.c.bf16 %v316, %v316
  %v400 = vpack.c.bf16 %v319, %v319
  %v401 = vpack.c.bf16 %v321, %v321
  %v402 = vpack.c.bf16 %v324, %v324
  %v403 = vpack.c.bf16 %v326, %v326
  %v404 = vpack.c.bf16 %v329, %v329
  %v405 = vpack.c.bf16 %v331, %v331
  %v406 = vpack.c.bf16 %v334, %v334
  %v407 = vpack.c.bf16 %v336, %v336
  %v408 = vpack.c.bf16 %v339, %v339
  %v409 = vpack.c.bf16 %v341, %v341
  %v410 = vpack.c.bf16 %v344, %v344
  %v411 = vpack.c.bf16 %v346, %v346
  %412 = vst [vmem:[%s4] sm:$0xf] %v348
  %413 = vst [vmem:[%s4 + $0x4] sm:$0xf] %v349
  %414 = vst [vmem:[%s4 + $0x8] sm:$0xf] %v350
  %415 = vst [vmem:[%s4 + $0xc] sm:$0xf] %v351
  %416 = vst [vmem:[%s4 + $0x10] sm:$0xf] %v352
  %417 = vst [vmem:[%s4 + $0x14] sm:$0xf] %v353
  %418 = vst [vmem:[%s4 + $0x18] sm:$0xf] %v354
  %419 = vst [vmem:[%s4 + $0x1c] sm:$0xf] %v355
  %420 = vst [vmem:[%s4 + $0x20] sm:$0xf] %v356
  %421 = vst [vmem:[%s4 + $0x24] sm:$0xf] %v357
  %422 = vst [vmem:[%s4 + $0x28] sm:$0xf] %v358
  %423 = vst [vmem:[%s4 + $0x2c] sm:$0xf] %v359
  %424 = vst [vmem:[%s4 + $0x30] sm:$0xf] %v360
  %425 = vst [vmem:[%s4 + $0x34] sm:$0xf] %v361
  %426 = vst [vmem:[%s4 + $0x38] sm:$0xf] %v362
  %427 = vst [vmem:[%s4 + $0x3c] sm:$0xf] %v363
  %428 = vst [vmem:[%s4 + $0x40] sm:$0xf] %v364
  %429 = vst [vmem:[%s4 + $0x44] sm:$0xf] %v365
  %430 = vst [vmem:[%s4 + $0x48] sm:$0xf] %v366
  %431 = vst [vmem:[%s4 + $0x4c] sm:$0xf] %v367
  %432 = vst [vmem:[%s4 + $0x50] sm:$0xf] %v368
  %433 = vst [vmem:[%s4 + $0x54] sm:$0xf] %v369
  %434 = vst [vmem:[%s4 + $0x58] sm:$0xf] %v370
  %435 = vst [vmem:[%s4 + $0x5c] sm:$0xf] %v371
  %436 = vst [vmem:[%s4 + $0x60] sm:$0xf] %v372
  %437 = vst [vmem:[%s4 + $0x64] sm:$0xf] %v373
  %438 = vst [vmem:[%s4 + $0x68] sm:$0xf] %v374
  %439 = vst [vmem:[%s4 + $0x6c] sm:$0xf] %v375
  %440 = vst [vmem:[%s4 + $0x70] sm:$0xf] %v376
  %441 = vst [vmem:[%s4 + $0x74] sm:$0xf] %v377
  %442 = vst [vmem:[%s4 + $0x78] sm:$0xf] %v378
  %443 = vst [vmem:[%s4 + $0x7c] sm:$0xf] %v379
  %444 = vst [vmem:[%s4 + $0x80] sm:$0xf] %v380
  %445 = vst [vmem:[%s4 + $0x84] sm:$0xf] %v381
  %446 = vst [vmem:[%s4 + $0x88] sm:$0xf] %v382
  %447 = vst [vmem:[%s4 + $0x8c] sm:$0xf] %v383
  %448 = vst [vmem:[%s4 + $0x90] sm:$0xf] %v384
  %449 = vst [vmem:[%s4 + $0x94] sm:$0xf] %v385
  %450 = vst [vmem:[%s4 + $0x98] sm:$0xf] %v386
  %451 = vst [vmem:[%s4 + $0x9c] sm:$0xf] %v387
  %452 = vst [vmem:[%s4 + $0xa0] sm:$0xf] %v388
  %453 = vst [vmem:[%s4 + $0xa4] sm:$0xf] %v389
  %454 = vst [vmem:[%s4 + $0xa8] sm:$0xf] %v390
  %455 = vst [vmem:[%s4 + $0xac] sm:$0xf] %v391
  %456 = vst [vmem:[%s4 + $0xb0] sm:$0xf] %v392
  %457 = vst [vmem:[%s4 + $0xb4] sm:$0xf] %v393
  %458 = vst [vmem:[%s4 + $0xb8] sm:$0xf] %v394
  %459 = vst [vmem:[%s4 + $0xbc] sm:$0xf] %v395
  %460 = vst [vmem:[%s4 + $0xc0] sm:$0xf] %v396
  %461 = vst [vmem:[%s4 + $0xc4] sm:$0xf] %v397
  %462 = vst [vmem:[%s4 + $0xc8] sm:$0xf] %v398
  %463 = vst [vmem:[%s4 + $0xcc] sm:$0xf] %v399
  %464 = vst [vmem:[%s4 + $0xd0] sm:$0xf] %v400
  %465 = vst [vmem:[%s4 + $0xd4] sm:$0xf] %v401
  %466 = vst [vmem:[%s4 + $0xd8] sm:$0xf] %v402
  %467 = vst [vmem:[%s4 + $0xdc] sm:$0xf] %v403
  %468 = vst [vmem:[%s4 + $0xe0] sm:$0xf] %v404
  %469 = vst [vmem:[%s4 + $0xe4] sm:$0xf] %v405
  %470 = vst [vmem:[%s4 + $0xe8] sm:$0xf] %v406
  %471 = vst [vmem:[%s4 + $0xec] sm:$0xf] %v407
  %472 = vst [vmem:[%s4 + $0xf0] sm:$0xf] %v408
  %473 = vst [vmem:[%s4 + $0xf4] sm:$0xf] %v409
  %474 = vst [vmem:[%s4 + $0xf8] sm:$0xf] %v410
  %475 = vst [vmem:[%s4 + $0xfc] sm:$0xf] %v411
  %v476 = vadd.f32 %v189, %v191
  %v477 = vadd.f32 %v476, %v194
  %v478 = vadd.f32 %v477, %v196
  %v479 = vadd.f32 %v478, %v199
  %v480 = vadd.f32 %v479, %v201
  %v481 = vadd.f32 %v480, %v204
  %v482 = vadd.f32 %v481, %v206
  %v483 = vadd.f32 %v482, %v209
  %v484 = vadd.f32 %v483, %v211
  %v485 = vadd.f32 %v484, %v214
  %v486 = vadd.f32 %v485, %v216
  %v487 = vadd.f32 %v486, %v219
  %v488 = vadd.f32 %v487, %v221
  %v489 = vadd.f32 %v488, %v224
  %v490 = vadd.f32 %v489, %v226
  %v491 = vadd.f32 %v490, %v229
  %v492 = vadd.f32 %v491, %v231
  %v493 = vadd.f32 %v492, %v234
  %v494 = vadd.f32 %v493, %v236
  %v495 = vadd.f32 %v494, %v239
  %v496 = vadd.f32 %v495, %v241
  %v497 = vadd.f32 %v496, %v244
  %v498 = vadd.f32 %v497, %v246
  %v499 = vadd.f32 %v498, %v249
  %v500 = vadd.f32 %v499, %v251
  %v501 = vadd.f32 %v500, %v254
  %v502 = vadd.f32 %v501, %v256
  %v503 = vadd.f32 %v502, %v259
  %v504 = vadd.f32 %v503, %v261
  %v505 = vadd.f32 %v504, %v264
  %v506 = vadd.f32 %v505, %v266
  %v507 = vadd.f32 %v506, %v269
  %v508 = vadd.f32 %v507, %v271
  %v509 = vadd.f32 %v508, %v274
  %v510 = vadd.f32 %v509, %v276
  %v511 = vadd.f32 %v510, %v279
  %v512 = vadd.f32 %v511, %v281
  %v513 = vadd.f32 %v512, %v284
  %v514 = vadd.f32 %v513, %v286
  %v515 = vadd.f32 %v514, %v289
  %v516 = vadd.f32 %v515, %v291
  %v517 = vadd.f32 %v516, %v294
  %v518 = vadd.f32 %v517, %v296
  %v519 = vadd.f32 %v518, %v299
  %v520 = vadd.f32 %v519, %v301
  %v521 = vadd.f32 %v520, %v304
  %v522 = vadd.f32 %v521, %v306
  %v523 = vadd.f32 %v522, %v309
  %v524 = vadd.f32 %v523, %v311
  %v525 = vadd.f32 %v524, %v314
  %v526 = vadd.f32 %v525, %v316
  %v527 = vadd.f32 %v526, %v319
  %v528 = vadd.f32 %v527, %v321
  %v529 = vadd.f32 %v528, %v324
  %v530 = vadd.f32 %v529, %v326
  %v531 = vadd.f32 %v530, %v329
  %v532 = vadd.f32 %v531, %v331
  %v533 = vadd.f32 %v532, %v334
  %v534 = vadd.f32 %v533, %v336
  %v535 = vadd.f32 %v534, %v339
  %v536 = vadd.f32 %v535, %v341
  %v537 = vadd.f32 %v536, %v344
  %v538 = vadd.f32 %v537, %v346
  %v539 = vrot.slane %v538, 4
  %v540 = vadd.f32 %v538, %v539
  %v541 = vrot.slane %v540, 2
  %v542 = vadd.f32 %v540, %v541
  %v543 = vrot.slane %v542, 1
  %v544 = vadd.f32 %v542, %v543
  %v545 = vmul.f32 %v544, 0.001953125
  %v546 = vsub.f32 %v189, %v545
  %v547 = vsub.f32 %v191, %v545
  %v548 = vsub.f32 %v194, %v545
  %v549 = vsub.f32 %v196, %v545
  %v550 = vsub.f32 %v199, %v545
  %v551 = vsub.f32 %v201, %v545
  %v552 = vsub.f32 %v204, %v545
  %v553 = vsub.f32 %v206, %v545
  %v554 = vsub.f32 %v209, %v545
  %v555 = vsub.f32 %v211, %v545
  %v556 = vsub.f32 %v214, %v545
  %v557 = vsub.f32 %v216, %v545
  %v558 = vsub.f32 %v219, %v545
  %v559 = vsub.f32 %v221, %v545
  %v560 = vsub.f32 %v224, %v545
  %v561 = vsub.f32 %v226, %v545
  %v562 = vsub.f32 %v229, %v545
  %v563 = vsub.f32 %v231, %v545
  %v564 = vsub.f32 %v234, %v545
  %v565 = vsub.f32 %v236, %v545
  %v566 = vsub.f32 %v239, %v545
  %v567 = vsub.f32 %v241, %v545
  %v568 = vsub.f32 %v244, %v545
  %v569 = vsub.f32 %v246, %v545
  %v570 = vsub.f32 %v249, %v545
  %v571 = vsub.f32 %v251, %v545
  %v572 = vsub.f32 %v254, %v545
  %v573 = vsub.f32 %v256, %v545
  %v574 = vsub.f32 %v259, %v545
  %v575 = vsub.f32 %v261, %v545
  %v576 = vsub.f32 %v264, %v545
  %v577 = vsub.f32 %v266, %v545
  %v578 = vsub.f32 %v269, %v545
  %v579 = vsub.f32 %v271, %v545
  %v580 = vsub.f32 %v274, %v545
  %v581 = vsub.f32 %v276, %v545
  %v582 = vsub.f32 %v279, %v545
  %v583 = vsub.f32 %v281, %v545
  %v584 = vsub.f32 %v284, %v545
  %v585 = vsub.f32 %v286, %v545
  %v586 = vsub.f32 %v289, %v545
  %v587 = vsub.f32 %v291, %v545
  %v588 = vsub.f32 %v294, %v545
  %v589 = vsub.f32 %v296, %v545
  %v590 = vsub.f32 %v299, %v545
  %v591 = vsub.f32 %v301, %v545
  %v592 = vsub.f32 %v304, %v545
  %v593 = vsub.f32 %v306, %v545
  %v594 = vsub.f32 %v309, %v545
  %v595 = vsub.f32 %v311, %v545
  %v596 = vsub.f32 %v314, %v545
  %v597 = vsub.f32 %v316, %v545
  %v598 = vsub.f32 %v319, %v545
  %v599 = vsub.f32 %v321, %v545
  %v600 = vsub.f32 %v324, %v545
  %v601 = vsub.f32 %v326, %v545
  %v602 = vsub.f32 %v329, %v545
  %v603 = vsub.f32 %v331, %v545
  %v604 = vsub.f32 %v334, %v545
  %v605 = vsub.f32 %v336, %v545
  %v606 = vsub.f32 %v339, %v545
  %v607 = vsub.f32 %v341, %v545
  %v608 = vsub.f32 %v344, %v545
  %v609 = vsub.f32 %v346, %v545
  %610 = vst [vmem:[%s5] sm:$0x1] %v544
  %v611 = vmul.f32 %v546, %v546
  %v612 = vmul.f32 %v547, %v547
  %v613 = vmul.f32 %v548, %v548
  %v614 = vmul.f32 %v549, %v549
  %v615 = vmul.f32 %v550, %v550
  %v616 = vmul.f32 %v551, %v551
  %v617 = vmul.f32 %v552, %v552
  %v618 = vmul.f32 %v553, %v553
  %v619 = vmul.f32 %v554, %v554
  %v620 = vmul.f32 %v555, %v555
  %v621 = vmul.f32 %v556, %v556
  %v622 = vmul.f32 %v557, %v557
  %v623 = vmul.f32 %v558, %v558
  %v624 = vmul.f32 %v559, %v559
  %v625 = vmul.f32 %v560, %v560
  %v626 = vmul.f32 %v561, %v561
  %v627 = vmul.f32 %v562, %v562
  %v628 = vmul.f32 %v563, %v563
  %v629 = vmul.f32 %v564, %v564
  %v630 = vmul.f32 %v565, %v565
  %v631 = vmul.f32 %v566, %v566
  %v632 = vmul.f32 %v567, %v567
  %v633 = vmul.f32 %v568, %v568
  %v634 = vmul.f32 %v569, %v569
  %v635 = vmul.f32 %v570, %v570
  %v636 = vmul.f32 %v571, %v571
  %v637 = vmul.f32 %v572, %v572
  %v638 = vmul.f32 %v573, %v573
  %v639 = vmul.f32 %v574, %v574
  %v640 = vmul.f32 %v575, %v575
  %v641 = vmul.f32 %v576, %v576
  %v642 = vmul.f32 %v577, %v577
  %v643 = vmul.f32 %v578, %v578
  %v644 = vmul.f32 %v579, %v579
  %v645 = vmul.f32 %v580, %v580
  %v646 = vmul.f32 %v581, %v581
  %v647 = vmul.f32 %v582, %v582
  %v648 = vmul.f32 %v583, %v583
  %v649 = vmul.f32 %v584, %v584
  %v650 = vmul.f32 %v585, %v585
  %v651 = vmul.f32 %v586, %v586
  %v652 = vmul.f32 %v587, %v587
  %v653 = vmul.f32 %v588, %v588
  %v654 = vmul.f32 %v589, %v589
  %v655 = vmul.f32 %v590, %v590
  %v656 = vmul.f32 %v591, %v591
  %v657 = vmul.f32 %v592, %v592
  %v658 = vmul.f32 %v593, %v593
  %v659 = vmul.f32 %v594, %v594
  %v660 = vmul.f32 %v595, %v595
  %v661 = vmul.f32 %v596, %v596
  %v662 = vmul.f32 %v597, %v597
  %v663 = vmul.f32 %v598, %v598
  %v664 = vmul.f32 %v599, %v599
  %v665 = vmul.f32 %v600, %v600
  %v666 = vmul.f32 %v601, %v601
  %v667 = vmul.f32 %v602, %v602
  %v668 = vmul.f32 %v603, %v603
  %v669 = vmul.f32 %v604, %v604
  %v670 = vmul.f32 %v605, %v605
  %v671 = vmul.f32 %v606, %v606
  %v672 = vmul.f32 %v607, %v607
  %v673 = vmul.f32 %v608, %v608
  %v674 = vmul.f32 %v609, %v609
  %v675 = vadd.f32 %v611, %v612
  %v676 = vadd.f32 %v675, %v613
  %v677 = vadd.f32 %v676, %v614
  %v678 = vadd.f32 %v677, %v615
  %v679 = vadd.f32 %v678, %v616
  %v680 = vadd.f32 %v679, %v617
  %v681 = vadd.f32 %v680, %v618
  %v682 = vadd.f32 %v681, %v619
  %v683 = vadd.f32 %v682, %v620
  %v684 = vadd.f32 %v683, %v621
  %v685 = vadd.f32 %v684, %v622
  %v686 = vadd.f32 %v685, %v623
  %v687 = vadd.f32 %v686, %v624
  %v688 = vadd.f32 %v687, %v625
  %v689 = vadd.f32 %v688, %v626
  %v690 = vadd.f32 %v689, %v627
  %v691 = vadd.f32 %v690, %v628
  %v692 = vadd.f32 %v691, %v629
  %v693 = vadd.f32 %v692, %v630
  %v694 = vadd.f32 %v693, %v631
  %v695 = vadd.f32 %v694, %v632
  %v696 = vadd.f32 %v695, %v633
  %v697 = vadd.f32 %v696, %v634
  %v698 = vadd.f32 %v697, %v635
  %v699 = vadd.f32 %v698, %v636
  %v700 = vadd.f32 %v699, %v637
  %v701 = vadd.f32 %v700, %v638
  %v702 = vadd.f32 %v701, %v639
  %v703 = vadd.f32 %v702, %v640
  %v704 = vadd.f32 %v703, %v641
  %v705 = vadd.f32 %v704, %v642
  %v706 = vadd.f32 %v705, %v643
  %v707 = vadd.f32 %v706, %v644
  %v708 = vadd.f32 %v707, %v645
  %v709 = vadd.f32 %v708, %v646
  %v710 = vadd.f32 %v709, %v647
  %v711 = vadd.f32 %v710, %v648
  %v712 = vadd.f32 %v711, %v649
  %v713 = vadd.f32 %v712, %v650
  %v714 = vadd.f32 %v713, %v651
  %v715 = vadd.f32 %v714, %v652
  %v716 = vadd.f32 %v715, %v653
  %v717 = vadd.f32 %v716, %v654
  %v718 = vadd.f32 %v717, %v655
  %v719 = vadd.f32 %v718, %v656
  %v720 = vadd.f32 %v719, %v657
  %v721 = vadd.f32 %v720, %v658
  %v722 = vadd.f32 %v721, %v659
  %v723 = vadd.f32 %v722, %v660
  %v724 = vadd.f32 %v723, %v661
  %v725 = vadd.f32 %v724, %v662
  %v726 = vadd.f32 %v725, %v663
  %v727 = vadd.f32 %v726, %v664
  %v728 = vadd.f32 %v727, %v665
  %v729 = vadd.f32 %v728, %v666
  %v730 = vadd.f32 %v729, %v667
  %v731 = vadd.f32 %v730, %v668
  %v732 = vadd.f32 %v731, %v669
  %v733 = vadd.f32 %v732, %v670
  %v734 = vadd.f32 %v733, %v671
  %v735 = vadd.f32 %v734, %v672
  %v736 = vadd.f32 %v735, %v673
  %v737 = vadd.f32 %v736, %v674
  %v738 = vrot.slane %v737, 4
  %v739 = vadd.f32 %v737, %v738
  %v740 = vrot.slane %v739, 2
  %v741 = vadd.f32 %v739, %v740
  %v742 = vrot.slane %v741, 1
  %v743 = vadd.f32 %v741, %v742
  %744 = vst [vmem:[%s5 + $0x1] sm:$0x1] %v743
  // Predicated region
  $region18: #{tucker_forward.4} parent=0 // pred_check
    _
  $region19: #{tucker_forward.4} parent=0 // pred_check_branch
    %746 = sbr.rel (0) target = $region21
  $region20: #{tucker_forward.4} parent=0 // pred_region
    _
  $region21: #{tucker_forward.4} parent=0 // pred_fallthru
    _
  // Predicated region
  $region22: #{tucker_forward.4} parent=0 // pred_check
    _
  $region23: #{tucker_forward.4} parent=0 // pred_check_branch
    %748 = sbr.rel (0) target = $region25
  $region24: #{tucker_forward.4} parent=0 // pred_region
    _
  $region25: #{tucker_forward.4} parent=0 // pred_fallthru
    _
  // Predicated region
  $region26: #{tucker_forward.4} parent=0 // pred_check
    _
  $region27: #{tucker_forward.4} parent=0 // pred_check_branch
    %750 = sbr.rel (0) target = $region29
  $region28: #{tucker_forward.4} parent=0 // pred_region
    _
  $region29: #{tucker_forward.4} parent=0 // pred_fallthru
    _
  // Predicated region
  $region30: #{tucker_forward.4} parent=0 // pred_check
    _
  $region31: #{tucker_forward.4} parent=0 // pred_check_branch
    %752 = sbr.rel (0) target = $region33
  $region32: #{tucker_forward.4} parent=0 // pred_region
    _
  $region33: #{tucker_forward.4} parent=0 // pred_fallthru
    _

// kernel: tucker_forward.7
$region0: #{tucker_forward.7}
  #allocation0 [shape = 'u32[]', space=smem, size = 0x4, offset = 0x4, fixed_abs, tag = 'smem constant byte address 0x4 - core index']
  #allocation1 [shape = 'u32[72,128]{1,0:T(1,128)}', space=vmem, size = 0x9000, scoped, tag = 'internal scratch']
  %s0 = inlined_call_operand.vmem [shape: bf16[512,128], index: 0, kind: input, shape index: {}]
  %s1 = inlined_call_operand.vmem [shape: f32[1,128], index: 1, kind: input, shape index: {}]
  %s2 = inlined_call_operand.vmem [shape: f32[1,128], index: 2, kind: input, shape index: {}]
  %s3 = inlined_call_operand.hbm [shape: f32[512,128], index: 3, kind: output, shape index: {}]
  %s4 = sld [smem:[#allocation0]]
  $region22: #{tucker_forward.7} parent=0
    _
  %s6 = ssub.s32 1, %s4
  %s7 = scalar_select 0, %s6, %s4
  $region1: #{tucker_forward.7} parent=0
    #allocation2 [shape = 'u8[262144]{0}', space=vmem, size = 0x40000, scoped, tag = 'output window, operand 0, single buffered']
    #allocation3 [shape = 's32[1]{0}', space=sflag, size = 0x4, scoped, tag = 'scoped memory for tucker_forward.7']
    %8 = vsyncpa [#allocation3], 0
    // Predicated region
    $region2: #{tucker_forward.7} parent=1 // pred_check
      _
    $region3: #{tucker_forward.7} parent=1 // pred_check_branch
      %10 = sbr.rel (0) target = $region5
    $region4: #{tucker_forward.7} parent=1 // pred_region
      _
    $region5: #{tucker_forward.7} parent=1 // pred_fallthru
      _
    // Predicated region
    $region6: #{tucker_forward.7} parent=1 // pred_check
      _
    $region7: #{tucker_forward.7} parent=1 // pred_check_branch
      %12 = sbr.rel (0) target = $region9
    $region8: #{tucker_forward.7} parent=1 // pred_region
      _
    $region9: #{tucker_forward.7} parent=1 // pred_fallthru
      _
    // Predicated region
    $region10: #{tucker_forward.7} parent=1 // pred_check
      _
    $region11: #{tucker_forward.7} parent=1 // pred_check_branch
      %14 = sbr.rel (0) target = $region13
    $region12: #{tucker_forward.7} parent=1 // pred_region
      _
    $region13: #{tucker_forward.7} parent=1 // pred_fallthru
      _
    %v15 = vld [vmem:[%s0] sm:$0xf]
    %v16 = vld [vmem:[%s0 + $0x4] sm:$0xf]
    %v17 = vld [vmem:[%s0 + $0x8] sm:$0xf]
    %v18 = vld [vmem:[%s0 + $0xc] sm:$0xf]
    %v19 = vld [vmem:[%s0 + $0x10] sm:$0xf]
    %v20 = vld [vmem:[%s0 + $0x14] sm:$0xf]
    %v21 = vld [vmem:[%s0 + $0x18] sm:$0xf]
    %v22 = vld [vmem:[%s0 + $0x1c] sm:$0xf]
    %v23 = vld [vmem:[%s0 + $0x20] sm:$0xf]
    %v24 = vld [vmem:[%s0 + $0x24] sm:$0xf]
    %v25 = vld [vmem:[%s0 + $0x28] sm:$0xf]
    %v26 = vld [vmem:[%s0 + $0x2c] sm:$0xf]
    %v27 = vld [vmem:[%s0 + $0x30] sm:$0xf]
    %v28 = vld [vmem:[%s0 + $0x34] sm:$0xf]
    %v29 = vld [vmem:[%s0 + $0x38] sm:$0xf]
    %v30 = vld [vmem:[%s0 + $0x3c] sm:$0xf]
    %v31 = vld [vmem:[%s0 + $0x40] sm:$0xf]
    %v32 = vld [vmem:[%s0 + $0x44] sm:$0xf]
    %v33 = vld [vmem:[%s0 + $0x48] sm:$0xf]
    %v34 = vld [vmem:[%s0 + $0x4c] sm:$0xf]
    %v35 = vld [vmem:[%s0 + $0x50] sm:$0xf]
    %v36 = vld [vmem:[%s0 + $0x54] sm:$0xf]
    %v37 = vld [vmem:[%s0 + $0x58] sm:$0xf]
    %v38 = vld [vmem:[%s0 + $0x5c] sm:$0xf]
    %v39 = vld [vmem:[%s0 + $0x60] sm:$0xf]
    %v40 = vld [vmem:[%s0 + $0x64] sm:$0xf]
    %v41 = vld [vmem:[%s0 + $0x68] sm:$0xf]
    %v42 = vld [vmem:[%s0 + $0x6c] sm:$0xf]
    %v43 = vld [vmem:[%s0 + $0x70] sm:$0xf]
    %v44 = vld [vmem:[%s0 + $0x74] sm:$0xf]
    %v45 = vld [vmem:[%s0 + $0x78] sm:$0xf]
    %v46 = vld [vmem:[%s0 + $0x7c] sm:$0xf]
    %v47 = vld [vmem:[%s0 + $0x80] sm:$0xf]
    %v48 = vld [vmem:[%s0 + $0x84] sm:$0xf]
    %v49 = vld [vmem:[%s0 + $0x88] sm:$0xf]
    %v50 = vld [vmem:[%s0 + $0x8c] sm:$0xf]
    %v51 = vld [vmem:[%s0 + $0x90] sm:$0xf]
    %v52 = vld [vmem:[%s0 + $0x94] sm:$0xf]
    %v53 = vld [vmem:[%s0 + $0x98] sm:$0xf]
    %v54 = vld [vmem:[%s0 + $0x9c] sm:$0xf]
    %v55 = vld [vmem:[%s0 + $0xa0] sm:$0xf]
    %v56 = vld [vmem:[%s0 + $0xa4] sm:$0xf]
    %v57 = vld [vmem:[%s0 + $0xa8] sm:$0xf]
    %v58 = vld [vmem:[%s0 + $0xac] sm:$0xf]
    %v59 = vld [vmem:[%s0 + $0xb0] sm:$0xf]
    %v60 = vld [vmem:[%s0 + $0xb4] sm:$0xf]
    %v61 = vld [vmem:[%s0 + $0xb8] sm:$0xf]
    %v62 = vld [vmem:[%s0 + $0xbc] sm:$0xf]
    %v63 = vld [vmem:[%s0 + $0xc0] sm:$0xf]
    %v64 = vld [vmem:[%s0 + $0xc4] sm:$0xf]
    %v65 = vld [vmem:[%s0 + $0xc8] sm:$0xf]
    %v66 = vld [vmem:[%s0 + $0xcc] sm:$0xf]
    %v67 = vld [vmem:[%s0 + $0xd0] sm:$0xf]
    %v68 = vld [vmem:[%s0 + $0xd4] sm:$0xf]
    %v69 = vld [vmem:[%s0 + $0xd8] sm:$0xf]
    %v70 = vld [vmem:[%s0 + $0xdc] sm:$0xf]
    %v71 = vld [vmem:[%s0 + $0xe0] sm:$0xf]
    %v72 = vld [vmem:[%s0 + $0xe4] sm:$0xf]
    %v73 = vld [vmem:[%s0 + $0xe8] sm:$0xf]
    %v74 = vld [vmem:[%s0 + $0xec] sm:$0xf]
    %v75 = vld [vmem:[%s0 + $0xf0] sm:$0xf]
    %v76 = vld [vmem:[%s0 + $0xf4] sm:$0xf]
    %v77 = vld [vmem:[%s0 + $0xf8] sm:$0xf]
    %v78 = vld [vmem:[%s0 + $0xfc] sm:$0xf]
    %v79 = vunpack.c.l.bf16 %v15
    %v80 = vunpack.c.l.bf16 %v16
    %v81 = vunpack.c.l.bf16 %v17
    %v82 = vunpack.c.l.bf16 %v18
    %v83 = vunpack.c.l.bf16 %v19
    %v84 = vunpack.c.l.bf16 %v20
    %v85 = vunpack.c.l.bf16 %v21
    %v86 = vunpack.c.l.bf16 %v22
    %v87 = vunpack.c.l.bf16 %v23
    %v88 = vunpack.c.l.bf16 %v24
    %v89 = vunpack.c.l.bf16 %v25
    %v90 = vunpack.c.l.bf16 %v26
    %v91 = vunpack.c.l.bf16 %v27
    %v92 = vunpack.c.l.bf16 %v28
    %v93 = vunpack.c.l.bf16 %v29
    %v94 = vunpack.c.l.bf16 %v30
    %v95 = vunpack.c.l.bf16 %v31
    %v96 = vunpack.c.l.bf16 %v32
    %v97 = vunpack.c.l.bf16 %v33
    %v98 = vunpack.c.l.bf16 %v34
    %v99 = vunpack.c.l.bf16 %v35
    %v100 = vunpack.c.l.bf16 %v36
    %v101 = vunpack.c.l.bf16 %v37
    %v102 = vunpack.c.l.bf16 %v38
    %v103 = vunpack.c.l.bf16 %v39
    %v104 = vunpack.c.l.bf16 %v40
    %v105 = vunpack.c.l.bf16 %v41
    %v106 = vunpack.c.l.bf16 %v42
    %v107 = vunpack.c.l.bf16 %v43
    %v108 = vunpack.c.l.bf16 %v44
    %v109 = vunpack.c.l.bf16 %v45
    %v110 = vunpack.c.l.bf16 %v46
    %v111 = vunpack.c.l.bf16 %v47
    %v112 = vunpack.c.l.bf16 %v48
    %v113 = vunpack.c.l.bf16 %v49
    %v114 = vunpack.c.l.bf16 %v50
    %v115 = vunpack.c.l.bf16 %v51
    %v116 = vunpack.c.l.bf16 %v52
    %v117 = vunpack.c.l.bf16 %v53
    %v118 = vunpack.c.l.bf16 %v54
    %v119 = vunpack.c.l.bf16 %v55
    %v120 = vunpack.c.l.bf16 %v56
    %v121 = vunpack.c.l.bf16 %v57
    %v122 = vunpack.c.l.bf16 %v58
    %v123 = vunpack.c.l.bf16 %v59
    %v124 = vunpack.c.l.bf16 %v60
    %v125 = vunpack.c.l.bf16 %v61
    %v126 = vunpack.c.l.bf16 %v62
    %v127 = vunpack.c.l.bf16 %v63
    %v128 = vunpack.c.l.bf16 %v64
    %v129 = vunpack.c.l.bf16 %v65
    %v130 = vunpack.c.l.bf16 %v66
    %v131 = vunpack.c.l.bf16 %v67
    %v132 = vunpack.c.l.bf16 %v68
    %v133 = vunpack.c.l.bf16 %v69
    %v134 = vunpack.c.l.bf16 %v70
    %v135 = vunpack.c.l.bf16 %v71
    %v136 = vunpack.c.l.bf16 %v72
    %v137 = vunpack.c.l.bf16 %v73
    %v138 = vunpack.c.l.bf16 %v74
    %v139 = vunpack.c.l.bf16 %v75
    %v140 = vunpack.c.l.bf16 %v76
    %v141 = vunpack.c.l.bf16 %v77
    %v142 = vunpack.c.l.bf16 %v78
    %v143 = vld [vmem:[%s1] sm:$0x1]
    %v145 = vperm.slane %v143, 0
    %v147 = vmul.f32 %v79, %v145
    %v148 = vmul.f32 %v80, %v145
    %v149 = vmul.f32 %v81, %v145
    %v150 = vmul.f32 %v82, %v145
    %v151 = vmul.f32 %v83, %v145
    %v152 = vmul.f32 %v84, %v145
    %v153 = vmul.f32 %v85, %v145
    %v154 = vmul.f32 %v86, %v145
    %v155 = vmul.f32 %v87, %v145
    %v156 = vmul.f32 %v88, %v145
    %v157 = vmul.f32 %v89, %v145
    %v158 = vmul.f32 %v90, %v145
    %v159 = vmul.f32 %v91, %v145
    %v160 = vmul.f32 %v92, %v145
    %v161 = vmul.f32 %v93, %v145
    %v162 = vmul.f32 %v94, %v145
    %v163 = vmul.f32 %v95, %v145
    %v164 = vmul.f32 %v96, %v145
    %v165 = vmul.f32 %v97, %v145
    %v166 = vmul.f32 %v98, %v145
    %v167 = vmul.f32 %v99, %v145
    %v168 = vmul.f32 %v100, %v145
    %v169 = vmul.f32 %v101, %v145
    %v170 = vmul.f32 %v102, %v145
    %v171 = vmul.f32 %v103, %v145
    %v172 = vmul.f32 %v104, %v145
    %v173 = vmul.f32 %v105, %v145
    %v174 = vmul.f32 %v106, %v145
    %v175 = vmul.f32 %v107, %v145
    %v176 = vmul.f32 %v108, %v145
    %v177 = vmul.f32 %v109, %v145
    %v178 = vmul.f32 %v110, %v145
    %v179 = vmul.f32 %v111, %v145
    %v180 = vmul.f32 %v112, %v145
    %v181 = vmul.f32 %v113, %v145
    %v182 = vmul.f32 %v114, %v145
    %v183 = vmul.f32 %v115, %v145
    %v184 = vmul.f32 %v116, %v145
    %v185 = vmul.f32 %v117, %v145
    %v186 = vmul.f32 %v118, %v145
    %v187 = vmul.f32 %v119, %v145
    %v188 = vmul.f32 %v120, %v145
    %v189 = vmul.f32 %v121, %v145
    %v190 = vmul.f32 %v122, %v145
    %v191 = vmul.f32 %v123, %v145
    %v192 = vmul.f32 %v124, %v145
    %v193 = vmul.f32 %v125, %v145
    %v194 = vmul.f32 %v126, %v145
    %v195 = vmul.f32 %v127, %v145
    %v196 = vmul.f32 %v128, %v145
    %v197 = vmul.f32 %v129, %v145
    %v198 = vmul.f32 %v130, %v145
    %v199 = vmul.f32 %v131, %v145
    %v200 = vmul.f32 %v132, %v145
    %v201 = vmul.f32 %v133, %v145
    %v202 = vmul.f32 %v134, %v145
    %v203 = vmul.f32 %v135, %v145
    %v204 = vmul.f32 %v136, %v145
    %v205 = vmul.f32 %v137, %v145
    %v206 = vmul.f32 %v138, %v145
    %v207 = vmul.f32 %v139, %v145
    %v208 = vmul.f32 %v140, %v145
    %v209 = vmul.f32 %v141, %v145
    %v210 = vmul.f32 %v142, %v145
    %v211 = vld [vmem:[%s2] sm:$0x1]
    %v213 = vperm.slane %v211, 0
    %v215 = vadd.f32 %v147, %v213
    %v216 = vadd.f32 %v148, %v213
    %v217 = vadd.f32 %v149, %v213
    %v218 = vadd.f32 %v150, %v213
    %v219 = vadd.f32 %v151, %v213
    %v220 = vadd.f32 %v152, %v213
    %v221 = vadd.f32 %v153, %v213
    %v222 = vadd.f32 %v154, %v213
    %v223 = vadd.f32 %v155, %v213
    %v224 = vadd.f32 %v156, %v213
    %v225 = vadd.f32 %v157, %v213
    %v226 = vadd.f32 %v158, %v213
    %v227 = vadd.f32 %v159, %v213
    %v228 = vadd.f32 %v160, %v213
    %v229 = vadd.f32 %v161, %v213
    %v230 = vadd.f32 %v162, %v213
    %v231 = vadd.f32 %v163, %v213
    %v232 = vadd.f32 %v164, %v213
    %v233 = vadd.f32 %v165, %v213
    %v234 = vadd.f32 %v166, %v213
    %v235 = vadd.f32 %v167, %v213
    %v236 = vadd.f32 %v168, %v213
    %v237 = vadd.f32 %v169, %v213
    %v238 = vadd.f32 %v170, %v213
    %v239 = vadd.f32 %v171, %v213
    %v240 = vadd.f32 %v172, %v213
    %v241 = vadd.f32 %v173, %v213
    %v242 = vadd.f32 %v174, %v213
    %v243 = vadd.f32 %v175, %v213
    %v244 = vadd.f32 %v176, %v213
    %v245 = vadd.f32 %v177, %v213
    %v246 = vadd.f32 %v178, %v213
    %v247 = vadd.f32 %v179, %v213
    %v248 = vadd.f32 %v180, %v213
    %v249 = vadd.f32 %v181, %v213
    %v250 = vadd.f32 %v182, %v213
    %v251 = vadd.f32 %v183, %v213
    %v252 = vadd.f32 %v184, %v213
    %v253 = vadd.f32 %v185, %v213
    %v254 = vadd.f32 %v186, %v213
    %v255 = vadd.f32 %v187, %v213
    %v256 = vadd.f32 %v188, %v213
    %v257 = vadd.f32 %v189, %v213
    %v258 = vadd.f32 %v190, %v213
    %v259 = vadd.f32 %v191, %v213
    %v260 = vadd.f32 %v192, %v213
    %v261 = vadd.f32 %v193, %v213
    %v262 = vadd.f32 %v194, %v213
    %v263 = vadd.f32 %v195, %v213
    %v264 = vadd.f32 %v196, %v213
    %v265 = vadd.f32 %v197, %v213
    %v266 = vadd.f32 %v198, %v213
    %v267 = vadd.f32 %v199, %v213
    %v268 = vadd.f32 %v200, %v213
    %v269 = vadd.f32 %v201, %v213
    %v270 = vadd.f32 %v202, %v213
    %v271 = vadd.f32 %v203, %v213
    %v272 = vadd.f32 %v204, %v213
    %v273 = vadd.f32 %v205, %v213
    %v274 = vadd.f32 %v206, %v213
    %v275 = vadd.f32 %v207, %v213
    %v276 = vadd.f32 %v208, %v213
    %v277 = vadd.f32 %v209, %v213
    %v278 = vadd.f32 %v210, %v213
    %v279 = vmin.f32 %v215, 20.0
    %v280 = vmin.f32 %v216, 20.0
    %v281 = vmin.f32 %v217, 20.0
    %v282 = vmin.f32 %v218, 20.0
    %v283 = vmin.f32 %v219, 20.0
    %v284 = vmin.f32 %v220, 20.0
    %v285 = vmin.f32 %v221, 20.0
    %v286 = vmin.f32 %v222, 20.0
    %v287 = vmin.f32 %v223, 20.0
    %v288 = vmin.f32 %v224, 20.0
    %v289 = vmin.f32 %v225, 20.0
    %v290 = vmin.f32 %v226, 20.0
    %v291 = vmin.f32 %v227, 20.0
    %v292 = vmin.f32 %v228, 20.0
    %v293 = vmin.f32 %v229, 20.0
    %v294 = vmin.f32 %v230, 20.0
    %v295 = vmin.f32 %v231, 20.0
    %v296 = vmin.f32 %v232, 20.0
    %v297 = vmin.f32 %v233, 20.0
    %v298 = vmin.f32 %v234, 20.0
    %v299 = vmin.f32 %v235, 20.0
    %v300 = vmin.f32 %v236, 20.0
    %v301 = vmin.f32 %v237, 20.0
    %v302 = vmin.f32 %v238, 20.0
    %v303 = vmin.f32 %v239, 20.0
    %v304 = vmin.f32 %v240, 20.0
    %v305 = vmin.f32 %v241, 20.0
    %v306 = vmin.f32 %v242, 20.0
    %v307 = vmin.f32 %v243, 20.0
    %v308 = vmin.f32 %v244, 20.0
    %v309 = vmin.f32 %v245, 20.0
    %v310 = vmin.f32 %v246, 20.0
    %v311 = vmin.f32 %v247, 20.0
    %v312 = vmin.f32 %v248, 20.0
    %v313 = vmin.f32 %v249, 20.0
    %v314 = vmin.f32 %v250, 20.0
    %v315 = vmin.f32 %v251, 20.0
    %v316 = vmin.f32 %v252, 20.0
    %v317 = vmin.f32 %v253, 20.0
    %v318 = vmin.f32 %v254, 20.0
    %v319 = vmin.f32 %v255, 20.0
    %v320 = vmin.f32 %v256, 20.0
    %v321 = vmin.f32 %v257, 20.0
    %v322 = vmin.f32 %v258, 20.0
    %v323 = vmin.f32 %v259, 20.0
    %v324 = vmin.f32 %v260, 20.0
    %v325 = vmin.f32 %v261, 20.0
    %v326 = vmin.f32 %v262, 20.0
    %v327 = vmin.f32 %v263, 20.0
    %v328 = vmin.f32 %v264, 20.0
    %v329 = vmin.f32 %v265, 20.0
    %v330 = vmin.f32 %v266, 20.0
    %v331 = vmin.f32 %v267, 20.0
    %v332 = vmin.f32 %v268, 20.0
    %v333 = vmin.f32 %v269, 20.0
    %v334 = vmin.f32 %v270, 20.0
    %v335 = vmin.f32 %v271, 20.0
    %v336 = vmin.f32 %v272, 20.0
    %v337 = vmin.f32 %v273, 20.0
    %v338 = vmin.f32 %v274, 20.0
    %v339 = vmin.f32 %v275, 20.0
    %v340 = vmin.f32 %v276, 20.0
    %v341 = vmin.f32 %v277, 20.0
    %v342 = vmin.f32 %v278, 20.0
    %v343 = vmul.f32 %v279, 1.442695
    %v344 = vpow.pop %v343
    %v345 = vmul.f32 %v280, 1.442695
    %v346 = vpow.pop %v345
    %v347 = vmul.f32 %v281, 1.442695
    %v348 = vpow.pop %v347
    %v349 = vmul.f32 %v282, 1.442695
    %v350 = vpow.pop %v349
    %v351 = vmul.f32 %v283, 1.442695
    %v352 = vpow.pop %v351
    %v353 = vmul.f32 %v284, 1.442695
    %v354 = vpow.pop %v353
    %v355 = vmul.f32 %v285, 1.442695
    %v356 = vpow.pop %v355
    %v357 = vmul.f32 %v286, 1.442695
    %v358 = vpow.pop %v357
    %v359 = vmul.f32 %v287, 1.442695
    %v360 = vpow.pop %v359
    %v361 = vmul.f32 %v288, 1.442695
    %v362 = vpow.pop %v361
    %v363 = vmul.f32 %v289, 1.442695
    %v364 = vpow.pop %v363
    %v365 = vmul.f32 %v290, 1.442695
    %v366 = vpow.pop %v365
    %v367 = vmul.f32 %v291, 1.442695
    %v368 = vpow.pop %v367
    %v369 = vmul.f32 %v292, 1.442695
    %v370 = vpow.pop %v369
    %v371 = vmul.f32 %v293, 1.442695
    %v372 = vpow.pop %v371
    %v373 = vmul.f32 %v294, 1.442695
    %v374 = vpow.pop %v373
    %v375 = vmul.f32 %v295, 1.442695
    %v376 = vpow.pop %v375
    %v377 = vmul.f32 %v296, 1.442695
    %v378 = vpow.pop %v377
    %v379 = vmul.f32 %v297, 1.442695
    %v380 = vpow.pop %v379
    %v381 = vmul.f32 %v298, 1.442695
    %v382 = vpow.pop %v381
    %v383 = vmul.f32 %v299, 1.442695
    %v384 = vpow.pop %v383
    %v385 = vmul.f32 %v300, 1.442695
    %v386 = vpow.pop %v385
    %v387 = vmul.f32 %v301, 1.442695
    %v388 = vpow.pop %v387
    %v389 = vmul.f32 %v302, 1.442695
    %v390 = vpow.pop %v389
    %v391 = vmul.f32 %v303, 1.442695
    %v392 = vpow.pop %v391
    %v393 = vmul.f32 %v304, 1.442695
    %v394 = vpow.pop %v393
    %v395 = vmul.f32 %v305, 1.442695
    %v396 = vpow.pop %v395
    %v397 = vmul.f32 %v306, 1.442695
    %v398 = vpow.pop %v397
    %v399 = vmul.f32 %v307, 1.442695
    %v400 = vpow.pop %v399
    %v401 = vmul.f32 %v308, 1.442695
    %v402 = vpow.pop %v401
    %v403 = vmul.f32 %v309, 1.442695
    %v404 = vpow.pop %v403
    %v405 = vmul.f32 %v310, 1.442695
    %v406 = vpow.pop %v405
    %v407 = vmul.f32 %v311, 1.442695
    %v408 = vpow.pop %v407
    %v409 = vmul.f32 %v312, 1.442695
    %v410 = vpow.pop %v409
    %v411 = vmul.f32 %v313, 1.442695
    %v412 = vpow.pop %v411
    %v413 = vmul.f32 %v314, 1.442695
    %v414 = vpow.pop %v413
    %v415 = vmul.f32 %v315, 1.442695
    %v416 = vpow.pop %v415
    %v417 = vmul.f32 %v316, 1.442695
    %v418 = vpow.pop %v417
    %v419 = vmul.f32 %v317, 1.442695
    %v420 = vpow.pop %v419
    %v421 = vmul.f32 %v318, 1.442695
    %v422 = vpow.pop %v421
    %v423 = vmul.f32 %v319, 1.442695
    %v424 = vpow.pop %v423
    %v425 = vmul.f32 %v320, 1.442695
    %v426 = vpow.pop %v425
    %v427 = vmul.f32 %v321, 1.442695
    %v428 = vpow.pop %v427
    %v429 = vmul.f32 %v322, 1.442695
    %v430 = vpow.pop %v429
    %v431 = vmul.f32 %v323, 1.442695
    %v432 = vpow.pop %v431
    %v433 = vmul.f32 %v324, 1.442695
    %v434 = vpow.pop %v433
    %v435 = vmul.f32 %v325, 1.442695
    %v436 = vpow.pop %v435
    %v437 = vmul.f32 %v326, 1.442695
    %v438 = vpow.pop %v437
    %v439 = vmul.f32 %v327, 1.442695
    %v440 = vpow.pop %v439
    %v441 = vmul.f32 %v328, 1.442695
    %v442 = vpow.pop %v441
    %v443 = vmul.f32 %v329, 1.442695
    %v444 = vpow.pop %v443
    %v445 = vmul.f32 %v330, 1.442695
    %v446 = vpow.pop %v445
    %v447 = vmul.f32 %v331, 1.442695
    %v448 = vpow.pop %v447
    %v449 = vmul.f32 %v332, 1.442695
    %v450 = vpow.pop %v449
    %v451 = vmul.f32 %v333, 1.442695
    %v452 = vpow.pop %v451
    %v453 = vmul.f32 %v334, 1.442695
    %v454 = vpow.pop %v453
    %v455 = vmul.f32 %v335, 1.442695
    %v456 = vpow.pop %v455
    %v457 = vmul.f32 %v336, 1.442695
    %v458 = vpow.pop %v457
    %v459 = vmul.f32 %v337, 1.442695
    %v460 = vpow.pop %v459
    %v461 = vmul.f32 %v338, 1.442695
    %v462 = vpow.pop %v461
    %v463 = vmul.f32 %v339, 1.442695
    %v464 = vpow.pop %v463
    %v465 = vmul.f32 %v340, 1.442695
    %v466 = vpow.pop %v465
    %v467 = vmul.f32 %v341, 1.442695
    %v468 = vpow.pop %v467
    %v469 = vmul.f32 %v342, 1.442695
    %v470 = vpow.pop %v469
    %v471 = vmul.f32 %v344, %v344
    %v472 = vmul.f32 %v346, %v346
    %v473 = vmul.f32 %v348, %v348
    %v474 = vmul.f32 %v350, %v350
    %v475 = vmul.f32 %v352, %v352
    %v476 = vmul.f32 %v354, %v354
    %v477 = vmul.f32 %v356, %v356
    %v478 = vmul.f32 %v358, %v358
    %v479 = vmul.f32 %v360, %v360
    %v480 = vmul.f32 %v362, %v362
    %v481 = vmul.f32 %v364, %v364
    %v482 = vmul.f32 %v366, %v366
    %v483 = vmul.f32 %v368, %v368
    %v484 = vmul.f32 %v370, %v370
    %v485 = vmul.f32 %v372, %v372
    %v486 = vmul.f32 %v374, %v374
    %v487 = vmul.f32 %v376, %v376
    %v488 = vmul.f32 %v378, %v378
    %v489 = vmul.f32 %v380, %v380
    %v490 = vmul.f32 %v382, %v382
    %v491 = vmul.f32 %v384, %v384
    %v492 = vmul.f32 %v386, %v386
    %v493 = vmul.f32 %v388, %v388
    %v494 = vmul.f32 %v390, %v390
    %v495 = vmul.f32 %v392, %v392
    %v496 = vmul.f32 %v394, %v394
    %v497 = vmul.f32 %v396, %v396
    %v498 = vmul.f32 %v398, %v398
    %v499 = vmul.f32 %v400, %v400
    %v500 = vmul.f32 %v402, %v402
    %v501 = vmul.f32 %v404, %v404
    %v502 = vmul.f32 %v406, %v406
    %v503 = vmul.f32 %v408, %v408
    %v504 = vmul.f32 %v410, %v410
    %v505 = vmul.f32 %v412, %v412
    %v506 = vmul.f32 %v414, %v414
    %v507 = vmul.f32 %v416, %v416
    %v508 = vmul.f32 %v418, %v418
    %v509 = vmul.f32 %v420, %v420
    %v510 = vmul.f32 %v422, %v422
    %v511 = vmul.f32 %v424, %v424
    %v512 = vmul.f32 %v426, %v426
    %v513 = vmul.f32 %v428, %v428
    %v514 = vmul.f32 %v430, %v430
    %v515 = vmul.f32 %v432, %v432
    %v516 = vmul.f32 %v434, %v434
    %v517 = vmul.f32 %v436, %v436
    %v518 = vmul.f32 %v438, %v438
    %v519 = vmul.f32 %v440, %v440
    %v520 = vmul.f32 %v442, %v442
    %v521 = vmul.f32 %v444, %v444
    %v522 = vmul.f32 %v446, %v446
    %v523 = vmul.f32 %v448, %v448
    %v524 = vmul.f32 %v450, %v450
    %v525 = vmul.f32 %v452, %v452
    %v526 = vmul.f32 %v454, %v454
    %v527 = vmul.f32 %v456, %v456
    %v528 = vmul.f32 %v458, %v458
    %v529 = vmul.f32 %v460, %v460
    %v530 = vmul.f32 %v462, %v462
    %v531 = vmul.f32 %v464, %v464
    %v532 = vmul.f32 %v466, %v466
    %v533 = vmul.f32 %v468, %v468
    %v534 = vmul.f32 %v470, %v470
    %v535 = vmul.f32 %v344, 2.0
    %v536 = vmul.f32 %v346, 2.0
    %v537 = vmul.f32 %v348, 2.0
    %v538 = vmul.f32 %v350, 2.0
    %v539 = vmul.f32 %v352, 2.0
    %v540 = vmul.f32 %v354, 2.0
    %v541 = vmul.f32 %v356, 2.0
    %v542 = vmul.f32 %v358, 2.0
    %v543 = vmul.f32 %v360, 2.0
    %v544 = vmul.f32 %v362, 2.0
    %v545 = vmul.f32 %v364, 2.0
    %v546 = vmul.f32 %v366, 2.0
    %v547 = vmul.f32 %v368, 2.0
    %v548 = vmul.f32 %v370, 2.0
    %v549 = vmul.f32 %v372, 2.0
    %v550 = vmul.f32 %v374, 2.0
    %v551 = vmul.f32 %v376, 2.0
    %v552 = vmul.f32 %v378, 2.0
    %v553 = vmul.f32 %v380, 2.0
    %v554 = vmul.f32 %v382, 2.0
    %v555 = vmul.f32 %v384, 2.0
    %v556 = vmul.f32 %v386, 2.0
    %v557 = vmul.f32 %v388, 2.0
    %v558 = vmul.f32 %v390, 2.0
    %v559 = vmul.f32 %v392, 2.0
    %v560 = vmul.f32 %v394, 2.0
    %v561 = vmul.f32 %v396, 2.0
    %v562 = vmul.f32 %v398, 2.0
    %v563 = vmul.f32 %v400, 2.0
    %v564 = vmul.f32 %v402, 2.0
    %v565 = vmul.f32 %v404, 2.0
    %v566 = vmul.f32 %v406, 2.0
    %v567 = vmul.f32 %v408, 2.0
    %v568 = vmul.f32 %v410, 2.0
    %v569 = vmul.f32 %v412, 2.0
    %v570 = vmul.f32 %v414, 2.0
    %v571 = vmul.f32 %v416, 2.0
    %v572 = vmul.f32 %v418, 2.0
    %v573 = vmul.f32 %v420, 2.0
    %v574 = vmul.f32 %v422, 2.0
    %v575 = vmul.f32 %v424, 2.0
    %v576 = vmul.f32 %v426, 2.0
    %v577 = vmul.f32 %v428, 2.0
    %v578 = vmul.f32 %v430, 2.0
    %v579 = vmul.f32 %v432, 2.0
    %v580 = vmul.f32 %v434, 2.0
    %v581 = vmul.f32 %v436, 2.0
    %v582 = vmul.f32 %v438, 2.0
    %v583 = vmul.f32 %v440, 2.0
    %v584 = vmul.f32 %v442, 2.0
    %v585 = vmul.f32 %v444, 2.0
    %v586 = vmul.f32 %v446, 2.0
    %v587 = vmul.f32 %v448, 2.0
    %v588 = vmul.f32 %v450, 2.0
    %v589 = vmul.f32 %v452, 2.0
    %v590 = vmul.f32 %v454, 2.0
    %v591 = vmul.f32 %v456, 2.0
    %v592 = vmul.f32 %v458, 2.0
    %v593 = vmul.f32 %v460, 2.0
    %v594 = vmul.f32 %v462, 2.0
    %v595 = vmul.f32 %v464, 2.0
    %v596 = vmul.f32 %v466, 2.0
    %v597 = vmul.f32 %v468, 2.0
    %v598 = vmul.f32 %v470, 2.0
    %v599 = vadd.f32 %v471, %v535
    %v600 = vadd.f32 %v472, %v536
    %v601 = vadd.f32 %v473, %v537
    %v602 = vadd.f32 %v474, %v538
    %v603 = vadd.f32 %v475, %v539
    %v604 = vadd.f32 %v476, %v540
    %v605 = vadd.f32 %v477, %v541
    %v606 = vadd.f32 %v478, %v542
    %v607 = vadd.f32 %v479, %v543
    %v608 = vadd.f32 %v480, %v544
    %v609 = vadd.f32 %v481, %v545
    %v610 = vadd.f32 %v482, %v546
    %v611 = vadd.f32 %v483, %v547
    %v612 = vadd.f32 %v484, %v548
    %v613 = vadd.f32 %v485, %v549
    %v614 = vadd.f32 %v486, %v550
    %v615 = vadd.f32 %v487, %v551
    %v616 = vadd.f32 %v488, %v552
    %v617 = vadd.f32 %v489, %v553
    %v618 = vadd.f32 %v490, %v554
    %v619 = vadd.f32 %v491, %v555
    %v620 = vadd.f32 %v492, %v556
    %v621 = vadd.f32 %v493, %v557
    %v622 = vadd.f32 %v494, %v558
    %v623 = vadd.f32 %v495, %v559
    %v624 = vadd.f32 %v496, %v560
    %v625 = vadd.f32 %v497, %v561
    %v626 = vadd.f32 %v498, %v562
    %v627 = vadd.f32 %v499, %v563
    %v628 = vadd.f32 %v500, %v564
    %v629 = vadd.f32 %v501, %v565
    %v630 = vadd.f32 %v502, %v566
    %v631 = vadd.f32 %v503, %v567
    %v632 = vadd.f32 %v504, %v568
    %v633 = vadd.f32 %v505, %v569
    %v634 = vadd.f32 %v506, %v570
    %v635 = vadd.f32 %v507, %v571
    %v636 = vadd.f32 %v508, %v572
    %v637 = vadd.f32 %v509, %v573
    %v638 = vadd.f32 %v510, %v574
    %v639 = vadd.f32 %v511, %v575
    %v640 = vadd.f32 %v512, %v576
    %v641 = vadd.f32 %v513, %v577
    %v642 = vadd.f32 %v514, %v578
    %v643 = vadd.f32 %v515, %v579
    %v644 = vadd.f32 %v516, %v580
    %v645 = vadd.f32 %v517, %v581
    %v646 = vadd.f32 %v518, %v582
    %v647 = vadd.f32 %v519, %v583
    %v648 = vadd.f32 %v520, %v584
    %v649 = vadd.f32 %v521, %v585
    %v650 = vadd.f32 %v522, %v586
    %v651 = vadd.f32 %v523, %v587
    %v652 = vadd.f32 %v524, %v588
    %v653 = vadd.f32 %v525, %v589
    %v654 = vadd.f32 %v526, %v590
    %v655 = vadd.f32 %v527, %v591
    %v656 = vadd.f32 %v528, %v592
    %v657 = vadd.f32 %v529, %v593
    %v658 = vadd.f32 %v530, %v594
    %v659 = vadd.f32 %v531, %v595
    %v660 = vadd.f32 %v532, %v596
    %v661 = vadd.f32 %v533, %v597
    %v662 = vadd.f32 %v534, %v598
    %v663 = vmul.f32 %v215, %v599
    %v664 = vmul.f32 %v216, %v600
    %v665 = vmul.f32 %v217, %v601
    %v666 = vmul.f32 %v218, %v602
    %v667 = vmul.f32 %v219, %v603
    %v668 = vmul.f32 %v220, %v604
    %v669 = vmul.f32 %v221, %v605
    %v670 = vmul.f32 %v222, %v606
    %v671 = vmul.f32 %v223, %v607
    %v672 = vmul.f32 %v224, %v608
    %v673 = vmul.f32 %v225, %v609
    %v674 = vmul.f32 %v226, %v610
    %v675 = vmul.f32 %v227, %v611
    %v676 = vmul.f32 %v228, %v612
    %v677 = vmul.f32 %v229, %v613
    %v678 = vmul.f32 %v230, %v614
    %v679 = vmul.f32 %v231, %v615
    %v680 = vmul.f32 %v232, %v616
    %v681 = vmul.f32 %v233, %v617
    %v682 = vmul.f32 %v234, %v618
    %v683 = vmul.f32 %v235, %v619
    %v684 = vmul.f32 %v236, %v620
    %v685 = vmul.f32 %v237, %v621
    %v686 = vmul.f32 %v238, %v622
    %v687 = vmul.f32 %v239, %v623
    %v688 = vmul.f32 %v240, %v624
    %v689 = vmul.f32 %v241, %v625
    %v690 = vmul.f32 %v242, %v626
    %v691 = vmul.f32 %v243, %v627
    %v692 = vmul.f32 %v244, %v628
    %v693 = vmul.f32 %v245, %v629
    %v694 = vmul.f32 %v246, %v630
    %v695 = vmul.f32 %v247, %v631
    %v696 = vmul.f32 %v248, %v632
    %v697 = vmul.f32 %v249, %v633
    %v698 = vmul.f32 %v250, %v634
    %v699 = vmul.f32 %v251, %v635
    %v700 = vmul.f32 %v252, %v636
    %v701 = vmul.f32 %v253, %v637
    %v702 = vmul.f32 %v254, %v638
    %v703 = vmul.f32 %v255, %v639
    %v704 = vmul.f32 %v256, %v640
    %v705 = vmul.f32 %v257, %v641
    %v706 = vmul.f32 %v258, %v642
    %v707 = vmul.f32 %v259, %v643
    %v708 = vmul.f32 %v260, %v644
    %v709 = vmul.f32 %v261, %v645
    %v710 = vmul.f32 %v262, %v646
    %v711 = vmul.f32 %v263, %v647
    %v712 = vmul.f32 %v264, %v648
    %v713 = vmul.f32 %v265, %v649
    %v714 = vmul.f32 %v266, %v650
    %v715 = vmul.f32 %v267, %v651
    %v716 = vmul.f32 %v268, %v652
    %v717 = vmul.f32 %v269, %v653
    %v718 = vmul.f32 %v270, %v654
    %v719 = vmul.f32 %v271, %v655
    %v720 = vmul.f32 %v272, %v656
    %v721 = vmul.f32 %v273, %v657
    %v722 = vmul.f32 %v274, %v658
    %v723 = vmul.f32 %v275, %v659
    %v724 = vmul.f32 %v276, %v660
    %v725 = vmul.f32 %v277, %v661
    %v726 = vmul.f32 %v278, %v662
    %v727 = vadd.f32 %v599, 2.0
    %v728 = vadd.f32 %v600, 2.0
    %v729 = vadd.f32 %v601, 2.0
    %v730 = vadd.f32 %v602, 2.0
    %v731 = vadd.f32 %v603, 2.0
    %v732 = vadd.f32 %v604, 2.0
    %v733 = vadd.f32 %v605, 2.0
    %v734 = vadd.f32 %v606, 2.0
    %v735 = vadd.f32 %v607, 2.0
    %v736 = vadd.f32 %v608, 2.0
    %v737 = vadd.f32 %v609, 2.0
    %v738 = vadd.f32 %v610, 2.0
    %v739 = vadd.f32 %v611, 2.0
    %v740 = vadd.f32 %v612, 2.0
    %v741 = vadd.f32 %v613, 2.0
    %v742 = vadd.f32 %v614, 2.0
    %v743 = vadd.f32 %v615, 2.0
    %v744 = vadd.f32 %v616, 2.0
    %v745 = vadd.f32 %v617, 2.0
    %v746 = vadd.f32 %v618, 2.0
    %v747 = vadd.f32 %v619, 2.0
    %v748 = vadd.f32 %v620, 2.0
    %v749 = vadd.f32 %v621, 2.0
    %v750 = vadd.f32 %v622, 2.0
    %v751 = vadd.f32 %v623, 2.0
    %v752 = vadd.f32 %v624, 2.0
    %v753 = vadd.f32 %v625, 2.0
    %v754 = vadd.f32 %v626, 2.0
    %v755 = vadd.f32 %v627, 2.0
    %v756 = vadd.f32 %v628, 2.0
    %v757 = vadd.f32 %v629, 2.0
    %v758 = vadd.f32 %v630, 2.0
    %v759 = vadd.f32 %v631, 2.0
    %v760 = vadd.f32 %v632, 2.0
    %v761 = vadd.f32 %v633, 2.0
    %v762 = vadd.f32 %v634, 2.0
    %v763 = vadd.f32 %v635, 2.0
    %v764 = vadd.f32 %v636, 2.0
    %v765 = vadd.f32 %v637, 2.0
    %v766 = vadd.f32 %v638, 2.0
    %v767 = vadd.f32 %v639, 2.0
    %v768 = vadd.f32 %v640, 2.0
    %v769 = vadd.f32 %v641, 2.0
    %v770 = vadd.f32 %v642, 2.0
    %v771 = vadd.f32 %v643, 2.0
    %v772 = vadd.f32 %v644, 2.0
    %v773 = vadd.f32 %v645, 2.0
    %v774 = vadd.f32 %v646, 2.0
    %v775 = vadd.f32 %v647, 2.0
    %v776 = vadd.f32 %v648, 2.0
    %v777 = vadd.f32 %v649, 2.0
    %v778 = vadd.f32 %v650, 2.0
    %v779 = vadd.f32 %v651, 2.0
    %v780 = vadd.f32 %v652, 2.0
    %v781 = vadd.f32 %v653, 2.0
    %v782 = vadd.f32 %v654, 2.0
    %v783 = vadd.f32 %v655, 2.0
    %v784 = vadd.f32 %v656, 2.0
    %v785 = vadd.f32 %v657, 2.0
    %v786 = vadd.f32 %v658, 2.0
    %v787 = vadd.f32 %v659, 2.0
    %v788 = vadd.f32 %v660, 2.0
    %v789 = vadd.f32 %v661, 2.0
    %v790 = vadd.f32 %v662, 2.0
    %v791 = vrcp.pop %v727
    %v792 = vrcp.pop %v728
    %v793 = vrcp.pop %v729
    %v794 = vrcp.pop %v730
    %v795 = vrcp.pop %v731
    %v796 = vrcp.pop %v732
    %v797 = vrcp.pop %v733
    %v798 = vrcp.pop %v734
    %v799 = vrcp.pop %v735
    %v800 = vrcp.pop %v736
    %v801 = vrcp.pop %v737
    %v802 = vrcp.pop %v738
    %v803 = vrcp.pop %v739
    %v804 = vrcp.pop %v740
    %v805 = vrcp.pop %v741
    %v806 = vrcp.pop %v742
    %v807 = vrcp.pop %v743
    %v808 = vrcp.pop %v744
    %v809 = vrcp.pop %v745
    %v810 = vrcp.pop %v746
    %v811 = vrcp.pop %v747
    %v812 = vrcp.pop %v748
    %v813 = vrcp.pop %v749
    %v814 = vrcp.pop %v750
    %v815 = vrcp.pop %v751
    %v816 = vrcp.pop %v752
    %v817 = vrcp.pop %v753
    %v818 = vrcp.pop %v754
    %v819 = vrcp.pop %v755
    %v820 = vrcp.pop %v756
    %v821 = vrcp.pop %v757
    %v822 = vrcp.pop %v758
    %v823 = vrcp.pop %v759
    %v824 = vrcp.pop %v760
    %v825 = vrcp.pop %v761
    %v826 = vrcp.pop %v762
    %v827 = vrcp.pop %v763
    %v828 = vrcp.pop %v764
    %v829 = vrcp.pop %v765
    %v830 = vrcp.pop %v766
    %v831 = vrcp.pop %v767
    %v832 = vrcp.pop %v768
    %v833 = vrcp.pop %v769
    %v834 = vrcp.pop %v770
    %v835 = vrcp.pop %v771
    %v836 = vrcp.pop %v772
    %v837 = vrcp.pop %v773
    %v838 = vrcp.pop %v774
    %v839 = vrcp.pop %v775
    %v840 = vrcp.pop %v776
    %v841 = vrcp.pop %v777
    %v842 = vrcp.pop %v778
    %v843 = vrcp.pop %v779
    %v844 = vrcp.pop %v780
    %v845 = vrcp.pop %v781
    %v846 = vrcp.pop %v782
    %v847 = vrcp.pop %v783
    %v848 = vrcp.pop %v784
    %v849 = vrcp.pop %v785
    %v850 = vrcp.pop %v786
    %v851 = vrcp.pop %v787
    %v852 = vrcp.pop %v788
    %v853 = vrcp.pop %v789
    %v854 = vrcp.pop %v790
    %v855 = vmul.f32 %v663, %v791
    %v856 = vmul.f32 %v664, %v792
    %v857 = vmul.f32 %v665, %v793
    %v858 = vmul.f32 %v666, %v794
    %v859 = vmul.f32 %v667, %v795
    %v860 = vmul.f32 %v668, %v796
    %v861 = vmul.f32 %v669, %v797
    %v862 = vmul.f32 %v670, %v798
    %v863 = vmul.f32 %v671, %v799
    %v864 = vmul.f32 %v672, %v800
    %v865 = vmul.f32 %v673, %v801
    %v866 = vmul.f32 %v674, %v802
    %v867 = vmul.f32 %v675, %v803
    %v868 = vmul.f32 %v676, %v804
    %v869 = vmul.f32 %v677, %v805
    %v870 = vmul.f32 %v678, %v806
    %v871 = vmul.f32 %v679, %v807
    %v872 = vmul.f32 %v680, %v808
    %v873 = vmul.f32 %v681, %v809
    %v874 = vmul.f32 %v682, %v810
    %v875 = vmul.f32 %v683, %v811
    %v876 = vmul.f32 %v684, %v812
    %v877 = vmul.f32 %v685, %v813
    %v878 = vmul.f32 %v686, %v814
    %v879 = vmul.f32 %v687, %v815
    %v880 = vmul.f32 %v688, %v816
    %v881 = vmul.f32 %v689, %v817
    %v882 = vmul.f32 %v690, %v818
    %v883 = vmul.f32 %v691, %v819
    %v884 = vmul.f32 %v692, %v820
    %v885 = vmul.f32 %v693, %v821
    %v886 = vmul.f32 %v694, %v822
    %v887 = vmul.f32 %v695, %v823
    %v888 = vmul.f32 %v696, %v824
    %v889 = vmul.f32 %v697, %v825
    %v890 = vmul.f32 %v698, %v826
    %v891 = vmul.f32 %v699, %v827
    %v892 = vmul.f32 %v700, %v828
    %v893 = vmul.f32 %v701, %v829
    %v894 = vmul.f32 %v702, %v830
    %v895 = vmul.f32 %v703, %v831
    %v896 = vmul.f32 %v704, %v832
    %v897 = vmul.f32 %v705, %v833
    %v898 = vmul.f32 %v706, %v834
    %v899 = vmul.f32 %v707, %v835
    %v900 = vmul.f32 %v708, %v836
    %v901 = vmul.f32 %v709, %v837
    %v902 = vmul.f32 %v710, %v838
    %v903 = vmul.f32 %v711, %v839
    %v904 = vmul.f32 %v712, %v840
    %v905 = vmul.f32 %v713, %v841
    %v906 = vmul.f32 %v714, %v842
    %v907 = vmul.f32 %v715, %v843
    %v908 = vmul.f32 %v716, %v844
    %v909 = vmul.f32 %v717, %v845
    %v910 = vmul.f32 %v718, %v846
    %v911 = vmul.f32 %v719, %v847
    %v912 = vmul.f32 %v720, %v848
    %v913 = vmul.f32 %v721, %v849
    %v914 = vmul.f32 %v722, %v850
    %v915 = vmul.f32 %v723, %v851
    %v916 = vmul.f32 %v724, %v852
    %v917 = vmul.f32 %v725, %v853
    %v918 = vmul.f32 %v726, %v854
    %vm919 = vcmp.gt.f32.partialorder %v215, 20.0
    %vm920 = vcmp.gt.f32.partialorder %v216, 20.0
    %vm921 = vcmp.gt.f32.partialorder %v217, 20.0
    %vm922 = vcmp.gt.f32.partialorder %v218, 20.0
    %vm923 = vcmp.gt.f32.partialorder %v219, 20.0
    %vm924 = vcmp.gt.f32.partialorder %v220, 20.0
    %vm925 = vcmp.gt.f32.partialorder %v221, 20.0
    %vm926 = vcmp.gt.f32.partialorder %v222, 20.0
    %vm927 = vcmp.gt.f32.partialorder %v223, 20.0
    %vm928 = vcmp.gt.f32.partialorder %v224, 20.0
    %vm929 = vcmp.gt.f32.partialorder %v225, 20.0
    %vm930 = vcmp.gt.f32.partialorder %v226, 20.0
    %vm931 = vcmp.gt.f32.partialorder %v227, 20.0
    %vm932 = vcmp.gt.f32.partialorder %v228, 20.0
    %vm933 = vcmp.gt.f32.partialorder %v229, 20.0
    %vm934 = vcmp.gt.f32.partialorder %v230, 20.0
    %vm935 = vcmp.gt.f32.partialorder %v231, 20.0
    %vm936 = vcmp.gt.f32.partialorder %v232, 20.0
    %vm937 = vcmp.gt.f32.partialorder %v233, 20.0
    %vm938 = vcmp.gt.f32.partialorder %v234, 20.0
    %vm939 = vcmp.gt.f32.partialorder %v235, 20.0
    %vm940 = vcmp.gt.f32.partialorder %v236, 20.0
    %vm941 = vcmp.gt.f32.partialorder %v237, 20.0
    %vm942 = vcmp.gt.f32.partialorder %v238, 20.0
    %vm943 = vcmp.gt.f32.partialorder %v239, 20.0
    %vm944 = vcmp.gt.f32.partialorder %v240, 20.0
    %vm945 = vcmp.gt.f32.partialorder %v241, 20.0
    %vm946 = vcmp.gt.f32.partialorder %v242, 20.0
    %vm947 = vcmp.gt.f32.partialorder %v243, 20.0
    %vm948 = vcmp.gt.f32.partialorder %v244, 20.0
    %vm949 = vcmp.gt.f32.partialorder %v245, 20.0
    %vm950 = vcmp.gt.f32.partialorder %v246, 20.0
    %vm951 = vcmp.gt.f32.partialorder %v247, 20.0
    %vm952 = vcmp.gt.f32.partialorder %v248, 20.0
    %vm953 = vcmp.gt.f32.partialorder %v249, 20.0
    %vm954 = vcmp.gt.f32.partialorder %v250, 20.0
    %vm955 = vcmp.gt.f32.partialorder %v251, 20.0
    %vm956 = vcmp.gt.f32.partialorder %v252, 20.0
    %vm957 = vcmp.gt.f32.partialorder %v253, 20.0
    %vm958 = vcmp.gt.f32.partialorder %v254, 20.0
    %vm959 = vcmp.gt.f32.partialorder %v255, 20.0
    %vm960 = vcmp.gt.f32.partialorder %v256, 20.0
    %vm961 = vcmp.gt.f32.partialorder %v257, 20.0
    %vm962 = vcmp.gt.f32.partialorder %v258, 20.0
    %vm963 = vcmp.gt.f32.partialorder %v259, 20.0
    %vm964 = vcmp.gt.f32.partialorder %v260, 20.0
    %vm965 = vcmp.gt.f32.partialorder %v261, 20.0
    %vm966 = vcmp.gt.f32.partialorder %v262, 20.0
    %vm967 = vcmp.gt.f32.partialorder %v263, 20.0
    %vm968 = vcmp.gt.f32.partialorder %v264, 20.0
    %vm969 = vcmp.gt.f32.partialorder %v265, 20.0
    %vm970 = vcmp.gt.f32.partialorder %v266, 20.0
    %vm971 = vcmp.gt.f32.partialorder %v267, 20.0
    %vm972 = vcmp.gt.f32.partialorder %v268, 20.0
    %vm973 = vcmp.gt.f32.partialorder %v269, 20.0
    %vm974 = vcmp.gt.f32.partialorder %v270, 20.0
    %vm975 = vcmp.gt.f32.partialorder %v271, 20.0
    %vm976 = vcmp.gt.f32.partialorder %v272, 20.0
    %vm977 = vcmp.gt.f32.partialorder %v273, 20.0
    %vm978 = vcmp.gt.f32.partialorder %v274, 20.0
    %vm979 = vcmp.gt.f32.partialorder %v275, 20.0
    %vm980 = vcmp.gt.f32.partialorder %v276, 20.0
    %vm981 = vcmp.gt.f32.partialorder %v277, 20.0
    %vm982 = vcmp.gt.f32.partialorder %v278, 20.0
    %v983 = vsel %vm919, %v215, %v855
    %v984 = vsel %vm920, %v216, %v856
    %v985 = vsel %vm921, %v217, %v857
    %v986 = vsel %vm922, %v218, %v858
    %v987 = vsel %vm923, %v219, %v859
    %v988 = vsel %vm924, %v220, %v860
    %v989 = vsel %vm925, %v221, %v861
    %v990 = vsel %vm926, %v222, %v862
    %v991 = vsel %vm927, %v223, %v863
    %v992 = vsel %vm928, %v224, %v864
    %v993 = vsel %vm929, %v225, %v865
    %v994 = vsel %vm930, %v226, %v866
    %v995 = vsel %vm931, %v227, %v867
    %v996 = vsel %vm932, %v228, %v868
    %v997 = vsel %vm933, %v229, %v869
    %v998 = vsel %vm934, %v230, %v870
    %v999 = vsel %vm935, %v231, %v871
    %v1000 = vsel %vm936, %v232, %v872
    %v1001 = vsel %vm937, %v233, %v873
    %v1002 = vsel %vm938, %v234, %v874
    %v1003 = vsel %vm939, %v235, %v875
    %v1004 = vsel %vm940, %v236, %v876
    %v1005 = vsel %vm941, %v237, %v877
    %v1006 = vsel %vm942, %v238, %v878
    %v1007 = vsel %vm943, %v239, %v879
    %v1008 = vsel %vm944, %v240, %v880
    %v1009 = vsel %vm945, %v241, %v881
    %v1010 = vsel %vm946, %v242, %v882
    %v1011 = vsel %vm947, %v243, %v883
    %v1012 = vsel %vm948, %v244, %v884
    %v1013 = vsel %vm949, %v245, %v885
    %v1014 = vsel %vm950, %v246, %v886
    %v1015 = vsel %vm951, %v247, %v887
    %v1016 = vsel %vm952, %v248, %v888
    %v1017 = vsel %vm953, %v249, %v889
    %v1018 = vsel %vm954, %v250, %v890
    %v1019 = vsel %vm955, %v251, %v891
    %v1020 = vsel %vm956, %v252, %v892
    %v1021 = vsel %vm957, %v253, %v893
    %v1022 = vsel %vm958, %v254, %v894
    %v1023 = vsel %vm959, %v255, %v895
    %v1024 = vsel %vm960, %v256, %v896
    %v1025 = vsel %vm961, %v257, %v897
    %v1026 = vsel %vm962, %v258, %v898
    %v1027 = vsel %vm963, %v259, %v899
    %v1028 = vsel %vm964, %v260, %v900
    %v1029 = vsel %vm965, %v261, %v901
    %v1030 = vsel %vm966, %v262, %v902
    %v1031 = vsel %vm967, %v263, %v903
    %v1032 = vsel %vm968, %v264, %v904
    %v1033 = vsel %vm969, %v265, %v905
    %v1034 = vsel %vm970, %v266, %v906
    %v1035 = vsel %vm971, %v267, %v907
    %v1036 = vsel %vm972, %v268, %v908
    %v1037 = vsel %vm973, %v269, %v909
    %v1038 = vsel %vm974, %v270, %v910
    %v1039 = vsel %vm975, %v271, %v911
    %v1040 = vsel %vm976, %v272, %v912
    %v1041 = vsel %vm977, %v273, %v913
    %v1042 = vsel %vm978, %v274, %v914
    %v1043 = vsel %vm979, %v275, %v915
    %v1044 = vsel %vm980, %v276, %v916
    %v1045 = vsel %vm981, %v277, %v917
    %v1046 = vsel %vm982, %v278, %v918
    %1047 = vst [vmem:[#allocation2] sm:$0xff] %v983
    %1048 = vst [vmem:[#allocation2 + $0x8] sm:$0xff] %v984
    %1049 = vst [vmem:[#allocation2 + $0x10] sm:$0xff] %v985
    %1050 = vst [vmem:[#allocation2 + $0x18] sm:$0xff] %v986
    %1051 = vst [vmem:[#allocation2 + $0x20] sm:$0xff] %v987
    %1052 = vst [vmem:[#allocation2 + $0x28] sm:$0xff] %v988
    %1053 = vst [vmem:[#allocation2 + $0x30] sm:$0xff] %v989
    %1054 = vst [vmem:[#allocation2 + $0x38] sm:$0xff] %v990
    %1055 = vst [vmem:[#allocation2 + $0x40] sm:$0xff] %v991
    %1056 = vst [vmem:[#allocation2 + $0x48] sm:$0xff] %v992
    %1057 = vst [vmem:[#allocation2 + $0x50] sm:$0xff] %v993
    %1058 = vst [vmem:[#allocation2 + $0x58] sm:$0xff] %v994
    %1059 = vst [vmem:[#allocation2 + $0x60] sm:$0xff] %v995
    %1060 = vst [vmem:[#allocation2 + $0x68] sm:$0xff] %v996
    %1061 = vst [vmem:[#allocation2 + $0x70] sm:$0xff] %v997
    %1062 = vst [vmem:[#allocation2 + $0x78] sm:$0xff] %v998
    %1063 = vst [vmem:[#allocation2 + $0x80] sm:$0xff] %v999
    %1064 = vst [vmem:[#allocation2 + $0x88] sm:$0xff] %v1000
    %1065 = vst [vmem:[#allocation2 + $0x90] sm:$0xff] %v1001
    %1066 = vst [vmem:[#allocation2 + $0x98] sm:$0xff] %v1002
    %1067 = vst [vmem:[#allocation2 + $0xa0] sm:$0xff] %v1003
    %1068 = vst [vmem:[#allocation2 + $0xa8] sm:$0xff] %v1004
    %1069 = vst [vmem:[#allocation2 + $0xb0] sm:$0xff] %v1005
    %1070 = vst [vmem:[#allocation2 + $0xb8] sm:$0xff] %v1006
    %1071 = vst [vmem:[#allocation2 + $0xc0] sm:$0xff] %v1007
    %1072 = vst [vmem:[#allocation2 + $0xc8] sm:$0xff] %v1008
    %1073 = vst [vmem:[#allocation2 + $0xd0] sm:$0xff] %v1009
    %1074 = vst [vmem:[#allocation2 + $0xd8] sm:$0xff] %v1010
    %1075 = vst [vmem:[#allocation2 + $0xe0] sm:$0xff] %v1011
    %1076 = vst [vmem:[#allocation2 + $0xe8] sm:$0xff] %v1012
    %1077 = vst [vmem:[#allocation2 + $0xf0] sm:$0xff] %v1013
    %1078 = vst [vmem:[#allocation2 + $0xf8] sm:$0xff] %v1014
    %1079 = vst [vmem:[#allocation2 + $0x100] sm:$0xff] %v1015
    %1080 = vst [vmem:[#allocation2 + $0x108] sm:$0xff] %v1016
    %1081 = vst [vmem:[#allocation2 + $0x110] sm:$0xff] %v1017
    %1082 = vst [vmem:[#allocation2 + $0x118] sm:$0xff] %v1018
    %1083 = vst [vmem:[#allocation2 + $0x120] sm:$0xff] %v1019
    %1084 = vst [vmem:[#allocation2 + $0x128] sm:$0xff] %v1020
    %1085 = vst [vmem:[#allocation2 + $0x130] sm:$0xff] %v1021
    %1086 = vst [vmem:[#allocation2 + $0x138] sm:$0xff] %v1022
    %1087 = vst [vmem:[#allocation2 + $0x140] sm:$0xff] %v1023
    %1088 = vst [vmem:[#allocation2 + $0x148] sm:$0xff] %v1024
    %1089 = vst [vmem:[#allocation2 + $0x150] sm:$0xff] %v1025
    %1090 = vst [vmem:[#allocation2 + $0x158] sm:$0xff] %v1026
    %1091 = vst [vmem:[#allocation2 + $0x160] sm:$0xff] %v1027
    %1092 = vst [vmem:[#allocation2 + $0x168] sm:$0xff] %v1028
    %1093 = vst [vmem:[#allocation2 + $0x170] sm:$0xff] %v1029
    %1094 = vst [vmem:[#allocation2 + $0x178] sm:$0xff] %v1030
    %1095 = vst [vmem:[#allocation2 + $0x180] sm:$0xff] %v1031
    %1096 = vst [vmem:[#allocation2 + $0x188] sm:$0xff] %v1032
    %1097 = vst [vmem:[#allocation2 + $0x190] sm:$0xff] %v1033
    %1098 = vst [vmem:[#allocation2 + $0x198] sm:$0xff] %v1034
    %1099 = vst [vmem:[#allocation2 + $0x1a0] sm:$0xff] %v1035
    %1100 = vst [vmem:[#allocation2 + $0x1a8] sm:$0xff] %v1036
    %1101 = vst [vmem:[#allocation2 + $0x1b0] sm:$0xff] %v1037
    %1102 = vst [vmem:[#allocation2 + $0x1b8] sm:$0xff] %v1038
    %1103 = vst [vmem:[#allocation2 + $0x1c0] sm:$0xff] %v1039
    %1104 = vst [vmem:[#allocation2 + $0x1c8] sm:$0xff] %v1040
    %1105 = vst [vmem:[#allocation2 + $0x1d0] sm:$0xff] %v1041
    %1106 = vst [vmem:[#allocation2 + $0x1d8] sm:$0xff] %v1042
    %1107 = vst [vmem:[#allocation2 + $0x1e0] sm:$0xff] %v1043
    %1108 = vst [vmem:[#allocation2 + $0x1e8] sm:$0xff] %v1044
    %1109 = vst [vmem:[#allocation2 + $0x1f0] sm:$0xff] %v1045
    %1110 = vst [vmem:[#allocation2 + $0x1f8] sm:$0xff] %v1046
    // Predicated region
    $region14: #{tucker_forward.7} parent=1 // pred_check
      _
    $region15: #{tucker_forward.7} parent=1 // pred_check_branch
      %1112 = sbr.rel (0) target = $region17
    $region16: #{tucker_forward.7} parent=1 // pred_region
      %1114 = vsyncadd [#allocation3], 0
      %s1115 = sshll.u32 [#allocation2], 4
      %s1116 = int_to_ptr.vmem [resolvable:$true] %s1115
      %s1117 = sshll.u32 %s3, 4
      %s1118 = int_to_ptr.hbm [resolvable:$true] %s1117
      %1123 = dma.vmem_to_hbm [thread:$0]  %s1116, 8192, %s1118, [#allocation3], 128, 128, 8
    $region17: #{tucker_forward.7} parent=1 // pred_fallthru
      _
    // Predicated region
    $region18: #{tucker_forward.7} parent=1 // pred_check
      _
    $region19: #{tucker_forward.7} parent=1 // pred_check_branch
      %1125 = sbr.rel (0) target = $region21
    $region20: #{tucker_forward.7} parent=1 // pred_region
      %1127 = dma.done [#allocation3], 8192
    $region21: #{tucker_forward.7} parent=1 // pred_fallthru
      _
    %1128 = vsyncpa [#allocation3], 1

// kernel: tucker_forward.6
$region0: #{tucker_forward.6}
  #allocation0 [shape = 'u32[]', space=smem, size = 0x4, offset = 0x4, fixed_abs, tag = 'smem constant byte address 0x4 - core index']
  #allocation1 [shape = 'u32[72,128]{1,0:T(1,128)}', space=vmem, size = 0x9000, scoped, tag = 'internal scratch']
  %s0 = inlined_call_operand.vmem [shape: bf16[512,128], index: 0, kind: input, shape index: {}]
  %s1 = inlined_call_operand.vmem [shape: f32[1,128], index: 1, kind: input, shape index: {}]
  %s2 = inlined_call_operand.vmem [shape: f32[1,128], index: 2, kind: input, shape index: {}]
  %s3 = inlined_call_operand.vmem [shape: bf16[128,128], index: 3, kind: input, shape index: {}]
  %s4 = inlined_call_operand.vmem [shape: bf16[512,128], index: 4, kind: output, shape index: {0}]
  %s5 = inlined_call_operand.vmem [shape: f32[1,2,128], index: 5, kind: output, shape index: {1}]
  %6 = xla_tuple %s4, %s5
  %s7 = sld [smem:[#allocation0]]
  $region34: #{tucker_forward.6} parent=0
    _
  %s9 = ssub.s32 1, %s7
  %s10 = scalar_select 0, %s9, %s7
  // Predicated region
  $region2: #{tucker_forward.6} parent=0 // pred_check
    _
  $region3: #{tucker_forward.6} parent=0 // pred_check_branch
    %12 = sbr.rel (0) target = $region5
  $region4: #{tucker_forward.6} parent=0 // pred_region
    _
  $region5: #{tucker_forward.6} parent=0 // pred_fallthru
    _
  // Predicated region
  $region6: #{tucker_forward.6} parent=0 // pred_check
    _
  $region7: #{tucker_forward.6} parent=0 // pred_check_branch
    %14 = sbr.rel (0) target = $region9
  $region8: #{tucker_forward.6} parent=0 // pred_region
    _
  $region9: #{tucker_forward.6} parent=0 // pred_fallthru
    _
  // Predicated region
  $region10: #{tucker_forward.6} parent=0 // pred_check
    _
  $region11: #{tucker_forward.6} parent=0 // pred_check_branch
    %16 = sbr.rel (0) target = $region13
  $region12: #{tucker_forward.6} parent=0 // pred_region
    _
  $region13: #{tucker_forward.6} parent=0 // pred_fallthru
    _
  // Predicated region
  $region14: #{tucker_forward.6} parent=0 // pred_check
    _
  $region15: #{tucker_forward.6} parent=0 // pred_check_branch
    %18 = sbr.rel (0) target = $region17
  $region16: #{tucker_forward.6} parent=0 // pred_region
    _
  $region17: #{tucker_forward.6} parent=0 // pred_fallthru
    _
  %v19 = vld [vmem:[%s0] sm:$0xf]
  %v20 = vld [vmem:[%s0 + $0x4] sm:$0xf]
  %v21 = vld [vmem:[%s0 + $0x8] sm:$0xf]
  %v22 = vld [vmem:[%s0 + $0xc] sm:$0xf]
  %v23 = vld [vmem:[%s0 + $0x10] sm:$0xf]
  %v24 = vld [vmem:[%s0 + $0x14] sm:$0xf]
  %v25 = vld [vmem:[%s0 + $0x18] sm:$0xf]
  %v26 = vld [vmem:[%s0 + $0x1c] sm:$0xf]
  %v27 = vld [vmem:[%s0 + $0x20] sm:$0xf]
  %v28 = vld [vmem:[%s0 + $0x24] sm:$0xf]
  %v29 = vld [vmem:[%s0 + $0x28] sm:$0xf]
  %v30 = vld [vmem:[%s0 + $0x2c] sm:$0xf]
  %v31 = vld [vmem:[%s0 + $0x30] sm:$0xf]
  %v32 = vld [vmem:[%s0 + $0x34] sm:$0xf]
  %v33 = vld [vmem:[%s0 + $0x38] sm:$0xf]
  %v34 = vld [vmem:[%s0 + $0x3c] sm:$0xf]
  %v35 = vld [vmem:[%s0 + $0x40] sm:$0xf]
  %v36 = vld [vmem:[%s0 + $0x44] sm:$0xf]
  %v37 = vld [vmem:[%s0 + $0x48] sm:$0xf]
  %v38 = vld [vmem:[%s0 + $0x4c] sm:$0xf]
  %v39 = vld [vmem:[%s0 + $0x50] sm:$0xf]
  %v40 = vld [vmem:[%s0 + $0x54] sm:$0xf]
  %v41 = vld [vmem:[%s0 + $0x58] sm:$0xf]
  %v42 = vld [vmem:[%s0 + $0x5c] sm:$0xf]
  %v43 = vld [vmem:[%s0 + $0x60] sm:$0xf]
  %v44 = vld [vmem:[%s0 + $0x64] sm:$0xf]
  %v45 = vld [vmem:[%s0 + $0x68] sm:$0xf]
  %v46 = vld [vmem:[%s0 + $0x6c] sm:$0xf]
  %v47 = vld [vmem:[%s0 + $0x70] sm:$0xf]
  %v48 = vld [vmem:[%s0 + $0x74] sm:$0xf]
  %v49 = vld [vmem:[%s0 + $0x78] sm:$0xf]
  %v50 = vld [vmem:[%s0 + $0x7c] sm:$0xf]
  %v51 = vld [vmem:[%s0 + $0x80] sm:$0xf]
  %v52 = vld [vmem:[%s0 + $0x84] sm:$0xf]
  %v53 = vld [vmem:[%s0 + $0x88] sm:$0xf]
  %v54 = vld [vmem:[%s0 + $0x8c] sm:$0xf]
  %v55 = vld [vmem:[%s0 + $0x90] sm:$0xf]
  %v56 = vld [vmem:[%s0 + $0x94] sm:$0xf]
  %v57 = vld [vmem:[%s0 + $0x98] sm:$0xf]
  %v58 = vld [vmem:[%s0 + $0x9c] sm:$0xf]
  %v59 = vld [vmem:[%s0 + $0xa0] sm:$0xf]
  %v60 = vld [vmem:[%s0 + $0xa4] sm:$0xf]
  %v61 = vld [vmem:[%s0 + $0xa8] sm:$0xf]
  %v62 = vld [vmem:[%s0 + $0xac] sm:$0xf]
  %v63 = vld [vmem:[%s0 + $0xb0] sm:$0xf]
  %v64 = vld [vmem:[%s0 + $0xb4] sm:$0xf]
  %v65 = vld [vmem:[%s0 + $0xb8] sm:$0xf]
  %v66 = vld [vmem:[%s0 + $0xbc] sm:$0xf]
  %v67 = vld [vmem:[%s0 + $0xc0] sm:$0xf]
  %v68 = vld [vmem:[%s0 + $0xc4] sm:$0xf]
  %v69 = vld [vmem:[%s0 + $0xc8] sm:$0xf]
  %v70 = vld [vmem:[%s0 + $0xcc] sm:$0xf]
  %v71 = vld [vmem:[%s0 + $0xd0] sm:$0xf]
  %v72 = vld [vmem:[%s0 + $0xd4] sm:$0xf]
  %v73 = vld [vmem:[%s0 + $0xd8] sm:$0xf]
  %v74 = vld [vmem:[%s0 + $0xdc] sm:$0xf]
  %v75 = vld [vmem:[%s0 + $0xe0] sm:$0xf]
  %v76 = vld [vmem:[%s0 + $0xe4] sm:$0xf]
  %v77 = vld [vmem:[%s0 + $0xe8] sm:$0xf]
  %v78 = vld [vmem:[%s0 + $0xec] sm:$0xf]
  %v79 = vld [vmem:[%s0 + $0xf0] sm:$0xf]
  %v80 = vld [vmem:[%s0 + $0xf4] sm:$0xf]
  %v81 = vld [vmem:[%s0 + $0xf8] sm:$0xf]
  %v82 = vld [vmem:[%s0 + $0xfc] sm:$0xf]
  %v83 = vunpack.c.l.bf16 %v19
  %v84 = vunpack.c.l.bf16 %v20
  %v85 = vunpack.c.l.bf16 %v21
  %v86 = vunpack.c.l.bf16 %v22
  %v87 = vunpack.c.l.bf16 %v23
  %v88 = vunpack.c.l.bf16 %v24
  %v89 = vunpack.c.l.bf16 %v25
  %v90 = vunpack.c.l.bf16 %v26
  %v91 = vunpack.c.l.bf16 %v27
  %v92 = vunpack.c.l.bf16 %v28
  %v93 = vunpack.c.l.bf16 %v29
  %v94 = vunpack.c.l.bf16 %v30
  %v95 = vunpack.c.l.bf16 %v31
  %v96 = vunpack.c.l.bf16 %v32
  %v97 = vunpack.c.l.bf16 %v33
  %v98 = vunpack.c.l.bf16 %v34
  %v99 = vunpack.c.l.bf16 %v35
  %v100 = vunpack.c.l.bf16 %v36
  %v101 = vunpack.c.l.bf16 %v37
  %v102 = vunpack.c.l.bf16 %v38
  %v103 = vunpack.c.l.bf16 %v39
  %v104 = vunpack.c.l.bf16 %v40
  %v105 = vunpack.c.l.bf16 %v41
  %v106 = vunpack.c.l.bf16 %v42
  %v107 = vunpack.c.l.bf16 %v43
  %v108 = vunpack.c.l.bf16 %v44
  %v109 = vunpack.c.l.bf16 %v45
  %v110 = vunpack.c.l.bf16 %v46
  %v111 = vunpack.c.l.bf16 %v47
  %v112 = vunpack.c.l.bf16 %v48
  %v113 = vunpack.c.l.bf16 %v49
  %v114 = vunpack.c.l.bf16 %v50
  %v115 = vunpack.c.l.bf16 %v51
  %v116 = vunpack.c.l.bf16 %v52
  %v117 = vunpack.c.l.bf16 %v53
  %v118 = vunpack.c.l.bf16 %v54
  %v119 = vunpack.c.l.bf16 %v55
  %v120 = vunpack.c.l.bf16 %v56
  %v121 = vunpack.c.l.bf16 %v57
  %v122 = vunpack.c.l.bf16 %v58
  %v123 = vunpack.c.l.bf16 %v59
  %v124 = vunpack.c.l.bf16 %v60
  %v125 = vunpack.c.l.bf16 %v61
  %v126 = vunpack.c.l.bf16 %v62
  %v127 = vunpack.c.l.bf16 %v63
  %v128 = vunpack.c.l.bf16 %v64
  %v129 = vunpack.c.l.bf16 %v65
  %v130 = vunpack.c.l.bf16 %v66
  %v131 = vunpack.c.l.bf16 %v67
  %v132 = vunpack.c.l.bf16 %v68
  %v133 = vunpack.c.l.bf16 %v69
  %v134 = vunpack.c.l.bf16 %v70
  %v135 = vunpack.c.l.bf16 %v71
  %v136 = vunpack.c.l.bf16 %v72
  %v137 = vunpack.c.l.bf16 %v73
  %v138 = vunpack.c.l.bf16 %v74
  %v139 = vunpack.c.l.bf16 %v75
  %v140 = vunpack.c.l.bf16 %v76
  %v141 = vunpack.c.l.bf16 %v77
  %v142 = vunpack.c.l.bf16 %v78
  %v143 = vunpack.c.l.bf16 %v79
  %v144 = vunpack.c.l.bf16 %v80
  %v145 = vunpack.c.l.bf16 %v81
  %v146 = vunpack.c.l.bf16 %v82
  %v147 = vld [vmem:[%s1] sm:$0x1]
  %v149 = vperm.slane %v147, 0
  %v151 = vmul.f32 %v83, %v149
  %v152 = vmul.f32 %v84, %v149
  %v153 = vmul.f32 %v85, %v149
  %v154 = vmul.f32 %v86, %v149
  %v155 = vmul.f32 %v87, %v149
  %v156 = vmul.f32 %v88, %v149
  %v157 = vmul.f32 %v89, %v149
  %v158 = vmul.f32 %v90, %v149
  %v159 = vmul.f32 %v91, %v149
  %v160 = vmul.f32 %v92, %v149
  %v161 = vmul.f32 %v93, %v149
  %v162 = vmul.f32 %v94, %v149
  %v163 = vmul.f32 %v95, %v149
  %v164 = vmul.f32 %v96, %v149
  %v165 = vmul.f32 %v97, %v149
  %v166 = vmul.f32 %v98, %v149
  %v167 = vmul.f32 %v99, %v149
  %v168 = vmul.f32 %v100, %v149
  %v169 = vmul.f32 %v101, %v149
  %v170 = vmul.f32 %v102, %v149
  %v171 = vmul.f32 %v103, %v149
  %v172 = vmul.f32 %v104, %v149
  %v173 = vmul.f32 %v105, %v149
  %v174 = vmul.f32 %v106, %v149
  %v175 = vmul.f32 %v107, %v149
  %v176 = vmul.f32 %v108, %v149
  %v177 = vmul.f32 %v109, %v149
  %v178 = vmul.f32 %v110, %v149
  %v179 = vmul.f32 %v111, %v149
  %v180 = vmul.f32 %v112, %v149
  %v181 = vmul.f32 %v113, %v149
  %v182 = vmul.f32 %v114, %v149
  %v183 = vmul.f32 %v115, %v149
  %v184 = vmul.f32 %v116, %v149
  %v185 = vmul.f32 %v117, %v149
  %v186 = vmul.f32 %v118, %v149
  %v187 = vmul.f32 %v119, %v149
  %v188 = vmul.f32 %v120, %v149
  %v189 = vmul.f32 %v121, %v149
  %v190 = vmul.f32 %v122, %v149
  %v191 = vmul.f32 %v123, %v149
  %v192 = vmul.f32 %v124, %v149
  %v193 = vmul.f32 %v125, %v149
  %v194 = vmul.f32 %v126, %v149
  %v195 = vmul.f32 %v127, %v149
  %v196 = vmul.f32 %v128, %v149
  %v197 = vmul.f32 %v129, %v149
  %v198 = vmul.f32 %v130, %v149
  %v199 = vmul.f32 %v131, %v149
  %v200 = vmul.f32 %v132, %v149
  %v201 = vmul.f32 %v133, %v149
  %v202 = vmul.f32 %v134, %v149
  %v203 = vmul.f32 %v135, %v149
  %v204 = vmul.f32 %v136, %v149
  %v205 = vmul.f32 %v137, %v149
  %v206 = vmul.f32 %v138, %v149
  %v207 = vmul.f32 %v139, %v149
  %v208 = vmul.f32 %v140, %v149
  %v209 = vmul.f32 %v141, %v149
  %v210 = vmul.f32 %v142, %v149
  %v211 = vmul.f32 %v143, %v149
  %v212 = vmul.f32 %v144, %v149
  %v213 = vmul.f32 %v145, %v149
  %v214 = vmul.f32 %v146, %v149
  %v215 = vld [vmem:[%s2] sm:$0x1]
  %v217 = vperm.slane %v215, 0
  %v219 = vadd.f32 %v151, %v217
  %v220 = vadd.f32 %v152, %v217
  %v221 = vadd.f32 %v153, %v217
  %v222 = vadd.f32 %v154, %v217
  %v223 = vadd.f32 %v155, %v217
  %v224 = vadd.f32 %v156, %v217
  %v225 = vadd.f32 %v157, %v217
  %v226 = vadd.f32 %v158, %v217
  %v227 = vadd.f32 %v159, %v217
  %v228 = vadd.f32 %v160, %v217
  %v229 = vadd.f32 %v161, %v217
  %v230 = vadd.f32 %v162, %v217
  %v231 = vadd.f32 %v163, %v217
  %v232 = vadd.f32 %v164, %v217
  %v233 = vadd.f32 %v165, %v217
  %v234 = vadd.f32 %v166, %v217
  %v235 = vadd.f32 %v167, %v217
  %v236 = vadd.f32 %v168, %v217
  %v237 = vadd.f32 %v169, %v217
  %v238 = vadd.f32 %v170, %v217
  %v239 = vadd.f32 %v171, %v217
  %v240 = vadd.f32 %v172, %v217
  %v241 = vadd.f32 %v173, %v217
  %v242 = vadd.f32 %v174, %v217
  %v243 = vadd.f32 %v175, %v217
  %v244 = vadd.f32 %v176, %v217
  %v245 = vadd.f32 %v177, %v217
  %v246 = vadd.f32 %v178, %v217
  %v247 = vadd.f32 %v179, %v217
  %v248 = vadd.f32 %v180, %v217
  %v249 = vadd.f32 %v181, %v217
  %v250 = vadd.f32 %v182, %v217
  %v251 = vadd.f32 %v183, %v217
  %v252 = vadd.f32 %v184, %v217
  %v253 = vadd.f32 %v185, %v217
  %v254 = vadd.f32 %v186, %v217
  %v255 = vadd.f32 %v187, %v217
  %v256 = vadd.f32 %v188, %v217
  %v257 = vadd.f32 %v189, %v217
  %v258 = vadd.f32 %v190, %v217
  %v259 = vadd.f32 %v191, %v217
  %v260 = vadd.f32 %v192, %v217
  %v261 = vadd.f32 %v193, %v217
  %v262 = vadd.f32 %v194, %v217
  %v263 = vadd.f32 %v195, %v217
  %v264 = vadd.f32 %v196, %v217
  %v265 = vadd.f32 %v197, %v217
  %v266 = vadd.f32 %v198, %v217
  %v267 = vadd.f32 %v199, %v217
  %v268 = vadd.f32 %v200, %v217
  %v269 = vadd.f32 %v201, %v217
  %v270 = vadd.f32 %v202, %v217
  %v271 = vadd.f32 %v203, %v217
  %v272 = vadd.f32 %v204, %v217
  %v273 = vadd.f32 %v205, %v217
  %v274 = vadd.f32 %v206, %v217
  %v275 = vadd.f32 %v207, %v217
  %v276 = vadd.f32 %v208, %v217
  %v277 = vadd.f32 %v209, %v217
  %v278 = vadd.f32 %v210, %v217
  %v279 = vadd.f32 %v211, %v217
  %v280 = vadd.f32 %v212, %v217
  %v281 = vadd.f32 %v213, %v217
  %v282 = vadd.f32 %v214, %v217
  %v283 = vmin.f32 %v219, 20.0
  %v284 = vmin.f32 %v220, 20.0
  %v285 = vmin.f32 %v221, 20.0
  %v286 = vmin.f32 %v222, 20.0
  %v287 = vmin.f32 %v223, 20.0
  %v288 = vmin.f32 %v224, 20.0
  %v289 = vmin.f32 %v225, 20.0
  %v290 = vmin.f32 %v226, 20.0
  %v291 = vmin.f32 %v227, 20.0
  %v292 = vmin.f32 %v228, 20.0
  %v293 = vmin.f32 %v229, 20.0
  %v294 = vmin.f32 %v230, 20.0
  %v295 = vmin.f32 %v231, 20.0
  %v296 = vmin.f32 %v232, 20.0
  %v297 = vmin.f32 %v233, 20.0
  %v298 = vmin.f32 %v234, 20.0
  %v299 = vmin.f32 %v235, 20.0
  %v300 = vmin.f32 %v236, 20.0
  %v301 = vmin.f32 %v237, 20.0
  %v302 = vmin.f32 %v238, 20.0
  %v303 = vmin.f32 %v239, 20.0
  %v304 = vmin.f32 %v240, 20.0
  %v305 = vmin.f32 %v241, 20.0
  %v306 = vmin.f32 %v242, 20.0
  %v307 = vmin.f32 %v243, 20.0
  %v308 = vmin.f32 %v244, 20.0
  %v309 = vmin.f32 %v245, 20.0
  %v310 = vmin.f32 %v246, 20.0
  %v311 = vmin.f32 %v247, 20.0
  %v312 = vmin.f32 %v248, 20.0
  %v313 = vmin.f32 %v249, 20.0
  %v314 = vmin.f32 %v250, 20.0
  %v315 = vmin.f32 %v251, 20.0
  %v316 = vmin.f32 %v252, 20.0
  %v317 = vmin.f32 %v253, 20.0
  %v318 = vmin.f32 %v254, 20.0
  %v319 = vmin.f32 %v255, 20.0
  %v320 = vmin.f32 %v256, 20.0
  %v321 = vmin.f32 %v257, 20.0
  %v322 = vmin.f32 %v258, 20.0
  %v323 = vmin.f32 %v259, 20.0
  %v324 = vmin.f32 %v260, 20.0
  %v325 = vmin.f32 %v261, 20.0
  %v326 = vmin.f32 %v262, 20.0
  %v327 = vmin.f32 %v263, 20.0
  %v328 = vmin.f32 %v264, 20.0
  %v329 = vmin.f32 %v265, 20.0
  %v330 = vmin.f32 %v266, 20.0
  %v331 = vmin.f32 %v267, 20.0
  %v332 = vmin.f32 %v268, 20.0
  %v333 = vmin.f32 %v269, 20.0
  %v334 = vmin.f32 %v270, 20.0
  %v335 = vmin.f32 %v271, 20.0
  %v336 = vmin.f32 %v272, 20.0
  %v337 = vmin.f32 %v273, 20.0
  %v338 = vmin.f32 %v274, 20.0
  %v339 = vmin.f32 %v275, 20.0
  %v340 = vmin.f32 %v276, 20.0
  %v341 = vmin.f32 %v277, 20.0
  %v342 = vmin.f32 %v278, 20.0
  %v343 = vmin.f32 %v279, 20.0
  %v344 = vmin.f32 %v280, 20.0
  %v345 = vmin.f32 %v281, 20.0
  %v346 = vmin.f32 %v282, 20.0
  %v347 = vmul.f32 %v283, 1.442695
  %v348 = vpow.pop %v347
  %v349 = vmul.f32 %v284, 1.442695
  %v350 = vpow.pop %v349
  %v351 = vmul.f32 %v285, 1.442695
  %v352 = vpow.pop %v351
  %v353 = vmul.f32 %v286, 1.442695
  %v354 = vpow.pop %v353
  %v355 = vmul.f32 %v287, 1.442695
  %v356 = vpow.pop %v355
  %v357 = vmul.f32 %v288, 1.442695
  %v358 = vpow.pop %v357
  %v359 = vmul.f32 %v289, 1.442695
  %v360 = vpow.pop %v359
  %v361 = vmul.f32 %v290, 1.442695
  %v362 = vpow.pop %v361
  %v363 = vmul.f32 %v291, 1.442695
  %v364 = vpow.pop %v363
  %v365 = vmul.f32 %v292, 1.442695
  %v366 = vpow.pop %v365
  %v367 = vmul.f32 %v293, 1.442695
  %v368 = vpow.pop %v367
  %v369 = vmul.f32 %v294, 1.442695
  %v370 = vpow.pop %v369
  %v371 = vmul.f32 %v295, 1.442695
  %v372 = vpow.pop %v371
  %v373 = vmul.f32 %v296, 1.442695
  %v374 = vpow.pop %v373
  %v375 = vmul.f32 %v297, 1.442695
  %v376 = vpow.pop %v375
  %v377 = vmul.f32 %v298, 1.442695
  %v378 = vpow.pop %v377
  %v379 = vmul.f32 %v299, 1.442695
  %v380 = vpow.pop %v379
  %v381 = vmul.f32 %v300, 1.442695
  %v382 = vpow.pop %v381
  %v383 = vmul.f32 %v301, 1.442695
  %v384 = vpow.pop %v383
  %v385 = vmul.f32 %v302, 1.442695
  %v386 = vpow.pop %v385
  %v387 = vmul.f32 %v303, 1.442695
  %v388 = vpow.pop %v387
  %v389 = vmul.f32 %v304, 1.442695
  %v390 = vpow.pop %v389
  %v391 = vmul.f32 %v305, 1.442695
  %v392 = vpow.pop %v391
  %v393 = vmul.f32 %v306, 1.442695
  %v394 = vpow.pop %v393
  %v395 = vmul.f32 %v307, 1.442695
  %v396 = vpow.pop %v395
  %v397 = vmul.f32 %v308, 1.442695
  %v398 = vpow.pop %v397
  %v399 = vmul.f32 %v309, 1.442695
  %v400 = vpow.pop %v399
  %v401 = vmul.f32 %v310, 1.442695
  %v402 = vpow.pop %v401
  %v403 = vmul.f32 %v311, 1.442695
  %v404 = vpow.pop %v403
  %v405 = vmul.f32 %v312, 1.442695
  %v406 = vpow.pop %v405
  %v407 = vmul.f32 %v313, 1.442695
  %v408 = vpow.pop %v407
  %v409 = vmul.f32 %v314, 1.442695
  %v410 = vpow.pop %v409
  %v411 = vmul.f32 %v315, 1.442695
  %v412 = vpow.pop %v411
  %v413 = vmul.f32 %v316, 1.442695
  %v414 = vpow.pop %v413
  %v415 = vmul.f32 %v317, 1.442695
  %v416 = vpow.pop %v415
  %v417 = vmul.f32 %v318, 1.442695
  %v418 = vpow.pop %v417
  %v419 = vmul.f32 %v319, 1.442695
  %v420 = vpow.pop %v419
  %v421 = vmul.f32 %v320, 1.442695
  %v422 = vpow.pop %v421
  %v423 = vmul.f32 %v321, 1.442695
  %v424 = vpow.pop %v423
  %v425 = vmul.f32 %v322, 1.442695
  %v426 = vpow.pop %v425
  %v427 = vmul.f32 %v323, 1.442695
  %v428 = vpow.pop %v427
  %v429 = vmul.f32 %v324, 1.442695
  %v430 = vpow.pop %v429
  %v431 = vmul.f32 %v325, 1.442695
  %v432 = vpow.pop %v431
  %v433 = vmul.f32 %v326, 1.442695
  %v434 = vpow.pop %v433
  %v435 = vmul.f32 %v327, 1.442695
  %v436 = vpow.pop %v435
  %v437 = vmul.f32 %v328, 1.442695
  %v438 = vpow.pop %v437
  %v439 = vmul.f32 %v329, 1.442695
  %v440 = vpow.pop %v439
  %v441 = vmul.f32 %v330, 1.442695
  %v442 = vpow.pop %v441
  %v443 = vmul.f32 %v331, 1.442695
  %v444 = vpow.pop %v443
  %v445 = vmul.f32 %v332, 1.442695
  %v446 = vpow.pop %v445
  %v447 = vmul.f32 %v333, 1.442695
  %v448 = vpow.pop %v447
  %v449 = vmul.f32 %v334, 1.442695
  %v450 = vpow.pop %v449
  %v451 = vmul.f32 %v335, 1.442695
  %v452 = vpow.pop %v451
  %v453 = vmul.f32 %v336, 1.442695
  %v454 = vpow.pop %v453
  %v455 = vmul.f32 %v337, 1.442695
  %v456 = vpow.pop %v455
  %v457 = vmul.f32 %v338, 1.442695
  %v458 = vpow.pop %v457
  %v459 = vmul.f32 %v339, 1.442695
  %v460 = vpow.pop %v459
  %v461 = vmul.f32 %v340, 1.442695
  %v462 = vpow.pop %v461
  %v463 = vmul.f32 %v341, 1.442695
  %v464 = vpow.pop %v463
  %v465 = vmul.f32 %v342, 1.442695
  %v466 = vpow.pop %v465
  %v467 = vmul.f32 %v343, 1.442695
  %v468 = vpow.pop %v467
  %v469 = vmul.f32 %v344, 1.442695
  %v470 = vpow.pop %v469
  %v471 = vmul.f32 %v345, 1.442695
  %v472 = vpow.pop %v471
  %v473 = vmul.f32 %v346, 1.442695
  %v474 = vpow.pop %v473
  %v475 = vmul.f32 %v348, %v348
  %v476 = vmul.f32 %v350, %v350
  %v477 = vmul.f32 %v352, %v352
  %v478 = vmul.f32 %v354, %v354
  %v479 = vmul.f32 %v356, %v356
  %v480 = vmul.f32 %v358, %v358
  %v481 = vmul.f32 %v360, %v360
  %v482 = vmul.f32 %v362, %v362
  %v483 = vmul.f32 %v364, %v364
  %v484 = vmul.f32 %v366, %v366
  %v485 = vmul.f32 %v368, %v368
  %v486 = vmul.f32 %v370, %v370
  %v487 = vmul.f32 %v372, %v372
  %v488 = vmul.f32 %v374, %v374
  %v489 = vmul.f32 %v376, %v376
  %v490 = vmul.f32 %v378, %v378
  %v491 = vmul.f32 %v380, %v380
  %v492 = vmul.f32 %v382, %v382
  %v493 = vmul.f32 %v384, %v384
  %v494 = vmul.f32 %v386, %v386
  %v495 = vmul.f32 %v388, %v388
  %v496 = vmul.f32 %v390, %v390
  %v497 = vmul.f32 %v392, %v392
  %v498 = vmul.f32 %v394, %v394
  %v499 = vmul.f32 %v396, %v396
  %v500 = vmul.f32 %v398, %v398
  %v501 = vmul.f32 %v400, %v400
  %v502 = vmul.f32 %v402, %v402
  %v503 = vmul.f32 %v404, %v404
  %v504 = vmul.f32 %v406, %v406
  %v505 = vmul.f32 %v408, %v408
  %v506 = vmul.f32 %v410, %v410
  %v507 = vmul.f32 %v412, %v412
  %v508 = vmul.f32 %v414, %v414
  %v509 = vmul.f32 %v416, %v416
  %v510 = vmul.f32 %v418, %v418
  %v511 = vmul.f32 %v420, %v420
  %v512 = vmul.f32 %v422, %v422
  %v513 = vmul.f32 %v424, %v424
  %v514 = vmul.f32 %v426, %v426
  %v515 = vmul.f32 %v428, %v428
  %v516 = vmul.f32 %v430, %v430
  %v517 = vmul.f32 %v432, %v432
  %v518 = vmul.f32 %v434, %v434
  %v519 = vmul.f32 %v436, %v436
  %v520 = vmul.f32 %v438, %v438
  %v521 = vmul.f32 %v440, %v440
  %v522 = vmul.f32 %v442, %v442
  %v523 = vmul.f32 %v444, %v444
  %v524 = vmul.f32 %v446, %v446
  %v525 = vmul.f32 %v448, %v448
  %v526 = vmul.f32 %v450, %v450
  %v527 = vmul.f32 %v452, %v452
  %v528 = vmul.f32 %v454, %v454
  %v529 = vmul.f32 %v456, %v456
  %v530 = vmul.f32 %v458, %v458
  %v531 = vmul.f32 %v460, %v460
  %v532 = vmul.f32 %v462, %v462
  %v533 = vmul.f32 %v464, %v464
  %v534 = vmul.f32 %v466, %v466
  %v535 = vmul.f32 %v468, %v468
  %v536 = vmul.f32 %v470, %v470
  %v537 = vmul.f32 %v472, %v472
  %v538 = vmul.f32 %v474, %v474
  %v539 = vmul.f32 %v348, 2.0
  %v540 = vmul.f32 %v350, 2.0
  %v541 = vmul.f32 %v352, 2.0
  %v542 = vmul.f32 %v354, 2.0
  %v543 = vmul.f32 %v356, 2.0
  %v544 = vmul.f32 %v358, 2.0
  %v545 = vmul.f32 %v360, 2.0
  %v546 = vmul.f32 %v362, 2.0
  %v547 = vmul.f32 %v364, 2.0
  %v548 = vmul.f32 %v366, 2.0
  %v549 = vmul.f32 %v368, 2.0
  %v550 = vmul.f32 %v370, 2.0
  %v551 = vmul.f32 %v372, 2.0
  %v552 = vmul.f32 %v374, 2.0
  %v553 = vmul.f32 %v376, 2.0
  %v554 = vmul.f32 %v378, 2.0
  %v555 = vmul.f32 %v380, 2.0
  %v556 = vmul.f32 %v382, 2.0
  %v557 = vmul.f32 %v384, 2.0
  %v558 = vmul.f32 %v386, 2.0
  %v559 = vmul.f32 %v388, 2.0
  %v560 = vmul.f32 %v390, 2.0
  %v561 = vmul.f32 %v392, 2.0
  %v562 = vmul.f32 %v394, 2.0
  %v563 = vmul.f32 %v396, 2.0
  %v564 = vmul.f32 %v398, 2.0
  %v565 = vmul.f32 %v400, 2.0
  %v566 = vmul.f32 %v402, 2.0
  %v567 = vmul.f32 %v404, 2.0
  %v568 = vmul.f32 %v406, 2.0
  %v569 = vmul.f32 %v408, 2.0
  %v570 = vmul.f32 %v410, 2.0
  %v571 = vmul.f32 %v412, 2.0
  %v572 = vmul.f32 %v414, 2.0
  %v573 = vmul.f32 %v416, 2.0
  %v574 = vmul.f32 %v418, 2.0
  %v575 = vmul.f32 %v420, 2.0
  %v576 = vmul.f32 %v422, 2.0
  %v577 = vmul.f32 %v424, 2.0
  %v578 = vmul.f32 %v426, 2.0
  %v579 = vmul.f32 %v428, 2.0
  %v580 = vmul.f32 %v430, 2.0
  %v581 = vmul.f32 %v432, 2.0
  %v582 = vmul.f32 %v434, 2.0
  %v583 = vmul.f32 %v436, 2.0
  %v584 = vmul.f32 %v438, 2.0
  %v585 = vmul.f32 %v440, 2.0
  %v586 = vmul.f32 %v442, 2.0
  %v587 = vmul.f32 %v444, 2.0
  %v588 = vmul.f32 %v446, 2.0
  %v589 = vmul.f32 %v448, 2.0
  %v590 = vmul.f32 %v450, 2.0
  %v591 = vmul.f32 %v452, 2.0
  %v592 = vmul.f32 %v454, 2.0
  %v593 = vmul.f32 %v456, 2.0
  %v594 = vmul.f32 %v458, 2.0
  %v595 = vmul.f32 %v460, 2.0
  %v596 = vmul.f32 %v462, 2.0
  %v597 = vmul.f32 %v464, 2.0
  %v598 = vmul.f32 %v466, 2.0
  %v599 = vmul.f32 %v468, 2.0
  %v600 = vmul.f32 %v470, 2.0
  %v601 = vmul.f32 %v472, 2.0
  %v602 = vmul.f32 %v474, 2.0
  %v603 = vadd.f32 %v475, %v539
  %v604 = vadd.f32 %v476, %v540
  %v605 = vadd.f32 %v477, %v541
  %v606 = vadd.f32 %v478, %v542
  %v607 = vadd.f32 %v479, %v543
  %v608 = vadd.f32 %v480, %v544
  %v609 = vadd.f32 %v481, %v545
  %v610 = vadd.f32 %v482, %v546
  %v611 = vadd.f32 %v483, %v547
  %v612 = vadd.f32 %v484, %v548
  %v613 = vadd.f32 %v485, %v549
  %v614 = vadd.f32 %v486, %v550
  %v615 = vadd.f32 %v487, %v551
  %v616 = vadd.f32 %v488, %v552
  %v617 = vadd.f32 %v489, %v553
  %v618 = vadd.f32 %v490, %v554
  %v619 = vadd.f32 %v491, %v555
  %v620 = vadd.f32 %v492, %v556
  %v621 = vadd.f32 %v493, %v557
  %v622 = vadd.f32 %v494, %v558
  %v623 = vadd.f32 %v495, %v559
  %v624 = vadd.f32 %v496, %v560
  %v625 = vadd.f32 %v497, %v561
  %v626 = vadd.f32 %v498, %v562
  %v627 = vadd.f32 %v499, %v563
  %v628 = vadd.f32 %v500, %v564
  %v629 = vadd.f32 %v501, %v565
  %v630 = vadd.f32 %v502, %v566
  %v631 = vadd.f32 %v503, %v567
  %v632 = vadd.f32 %v504, %v568
  %v633 = vadd.f32 %v505, %v569
  %v634 = vadd.f32 %v506, %v570
  %v635 = vadd.f32 %v507, %v571
  %v636 = vadd.f32 %v508, %v572
  %v637 = vadd.f32 %v509, %v573
  %v638 = vadd.f32 %v510, %v574
  %v639 = vadd.f32 %v511, %v575
  %v640 = vadd.f32 %v512, %v576
  %v641 = vadd.f32 %v513, %v577
  %v642 = vadd.f32 %v514, %v578
  %v643 = vadd.f32 %v515, %v579
  %v644 = vadd.f32 %v516, %v580
  %v645 = vadd.f32 %v517, %v581
  %v646 = vadd.f32 %v518, %v582
  %v647 = vadd.f32 %v519, %v583
  %v648 = vadd.f32 %v520, %v584
  %v649 = vadd.f32 %v521, %v585
  %v650 = vadd.f32 %v522, %v586
  %v651 = vadd.f32 %v523, %v587
  %v652 = vadd.f32 %v524, %v588
  %v653 = vadd.f32 %v525, %v589
  %v654 = vadd.f32 %v526, %v590
  %v655 = vadd.f32 %v527, %v591
  %v656 = vadd.f32 %v528, %v592
  %v657 = vadd.f32 %v529, %v593
  %v658 = vadd.f32 %v530, %v594
  %v659 = vadd.f32 %v531, %v595
  %v660 = vadd.f32 %v532, %v596
  %v661 = vadd.f32 %v533, %v597
  %v662 = vadd.f32 %v534, %v598
  %v663 = vadd.f32 %v535, %v599
  %v664 = vadd.f32 %v536, %v600
  %v665 = vadd.f32 %v537, %v601
  %v666 = vadd.f32 %v538, %v602
  %v667 = vmul.f32 %v219, %v603
  %v668 = vmul.f32 %v220, %v604
  %v669 = vmul.f32 %v221, %v605
  %v670 = vmul.f32 %v222, %v606
  %v671 = vmul.f32 %v223, %v607
  %v672 = vmul.f32 %v224, %v608
  %v673 = vmul.f32 %v225, %v609
  %v674 = vmul.f32 %v226, %v610
  %v675 = vmul.f32 %v227, %v611
  %v676 = vmul.f32 %v228, %v612
  %v677 = vmul.f32 %v229, %v613
  %v678 = vmul.f32 %v230, %v614
  %v679 = vmul.f32 %v231, %v615
  %v680 = vmul.f32 %v232, %v616
  %v681 = vmul.f32 %v233, %v617
  %v682 = vmul.f32 %v234, %v618
  %v683 = vmul.f32 %v235, %v619
  %v684 = vmul.f32 %v236, %v620
  %v685 = vmul.f32 %v237, %v621
  %v686 = vmul.f32 %v238, %v622
  %v687 = vmul.f32 %v239, %v623
  %v688 = vmul.f32 %v240, %v624
  %v689 = vmul.f32 %v241, %v625
  %v690 = vmul.f32 %v242, %v626
  %v691 = vmul.f32 %v243, %v627
  %v692 = vmul.f32 %v244, %v628
  %v693 = vmul.f32 %v245, %v629
  %v694 = vmul.f32 %v246, %v630
  %v695 = vmul.f32 %v247, %v631
  %v696 = vmul.f32 %v248, %v632
  %v697 = vmul.f32 %v249, %v633
  %v698 = vmul.f32 %v250, %v634
  %v699 = vmul.f32 %v251, %v635
  %v700 = vmul.f32 %v252, %v636
  %v701 = vmul.f32 %v253, %v637
  %v702 = vmul.f32 %v254, %v638
  %v703 = vmul.f32 %v255, %v639
  %v704 = vmul.f32 %v256, %v640
  %v705 = vmul.f32 %v257, %v641
  %v706 = vmul.f32 %v258, %v642
  %v707 = vmul.f32 %v259, %v643
  %v708 = vmul.f32 %v260, %v644
  %v709 = vmul.f32 %v261, %v645
  %v710 = vmul.f32 %v262, %v646
  %v711 = vmul.f32 %v263, %v647
  %v712 = vmul.f32 %v264, %v648
  %v713 = vmul.f32 %v265, %v649
  %v714 = vmul.f32 %v266, %v650
  %v715 = vmul.f32 %v267, %v651
  %v716 = vmul.f32 %v268, %v652
  %v717 = vmul.f32 %v269, %v653
  %v718 = vmul.f32 %v270, %v654
  %v719 = vmul.f32 %v271, %v655
  %v720 = vmul.f32 %v272, %v656
  %v721 = vmul.f32 %v273, %v657
  %v722 = vmul.f32 %v274, %v658
  %v723 = vmul.f32 %v275, %v659
  %v724 = vmul.f32 %v276, %v660
  %v725 = vmul.f32 %v277, %v661
  %v726 = vmul.f32 %v278, %v662
  %v727 = vmul.f32 %v279, %v663
  %v728 = vmul.f32 %v280, %v664
  %v729 = vmul.f32 %v281, %v665
  %v730 = vmul.f32 %v282, %v666
  %v731 = vadd.f32 %v603, 2.0
  %v732 = vadd.f32 %v604, 2.0
  %v733 = vadd.f32 %v605, 2.0
  %v734 = vadd.f32 %v606, 2.0
  %v735 = vadd.f32 %v607, 2.0
  %v736 = vadd.f32 %v608, 2.0
  %v737 = vadd.f32 %v609, 2.0
  %v738 = vadd.f32 %v610, 2.0
  %v739 = vadd.f32 %v611, 2.0
  %v740 = vadd.f32 %v612, 2.0
  %v741 = vadd.f32 %v613, 2.0
  %v742 = vadd.f32 %v614, 2.0
  %v743 = vadd.f32 %v615, 2.0
  %v744 = vadd.f32 %v616, 2.0
  %v745 = vadd.f32 %v617, 2.0
  %v746 = vadd.f32 %v618, 2.0
  %v747 = vadd.f32 %v619, 2.0
  %v748 = vadd.f32 %v620, 2.0
  %v749 = vadd.f32 %v621, 2.0
  %v750 = vadd.f32 %v622, 2.0
  %v751 = vadd.f32 %v623, 2.0
  %v752 = vadd.f32 %v624, 2.0
  %v753 = vadd.f32 %v625, 2.0
  %v754 = vadd.f32 %v626, 2.0
  %v755 = vadd.f32 %v627, 2.0
  %v756 = vadd.f32 %v628, 2.0
  %v757 = vadd.f32 %v629, 2.0
  %v758 = vadd.f32 %v630, 2.0
  %v759 = vadd.f32 %v631, 2.0
  %v760 = vadd.f32 %v632, 2.0
  %v761 = vadd.f32 %v633, 2.0
  %v762 = vadd.f32 %v634, 2.0
  %v763 = vadd.f32 %v635, 2.0
  %v764 = vadd.f32 %v636, 2.0
  %v765 = vadd.f32 %v637, 2.0
  %v766 = vadd.f32 %v638, 2.0
  %v767 = vadd.f32 %v639, 2.0
  %v768 = vadd.f32 %v640, 2.0
  %v769 = vadd.f32 %v641, 2.0
  %v770 = vadd.f32 %v642, 2.0
  %v771 = vadd.f32 %v643, 2.0
  %v772 = vadd.f32 %v644, 2.0
  %v773 = vadd.f32 %v645, 2.0
  %v774 = vadd.f32 %v646, 2.0
  %v775 = vadd.f32 %v647, 2.0
  %v776 = vadd.f32 %v648, 2.0
  %v777 = vadd.f32 %v649, 2.0
  %v778 = vadd.f32 %v650, 2.0
  %v779 = vadd.f32 %v651, 2.0
  %v780 = vadd.f32 %v652, 2.0
  %v781 = vadd.f32 %v653, 2.0
  %v782 = vadd.f32 %v654, 2.0
  %v783 = vadd.f32 %v655, 2.0
  %v784 = vadd.f32 %v656, 2.0
  %v785 = vadd.f32 %v657, 2.0
  %v786 = vadd.f32 %v658, 2.0
  %v787 = vadd.f32 %v659, 2.0
  %v788 = vadd.f32 %v660, 2.0
  %v789 = vadd.f32 %v661, 2.0
  %v790 = vadd.f32 %v662, 2.0
  %v791 = vadd.f32 %v663, 2.0
  %v792 = vadd.f32 %v664, 2.0
  %v793 = vadd.f32 %v665, 2.0
  %v794 = vadd.f32 %v666, 2.0
  %v795 = vrcp.pop %v731
  %v796 = vrcp.pop %v732
  %v797 = vrcp.pop %v733
  %v798 = vrcp.pop %v734
  %v799 = vrcp.pop %v735
  %v800 = vrcp.pop %v736
  %v801 = vrcp.pop %v737
  %v802 = vrcp.pop %v738
  %v803 = vrcp.pop %v739
  %v804 = vrcp.pop %v740
  %v805 = vrcp.pop %v741
  %v806 = vrcp.pop %v742
  %v807 = vrcp.pop %v743
  %v808 = vrcp.pop %v744
  %v809 = vrcp.pop %v745
  %v810 = vrcp.pop %v746
  %v811 = vrcp.pop %v747
  %v812 = vrcp.pop %v748
  %v813 = vrcp.pop %v749
  %v814 = vrcp.pop %v750
  %v815 = vrcp.pop %v751
  %v816 = vrcp.pop %v752
  %v817 = vrcp.pop %v753
  %v818 = vrcp.pop %v754
  %v819 = vrcp.pop %v755
  %v820 = vrcp.pop %v756
  %v821 = vrcp.pop %v757
  %v822 = vrcp.pop %v758
  %v823 = vrcp.pop %v759
  %v824 = vrcp.pop %v760
  %v825 = vrcp.pop %v761
  %v826 = vrcp.pop %v762
  %v827 = vrcp.pop %v763
  %v828 = vrcp.pop %v764
  %v829 = vrcp.pop %v765
  %v830 = vrcp.pop %v766
  %v831 = vrcp.pop %v767
  %v832 = vrcp.pop %v768
  %v833 = vrcp.pop %v769
  %v834 = vrcp.pop %v770
  %v835 = vrcp.pop %v771
  %v836 = vrcp.pop %v772
  %v837 = vrcp.pop %v773
  %v838 = vrcp.pop %v774
  %v839 = vrcp.pop %v775
  %v840 = vrcp.pop %v776
  %v841 = vrcp.pop %v777
  %v842 = vrcp.pop %v778
  %v843 = vrcp.pop %v779
  %v844 = vrcp.pop %v780
  %v845 = vrcp.pop %v781
  %v846 = vrcp.pop %v782
  %v847 = vrcp.pop %v783
  %v848 = vrcp.pop %v784
  %v849 = vrcp.pop %v785
  %v850 = vrcp.pop %v786
  %v851 = vrcp.pop %v787
  %v852 = vrcp.pop %v788
  %v853 = vrcp.pop %v789
  %v854 = vrcp.pop %v790
  %v855 = vrcp.pop %v791
  %v856 = vrcp.pop %v792
  %v857 = vrcp.pop %v793
  %v858 = vrcp.pop %v794
  %v859 = vmul.f32 %v667, %v795
  %v860 = vmul.f32 %v668, %v796
  %v861 = vmul.f32 %v669, %v797
  %v862 = vmul.f32 %v670, %v798
  %v863 = vmul.f32 %v671, %v799
  %v864 = vmul.f32 %v672, %v800
  %v865 = vmul.f32 %v673, %v801
  %v866 = vmul.f32 %v674, %v802
  %v867 = vmul.f32 %v675, %v803
  %v868 = vmul.f32 %v676, %v804
  %v869 = vmul.f32 %v677, %v805
  %v870 = vmul.f32 %v678, %v806
  %v871 = vmul.f32 %v679, %v807
  %v872 = vmul.f32 %v680, %v808
  %v873 = vmul.f32 %v681, %v809
  %v874 = vmul.f32 %v682, %v810
  %v875 = vmul.f32 %v683, %v811
  %v876 = vmul.f32 %v684, %v812
  %v877 = vmul.f32 %v685, %v813
  %v878 = vmul.f32 %v686, %v814
  %v879 = vmul.f32 %v687, %v815
  %v880 = vmul.f32 %v688, %v816
  %v881 = vmul.f32 %v689, %v817
  %v882 = vmul.f32 %v690, %v818
  %v883 = vmul.f32 %v691, %v819
  %v884 = vmul.f32 %v692, %v820
  %v885 = vmul.f32 %v693, %v821
  %v886 = vmul.f32 %v694, %v822
  %v887 = vmul.f32 %v695, %v823
  %v888 = vmul.f32 %v696, %v824
  %v889 = vmul.f32 %v697, %v825
  %v890 = vmul.f32 %v698, %v826
  %v891 = vmul.f32 %v699, %v827
  %v892 = vmul.f32 %v700, %v828
  %v893 = vmul.f32 %v701, %v829
  %v894 = vmul.f32 %v702, %v830
  %v895 = vmul.f32 %v703, %v831
  %v896 = vmul.f32 %v704, %v832
  %v897 = vmul.f32 %v705, %v833
  %v898 = vmul.f32 %v706, %v834
  %v899 = vmul.f32 %v707, %v835
  %v900 = vmul.f32 %v708, %v836
  %v901 = vmul.f32 %v709, %v837
  %v902 = vmul.f32 %v710, %v838
  %v903 = vmul.f32 %v711, %v839
  %v904 = vmul.f32 %v712, %v840
  %v905 = vmul.f32 %v713, %v841
  %v906 = vmul.f32 %v714, %v842
  %v907 = vmul.f32 %v715, %v843
  %v908 = vmul.f32 %v716, %v844
  %v909 = vmul.f32 %v717, %v845
  %v910 = vmul.f32 %v718, %v846
  %v911 = vmul.f32 %v719, %v847
  %v912 = vmul.f32 %v720, %v848
  %v913 = vmul.f32 %v721, %v849
  %v914 = vmul.f32 %v722, %v850
  %v915 = vmul.f32 %v723, %v851
  %v916 = vmul.f32 %v724, %v852
  %v917 = vmul.f32 %v725, %v853
  %v918 = vmul.f32 %v726, %v854
  %v919 = vmul.f32 %v727, %v855
  %v920 = vmul.f32 %v728, %v856
  %v921 = vmul.f32 %v729, %v857
  %v922 = vmul.f32 %v730, %v858
  %vm923 = vcmp.gt.f32.partialorder %v219, 20.0
  %vm924 = vcmp.gt.f32.partialorder %v220, 20.0
  %vm925 = vcmp.gt.f32.partialorder %v221, 20.0
  %vm926 = vcmp.gt.f32.partialorder %v222, 20.0
  %vm927 = vcmp.gt.f32.partialorder %v223, 20.0
  %vm928 = vcmp.gt.f32.partialorder %v224, 20.0
  %vm929 = vcmp.gt.f32.partialorder %v225, 20.0
  %vm930 = vcmp.gt.f32.partialorder %v226, 20.0
  %vm931 = vcmp.gt.f32.partialorder %v227, 20.0
  %vm932 = vcmp.gt.f32.partialorder %v228, 20.0
  %vm933 = vcmp.gt.f32.partialorder %v229, 20.0
  %vm934 = vcmp.gt.f32.partialorder %v230, 20.0
  %vm935 = vcmp.gt.f32.partialorder %v231, 20.0
  %vm936 = vcmp.gt.f32.partialorder %v232, 20.0
  %vm937 = vcmp.gt.f32.partialorder %v233, 20.0
  %vm938 = vcmp.gt.f32.partialorder %v234, 20.0
  %vm939 = vcmp.gt.f32.partialorder %v235, 20.0
  %vm940 = vcmp.gt.f32.partialorder %v236, 20.0
  %vm941 = vcmp.gt.f32.partialorder %v237, 20.0
  %vm942 = vcmp.gt.f32.partialorder %v238, 20.0
  %vm943 = vcmp.gt.f32.partialorder %v239, 20.0
  %vm944 = vcmp.gt.f32.partialorder %v240, 20.0
  %vm945 = vcmp.gt.f32.partialorder %v241, 20.0
  %vm946 = vcmp.gt.f32.partialorder %v242, 20.0
  %vm947 = vcmp.gt.f32.partialorder %v243, 20.0
  %vm948 = vcmp.gt.f32.partialorder %v244, 20.0
  %vm949 = vcmp.gt.f32.partialorder %v245, 20.0
  %vm950 = vcmp.gt.f32.partialorder %v246, 20.0
  %vm951 = vcmp.gt.f32.partialorder %v247, 20.0
  %vm952 = vcmp.gt.f32.partialorder %v248, 20.0
  %vm953 = vcmp.gt.f32.partialorder %v249, 20.0
  %vm954 = vcmp.gt.f32.partialorder %v250, 20.0
  %vm955 = vcmp.gt.f32.partialorder %v251, 20.0
  %vm956 = vcmp.gt.f32.partialorder %v252, 20.0
  %vm957 = vcmp.gt.f32.partialorder %v253, 20.0
  %vm958 = vcmp.gt.f32.partialorder %v254, 20.0
  %vm959 = vcmp.gt.f32.partialorder %v255, 20.0
  %vm960 = vcmp.gt.f32.partialorder %v256, 20.0
  %vm961 = vcmp.gt.f32.partialorder %v257, 20.0
  %vm962 = vcmp.gt.f32.partialorder %v258, 20.0
  %vm963 = vcmp.gt.f32.partialorder %v259, 20.0
  %vm964 = vcmp.gt.f32.partialorder %v260, 20.0
  %vm965 = vcmp.gt.f32.partialorder %v261, 20.0
  %vm966 = vcmp.gt.f32.partialorder %v262, 20.0
  %vm967 = vcmp.gt.f32.partialorder %v263, 20.0
  %vm968 = vcmp.gt.f32.partialorder %v264, 20.0
  %vm969 = vcmp.gt.f32.partialorder %v265, 20.0
  %vm970 = vcmp.gt.f32.partialorder %v266, 20.0
  %vm971 = vcmp.gt.f32.partialorder %v267, 20.0
  %vm972 = vcmp.gt.f32.partialorder %v268, 20.0
  %vm973 = vcmp.gt.f32.partialorder %v269, 20.0
  %vm974 = vcmp.gt.f32.partialorder %v270, 20.0
  %vm975 = vcmp.gt.f32.partialorder %v271, 20.0
  %vm976 = vcmp.gt.f32.partialorder %v272, 20.0
  %vm977 = vcmp.gt.f32.partialorder %v273, 20.0
  %vm978 = vcmp.gt.f32.partialorder %v274, 20.0
  %vm979 = vcmp.gt.f32.partialorder %v275, 20.0
  %vm980 = vcmp.gt.f32.partialorder %v276, 20.0
  %vm981 = vcmp.gt.f32.partialorder %v277, 20.0
  %vm982 = vcmp.gt.f32.partialorder %v278, 20.0
  %vm983 = vcmp.gt.f32.partialorder %v279, 20.0
  %vm984 = vcmp.gt.f32.partialorder %v280, 20.0
  %vm985 = vcmp.gt.f32.partialorder %v281, 20.0
  %vm986 = vcmp.gt.f32.partialorder %v282, 20.0
  %v987 = vsel %vm923, %v219, %v859
  %v988 = vsel %vm924, %v220, %v860
  %v989 = vsel %vm925, %v221, %v861
  %v990 = vsel %vm926, %v222, %v862
  %v991 = vsel %vm927, %v223, %v863
  %v992 = vsel %vm928, %v224, %v864
  %v993 = vsel %vm929, %v225, %v865
  %v994 = vsel %vm930, %v226, %v866
  %v995 = vsel %vm931, %v227, %v867
  %v996 = vsel %vm932, %v228, %v868
  %v997 = vsel %vm933, %v229, %v869
  %v998 = vsel %vm934, %v230, %v870
  %v999 = vsel %vm935, %v231, %v871
  %v1000 = vsel %vm936, %v232, %v872
  %v1001 = vsel %vm937, %v233, %v873
  %v1002 = vsel %vm938, %v234, %v874
  %v1003 = vsel %vm939, %v235, %v875
  %v1004 = vsel %vm940, %v236, %v876
  %v1005 = vsel %vm941, %v237, %v877
  %v1006 = vsel %vm942, %v238, %v878
  %v1007 = vsel %vm943, %v239, %v879
  %v1008 = vsel %vm944, %v240, %v880
  %v1009 = vsel %vm945, %v241, %v881
  %v1010 = vsel %vm946, %v242, %v882
  %v1011 = vsel %vm947, %v243, %v883
  %v1012 = vsel %vm948, %v244, %v884
  %v1013 = vsel %vm949, %v245, %v885
  %v1014 = vsel %vm950, %v246, %v886
  %v1015 = vsel %vm951, %v247, %v887
  %v1016 = vsel %vm952, %v248, %v888
  %v1017 = vsel %vm953, %v249, %v889
  %v1018 = vsel %vm954, %v250, %v890
  %v1019 = vsel %vm955, %v251, %v891
  %v1020 = vsel %vm956, %v252, %v892
  %v1021 = vsel %vm957, %v253, %v893
  %v1022 = vsel %vm958, %v254, %v894
  %v1023 = vsel %vm959, %v255, %v895
  %v1024 = vsel %vm960, %v256, %v896
  %v1025 = vsel %vm961, %v257, %v897
  %v1026 = vsel %vm962, %v258, %v898
  %v1027 = vsel %vm963, %v259, %v899
  %v1028 = vsel %vm964, %v260, %v900
  %v1029 = vsel %vm965, %v261, %v901
  %v1030 = vsel %vm966, %v262, %v902
  %v1031 = vsel %vm967, %v263, %v903
  %v1032 = vsel %vm968, %v264, %v904
  %v1033 = vsel %vm969, %v265, %v905
  %v1034 = vsel %vm970, %v266, %v906
  %v1035 = vsel %vm971, %v267, %v907
  %v1036 = vsel %vm972, %v268, %v908
  %v1037 = vsel %vm973, %v269, %v909
  %v1038 = vsel %vm974, %v270, %v910
  %v1039 = vsel %vm975, %v271, %v911
  %v1040 = vsel %vm976, %v272, %v912
  %v1041 = vsel %vm977, %v273, %v913
  %v1042 = vsel %vm978, %v274, %v914
  %v1043 = vsel %vm979, %v275, %v915
  %v1044 = vsel %vm980, %v276, %v916
  %v1045 = vsel %vm981, %v277, %v917
  %v1046 = vsel %vm982, %v278, %v918
  %v1047 = vsel %vm983, %v279, %v919
  %v1048 = vsel %vm984, %v280, %v920
  %v1049 = vsel %vm985, %v281, %v921
  %v1050 = vsel %vm986, %v282, %v922
  %v1051 = vpack.c.bf16 %v988, %v987
  %v1052 = vpack.c.bf16 %v990, %v989
  %v1053 = vpack.c.bf16 %v992, %v991
  %v1054 = vpack.c.bf16 %v994, %v993
  %v1055 = vpack.c.bf16 %v996, %v995
  %v1056 = vpack.c.bf16 %v998, %v997
  %v1057 = vpack.c.bf16 %v1000, %v999
  %v1058 = vpack.c.bf16 %v1002, %v1001
  %v1059 = vpack.c.bf16 %v1004, %v1003
  %v1060 = vpack.c.bf16 %v1006, %v1005
  %v1061 = vpack.c.bf16 %v1008, %v1007
  %v1062 = vpack.c.bf16 %v1010, %v1009
  %v1063 = vpack.c.bf16 %v1012, %v1011
  %v1064 = vpack.c.bf16 %v1014, %v1013
  %v1065 = vpack.c.bf16 %v1016, %v1015
  %v1066 = vpack.c.bf16 %v1018, %v1017
  %v1067 = vpack.c.bf16 %v1020, %v1019
  %v1068 = vpack.c.bf16 %v1022, %v1021
  %v1069 = vpack.c.bf16 %v1024, %v1023
  %v1070 = vpack.c.bf16 %v1026, %v1025
  %v1071 = vpack.c.bf16 %v1028, %v1027
  %v1072 = vpack.c.bf16 %v1030, %v1029
  %v1073 = vpack.c.bf16 %v1032, %v1031
  %v1074 = vpack.c.bf16 %v1034, %v1033
  %v1075 = vpack.c.bf16 %v1036, %v1035
  %v1076 = vpack.c.bf16 %v1038, %v1037
  %v1077 = vpack.c.bf16 %v1040, %v1039
  %v1078 = vpack.c.bf16 %v1042, %v1041
  %v1079 = vpack.c.bf16 %v1044, %v1043
  %v1080 = vpack.c.bf16 %v1046, %v1045
  %v1081 = vpack.c.bf16 %v1048, %v1047
  %v1082 = vpack.c.bf16 %v1050, %v1049
  %v1083 = vld [vmem:[%s3] sm:$0xf]
  %v1084 = vld [vmem:[%s3 + $0x4] sm:$0xf]
  %v1085 = vld [vmem:[%s3 + $0x8] sm:$0xf]
  %v1086 = vld [vmem:[%s3 + $0xc] sm:$0xf]
  %v1087 = vld [vmem:[%s3 + $0x10] sm:$0xf]
  %v1088 = vld [vmem:[%s3 + $0x14] sm:$0xf]
  %v1089 = vld [vmem:[%s3 + $0x18] sm:$0xf]
  %v1090 = vld [vmem:[%s3 + $0x1c] sm:$0xf]
  %v1091 = vld [vmem:[%s3 + $0x20] sm:$0xf]
  %v1092 = vld [vmem:[%s3 + $0x24] sm:$0xf]
  %v1093 = vld [vmem:[%s3 + $0x28] sm:$0xf]
  %v1094 = vld [vmem:[%s3 + $0x2c] sm:$0xf]
  %v1095 = vld [vmem:[%s3 + $0x30] sm:$0xf]
  %v1096 = vld [vmem:[%s3 + $0x34] sm:$0xf]
  %v1097 = vld [vmem:[%s3 + $0x38] sm:$0xf]
  %v1098 = vld [vmem:[%s3 + $0x3c] sm:$0xf]
  %v1115 = vunpack.c.l.b16 %v1083
  %v1116 = vunpack.c.l.b16 %v1084
  %v1117 = vunpack.c.l.b16 %v1085
  %v1118 = vunpack.c.l.b16 %v1086
  %v1119 = vunpack.c.l.b16 %v1087
  %v1120 = vunpack.c.l.b16 %v1088
  %v1121 = vunpack.c.l.b16 %v1089
  %v1122 = vunpack.c.l.b16 %v1090
  %v1123 = vunpack.c.l.b16 %v1091
  %v1124 = vunpack.c.l.b16 %v1092
  %v1125 = vunpack.c.l.b16 %v1093
  %v1126 = vunpack.c.l.b16 %v1094
  %v1127 = vunpack.c.l.b16 %v1095
  %v1128 = vunpack.c.l.b16 %v1096
  %v1129 = vunpack.c.l.b16 %v1097
  %v1130 = vunpack.c.l.b16 %v1098
  %v1131 = vpack.c.b16 %v1116, %v1115
  %v1132 = vpack.c.b16 %v1118, %v1117
  %v1133 = vpack.c.b16 %v1120, %v1119
  %v1134 = vpack.c.b16 %v1122, %v1121
  %v1135 = vpack.c.b16 %v1124, %v1123
  %v1136 = vpack.c.b16 %v1126, %v1125
  %v1137 = vpack.c.b16 %v1128, %v1127
  %v1138 = vpack.c.b16 %v1130, %v1129
  %1147 = vmatpush.bf16.msra.mxu0 %v1138
  %1148 = vmatpush.bf16.msra.mxu0 %v1137
  %1149 = vmatpush.bf16.msra.mxu0 %v1136
  %1150 = vmatpush.bf16.msra.mxu0 %v1135
  %1151 = vmatpush.bf16.msra.mxu0 %v1134
  %1152 = vmatpush.bf16.msra.mxu0 %v1133
  %1153 = vmatpush.bf16.msra.mxu0 %v1132
  %1154 = vmatpush.bf16.msra.mxu0 %v1131
  %1155 = vmatmul.bf16.gmra.mxu0 %v1051
  %v1156 = vpop.f32.mrf.mxu0
  %v1157 = vadd.f32 0.0, %v1156
  %v1158 = vpop.f32.mrf.mxu0
  %v1159 = vadd.f32 0.0, %v1158
  %1160 = vmatmul.bf16.gmra.mxu0 %v1052
  %v1161 = vpop.f32.mrf.mxu0
  %v1162 = vadd.f32 0.0, %v1161
  %v1163 = vpop.f32.mrf.mxu0
  %v1164 = vadd.f32 0.0, %v1163
  %1165 = vmatmul.bf16.gmra.mxu0 %v1053
  %v1166 = vpop.f32.mrf.mxu0
  %v1167 = vadd.f32 0.0, %v1166
  %v1168 = vpop.f32.mrf.mxu0
  %v1169 = vadd.f32 0.0, %v1168
  %1170 = vmatmul.bf16.gmra.mxu0 %v1054
  %v1171 = vpop.f32.mrf.mxu0
  %v1172 = vadd.f32 0.0, %v1171
  %v1173 = vpop.f32.mrf.mxu0
  %v1174 = vadd.f32 0.0, %v1173
  %1175 = vmatmul.bf16.gmra.mxu0 %v1055
  %v1176 = vpop.f32.mrf.mxu0
  %v1177 = vadd.f32 0.0, %v1176
  %v1178 = vpop.f32.mrf.mxu0
  %v1179 = vadd.f32 0.0, %v1178
  %1180 = vmatmul.bf16.gmra.mxu0 %v1056
  %v1181 = vpop.f32.mrf.mxu0
  %v1182 = vadd.f32 0.0, %v1181
  %v1183 = vpop.f32.mrf.mxu0
  %v1184 = vadd.f32 0.0, %v1183
  %1185 = vmatmul.bf16.gmra.mxu0 %v1057
  %v1186 = vpop.f32.mrf.mxu0
  %v1187 = vadd.f32 0.0, %v1186
  %v1188 = vpop.f32.mrf.mxu0
  %v1189 = vadd.f32 0.0, %v1188
  %1190 = vmatmul.bf16.gmra.mxu0 %v1058
  %v1191 = vpop.f32.mrf.mxu0
  %v1192 = vadd.f32 0.0, %v1191
  %v1193 = vpop.f32.mrf.mxu0
  %v1194 = vadd.f32 0.0, %v1193
  %1195 = vmatmul.bf16.gmra.mxu0 %v1059
  %v1196 = vpop.f32.mrf.mxu0
  %v1197 = vadd.f32 0.0, %v1196
  %v1198 = vpop.f32.mrf.mxu0
  %v1199 = vadd.f32 0.0, %v1198
  %1200 = vmatmul.bf16.gmra.mxu0 %v1060
  %v1201 = vpop.f32.mrf.mxu0
  %v1202 = vadd.f32 0.0, %v1201
  %v1203 = vpop.f32.mrf.mxu0
  %v1204 = vadd.f32 0.0, %v1203
  %1205 = vmatmul.bf16.gmra.mxu0 %v1061
  %v1206 = vpop.f32.mrf.mxu0
  %v1207 = vadd.f32 0.0, %v1206
  %v1208 = vpop.f32.mrf.mxu0
  %v1209 = vadd.f32 0.0, %v1208
  %1210 = vmatmul.bf16.gmra.mxu0 %v1062
  %v1211 = vpop.f32.mrf.mxu0
  %v1212 = vadd.f32 0.0, %v1211
  %v1213 = vpop.f32.mrf.mxu0
  %v1214 = vadd.f32 0.0, %v1213
  %1215 = vmatmul.bf16.gmra.mxu0 %v1063
  %v1216 = vpop.f32.mrf.mxu0
  %v1217 = vadd.f32 0.0, %v1216
  %v1218 = vpop.f32.mrf.mxu0
  %v1219 = vadd.f32 0.0, %v1218
  %1220 = vmatmul.bf16.gmra.mxu0 %v1064
  %v1221 = vpop.f32.mrf.mxu0
  %v1222 = vadd.f32 0.0, %v1221
  %v1223 = vpop.f32.mrf.mxu0
  %v1224 = vadd.f32 0.0, %v1223
  %1225 = vmatmul.bf16.gmra.mxu0 %v1065
  %v1226 = vpop.f32.mrf.mxu0
  %v1227 = vadd.f32 0.0, %v1226
  %v1228 = vpop.f32.mrf.mxu0
  %v1229 = vadd.f32 0.0, %v1228
  %1230 = vmatmul.bf16.gmra.mxu0 %v1066
  %v1231 = vpop.f32.mrf.mxu0
  %v1232 = vadd.f32 0.0, %v1231
  %v1233 = vpop.f32.mrf.mxu0
  %v1234 = vadd.f32 0.0, %v1233
  %1235 = vmatmul.bf16.gmra.mxu0 %v1067
  %v1236 = vpop.f32.mrf.mxu0
  %v1237 = vadd.f32 0.0, %v1236
  %v1238 = vpop.f32.mrf.mxu0
  %v1239 = vadd.f32 0.0, %v1238
  %1240 = vmatmul.bf16.gmra.mxu0 %v1068
  %v1241 = vpop.f32.mrf.mxu0
  %v1242 = vadd.f32 0.0, %v1241
  %v1243 = vpop.f32.mrf.mxu0
  %v1244 = vadd.f32 0.0, %v1243
  %1245 = vmatmul.bf16.gmra.mxu0 %v1069
  %v1246 = vpop.f32.mrf.mxu0
  %v1247 = vadd.f32 0.0, %v1246
  %v1248 = vpop.f32.mrf.mxu0
  %v1249 = vadd.f32 0.0, %v1248
  %1250 = vmatmul.bf16.gmra.mxu0 %v1070
  %v1251 = vpop.f32.mrf.mxu0
  %v1252 = vadd.f32 0.0, %v1251
  %v1253 = vpop.f32.mrf.mxu0
  %v1254 = vadd.f32 0.0, %v1253
  %1255 = vmatmul.bf16.gmra.mxu0 %v1071
  %v1256 = vpop.f32.mrf.mxu0
  %v1257 = vadd.f32 0.0, %v1256
  %v1258 = vpop.f32.mrf.mxu0
  %v1259 = vadd.f32 0.0, %v1258
  %1260 = vmatmul.bf16.gmra.mxu0 %v1072
  %v1261 = vpop.f32.mrf.mxu0
  %v1262 = vadd.f32 0.0, %v1261
  %v1263 = vpop.f32.mrf.mxu0
  %v1264 = vadd.f32 0.0, %v1263
  %1265 = vmatmul.bf16.gmra.mxu0 %v1073
  %v1266 = vpop.f32.mrf.mxu0
  %v1267 = vadd.f32 0.0, %v1266
  %v1268 = vpop.f32.mrf.mxu0
  %v1269 = vadd.f32 0.0, %v1268
  %1270 = vmatmul.bf16.gmra.mxu0 %v1074
  %v1271 = vpop.f32.mrf.mxu0
  %v1272 = vadd.f32 0.0, %v1271
  %v1273 = vpop.f32.mrf.mxu0
  %v1274 = vadd.f32 0.0, %v1273
  %1275 = vmatmul.bf16.gmra.mxu0 %v1075
  %v1276 = vpop.f32.mrf.mxu0
  %v1277 = vadd.f32 0.0, %v1276
  %v1278 = vpop.f32.mrf.mxu0
  %v1279 = vadd.f32 0.0, %v1278
  %1280 = vmatmul.bf16.gmra.mxu0 %v1076
  %v1281 = vpop.f32.mrf.mxu0
  %v1282 = vadd.f32 0.0, %v1281
  %v1283 = vpop.f32.mrf.mxu0
  %v1284 = vadd.f32 0.0, %v1283
  %1285 = vmatmul.bf16.gmra.mxu0 %v1077
  %v1286 = vpop.f32.mrf.mxu0
  %v1287 = vadd.f32 0.0, %v1286
  %v1288 = vpop.f32.mrf.mxu0
  %v1289 = vadd.f32 0.0, %v1288
  %1290 = vmatmul.bf16.gmra.mxu0 %v1078
  %v1291 = vpop.f32.mrf.mxu0
  %v1292 = vadd.f32 0.0, %v1291
  %v1293 = vpop.f32.mrf.mxu0
  %v1294 = vadd.f32 0.0, %v1293
  %1295 = vmatmul.bf16.gmra.mxu0 %v1079
  %v1296 = vpop.f32.mrf.mxu0
  %v1297 = vadd.f32 0.0, %v1296
  %v1298 = vpop.f32.mrf.mxu0
  %v1299 = vadd.f32 0.0, %v1298
  %1300 = vmatmul.bf16.gmra.mxu0 %v1080
  %v1301 = vpop.f32.mrf.mxu0
  %v1302 = vadd.f32 0.0, %v1301
  %v1303 = vpop.f32.mrf.mxu0
  %v1304 = vadd.f32 0.0, %v1303
  %1305 = vmatmul.bf16.gmra.mxu0 %v1081
  %v1306 = vpop.f32.mrf.mxu0
  %v1307 = vadd.f32 0.0, %v1306
  %v1308 = vpop.f32.mrf.mxu0
  %v1309 = vadd.f32 0.0, %v1308
  %1310 = vmatmul.bf16.gmra.mxu0 %v1082
  %v1311 = vpop.f32.mrf.mxu0
  %v1312 = vadd.f32 0.0, %v1311
  %v1313 = vpop.f32.mrf.mxu0
  %v1314 = vadd.f32 0.0, %v1313
  %1315 = vdwg.mxu0
  %v1316 = vpack.c.bf16 %v1157, %v1157
  %v1317 = vpack.c.bf16 %v1159, %v1159
  %v1318 = vpack.c.bf16 %v1162, %v1162
  %v1319 = vpack.c.bf16 %v1164, %v1164
  %v1320 = vpack.c.bf16 %v1167, %v1167
  %v1321 = vpack.c.bf16 %v1169, %v1169
  %v1322 = vpack.c.bf16 %v1172, %v1172
  %v1323 = vpack.c.bf16 %v1174, %v1174
  %v1324 = vpack.c.bf16 %v1177, %v1177
  %v1325 = vpack.c.bf16 %v1179, %v1179
  %v1326 = vpack.c.bf16 %v1182, %v1182
  %v1327 = vpack.c.bf16 %v1184, %v1184
  %v1328 = vpack.c.bf16 %v1187, %v1187
  %v1329 = vpack.c.bf16 %v1189, %v1189
  %v1330 = vpack.c.bf16 %v1192, %v1192
  %v1331 = vpack.c.bf16 %v1194, %v1194
  %v1332 = vpack.c.bf16 %v1197, %v1197
  %v1333 = vpack.c.bf16 %v1199, %v1199
  %v1334 = vpack.c.bf16 %v1202, %v1202
  %v1335 = vpack.c.bf16 %v1204, %v1204
  %v1336 = vpack.c.bf16 %v1207, %v1207
  %v1337 = vpack.c.bf16 %v1209, %v1209
  %v1338 = vpack.c.bf16 %v1212, %v1212
  %v1339 = vpack.c.bf16 %v1214, %v1214
  %v1340 = vpack.c.bf16 %v1217, %v1217
  %v1341 = vpack.c.bf16 %v1219, %v1219
  %v1342 = vpack.c.bf16 %v1222, %v1222
  %v1343 = vpack.c.bf16 %v1224, %v1224
  %v1344 = vpack.c.bf16 %v1227, %v1227
  %v1345 = vpack.c.bf16 %v1229, %v1229
  %v1346 = vpack.c.bf16 %v1232, %v1232
  %v1347 = vpack.c.bf16 %v1234, %v1234
  %v1348 = vpack.c.bf16 %v1237, %v1237
  %v1349 = vpack.c.bf16 %v1239, %v1239
  %v1350 = vpack.c.bf16 %v1242, %v1242
  %v1351 = vpack.c.bf16 %v1244, %v1244
  %v1352 = vpack.c.bf16 %v1247, %v1247
  %v1353 = vpack.c.bf16 %v1249, %v1249
  %v1354 = vpack.c.bf16 %v1252, %v1252
  %v1355 = vpack.c.bf16 %v1254, %v1254
  %v1356 = vpack.c.bf16 %v1257, %v1257
  %v1357 = vpack.c.bf16 %v1259, %v1259
  %v1358 = vpack.c.bf16 %v1262, %v1262
  %v1359 = vpack.c.bf16 %v1264, %v1264
  %v1360 = vpack.c.bf16 %v1267, %v1267
  %v1361 = vpack.c.bf16 %v1269, %v1269
  %v1362 = vpack.c.bf16 %v1272, %v1272
  %v1363 = vpack.c.bf16 %v1274, %v1274
  %v1364 = vpack.c.bf16 %v1277, %v1277
  %v1365 = vpack.c.bf16 %v1279, %v1279
  %v1366 = vpack.c.bf16 %v1282, %v1282
  %v1367 = vpack.c.bf16 %v1284, %v1284
  %v1368 = vpack.c.bf16 %v1287, %v1287
  %v1369 = vpack.c.bf16 %v1289, %v1289
  %v1370 = vpack.c.bf16 %v1292, %v1292
  %v1371 = vpack.c.bf16 %v1294, %v1294
  %v1372 = vpack.c.bf16 %v1297, %v1297
  %v1373 = vpack.c.bf16 %v1299, %v1299
  %v1374 = vpack.c.bf16 %v1302, %v1302
  %v1375 = vpack.c.bf16 %v1304, %v1304
  %v1376 = vpack.c.bf16 %v1307, %v1307
  %v1377 = vpack.c.bf16 %v1309, %v1309
  %v1378 = vpack.c.bf16 %v1312, %v1312
  %v1379 = vpack.c.bf16 %v1314, %v1314
  %1380 = vst [vmem:[%s4] sm:$0xf] %v1316
  %1381 = vst [vmem:[%s4 + $0x4] sm:$0xf] %v1317
  %1382 = vst [vmem:[%s4 + $0x8] sm:$0xf] %v1318
  %1383 = vst [vmem:[%s4 + $0xc] sm:$0xf] %v1319
  %1384 = vst [vmem:[%s4 + $0x10] sm:$0xf] %v1320
  %1385 = vst [vmem:[%s4 + $0x14] sm:$0xf] %v1321
  %1386 = vst [vmem:[%s4 + $0x18] sm:$0xf] %v1322
  %1387 = vst [vmem:[%s4 + $0x1c] sm:$0xf] %v1323
  %1388 = vst [vmem:[%s4 + $0x20] sm:$0xf] %v1324
  %1389 = vst [vmem:[%s4 + $0x24] sm:$0xf] %v1325
  %1390 = vst [vmem:[%s4 + $0x28] sm:$0xf] %v1326
  %1391 = vst [vmem:[%s4 + $0x2c] sm:$0xf] %v1327
  %1392 = vst [vmem:[%s4 + $0x30] sm:$0xf] %v1328
  %1393 = vst [vmem:[%s4 + $0x34] sm:$0xf] %v1329
  %1394 = vst [vmem:[%s4 + $0x38] sm:$0xf] %v1330
  %1395 = vst [vmem:[%s4 + $0x3c] sm:$0xf] %v1331
  %1396 = vst [vmem:[%s4 + $0x40] sm:$0xf] %v1332
  %1397 = vst [vmem:[%s4 + $0x44] sm:$0xf] %v1333
  %1398 = vst [vmem:[%s4 + $0x48] sm:$0xf] %v1334
  %1399 = vst [vmem:[%s4 + $0x4c] sm:$0xf] %v1335
  %1400 = vst [vmem:[%s4 + $0x50] sm:$0xf] %v1336
  %1401 = vst [vmem:[%s4 + $0x54] sm:$0xf] %v1337
  %1402 = vst [vmem:[%s4 + $0x58] sm:$0xf] %v1338
  %1403 = vst [vmem:[%s4 + $0x5c] sm:$0xf] %v1339
  %1404 = vst [vmem:[%s4 + $0x60] sm:$0xf] %v1340
  %1405 = vst [vmem:[%s4 + $0x64] sm:$0xf] %v1341
  %1406 = vst [vmem:[%s4 + $0x68] sm:$0xf] %v1342
  %1407 = vst [vmem:[%s4 + $0x6c] sm:$0xf] %v1343
  %1408 = vst [vmem:[%s4 + $0x70] sm:$0xf] %v1344
  %1409 = vst [vmem:[%s4 + $0x74] sm:$0xf] %v1345
  %1410 = vst [vmem:[%s4 + $0x78] sm:$0xf] %v1346
  %1411 = vst [vmem:[%s4 + $0x7c] sm:$0xf] %v1347
  %1412 = vst [vmem:[%s4 + $0x80] sm:$0xf] %v1348
  %1413 = vst [vmem:[%s4 + $0x84] sm:$0xf] %v1349
  %1414 = vst [vmem:[%s4 + $0x88] sm:$0xf] %v1350
  %1415 = vst [vmem:[%s4 + $0x8c] sm:$0xf] %v1351
  %1416 = vst [vmem:[%s4 + $0x90] sm:$0xf] %v1352
  %1417 = vst [vmem:[%s4 + $0x94] sm:$0xf] %v1353
  %1418 = vst [vmem:[%s4 + $0x98] sm:$0xf] %v1354
  %1419 = vst [vmem:[%s4 + $0x9c] sm:$0xf] %v1355
  %1420 = vst [vmem:[%s4 + $0xa0] sm:$0xf] %v1356
  %1421 = vst [vmem:[%s4 + $0xa4] sm:$0xf] %v1357
  %1422 = vst [vmem:[%s4 + $0xa8] sm:$0xf] %v1358
  %1423 = vst [vmem:[%s4 + $0xac] sm:$0xf] %v1359
  %1424 = vst [vmem:[%s4 + $0xb0] sm:$0xf] %v1360
  %1425 = vst [vmem:[%s4 + $0xb4] sm:$0xf] %v1361
  %1426 = vst [vmem:[%s4 + $0xb8] sm:$0xf] %v1362
  %1427 = vst [vmem:[%s4 + $0xbc] sm:$0xf] %v1363
  %1428 = vst [vmem:[%s4 + $0xc0] sm:$0xf] %v1364
  %1429 = vst [vmem:[%s4 + $0xc4] sm:$0xf] %v1365
  %1430 = vst [vmem:[%s4 + $0xc8] sm:$0xf] %v1366
  %1431 = vst [vmem:[%s4 + $0xcc] sm:$0xf] %v1367
  %1432 = vst [vmem:[%s4 + $0xd0] sm:$0xf] %v1368
  %1433 = vst [vmem:[%s4 + $0xd4] sm:$0xf] %v1369
  %1434 = vst [vmem:[%s4 + $0xd8] sm:$0xf] %v1370
  %1435 = vst [vmem:[%s4 + $0xdc] sm:$0xf] %v1371
  %1436 = vst [vmem:[%s4 + $0xe0] sm:$0xf] %v1372
  %1437 = vst [vmem:[%s4 + $0xe4] sm:$0xf] %v1373
  %1438 = vst [vmem:[%s4 + $0xe8] sm:$0xf] %v1374
  %1439 = vst [vmem:[%s4 + $0xec] sm:$0xf] %v1375
  %1440 = vst [vmem:[%s4 + $0xf0] sm:$0xf] %v1376
  %1441 = vst [vmem:[%s4 + $0xf4] sm:$0xf] %v1377
  %1442 = vst [vmem:[%s4 + $0xf8] sm:$0xf] %v1378
  %1443 = vst [vmem:[%s4 + $0xfc] sm:$0xf] %v1379
  %v1444 = vadd.f32 %v1157, %v1159
  %v1445 = vadd.f32 %v1444, %v1162
  %v1446 = vadd.f32 %v1445, %v1164
  %v1447 = vadd.f32 %v1446, %v1167
  %v1448 = vadd.f32 %v1447, %v1169
  %v1449 = vadd.f32 %v1448, %v1172
  %v1450 = vadd.f32 %v1449, %v1174
  %v1451 = vadd.f32 %v1450, %v1177
  %v1452 = vadd.f32 %v1451, %v1179
  %v1453 = vadd.f32 %v1452, %v1182
  %v1454 = vadd.f32 %v1453, %v1184
  %v1455 = vadd.f32 %v1454, %v1187
  %v1456 = vadd.f32 %v1455, %v1189
  %v1457 = vadd.f32 %v1456, %v1192
  %v1458 = vadd.f32 %v1457, %v1194
  %v1459 = vadd.f32 %v1458, %v1197
  %v1460 = vadd.f32 %v1459, %v1199
  %v1461 = vadd.f32 %v1460, %v1202
  %v1462 = vadd.f32 %v1461, %v1204
  %v1463 = vadd.f32 %v1462, %v1207
  %v1464 = vadd.f32 %v1463, %v1209
  %v1465 = vadd.f32 %v1464, %v1212
  %v1466 = vadd.f32 %v1465, %v1214
  %v1467 = vadd.f32 %v1466, %v1217
  %v1468 = vadd.f32 %v1467, %v1219
  %v1469 = vadd.f32 %v1468, %v1222
  %v1470 = vadd.f32 %v1469, %v1224
  %v1471 = vadd.f32 %v1470, %v1227
  %v1472 = vadd.f32 %v1471, %v1229
  %v1473 = vadd.f32 %v1472, %v1232
  %v1474 = vadd.f32 %v1473, %v1234
  %v1475 = vadd.f32 %v1474, %v1237
  %v1476 = vadd.f32 %v1475, %v1239
  %v1477 = vadd.f32 %v1476, %v1242
  %v1478 = vadd.f32 %v1477, %v1244
  %v1479 = vadd.f32 %v1478, %v1247
  %v1480 = vadd.f32 %v1479, %v1249
  %v1481 = vadd.f32 %v1480, %v1252
  %v1482 = vadd.f32 %v1481, %v1254
  %v1483 = vadd.f32 %v1482, %v1257
  %v1484 = vadd.f32 %v1483, %v1259
  %v1485 = vadd.f32 %v1484, %v1262
  %v1486 = vadd.f32 %v1485, %v1264
  %v1487 = vadd.f32 %v1486, %v1267
  %v1488 = vadd.f32 %v1487, %v1269
  %v1489 = vadd.f32 %v1488, %v1272
  %v1490 = vadd.f32 %v1489, %v1274
  %v1491 = vadd.f32 %v1490, %v1277
  %v1492 = vadd.f32 %v1491, %v1279
  %v1493 = vadd.f32 %v1492, %v1282
  %v1494 = vadd.f32 %v1493, %v1284
  %v1495 = vadd.f32 %v1494, %v1287
  %v1496 = vadd.f32 %v1495, %v1289
  %v1497 = vadd.f32 %v1496, %v1292
  %v1498 = vadd.f32 %v1497, %v1294
  %v1499 = vadd.f32 %v1498, %v1297
  %v1500 = vadd.f32 %v1499, %v1299
  %v1501 = vadd.f32 %v1500, %v1302
  %v1502 = vadd.f32 %v1501, %v1304
  %v1503 = vadd.f32 %v1502, %v1307
  %v1504 = vadd.f32 %v1503, %v1309
  %v1505 = vadd.f32 %v1504, %v1312
  %v1506 = vadd.f32 %v1505, %v1314
  %v1507 = vrot.slane %v1506, 4
  %v1508 = vadd.f32 %v1506, %v1507
  %v1509 = vrot.slane %v1508, 2
  %v1510 = vadd.f32 %v1508, %v1509
  %v1511 = vrot.slane %v1510, 1
  %v1512 = vadd.f32 %v1510, %v1511
  %v1513 = vmul.f32 %v1512, 0.001953125
  %v1514 = vsub.f32 %v1157, %v1513
  %v1515 = vsub.f32 %v1159, %v1513
  %v1516 = vsub.f32 %v1162, %v1513
  %v1517 = vsub.f32 %v1164, %v1513
  %v1518 = vsub.f32 %v1167, %v1513
  %v1519 = vsub.f32 %v1169, %v1513
  %v1520 = vsub.f32 %v1172, %v1513
  %v1521 = vsub.f32 %v1174, %v1513
  %v1522 = vsub.f32 %v1177, %v1513
  %v1523 = vsub.f32 %v1179, %v1513
  %v1524 = vsub.f32 %v1182, %v1513
  %v1525 = vsub.f32 %v1184, %v1513
  %v1526 = vsub.f32 %v1187, %v1513
  %v1527 = vsub.f32 %v1189, %v1513
  %v1528 = vsub.f32 %v1192, %v1513
  %v1529 = vsub.f32 %v1194, %v1513
  %v1530 = vsub.f32 %v1197, %v1513
  %v1531 = vsub.f32 %v1199, %v1513
  %v1532 = vsub.f32 %v1202, %v1513
  %v1533 = vsub.f32 %v1204, %v1513
  %v1534 = vsub.f32 %v1207, %v1513
  %v1535 = vsub.f32 %v1209, %v1513
  %v1536 = vsub.f32 %v1212, %v1513
  %v1537 = vsub.f32 %v1214, %v1513
  %v1538 = vsub.f32 %v1217, %v1513
  %v1539 = vsub.f32 %v1219, %v1513
  %v1540 = vsub.f32 %v1222, %v1513
  %v1541 = vsub.f32 %v1224, %v1513
  %v1542 = vsub.f32 %v1227, %v1513
  %v1543 = vsub.f32 %v1229, %v1513
  %v1544 = vsub.f32 %v1232, %v1513
  %v1545 = vsub.f32 %v1234, %v1513
  %v1546 = vsub.f32 %v1237, %v1513
  %v1547 = vsub.f32 %v1239, %v1513
  %v1548 = vsub.f32 %v1242, %v1513
  %v1549 = vsub.f32 %v1244, %v1513
  %v1550 = vsub.f32 %v1247, %v1513
  %v1551 = vsub.f32 %v1249, %v1513
  %v1552 = vsub.f32 %v1252, %v1513
  %v1553 = vsub.f32 %v1254, %v1513
  %v1554 = vsub.f32 %v1257, %v1513
  %v1555 = vsub.f32 %v1259, %v1513
  %v1556 = vsub.f32 %v1262, %v1513
  %v1557 = vsub.f32 %v1264, %v1513
  %v1558 = vsub.f32 %v1267, %v1513
  %v1559 = vsub.f32 %v1269, %v1513
  %v1560 = vsub.f32 %v1272, %v1513
  %v1561 = vsub.f32 %v1274, %v1513
  %v1562 = vsub.f32 %v1277, %v1513
  %v1563 = vsub.f32 %v1279, %v1513
  %v1564 = vsub.f32 %v1282, %v1513
  %v1565 = vsub.f32 %v1284, %v1513
  %v1566 = vsub.f32 %v1287, %v1513
  %v1567 = vsub.f32 %v1289, %v1513
  %v1568 = vsub.f32 %v1292, %v1513
  %v1569 = vsub.f32 %v1294, %v1513
  %v1570 = vsub.f32 %v1297, %v1513
  %v1571 = vsub.f32 %v1299, %v1513
  %v1572 = vsub.f32 %v1302, %v1513
  %v1573 = vsub.f32 %v1304, %v1513
  %v1574 = vsub.f32 %v1307, %v1513
  %v1575 = vsub.f32 %v1309, %v1513
  %v1576 = vsub.f32 %v1312, %v1513
  %v1577 = vsub.f32 %v1314, %v1513
  %1578 = vst [vmem:[%s5] sm:$0x1] %v1512
  %v1579 = vmul.f32 %v1514, %v1514
  %v1580 = vmul.f32 %v1515, %v1515
  %v1581 = vmul.f32 %v1516, %v1516
  %v1582 = vmul.f32 %v1517, %v1517
  %v1583 = vmul.f32 %v1518, %v1518
  %v1584 = vmul.f32 %v1519, %v1519
  %v1585 = vmul.f32 %v1520, %v1520
  %v1586 = vmul.f32 %v1521, %v1521
  %v1587 = vmul.f32 %v1522, %v1522
  %v1588 = vmul.f32 %v1523, %v1523
  %v1589 = vmul.f32 %v1524, %v1524
  %v1590 = vmul.f32 %v1525, %v1525
  %v1591 = vmul.f32 %v1526, %v1526
  %v1592 = vmul.f32 %v1527, %v1527
  %v1593 = vmul.f32 %v1528, %v1528
  %v1594 = vmul.f32 %v1529, %v1529
  %v1595 = vmul.f32 %v1530, %v1530
  %v1596 = vmul.f32 %v1531, %v1531
  %v1597 = vmul.f32 %v1532, %v1532
  %v1598 = vmul.f32 %v1533, %v1533
  %v1599 = vmul.f32 %v1534, %v1534
  %v1600 = vmul.f32 %v1535, %v1535
  %v1601 = vmul.f32 %v1536, %v1536
  %v1602 = vmul.f32 %v1537, %v1537
  %v1603 = vmul.f32 %v1538, %v1538
  %v1604 = vmul.f32 %v1539, %v1539
  %v1605 = vmul.f32 %v1540, %v1540
  %v1606 = vmul.f32 %v1541, %v1541
  %v1607 = vmul.f32 %v1542, %v1542
  %v1608 = vmul.f32 %v1543, %v1543
  %v1609 = vmul.f32 %v1544, %v1544
  %v1610 = vmul.f32 %v1545, %v1545
  %v1611 = vmul.f32 %v1546, %v1546
  %v1612 = vmul.f32 %v1547, %v1547
  %v1613 = vmul.f32 %v1548, %v1548
  %v1614 = vmul.f32 %v1549, %v1549
  %v1615 = vmul.f32 %v1550, %v1550
  %v1616 = vmul.f32 %v1551, %v1551
  %v1617 = vmul.f32 %v1552, %v1552
  %v1618 = vmul.f32 %v1553, %v1553
  %v1619 = vmul.f32 %v1554, %v1554
  %v1620 = vmul.f32 %v1555, %v1555
  %v1621 = vmul.f32 %v1556, %v1556
  %v1622 = vmul.f32 %v1557, %v1557
  %v1623 = vmul.f32 %v1558, %v1558
  %v1624 = vmul.f32 %v1559, %v1559
  %v1625 = vmul.f32 %v1560, %v1560
  %v1626 = vmul.f32 %v1561, %v1561
  %v1627 = vmul.f32 %v1562, %v1562
  %v1628 = vmul.f32 %v1563, %v1563
  %v1629 = vmul.f32 %v1564, %v1564
  %v1630 = vmul.f32 %v1565, %v1565
  %v1631 = vmul.f32 %v1566, %v1566
  %v1632 = vmul.f32 %v1567, %v1567
  %v1633 = vmul.f32 %v1568, %v1568
  %v1634 = vmul.f32 %v1569, %v1569
  %v1635 = vmul.f32 %v1570, %v1570
  %v1636 = vmul.f32 %v1571, %v1571
  %v1637 = vmul.f32 %v1572, %v1572
  %v1638 = vmul.f32 %v1573, %v1573
  %v1639 = vmul.f32 %v1574, %v1574
  %v1640 = vmul.f32 %v1575, %v1575
  %v1641 = vmul.f32 %v1576, %v1576
  %v1642 = vmul.f32 %v1577, %v1577
  %v1643 = vadd.f32 %v1579, %v1580
  %v1644 = vadd.f32 %v1643, %v1581
  %v1645 = vadd.f32 %v1644, %v1582
  %v1646 = vadd.f32 %v1645, %v1583
  %v1647 = vadd.f32 %v1646, %v1584
  %v1648 = vadd.f32 %v1647, %v1585
  %v1649 = vadd.f32 %v1648, %v1586
  %v1650 = vadd.f32 %v1649, %v1587
  %v1651 = vadd.f32 %v1650, %v1588
  %v1652 = vadd.f32 %v1651, %v1589
  %v1653 = vadd.f32 %v1652, %v1590
  %v1654 = vadd.f32 %v1653, %v1591
  %v1655 = vadd.f32 %v1654, %v1592
  %v1656 = vadd.f32 %v1655, %v1593
  %v1657 = vadd.f32 %v1656, %v1594
  %v1658 = vadd.f32 %v1657, %v1595
  %v1659 = vadd.f32 %v1658, %v1596
  %v1660 = vadd.f32 %v1659, %v1597
  %v1661 = vadd.f32 %v1660, %v1598
  %v1662 = vadd.f32 %v1661, %v1599
  %v1663 = vadd.f32 %v1662, %v1600
  %v1664 = vadd.f32 %v1663, %v1601
  %v1665 = vadd.f32 %v1664, %v1602
  %v1666 = vadd.f32 %v1665, %v1603
  %v1667 = vadd.f32 %v1666, %v1604
  %v1668 = vadd.f32 %v1667, %v1605
  %v1669 = vadd.f32 %v1668, %v1606
  %v1670 = vadd.f32 %v1669, %v1607
  %v1671 = vadd.f32 %v1670, %v1608
  %v1672 = vadd.f32 %v1671, %v1609
  %v1673 = vadd.f32 %v1672, %v1610
  %v1674 = vadd.f32 %v1673, %v1611
  %v1675 = vadd.f32 %v1674, %v1612
  %v1676 = vadd.f32 %v1675, %v1613
  %v1677 = vadd.f32 %v1676, %v1614
  %v1678 = vadd.f32 %v1677, %v1615
  %v1679 = vadd.f32 %v1678, %v1616
  %v1680 = vadd.f32 %v1679, %v1617
  %v1681 = vadd.f32 %v1680, %v1618
  %v1682 = vadd.f32 %v1681, %v1619
  %v1683 = vadd.f32 %v1682, %v1620
  %v1684 = vadd.f32 %v1683, %v1621
  %v1685 = vadd.f32 %v1684, %v1622
  %v1686 = vadd.f32 %v1685, %v1623
  %v1687 = vadd.f32 %v1686, %v1624
  %v1688 = vadd.f32 %v1687, %v1625
  %v1689 = vadd.f32 %v1688, %v1626
  %v1690 = vadd.f32 %v1689, %v1627
  %v1691 = vadd.f32 %v1690, %v1628
  %v1692 = vadd.f32 %v1691, %v1629
  %v1693 = vadd.f32 %v1692, %v1630
  %v1694 = vadd.f32 %v1693, %v1631
  %v1695 = vadd.f32 %v1694, %v1632
  %v1696 = vadd.f32 %v1695, %v1633
  %v1697 = vadd.f32 %v1696, %v1634
  %v1698 = vadd.f32 %v1697, %v1635
  %v1699 = vadd.f32 %v1698, %v1636
  %v1700 = vadd.f32 %v1699, %v1637
  %v1701 = vadd.f32 %v1700, %v1638
  %v1702 = vadd.f32 %v1701, %v1639
  %v1703 = vadd.f32 %v1702, %v1640
  %v1704 = vadd.f32 %v1703, %v1641
  %v1705 = vadd.f32 %v1704, %v1642
  %v1706 = vrot.slane %v1705, 4
  %v1707 = vadd.f32 %v1705, %v1706
  %v1708 = vrot.slane %v1707, 2
  %v1709 = vadd.f32 %v1707, %v1708
  %v1710 = vrot.slane %v1709, 1
  %v1711 = vadd.f32 %v1709, %v1710
  %1712 = vst [vmem:[%s5 + $0x1] sm:$0x1] %v1711
  // Predicated region
  $region18: #{tucker_forward.6} parent=0 // pred_check
    _
  $region19: #{tucker_forward.6} parent=0 // pred_check_branch
    %1714 = sbr.rel (0) target = $region21
  $region20: #{tucker_forward.6} parent=0 // pred_region
    _
  $region21: #{tucker_forward.6} parent=0 // pred_fallthru
    _
  // Predicated region
  $region22: #{tucker_forward.6} parent=0 // pred_check
    _
  $region23: #{tucker_forward.6} parent=0 // pred_check_branch
    %1716 = sbr.rel (0) target = $region25
  $region24: #{tucker_forward.6} parent=0 // pred_region
    _
  $region25: #{tucker_forward.6} parent=0 // pred_fallthru
    _
  // Predicated region
  $region26: #{tucker_forward.6} parent=0 // pred_check
    _
  $region27: #{tucker_forward.6} parent=0 // pred_check_branch
    %1718 = sbr.rel (0) target = $region29
  $region28: #{tucker_forward.6} parent=0 // pred_region
    _
  $region29: #{tucker_forward.6} parent=0 // pred_fallthru
    _
  // Predicated region
  $region30: #{tucker_forward.6} parent=0 // pred_check
    _
  $region31: #{tucker_forward.6} parent=0 // pred_check_branch
    %1720 = sbr.rel (0) target = $region33
  $region32: #{tucker_forward.6} parent=0 // pred_region
    _
  $region33: #{tucker_forward.6} parent=0 // pred_fallthru
    _

// kernel: tucker_forward.5
$region0: #{tucker_forward.5}
  #allocation0 [shape = 'u32[]', space=smem, size = 0x4, offset = 0x4, fixed_abs, tag = 'smem constant byte address 0x4 - core index']
  #allocation1 [shape = 'u32[72,128]{1,0:T(1,128)}', space=vmem, size = 0x9000, scoped, tag = 'internal scratch']
  #allocation2 [shape = 'bf16[18,18,128]{2,1,0:T(8,128)(2,1)}', space=vmem, size = 0x1b000, scoped, tag = 'scratch operand']
  %s0 = inlined_call_operand.vmem [shape: bf16[2,256,128], index: 0, kind: input, shape index: {}]
  %s1 = inlined_call_operand.vmem [shape: f32[1,128], index: 1, kind: input, shape index: {}]
  %s2 = inlined_call_operand.vmem [shape: f32[1,128], index: 2, kind: input, shape index: {}]
  %s3 = inlined_call_operand.vmem [shape: bf16[9,128,128], index: 3, kind: input, shape index: {}]
  %s4 = inlined_call_operand.vmem [shape: bf16[2,256,128], index: 4, kind: output, shape index: {0}]
  %s5 = inlined_call_operand.vmem [shape: f32[2,2,128], index: 5, kind: output, shape index: {1}]
  %6 = xla_tuple %s4, %s5
  %s7 = sld [smem:[#allocation0]]
  $region57: #{tucker_forward.5} parent=0
    _
  %s9 = ssub.s32 1, %s7
  %s10 = scalar_select 0, %s9, %s7
  loop: start=0, step=1, limit=4
  $region2: #{tucker_forward.5} parent=0 // loop_pre_header
    _
  $region3: #{tucker_forward.5} parent=0 // loop_header
    %s12 = sphi 0, %s16
    %p13 = scmp.ge.s32.totalorder %s12, 4
    %s22 = sphi 0, %s24
    %s25 = sphi 0, %s22
    %s26 = sphi 0, %s25
    %s42 = sphi 0, %s26
    %s46 = sphi 0, %s46
    %s48 = sphi 0, %s46
    %s49 = sphi 0, %s48
    %s63 = sphi 0, %s49
    %s67 = sphi 0, %s67
    %s69 = sphi 0, %s67
    %s70 = sphi 0, %s69
    %s84 = sphi 0, %s70
    %s88 = sphi 0, %s88
    %s90 = sphi 0, %s88
    %s91 = sphi 0, %s90
    %s105 = sphi 0, %s91
    %s111 = sphi 0, %s113
    %s114 = sphi 0, %s111
    %s115 = sphi 0, %s114
    %s131 = sphi 0, %s115
    %s137 = sphi 0, %s139
    %s140 = sphi 0, %s137
    %s141 = sphi 0, %s140
    %s157 = sphi 0, %s141
  $region4: #{tucker_forward.5} parent=0 // loop_header_branch
    %15 = sbr.rel (%p13) target = $region8
  $region5: #{tucker_forward.5} parent=0 // loop_body
    %s17 = ssub.s32 %s12, 1
    %s18 = ssub.s32 %s12, 2
    %s19 = sadd.s32 %s12, 1
    %s20 = ssub.s32 %s12, %s19
    %p21 = scmp.eq.s32.totalorder %s20, 0
    %s23 = sadd.s32 %s22, 1
    %s24 = scalar_select %p21, %s22, %s23
    %p27 = pneg %p21
    %p28 = scmp.eq.s32.totalorder %s12, 1
    %p29 = por %p27, %p28
    %p30 = scmp.ne.s32.totalorder %s22, %s25
    %p31 = scmp.eq.s32.totalorder %s12, 0
    %p32 = por %p30, %p31
    %p33 = scmp.ne.s32.totalorder %s22, %s25
    %p34 = scmp.eq.s32.totalorder %s17, 1
    %p35 = por %p33, %p34
    %p36 = scmp.ne.s32.totalorder %s25, %s26
    %p37 = scmp.eq.s32.totalorder %s17, 0
    %p38 = por %p36, %p37
    %p39 = scmp.ne.s32.totalorder %s25, %s26
    %p40 = scmp.eq.s32.totalorder %s18, 1
    %p41 = por %p39, %p40
    %p43 = scmp.ne.s32.totalorder %s26, %s42
    %p44 = scmp.eq.s32.totalorder %s18, 0
    %p45 = por %p43, %p44
    %s47 = sadd.s32 %s46, 1
    %p50 = scmp.eq.s32.totalorder %s12, 1
    %p51 = scmp.ne.s32.totalorder %s46, %s48
    %p52 = scmp.eq.s32.totalorder %s12, 0
    %p53 = por %p51, %p52
    %p54 = scmp.ne.s32.totalorder %s46, %s48
    %p55 = scmp.eq.s32.totalorder %s17, 1
    %p56 = por %p54, %p55
    %p57 = scmp.ne.s32.totalorder %s48, %s49
    %p58 = scmp.eq.s32.totalorder %s17, 0
    %p59 = por %p57, %p58
    %p60 = scmp.ne.s32.totalorder %s48, %s49
    %p61 = scmp.eq.s32.totalorder %s18, 1
    %p62 = por %p60, %p61
    %p64 = scmp.ne.s32.totalorder %s49, %s63
    %p65 = scmp.eq.s32.totalorder %s18, 0
    %p66 = por %p64, %p65
    %s68 = sadd.s32 %s67, 1
    %p71 = scmp.eq.s32.totalorder %s12, 1
    %p72 = scmp.ne.s32.totalorder %s67, %s69
    %p73 = scmp.eq.s32.totalorder %s12, 0
    %p74 = por %p72, %p73
    %p75 = scmp.ne.s32.totalorder %s67, %s69
    %p76 = scmp.eq.s32.totalorder %s17, 1
    %p77 = por %p75, %p76
    %p78 = scmp.ne.s32.totalorder %s69, %s70
    %p79 = scmp.eq.s32.totalorder %s17, 0
    %p80 = por %p78, %p79
    %p81 = scmp.ne.s32.totalorder %s69, %s70
    %p82 = scmp.eq.s32.totalorder %s18, 1
    %p83 = por %p81, %p82
    %p85 = scmp.ne.s32.totalorder %s70, %s84
    %p86 = scmp.eq.s32.totalorder %s18, 0
    %p87 = por %p85, %p86
    %s89 = sadd.s32 %s88, 1
    %p92 = scmp.eq.s32.totalorder %s12, 1
    %p93 = scmp.ne.s32.totalorder %s88, %s90
    %p94 = scmp.eq.s32.totalorder %s12, 0
    %p95 = por %p93, %p94
    %p96 = scmp.ne.s32.totalorder %s88, %s90
    %p97 = scmp.eq.s32.totalorder %s17, 1
    %p98 = por %p96, %p97
    %p99 = scmp.ne.s32.totalorder %s90, %s91
    %p100 = scmp.eq.s32.totalorder %s17, 0
    %p101 = por %p99, %p100
    %p102 = scmp.ne.s32.totalorder %s90, %s91
    %p103 = scmp.eq.s32.totalorder %s18, 1
    %p104 = por %p102, %p103
    %p106 = scmp.ne.s32.totalorder %s91, %s105
    %p107 = scmp.eq.s32.totalorder %s18, 0
    %p108 = por %p106, %p107
    %s109 = ssub.s32 %s12, %s19
    %p110 = scmp.eq.s32.totalorder %s109, 0
    %s112 = sadd.s32 %s111, 1
    %s113 = scalar_select %p110, %s111, %s112
    %p116 = pneg %p110
    %p117 = scmp.eq.s32.totalorder %s12, 1
    %p118 = por %p116, %p117
    %p119 = scmp.ne.s32.totalorder %s111, %s114
    %p120 = scmp.eq.s32.totalorder %s12, 0
    %p121 = por %p119, %p120
    %p122 = scmp.ne.s32.totalorder %s111, %s114
    %p123 = scmp.eq.s32.totalorder %s17, 1
    %p124 = por %p122, %p123
    %p125 = scmp.ne.s32.totalorder %s114, %s115
    %p126 = scmp.eq.s32.totalorder %s17, 0
    %p127 = por %p125, %p126
    %p128 = scmp.ne.s32.totalorder %s114, %s115
    %p129 = scmp.eq.s32.totalorder %s18, 1
    %p130 = por %p128, %p129
    %p132 = scmp.ne.s32.totalorder %s115, %s131
    %p133 = scmp.eq.s32.totalorder %s18, 0
    %p134 = por %p132, %p133
    %s135 = ssub.s32 %s12, %s19
    %p136 = scmp.eq.s32.totalorder %s135, 0
    %s138 = sadd.s32 %s137, 1
    %s139 = scalar_select %p136, %s137, %s138
    %p142 = pneg %p136
    %p143 = scmp.eq.s32.totalorder %s12, 1
    %p144 = por %p142, %p143
    %p145 = scmp.ne.s32.totalorder %s137, %s140
    %p146 = scmp.eq.s32.totalorder %s12, 0
    %p147 = por %p145, %p146
    %p148 = scmp.ne.s32.totalorder %s137, %s140
    %p149 = scmp.eq.s32.totalorder %s17, 1
    %p150 = por %p148, %p149
    %p151 = scmp.ne.s32.totalorder %s140, %s141
    %p152 = scmp.eq.s32.totalorder %s17, 0
    %p153 = por %p151, %p152
    %p154 = scmp.ne.s32.totalorder %s140, %s141
    %p155 = scmp.eq.s32.totalorder %s18, 1
    %p156 = por %p154, %p155
    %p158 = scmp.ne.s32.totalorder %s141, %s157
    %p159 = scmp.eq.s32.totalorder %s18, 0
    %p160 = por %p158, %p159
    %p161 = scmp.le.s32.totalorder 1, %s12
    %p162 = scmp.lt.s32.totalorder %s12, 3
    %p163 = pnand %p161, %p162
    %p164 = pneg %p163
    // Predicated region
    $region9: #{tucker_forward.5} parent=5 // pred_check
      _
    $region10: #{tucker_forward.5} parent=5 // pred_check_branch
      %166 = sbr.rel (%p163) target = $region12
    $region11: #{tucker_forward.5} parent=5 // pred_region
      %s167 = ssub.s32 %s12, 1
      // Predicated region
      $region13: #{tucker_forward.5} parent=11 // pred_check
        %p168 = pneg %p59
      $region14: #{tucker_forward.5} parent=11 // pred_check_branch
        %170 = sbr.rel (%p168) target = $region16
      $region15: #{tucker_forward.5} parent=11 // pred_region
        _
      $region16: #{tucker_forward.5} parent=11 // pred_fallthru
        _
      // Predicated region
      $region17: #{tucker_forward.5} parent=11 // pred_check
        %p171 = pneg %p80
      $region18: #{tucker_forward.5} parent=11 // pred_check_branch
        %173 = sbr.rel (%p171) target = $region20
      $region19: #{tucker_forward.5} parent=11 // pred_region
        _
      $region20: #{tucker_forward.5} parent=11 // pred_fallthru
        _
      // Predicated region
      $region21: #{tucker_forward.5} parent=11 // pred_check
        %p174 = pneg %p101
      $region22: #{tucker_forward.5} parent=11 // pred_check_branch
        %176 = sbr.rel (%p174) target = $region24
      $region23: #{tucker_forward.5} parent=11 // pred_region
        _
      $region24: #{tucker_forward.5} parent=11 // pred_fallthru
        _
    $region12: #{tucker_forward.5} parent=5 // pred_fallthru
      _
    %p177 = scmp.lt.s32.totalorder %s12, 2
    // Predicated region
    $region25: #{tucker_forward.5} parent=5 // pred_check
      %p178 = pneg %p177
    $region26: #{tucker_forward.5} parent=5 // pred_check_branch
      %180 = sbr.rel (%p178) target = $region28
    $region27: #{tucker_forward.5} parent=5 // pred_region
      // Predicated region
      $region29: #{tucker_forward.5} parent=27 // pred_check
        %p181 = pneg %p32
      $region30: #{tucker_forward.5} parent=27 // pred_check_branch
        %183 = sbr.rel (%p181) target = $region32
      $region31: #{tucker_forward.5} parent=27 // pred_region
        %p184 = scmp.lt.s32.totalorder %s12, 1
        %s185 = scalar_select %p184, %s12, 1
        %s186 = smul.addr %s185, 32
        %s187 = smul.addr %s186, 4
        %s188 = scalar_lea.vmem %s0, %s187
      $region32: #{tucker_forward.5} parent=27 // pred_fallthru
        _
    $region28: #{tucker_forward.5} parent=5 // pred_fallthru
      _
    %p189 = scmp.le.s32.totalorder 1, %s12
    %p190 = scmp.lt.s32.totalorder %s12, 3
    %p191 = pnand %p189, %p190
    %p192 = pneg %p191
    // Predicated region
    $region33: #{tucker_forward.5} parent=5 // pred_check
      _
    $region34: #{tucker_forward.5} parent=5 // pred_check_branch
      %194 = sbr.rel (%p191) target = $region36
    $region35: #{tucker_forward.5} parent=5 // pred_region
      %s195 = ssub.s32 %s12, 1
      %p196 = scmp.lt.s32.totalorder %s17, 1
      %s197 = scalar_select %p196, %s17, 1
      %s198 = smul.addr %s197, 32
      %s199 = smul.addr %s198, 4
      %s200 = scalar_lea.vmem %s0, %s199
      %p201 = pneg %p38
      %p202 = pneg %p35
      %p203 = pneg %p59
      %p204 = pneg %p56
      %p205 = pneg %p80
      %p206 = pneg %p77
      %p207 = pneg %p101
      %p208 = pneg %p98
      %p209 = pneg %p127
      %p210 = pneg %p124
      %p211 = scmp.lt.s32.totalorder %s17, 1
      %s212 = scalar_select %p211, %s17, 1
      %s213 = smul.addr %s212, 32
      %s214 = smul.addr %s213, 4
      %s215 = scalar_lea.vmem %s4, %s214
      %p216 = pneg %p153
      %p217 = pneg %p150
      %p218 = scmp.lt.s32.totalorder %s17, 1
      %s219 = scalar_select %p218, %s17, 1
      %s220 = smul.addr %s219, 2
      %s221 = scalar_lea.vmem %s5, %s220
      %p222 = scmp.lt.s32.totalorder %s17, 1
      %s223 = scalar_select %p222, %s17, 1
      %s224 = smul.addr %s223, 32
      %s225 = smul.addr %s224, 4
      %s226 = scalar_lea.vmem %s0, %s225
      %p227 = scmp.lt.s32.totalorder %s17, 1
      %s228 = scalar_select %p227, %s17, 1
      %s229 = smul.addr %s228, 32
      %s230 = smul.addr %s229, 4
      %s231 = scalar_lea.vmem %s4, %s230
      %p232 = scmp.lt.s32.totalorder %s17, 1
      %s233 = scalar_select %p232, %s17, 1
      %s234 = smul.addr %s233, 2
      %s235 = scalar_lea.vmem %s5, %s234
      %237 = vst [vmem:[#allocation2] sm:$0xf] 0
      %238 = vst [vmem:[#allocation2 + $0x4] sm:$0xf] 0
      %239 = vst [vmem:[#allocation2 + $0x8] sm:$0x1] 0
      %240 = vst [vmem:[#allocation2 + $0xc] sm:$0xf] 0
      %241 = vst [vmem:[#allocation2 + $0x10] sm:$0xf] 0
      %242 = vst [vmem:[#allocation2 + $0x14] sm:$0x1] 0
      %243 = vst [vmem:[#allocation2 + $0x18] sm:$0xf] 0
      %244 = vst [vmem:[#allocation2 + $0x1c] sm:$0xf] 0
      %245 = vst [vmem:[#allocation2 + $0x20] sm:$0x1] 0
      %246 = vst [vmem:[#allocation2 + $0x24] sm:$0xf] 0
      %247 = vst [vmem:[#allocation2 + $0x28] sm:$0xf] 0
      %248 = vst [vmem:[#allocation2 + $0x2c] sm:$0x1] 0
      %249 = vst [vmem:[#allocation2 + $0x30] sm:$0xf] 0
      %250 = vst [vmem:[#allocation2 + $0x34] sm:$0xf] 0
      %251 = vst [vmem:[#allocation2 + $0x38] sm:$0x1] 0
      %252 = vst [vmem:[#allocation2 + $0x3c] sm:$0xf] 0
      %253 = vst [vmem:[#allocation2 + $0x40] sm:$0xf] 0
      %254 = vst [vmem:[#allocation2 + $0x44] sm:$0x1] 0
      %255 = vst [vmem:[#allocation2 + $0x48] sm:$0xf] 0
      %256 = vst [vmem:[#allocation2 + $0x4c] sm:$0xf] 0
      %257 = vst [vmem:[#allocation2 + $0x50] sm:$0x1] 0
      %258 = vst [vmem:[#allocation2 + $0x54] sm:$0xf] 0
      %259 = vst [vmem:[#allocation2 + $0x58] sm:$0xf] 0
      %260 = vst [vmem:[#allocation2 + $0x5c] sm:$0x1] 0
      %261 = vst [vmem:[#allocation2 + $0x60] sm:$0xf] 0
      %262 = vst [vmem:[#allocation2 + $0x64] sm:$0xf] 0
      %263 = vst [vmem:[#allocation2 + $0x68] sm:$0x1] 0
      %264 = vst [vmem:[#allocation2 + $0x6c] sm:$0xf] 0
      %265 = vst [vmem:[#allocation2 + $0x70] sm:$0xf] 0
      %266 = vst [vmem:[#allocation2 + $0x74] sm:$0x1] 0
      %267 = vst [vmem:[#allocation2 + $0x78] sm:$0xf] 0
      %268 = vst [vmem:[#allocation2 + $0x7c] sm:$0xf] 0
      %269 = vst [vmem:[#allocation2 + $0x80] sm:$0x1] 0
      %270 = vst [vmem:[#allocation2 + $0x84] sm:$0xf] 0
      %271 = vst [vmem:[#allocation2 + $0x88] sm:$0xf] 0
      %272 = vst [vmem:[#allocation2 + $0x8c] sm:$0x1] 0
      %273 = vst [vmem:[#allocation2 + $0x90] sm:$0xf] 0
      %274 = vst [vmem:[#allocation2 + $0x94] sm:$0xf] 0
      %275 = vst [vmem:[#allocation2 + $0x98] sm:$0x1] 0
      %276 = vst [vmem:[#allocation2 + $0x9c] sm:$0xf] 0
      %277 = vst [vmem:[#allocation2 + $0xa0] sm:$0xf] 0
      %278 = vst [vmem:[#allocation2 + $0xa4] sm:$0x1] 0
      %279 = vst [vmem:[#allocation2 + $0xa8] sm:$0xf] 0
      %280 = vst [vmem:[#allocation2 + $0xac] sm:$0xf] 0
      %281 = vst [vmem:[#allocation2 + $0xb0] sm:$0x1] 0
      %282 = vst [vmem:[#allocation2 + $0xb4] sm:$0xf] 0
      %283 = vst [vmem:[#allocation2 + $0xb8] sm:$0xf] 0
      %284 = vst [vmem:[#allocation2 + $0xbc] sm:$0x1] 0
      %285 = vst [vmem:[#allocation2 + $0xc0] sm:$0xf] 0
      %286 = vst [vmem:[#allocation2 + $0xc4] sm:$0xf] 0
      %287 = vst [vmem:[#allocation2 + $0xc8] sm:$0x1] 0
      %288 = vst [vmem:[#allocation2 + $0xcc] sm:$0xf] 0
      %289 = vst [vmem:[#allocation2 + $0xd0] sm:$0xf] 0
      %290 = vst [vmem:[#allocation2 + $0xd4] sm:$0x1] 0
      %v291 = vld [vmem:[%s226] sm:$0xf]
      %v292 = vld [vmem:[%s226 + $0x4] sm:$0xf]
      %v293 = vld [vmem:[%s226 + $0x8] sm:$0xf]
      %v294 = vld [vmem:[%s226 + $0xc] sm:$0xf]
      %v295 = vld [vmem:[%s226 + $0x10] sm:$0xf]
      %v296 = vld [vmem:[%s226 + $0x14] sm:$0xf]
      %v297 = vld [vmem:[%s226 + $0x18] sm:$0xf]
      %v298 = vld [vmem:[%s226 + $0x1c] sm:$0xf]
      %v299 = vld [vmem:[%s226 + $0x20] sm:$0xf]
      %v300 = vld [vmem:[%s226 + $0x24] sm:$0xf]
      %v301 = vld [vmem:[%s226 + $0x28] sm:$0xf]
      %v302 = vld [vmem:[%s226 + $0x2c] sm:$0xf]
      %v303 = vld [vmem:[%s226 + $0x30] sm:$0xf]
      %v304 = vld [vmem:[%s226 + $0x34] sm:$0xf]
      %v305 = vld [vmem:[%s226 + $0x38] sm:$0xf]
      %v306 = vld [vmem:[%s226 + $0x3c] sm:$0xf]
      %v307 = vld [vmem:[%s226 + $0x40] sm:$0xf]
      %v308 = vld [vmem:[%s226 + $0x44] sm:$0xf]
      %v309 = vld [vmem:[%s226 + $0x48] sm:$0xf]
      %v310 = vld [vmem:[%s226 + $0x4c] sm:$0xf]
      %v311 = vld [vmem:[%s226 + $0x50] sm:$0xf]
      %v312 = vld [vmem:[%s226 + $0x54] sm:$0xf]
      %v313 = vld [vmem:[%s226 + $0x58] sm:$0xf]
      %v314 = vld [vmem:[%s226 + $0x5c] sm:$0xf]
      %v315 = vld [vmem:[%s226 + $0x60] sm:$0xf]
      %v316 = vld [vmem:[%s226 + $0x64] sm:$0xf]
      %v317 = vld [vmem:[%s226 + $0x68] sm:$0xf]
      %v318 = vld [vmem:[%s226 + $0x6c] sm:$0xf]
      %v319 = vld [vmem:[%s226 + $0x70] sm:$0xf]
      %v320 = vld [vmem:[%s226 + $0x74] sm:$0xf]
      %v321 = vld [vmem:[%s226 + $0x78] sm:$0xf]
      %v322 = vld [vmem:[%s226 + $0x7c] sm:$0xf]
      %v323 = vunpack.c.l.bf16 %v291
      %v324 = vunpack.c.l.bf16 %v292
      %v325 = vunpack.c.l.bf16 %v293
      %v326 = vunpack.c.l.bf16 %v294
      %v327 = vunpack.c.l.bf16 %v295
      %v328 = vunpack.c.l.bf16 %v296
      %v329 = vunpack.c.l.bf16 %v297
      %v330 = vunpack.c.l.bf16 %v298
      %v331 = vunpack.c.l.bf16 %v299
      %v332 = vunpack.c.l.bf16 %v300
      %v333 = vunpack.c.l.bf16 %v301
      %v334 = vunpack.c.l.bf16 %v302
      %v335 = vunpack.c.l.bf16 %v303
      %v336 = vunpack.c.l.bf16 %v304
      %v337 = vunpack.c.l.bf16 %v305
      %v338 = vunpack.c.l.bf16 %v306
      %v339 = vunpack.c.l.bf16 %v307
      %v340 = vunpack.c.l.bf16 %v308
      %v341 = vunpack.c.l.bf16 %v309
      %v342 = vunpack.c.l.bf16 %v310
      %v343 = vunpack.c.l.bf16 %v311
      %v344 = vunpack.c.l.bf16 %v312
      %v345 = vunpack.c.l.bf16 %v313
      %v346 = vunpack.c.l.bf16 %v314
      %v347 = vunpack.c.l.bf16 %v315
      %v348 = vunpack.c.l.bf16 %v316
      %v349 = vunpack.c.l.bf16 %v317
      %v350 = vunpack.c.l.bf16 %v318
      %v351 = vunpack.c.l.bf16 %v319
      %v352 = vunpack.c.l.bf16 %v320
      %v353 = vunpack.c.l.bf16 %v321
      %v354 = vunpack.c.l.bf16 %v322
      %v355 = vld [vmem:[%s1] sm:$0x1]
      %v357 = vperm.slane %v355, 0
      %v359 = vmul.f32 %v323, %v357
      %v360 = vmul.f32 %v324, %v357
      %v361 = vmul.f32 %v325, %v357
      %v362 = vmul.f32 %v326, %v357
      %v363 = vmul.f32 %v327, %v357
      %v364 = vmul.f32 %v328, %v357
      %v365 = vmul.f32 %v329, %v357
      %v366 = vmul.f32 %v330, %v357
      %v367 = vmul.f32 %v331, %v357
      %v368 = vmul.f32 %v332, %v357
      %v369 = vmul.f32 %v333, %v357
      %v370 = vmul.f32 %v334, %v357
      %v371 = vmul.f32 %v335, %v357
      %v372 = vmul.f32 %v336, %v357
      %v373 = vmul.f32 %v337, %v357
      %v374 = vmul.f32 %v338, %v357
      %v375 = vmul.f32 %v339, %v357
      %v376 = vmul.f32 %v340, %v357
      %v377 = vmul.f32 %v341, %v357
      %v378 = vmul.f32 %v342, %v357
      %v379 = vmul.f32 %v343, %v357
      %v380 = vmul.f32 %v344, %v357
      %v381 = vmul.f32 %v345, %v357
      %v382 = vmul.f32 %v346, %v357
      %v383 = vmul.f32 %v347, %v357
      %v384 = vmul.f32 %v348, %v357
      %v385 = vmul.f32 %v349, %v357
      %v386 = vmul.f32 %v350, %v357
      %v387 = vmul.f32 %v351, %v357
      %v388 = vmul.f32 %v352, %v357
      %v389 = vmul.f32 %v353, %v357
      %v390 = vmul.f32 %v354, %v357
      %v391 = vld [vmem:[%s2] sm:$0x1]
      %v393 = vperm.slane %v391, 0
      %v395 = vadd.f32 %v359, %v393
      %v396 = vadd.f32 %v360, %v393
      %v397 = vadd.f32 %v361, %v393
      %v398 = vadd.f32 %v362, %v393
      %v399 = vadd.f32 %v363, %v393
      %v400 = vadd.f32 %v364, %v393
      %v401 = vadd.f32 %v365, %v393
      %v402 = vadd.f32 %v366, %v393
      %v403 = vadd.f32 %v367, %v393
      %v404 = vadd.f32 %v368, %v393
      %v405 = vadd.f32 %v369, %v393
      %v406 = vadd.f32 %v370, %v393
      %v407 = vadd.f32 %v371, %v393
      %v408 = vadd.f32 %v372, %v393
      %v409 = vadd.f32 %v373, %v393
      %v410 = vadd.f32 %v374, %v393
      %v411 = vadd.f32 %v375, %v393
      %v412 = vadd.f32 %v376, %v393
      %v413 = vadd.f32 %v377, %v393
      %v414 = vadd.f32 %v378, %v393
      %v415 = vadd.f32 %v379, %v393
      %v416 = vadd.f32 %v380, %v393
      %v417 = vadd.f32 %v381, %v393
      %v418 = vadd.f32 %v382, %v393
      %v419 = vadd.f32 %v383, %v393
      %v420 = vadd.f32 %v384, %v393
      %v421 = vadd.f32 %v385, %v393
      %v422 = vadd.f32 %v386, %v393
      %v423 = vadd.f32 %v387, %v393
      %v424 = vadd.f32 %v388, %v393
      %v425 = vadd.f32 %v389, %v393
      %v426 = vadd.f32 %v390, %v393
      %v427 = vmin.f32 %v395, 20.0
      %v428 = vmin.f32 %v396, 20.0
      %v429 = vmin.f32 %v397, 20.0
      %v430 = vmin.f32 %v398, 20.0
      %v431 = vmin.f32 %v399, 20.0
      %v432 = vmin.f32 %v400, 20.0
      %v433 = vmin.f32 %v401, 20.0
      %v434 = vmin.f32 %v402, 20.0
      %v435 = vmin.f32 %v403, 20.0
      %v436 = vmin.f32 %v404, 20.0
      %v437 = vmin.f32 %v405, 20.0
      %v438 = vmin.f32 %v406, 20.0
      %v439 = vmin.f32 %v407, 20.0
      %v440 = vmin.f32 %v408, 20.0
      %v441 = vmin.f32 %v409, 20.0
      %v442 = vmin.f32 %v410, 20.0
      %v443 = vmin.f32 %v411, 20.0
      %v444 = vmin.f32 %v412, 20.0
      %v445 = vmin.f32 %v413, 20.0
      %v446 = vmin.f32 %v414, 20.0
      %v447 = vmin.f32 %v415, 20.0
      %v448 = vmin.f32 %v416, 20.0
      %v449 = vmin.f32 %v417, 20.0
      %v450 = vmin.f32 %v418, 20.0
      %v451 = vmin.f32 %v419, 20.0
      %v452 = vmin.f32 %v420, 20.0
      %v453 = vmin.f32 %v421, 20.0
      %v454 = vmin.f32 %v422, 20.0
      %v455 = vmin.f32 %v423, 20.0
      %v456 = vmin.f32 %v424, 20.0
      %v457 = vmin.f32 %v425, 20.0
      %v458 = vmin.f32 %v426, 20.0
      %v459 = vmul.f32 %v427, 1.442695
      %v460 = vpow.pop %v459
      %v461 = vmul.f32 %v428, 1.442695
      %v462 = vpow.pop %v461
      %v463 = vmul.f32 %v429, 1.442695
      %v464 = vpow.pop %v463
      %v465 = vmul.f32 %v430, 1.442695
      %v466 = vpow.pop %v465
      %v467 = vmul.f32 %v431, 1.442695
      %v468 = vpow.pop %v467
      %v469 = vmul.f32 %v432, 1.442695
      %v470 = vpow.pop %v469
      %v471 = vmul.f32 %v433, 1.442695
      %v472 = vpow.pop %v471
      %v473 = vmul.f32 %v434, 1.442695
      %v474 = vpow.pop %v473
      %v475 = vmul.f32 %v435, 1.442695
      %v476 = vpow.pop %v475
      %v477 = vmul.f32 %v436, 1.442695
      %v478 = vpow.pop %v477
      %v479 = vmul.f32 %v437, 1.442695
      %v480 = vpow.pop %v479
      %v481 = vmul.f32 %v438, 1.442695
      %v482 = vpow.pop %v481
      %v483 = vmul.f32 %v439, 1.442695
      %v484 = vpow.pop %v483
      %v485 = vmul.f32 %v440, 1.442695
      %v486 = vpow.pop %v485
      %v487 = vmul.f32 %v441, 1.442695
      %v488 = vpow.pop %v487
      %v489 = vmul.f32 %v442, 1.442695
      %v490 = vpow.pop %v489
      %v491 = vmul.f32 %v443, 1.442695
      %v492 = vpow.pop %v491
      %v493 = vmul.f32 %v444, 1.442695
      %v494 = vpow.pop %v493
      %v495 = vmul.f32 %v445, 1.442695
      %v496 = vpow.pop %v495
      %v497 = vmul.f32 %v446, 1.442695
      %v498 = vpow.pop %v497
      %v499 = vmul.f32 %v447, 1.442695
      %v500 = vpow.pop %v499
      %v501 = vmul.f32 %v448, 1.442695
      %v502 = vpow.pop %v501
      %v503 = vmul.f32 %v449, 1.442695
      %v504 = vpow.pop %v503
      %v505 = vmul.f32 %v450, 1.442695
      %v506 = vpow.pop %v505
      %v507 = vmul.f32 %v451, 1.442695
      %v508 = vpow.pop %v507
      %v509 = vmul.f32 %v452, 1.442695
      %v510 = vpow.pop %v509
      %v511 = vmul.f32 %v453, 1.442695
      %v512 = vpow.pop %v511
      %v513 = vmul.f32 %v454, 1.442695
      %v514 = vpow.pop %v513
      %v515 = vmul.f32 %v455, 1.442695
      %v516 = vpow.pop %v515
      %v517 = vmul.f32 %v456, 1.442695
      %v518 = vpow.pop %v517
      %v519 = vmul.f32 %v457, 1.442695
      %v520 = vpow.pop %v519
      %v521 = vmul.f32 %v458, 1.442695
      %v522 = vpow.pop %v521
      %v523 = vmul.f32 %v460, %v460
      %v524 = vmul.f32 %v462, %v462
      %v525 = vmul.f32 %v464, %v464
      %v526 = vmul.f32 %v466, %v466
      %v527 = vmul.f32 %v468, %v468
      %v528 = vmul.f32 %v470, %v470
      %v529 = vmul.f32 %v472, %v472
      %v530 = vmul.f32 %v474, %v474
      %v531 = vmul.f32 %v476, %v476
      %v532 = vmul.f32 %v478, %v478
      %v533 = vmul.f32 %v480, %v480
      %v534 = vmul.f32 %v482, %v482
      %v535 = vmul.f32 %v484, %v484
      %v536 = vmul.f32 %v486, %v486
      %v537 = vmul.f32 %v488, %v488
      %v538 = vmul.f32 %v490, %v490
      %v539 = vmul.f32 %v492, %v492
      %v540 = vmul.f32 %v494, %v494
      %v541 = vmul.f32 %v496, %v496
      %v542 = vmul.f32 %v498, %v498
      %v543 = vmul.f32 %v500, %v500
      %v544 = vmul.f32 %v502, %v502
      %v545 = vmul.f32 %v504, %v504
      %v546 = vmul.f32 %v506, %v506
      %v547 = vmul.f32 %v508, %v508
      %v548 = vmul.f32 %v510, %v510
      %v549 = vmul.f32 %v512, %v512
      %v550 = vmul.f32 %v514, %v514
      %v551 = vmul.f32 %v516, %v516
      %v552 = vmul.f32 %v518, %v518
      %v553 = vmul.f32 %v520, %v520
      %v554 = vmul.f32 %v522, %v522
      %v555 = vmul.f32 %v460, 2.0
      %v556 = vmul.f32 %v462, 2.0
      %v557 = vmul.f32 %v464, 2.0
      %v558 = vmul.f32 %v466, 2.0
      %v559 = vmul.f32 %v468, 2.0
      %v560 = vmul.f32 %v470, 2.0
      %v561 = vmul.f32 %v472, 2.0
      %v562 = vmul.f32 %v474, 2.0
      %v563 = vmul.f32 %v476, 2.0
      %v564 = vmul.f32 %v478, 2.0
      %v565 = vmul.f32 %v480, 2.0
      %v566 = vmul.f32 %v482, 2.0
      %v567 = vmul.f32 %v484, 2.0
      %v568 = vmul.f32 %v486, 2.0
      %v569 = vmul.f32 %v488, 2.0
      %v570 = vmul.f32 %v490, 2.0
      %v571 = vmul.f32 %v492, 2.0
      %v572 = vmul.f32 %v494, 2.0
      %v573 = vmul.f32 %v496, 2.0
      %v574 = vmul.f32 %v498, 2.0
      %v575 = vmul.f32 %v500, 2.0
      %v576 = vmul.f32 %v502, 2.0
      %v577 = vmul.f32 %v504, 2.0
      %v578 = vmul.f32 %v506, 2.0
      %v579 = vmul.f32 %v508, 2.0
      %v580 = vmul.f32 %v510, 2.0
      %v581 = vmul.f32 %v512, 2.0
      %v582 = vmul.f32 %v514, 2.0
      %v583 = vmul.f32 %v516, 2.0
      %v584 = vmul.f32 %v518, 2.0
      %v585 = vmul.f32 %v520, 2.0
      %v586 = vmul.f32 %v522, 2.0
      %v587 = vadd.f32 %v523, %v555
      %v588 = vadd.f32 %v524, %v556
      %v589 = vadd.f32 %v525, %v557
      %v590 = vadd.f32 %v526, %v558
      %v591 = vadd.f32 %v527, %v559
      %v592 = vadd.f32 %v528, %v560
      %v593 = vadd.f32 %v529, %v561
      %v594 = vadd.f32 %v530, %v562
      %v595 = vadd.f32 %v531, %v563
      %v596 = vadd.f32 %v532, %v564
      %v597 = vadd.f32 %v533, %v565
      %v598 = vadd.f32 %v534, %v566
      %v599 = vadd.f32 %v535, %v567
      %v600 = vadd.f32 %v536, %v568
      %v601 = vadd.f32 %v537, %v569
      %v602 = vadd.f32 %v538, %v570
      %v603 = vadd.f32 %v539, %v571
      %v604 = vadd.f32 %v540, %v572
      %v605 = vadd.f32 %v541, %v573
      %v606 = vadd.f32 %v542, %v574
      %v607 = vadd.f32 %v543, %v575
      %v608 = vadd.f32 %v544, %v576
      %v609 = vadd.f32 %v545, %v577
      %v610 = vadd.f32 %v546, %v578
      %v611 = vadd.f32 %v547, %v579
      %v612 = vadd.f32 %v548, %v580
      %v613 = vadd.f32 %v549, %v581
      %v614 = vadd.f32 %v550, %v582
      %v615 = vadd.f32 %v551, %v583
      %v616 = vadd.f32 %v552, %v584
      %v617 = vadd.f32 %v553, %v585
      %v618 = vadd.f32 %v554, %v586
      %v619 = vmul.f32 %v395, %v587
      %v620 = vmul.f32 %v396, %v588
      %v621 = vmul.f32 %v397, %v589
      %v622 = vmul.f32 %v398, %v590
      %v623 = vmul.f32 %v399, %v591
      %v624 = vmul.f32 %v400, %v592
      %v625 = vmul.f32 %v401, %v593
      %v626 = vmul.f32 %v402, %v594
      %v627 = vmul.f32 %v403, %v595
      %v628 = vmul.f32 %v404, %v596
      %v629 = vmul.f32 %v405, %v597
      %v630 = vmul.f32 %v406, %v598
      %v631 = vmul.f32 %v407, %v599
      %v632 = vmul.f32 %v408, %v600
      %v633 = vmul.f32 %v409, %v601
      %v634 = vmul.f32 %v410, %v602
      %v635 = vmul.f32 %v411, %v603
      %v636 = vmul.f32 %v412, %v604
      %v637 = vmul.f32 %v413, %v605
      %v638 = vmul.f32 %v414, %v606
      %v639 = vmul.f32 %v415, %v607
      %v640 = vmul.f32 %v416, %v608
      %v641 = vmul.f32 %v417, %v609
      %v642 = vmul.f32 %v418, %v610
      %v643 = vmul.f32 %v419, %v611
      %v644 = vmul.f32 %v420, %v612
      %v645 = vmul.f32 %v421, %v613
      %v646 = vmul.f32 %v422, %v614
      %v647 = vmul.f32 %v423, %v615
      %v648 = vmul.f32 %v424, %v616
      %v649 = vmul.f32 %v425, %v617
      %v650 = vmul.f32 %v426, %v618
      %v651 = vadd.f32 %v587, 2.0
      %v652 = vadd.f32 %v588, 2.0
      %v653 = vadd.f32 %v589, 2.0
      %v654 = vadd.f32 %v590, 2.0
      %v655 = vadd.f32 %v591, 2.0
      %v656 = vadd.f32 %v592, 2.0
      %v657 = vadd.f32 %v593, 2.0
      %v658 = vadd.f32 %v594, 2.0
      %v659 = vadd.f32 %v595, 2.0
      %v660 = vadd.f32 %v596, 2.0
      %v661 = vadd.f32 %v597, 2.0
      %v662 = vadd.f32 %v598, 2.0
      %v663 = vadd.f32 %v599, 2.0
      %v664 = vadd.f32 %v600, 2.0
      %v665 = vadd.f32 %v601, 2.0
      %v666 = vadd.f32 %v602, 2.0
      %v667 = vadd.f32 %v603, 2.0
      %v668 = vadd.f32 %v604, 2.0
      %v669 = vadd.f32 %v605, 2.0
      %v670 = vadd.f32 %v606, 2.0
      %v671 = vadd.f32 %v607, 2.0
      %v672 = vadd.f32 %v608, 2.0
      %v673 = vadd.f32 %v609, 2.0
      %v674 = vadd.f32 %v610, 2.0
      %v675 = vadd.f32 %v611, 2.0
      %v676 = vadd.f32 %v612, 2.0
      %v677 = vadd.f32 %v613, 2.0
      %v678 = vadd.f32 %v614, 2.0
      %v679 = vadd.f32 %v615, 2.0
      %v680 = vadd.f32 %v616, 2.0
      %v681 = vadd.f32 %v617, 2.0
      %v682 = vadd.f32 %v618, 2.0
      %v683 = vrcp.pop %v651
      %v684 = vrcp.pop %v652
      %v685 = vrcp.pop %v653
      %v686 = vrcp.pop %v654
      %v687 = vrcp.pop %v655
      %v688 = vrcp.pop %v656
      %v689 = vrcp.pop %v657
      %v690 = vrcp.pop %v658
      %v691 = vrcp.pop %v659
      %v692 = vrcp.pop %v660
      %v693 = vrcp.pop %v661
      %v694 = vrcp.pop %v662
      %v695 = vrcp.pop %v663
      %v696 = vrcp.pop %v664
      %v697 = vrcp.pop %v665
      %v698 = vrcp.pop %v666
      %v699 = vrcp.pop %v667
      %v700 = vrcp.pop %v668
      %v701 = vrcp.pop %v669
      %v702 = vrcp.pop %v670
      %v703 = vrcp.pop %v671
      %v704 = vrcp.pop %v672
      %v705 = vrcp.pop %v673
      %v706 = vrcp.pop %v674
      %v707 = vrcp.pop %v675
      %v708 = vrcp.pop %v676
      %v709 = vrcp.pop %v677
      %v710 = vrcp.pop %v678
      %v711 = vrcp.pop %v679
      %v712 = vrcp.pop %v680
      %v713 = vrcp.pop %v681
      %v714 = vrcp.pop %v682
      %v715 = vmul.f32 %v619, %v683
      %v716 = vmul.f32 %v620, %v684
      %v717 = vmul.f32 %v621, %v685
      %v718 = vmul.f32 %v622, %v686
      %v719 = vmul.f32 %v623, %v687
      %v720 = vmul.f32 %v624, %v688
      %v721 = vmul.f32 %v625, %v689
      %v722 = vmul.f32 %v626, %v690
      %v723 = vmul.f32 %v627, %v691
      %v724 = vmul.f32 %v628, %v692
      %v725 = vmul.f32 %v629, %v693
      %v726 = vmul.f32 %v630, %v694
      %v727 = vmul.f32 %v631, %v695
      %v728 = vmul.f32 %v632, %v696
      %v729 = vmul.f32 %v633, %v697
      %v730 = vmul.f32 %v634, %v698
      %v731 = vmul.f32 %v635, %v699
      %v732 = vmul.f32 %v636, %v700
      %v733 = vmul.f32 %v637, %v701
      %v734 = vmul.f32 %v638, %v702
      %v735 = vmul.f32 %v639, %v703
      %v736 = vmul.f32 %v640, %v704
      %v737 = vmul.f32 %v641, %v705
      %v738 = vmul.f32 %v642, %v706
      %v739 = vmul.f32 %v643, %v707
      %v740 = vmul.f32 %v644, %v708
      %v741 = vmul.f32 %v645, %v709
      %v742 = vmul.f32 %v646, %v710
      %v743 = vmul.f32 %v647, %v711
      %v744 = vmul.f32 %v648, %v712
      %v745 = vmul.f32 %v649, %v713
      %v746 = vmul.f32 %v650, %v714
      %vm747 = vcmp.gt.f32.partialorder %v395, 20.0
      %vm748 = vcmp.gt.f32.partialorder %v396, 20.0
      %vm749 = vcmp.gt.f32.partialorder %v397, 20.0
      %vm750 = vcmp.gt.f32.partialorder %v398, 20.0
      %vm751 = vcmp.gt.f32.partialorder %v399, 20.0
      %vm752 = vcmp.gt.f32.partialorder %v400, 20.0
      %vm753 = vcmp.gt.f32.partialorder %v401, 20.0
      %vm754 = vcmp.gt.f32.partialorder %v402, 20.0
      %vm755 = vcmp.gt.f32.partialorder %v403, 20.0
      %vm756 = vcmp.gt.f32.partialorder %v404, 20.0
      %vm757 = vcmp.gt.f32.partialorder %v405, 20.0
      %vm758 = vcmp.gt.f32.partialorder %v406, 20.0
      %vm759 = vcmp.gt.f32.partialorder %v407, 20.0
      %vm760 = vcmp.gt.f32.partialorder %v408, 20.0
      %vm761 = vcmp.gt.f32.partialorder %v409, 20.0
      %vm762 = vcmp.gt.f32.partialorder %v410, 20.0
      %vm763 = vcmp.gt.f32.partialorder %v411, 20.0
      %vm764 = vcmp.gt.f32.partialorder %v412, 20.0
      %vm765 = vcmp.gt.f32.partialorder %v413, 20.0
      %vm766 = vcmp.gt.f32.partialorder %v414, 20.0
      %vm767 = vcmp.gt.f32.partialorder %v415, 20.0
      %vm768 = vcmp.gt.f32.partialorder %v416, 20.0
      %vm769 = vcmp.gt.f32.partialorder %v417, 20.0
      %vm770 = vcmp.gt.f32.partialorder %v418, 20.0
      %vm771 = vcmp.gt.f32.partialorder %v419, 20.0
      %vm772 = vcmp.gt.f32.partialorder %v420, 20.0
      %vm773 = vcmp.gt.f32.partialorder %v421, 20.0
      %vm774 = vcmp.gt.f32.partialorder %v422, 20.0
      %vm775 = vcmp.gt.f32.partialorder %v423, 20.0
      %vm776 = vcmp.gt.f32.partialorder %v424, 20.0
      %vm777 = vcmp.gt.f32.partialorder %v425, 20.0
      %vm778 = vcmp.gt.f32.partialorder %v426, 20.0
      %v779 = vsel %vm747, %v395, %v715
      %v780 = vsel %vm748, %v396, %v716
      %v781 = vsel %vm749, %v397, %v717
      %v782 = vsel %vm750, %v398, %v718
      %v783 = vsel %vm751, %v399, %v719
      %v784 = vsel %vm752, %v400, %v720
      %v785 = vsel %vm753, %v401, %v721
      %v786 = vsel %vm754, %v402, %v722
      %v787 = vsel %vm755, %v403, %v723
      %v788 = vsel %vm756, %v404, %v724
      %v789 = vsel %vm757, %v405, %v725
      %v790 = vsel %vm758, %v406, %v726
      %v791 = vsel %vm759, %v407, %v727
      %v792 = vsel %vm760, %v408, %v728
      %v793 = vsel %vm761, %v409, %v729
      %v794 = vsel %vm762, %v410, %v730
      %v795 = vsel %vm763, %v411, %v731
      %v796 = vsel %vm764, %v412, %v732
      %v797 = vsel %vm765, %v413, %v733
      %v798 = vsel %vm766, %v414, %v734
      %v799 = vsel %vm767, %v415, %v735
      %v800 = vsel %vm768, %v416, %v736
      %v801 = vsel %vm769, %v417, %v737
      %v802 = vsel %vm770, %v418, %v738
      %v803 = vsel %vm771, %v419, %v739
      %v804 = vsel %vm772, %v420, %v740
      %v805 = vsel %vm773, %v421, %v741
      %v806 = vsel %vm774, %v422, %v742
      %v807 = vsel %vm775, %v423, %v743
      %v808 = vsel %vm776, %v424, %v744
      %v809 = vsel %vm777, %v425, %v745
      %v810 = vsel %vm778, %v426, %v746
      %v811 = vpack.c.bf16 %v779, %v779
      %v812 = vpack.c.bf16 %v780, %v780
      %v813 = vpack.c.bf16 %v781, %v781
      %v814 = vpack.c.bf16 %v782, %v782
      %v815 = vpack.c.bf16 %v783, %v783
      %v816 = vpack.c.bf16 %v784, %v784
      %v817 = vpack.c.bf16 %v785, %v785
      %v818 = vpack.c.bf16 %v786, %v786
      %v819 = vpack.c.bf16 %v787, %v787
      %v820 = vpack.c.bf16 %v788, %v788
      %v821 = vpack.c.bf16 %v789, %v789
      %v822 = vpack.c.bf16 %v790, %v790
      %v823 = vpack.c.bf16 %v791, %v791
      %v824 = vpack.c.bf16 %v792, %v792
      %v825 = vpack.c.bf16 %v793, %v793
      %v826 = vpack.c.bf16 %v794, %v794
      %v827 = vpack.c.bf16 %v795, %v795
      %v828 = vpack.c.bf16 %v796, %v796
      %v829 = vpack.c.bf16 %v797, %v797
      %v830 = vpack.c.bf16 %v798, %v798
      %v831 = vpack.c.bf16 %v799, %v799
      %v832 = vpack.c.bf16 %v800, %v800
      %v833 = vpack.c.bf16 %v801, %v801
      %v834 = vpack.c.bf16 %v802, %v802
      %v835 = vpack.c.bf16 %v803, %v803
      %v836 = vpack.c.bf16 %v804, %v804
      %v837 = vpack.c.bf16 %v805, %v805
      %v838 = vpack.c.bf16 %v806, %v806
      %v839 = vpack.c.bf16 %v807, %v807
      %v840 = vpack.c.bf16 %v808, %v808
      %v841 = vpack.c.bf16 %v809, %v809
      %v842 = vpack.c.bf16 %v810, %v810
      %vm843 = vsmask.f32 256
      %vm844 = vsmask.f32 4368
      %vm845 = vmor %vm843, %vm844
      %v847 = vshrl.u32 %v811, 16
      %v849 = vrot.slane %v847, 7
      %v850 = vshll.u32 %v811, 16
      %v852 = vor.u32 %v849, %v850
      %v853 = vrot.slane %v849, 4
      %v855 = vshrl.u32 %v812, 16
      %v857 = vrot.slane %v855, 7
      %v858 = vshll.u32 %v812, 16
      %v860 = vor.u32 %v857, %v858
      %v861 = vsel %vm845, %v853, %v860
      %v862 = vrot.slane %v857, 4
      %v864 = vshrl.u32 %v813, 16
      %v866 = vrot.slane %v864, 7
      %v867 = vshll.u32 %v813, 16
      %v869 = vor.u32 %v866, %v867
      %v870 = vrot.slane %v866, 4
      %v872 = vshrl.u32 %v814, 16
      %v874 = vrot.slane %v872, 7
      %v875 = vshll.u32 %v814, 16
      %v877 = vor.u32 %v874, %v875
      %v878 = vsel %vm845, %v870, %v877
      %v879 = vrot.slane %v874, 4
      %v881 = vshrl.u32 %v815, 16
      %v883 = vrot.slane %v881, 7
      %v884 = vshll.u32 %v815, 16
      %v886 = vor.u32 %v883, %v884
      %v887 = vrot.slane %v883, 4
      %v889 = vshrl.u32 %v816, 16
      %v891 = vrot.slane %v889, 7
      %v892 = vshll.u32 %v816, 16
      %v894 = vor.u32 %v891, %v892
      %v895 = vsel %vm845, %v887, %v894
      %v896 = vrot.slane %v891, 4
      %v898 = vshrl.u32 %v817, 16
      %v900 = vrot.slane %v898, 7
      %v901 = vshll.u32 %v817, 16
      %v903 = vor.u32 %v900, %v901
      %v904 = vrot.slane %v900, 4
      %v906 = vshrl.u32 %v818, 16
      %v908 = vrot.slane %v906, 7
      %v909 = vshll.u32 %v818, 16
      %v911 = vor.u32 %v908, %v909
      %v912 = vsel %vm845, %v904, %v911
      %v913 = vrot.slane %v908, 4
      %v915 = vshrl.u32 %v819, 16
      %v917 = vrot.slane %v915, 7
      %v918 = vshll.u32 %v819, 16
      %v920 = vor.u32 %v917, %v918
      %v921 = vrot.slane %v917, 4
      %v923 = vshrl.u32 %v820, 16
      %v925 = vrot.slane %v923, 7
      %v926 = vshll.u32 %v820, 16
      %v928 = vor.u32 %v925, %v926
      %v929 = vsel %vm845, %v921, %v928
      %v930 = vrot.slane %v925, 4
      %v932 = vshrl.u32 %v821, 16
      %v934 = vrot.slane %v932, 7
      %v935 = vshll.u32 %v821, 16
      %v937 = vor.u32 %v934, %v935
      %v938 = vrot.slane %v934, 4
      %v940 = vshrl.u32 %v822, 16
      %v942 = vrot.slane %v940, 7
      %v943 = vshll.u32 %v822, 16
      %v945 = vor.u32 %v942, %v943
      %v946 = vsel %vm845, %v938, %v945
      %v947 = vrot.slane %v942, 4
      %v949 = vshrl.u32 %v823, 16
      %v951 = vrot.slane %v949, 7
      %v952 = vshll.u32 %v823, 16
      %v954 = vor.u32 %v951, %v952
      %v955 = vrot.slane %v951, 4
      %v957 = vshrl.u32 %v824, 16
      %v959 = vrot.slane %v957, 7
      %v960 = vshll.u32 %v824, 16
      %v962 = vor.u32 %v959, %v960
      %v963 = vsel %vm845, %v955, %v962
      %v964 = vrot.slane %v959, 4
      %v966 = vshrl.u32 %v825, 16
      %v968 = vrot.slane %v966, 7
      %v969 = vshll.u32 %v825, 16
      %v971 = vor.u32 %v968, %v969
      %v972 = vrot.slane %v968, 4
      %v974 = vshrl.u32 %v826, 16
      %v976 = vrot.slane %v974, 7
      %v977 = vshll.u32 %v826, 16
      %v979 = vor.u32 %v976, %v977
      %v980 = vsel %vm845, %v972, %v979
      %v981 = vrot.slane %v976, 4
      %v983 = vshrl.u32 %v827, 16
      %v985 = vrot.slane %v983, 7
      %v986 = vshll.u32 %v827, 16
      %v988 = vor.u32 %v985, %v986
      %v989 = vrot.slane %v985, 4
      %v991 = vshrl.u32 %v828, 16
      %v993 = vrot.slane %v991, 7
      %v994 = vshll.u32 %v828, 16
      %v996 = vor.u32 %v993, %v994
      %v997 = vsel %vm845, %v989, %v996
      %v998 = vrot.slane %v993, 4
      %v1000 = vshrl.u32 %v829, 16
      %v1002 = vrot.slane %v1000, 7
      %v1003 = vshll.u32 %v829, 16
      %v1005 = vor.u32 %v1002, %v1003
      %v1006 = vrot.slane %v1002, 4
      %v1008 = vshrl.u32 %v830, 16
      %v1010 = vrot.slane %v1008, 7
      %v1011 = vshll.u32 %v830, 16
      %v1013 = vor.u32 %v1010, %v1011
      %v1014 = vsel %vm845, %v1006, %v1013
      %v1015 = vrot.slane %v1010, 4
      %v1017 = vshrl.u32 %v831, 16
      %v1019 = vrot.slane %v1017, 7
      %v1020 = vshll.u32 %v831, 16
      %v1022 = vor.u32 %v1019, %v1020
      %v1023 = vrot.slane %v1019, 4
      %v1025 = vshrl.u32 %v832, 16
      %v1027 = vrot.slane %v1025, 7
      %v1028 = vshll.u32 %v832, 16
      %v1030 = vor.u32 %v1027, %v1028
      %v1031 = vsel %vm845, %v1023, %v1030
      %v1032 = vrot.slane %v1027, 4
      %v1034 = vshrl.u32 %v833, 16
      %v1036 = vrot.slane %v1034, 7
      %v1037 = vshll.u32 %v833, 16
      %v1039 = vor.u32 %v1036, %v1037
      %v1040 = vrot.slane %v1036, 4
      %v1042 = vshrl.u32 %v834, 16
      %v1044 = vrot.slane %v1042, 7
      %v1045 = vshll.u32 %v834, 16
      %v1047 = vor.u32 %v1044, %v1045
      %v1048 = vsel %vm845, %v1040, %v1047
      %v1049 = vrot.slane %v1044, 4
      %v1051 = vshrl.u32 %v835, 16
      %v1053 = vrot.slane %v1051, 7
      %v1054 = vshll.u32 %v835, 16
      %v1056 = vor.u32 %v1053, %v1054
      %v1057 = vrot.slane %v1053, 4
      %v1059 = vshrl.u32 %v836, 16
      %v1061 = vrot.slane %v1059, 7
      %v1062 = vshll.u32 %v836, 16
      %v1064 = vor.u32 %v1061, %v1062
      %v1065 = vsel %vm845, %v1057, %v1064
      %v1066 = vrot.slane %v1061, 4
      %v1068 = vshrl.u32 %v837, 16
      %v1070 = vrot.slane %v1068, 7
      %v1071 = vshll.u32 %v837, 16
      %v1073 = vor.u32 %v1070, %v1071
      %v1074 = vrot.slane %v1070, 4
      %v1076 = vshrl.u32 %v838, 16
      %v1078 = vrot.slane %v1076, 7
      %v1079 = vshll.u32 %v838, 16
      %v1081 = vor.u32 %v1078, %v1079
      %v1082 = vsel %vm845, %v1074, %v1081
      %v1083 = vrot.slane %v1078, 4
      %v1085 = vshrl.u32 %v839, 16
      %v1087 = vrot.slane %v1085, 7
      %v1088 = vshll.u32 %v839, 16
      %v1090 = vor.u32 %v1087, %v1088
      %v1091 = vrot.slane %v1087, 4
      %v1093 = vshrl.u32 %v840, 16
      %v1095 = vrot.slane %v1093, 7
      %v1096 = vshll.u32 %v840, 16
      %v1098 = vor.u32 %v1095, %v1096
      %v1099 = vsel %vm845, %v1091, %v1098
      %v1100 = vrot.slane %v1095, 4
      %v1102 = vshrl.u32 %v841, 16
      %v1104 = vrot.slane %v1102, 7
      %v1105 = vshll.u32 %v841, 16
      %v1107 = vor.u32 %v1104, %v1105
      %v1108 = vrot.slane %v1104, 4
      %v1110 = vshrl.u32 %v842, 16
      %v1112 = vrot.slane %v1110, 7
      %v1113 = vshll.u32 %v842, 16
      %v1115 = vor.u32 %v1112, %v1113
      %v1116 = vsel %vm845, %v1108, %v1115
      %v1117 = vrot.slane %v1112, 4
      %s1166 = scalar_lea.vmem [#allocation2], 12
      %vm1167 = vcmask 1043456
      %vm1168 = vsmask.f32 7938
      %vm1169 = vmand %vm1167, %vm1168
      %v1170 = vld [vmem:[%s1166] sm:$0xf]
      %v1171 = vsel %vm1169, %v852, %v1170
      %1172 = vst [vmem:[%s1166] sm:$0xf] %v1171
      %1173 = vst [vmem:[%s1166 + $0x4] sm:$0xf] %v861
      %vm1174 = vcmask 1040384
      %vm1175 = vmand %vm1174, %vm843
      %v1176 = vld [vmem:[%s1166 + $0x8] sm:$0x1]
      %v1177 = vsel %vm1175, %v862, %v1176
      %1178 = vst [vmem:[%s1166 + $0x8] sm:$0x1] %v1177
      %v1179 = vld [vmem:[%s1166 + $0xc] sm:$0xf]
      %v1180 = vsel %vm1169, %v869, %v1179
      %1181 = vst [vmem:[%s1166 + $0xc] sm:$0xf] %v1180
      %1182 = vst [vmem:[%s1166 + $0x10] sm:$0xf] %v878
      %v1183 = vld [vmem:[%s1166 + $0x14] sm:$0x1]
      %v1184 = vsel %vm1175, %v879, %v1183
      %1185 = vst [vmem:[%s1166 + $0x14] sm:$0x1] %v1184
      %v1186 = vld [vmem:[%s1166 + $0x18] sm:$0xf]
      %v1187 = vsel %vm1169, %v886, %v1186
      %1188 = vst [vmem:[%s1166 + $0x18] sm:$0xf] %v1187
      %1189 = vst [vmem:[%s1166 + $0x1c] sm:$0xf] %v895
      %v1190 = vld [vmem:[%s1166 + $0x20] sm:$0x1]
      %v1191 = vsel %vm1175, %v896, %v1190
      %1192 = vst [vmem:[%s1166 + $0x20] sm:$0x1] %v1191
      %v1193 = vld [vmem:[%s1166 + $0x24] sm:$0xf]
      %v1194 = vsel %vm1169, %v903, %v1193
      %1195 = vst [vmem:[%s1166 + $0x24] sm:$0xf] %v1194
      %1196 = vst [vmem:[%s1166 + $0x28] sm:$0xf] %v912
      %v1197 = vld [vmem:[%s1166 + $0x2c] sm:$0x1]
      %v1198 = vsel %vm1175, %v913, %v1197
      %1199 = vst [vmem:[%s1166 + $0x2c] sm:$0x1] %v1198
      %v1200 = vld [vmem:[%s1166 + $0x30] sm:$0xf]
      %v1201 = vsel %vm1169, %v920, %v1200
      %1202 = vst [vmem:[%s1166 + $0x30] sm:$0xf] %v1201
      %1203 = vst [vmem:[%s1166 + $0x34] sm:$0xf] %v929
      %v1204 = vld [vmem:[%s1166 + $0x38] sm:$0x1]
      %v1205 = vsel %vm1175, %v930, %v1204
      %1206 = vst [vmem:[%s1166 + $0x38] sm:$0x1] %v1205
      %v1207 = vld [vmem:[%s1166 + $0x3c] sm:$0xf]
      %v1208 = vsel %vm1169, %v937, %v1207
      %1209 = vst [vmem:[%s1166 + $0x3c] sm:$0xf] %v1208
      %1210 = vst [vmem:[%s1166 + $0x40] sm:$0xf] %v946
      %v1211 = vld [vmem:[%s1166 + $0x44] sm:$0x1]
      %v1212 = vsel %vm1175, %v947, %v1211
      %1213 = vst [vmem:[%s1166 + $0x44] sm:$0x1] %v1212
      %v1214 = vld [vmem:[%s1166 + $0x48] sm:$0xf]
      %v1215 = vsel %vm1169, %v954, %v1214
      %1216 = vst [vmem:[%s1166 + $0x48] sm:$0xf] %v1215
      %1217 = vst [vmem:[%s1166 + $0x4c] sm:$0xf] %v963
      %v1218 = vld [vmem:[%s1166 + $0x50] sm:$0x1]
      %v1219 = vsel %vm1175, %v964, %v1218
      %1220 = vst [vmem:[%s1166 + $0x50] sm:$0x1] %v1219
      %v1221 = vld [vmem:[%s1166 + $0x54] sm:$0xf]
      %v1222 = vsel %vm1169, %v971, %v1221
      %1223 = vst [vmem:[%s1166 + $0x54] sm:$0xf] %v1222
      %1224 = vst [vmem:[%s1166 + $0x58] sm:$0xf] %v980
      %v1225 = vld [vmem:[%s1166 + $0x5c] sm:$0x1]
      %v1226 = vsel %vm1175, %v981, %v1225
      %1227 = vst [vmem:[%s1166 + $0x5c] sm:$0x1] %v1226
      %v1228 = vld [vmem:[%s1166 + $0x60] sm:$0xf]
      %v1229 = vsel %vm1169, %v988, %v1228
      %1230 = vst [vmem:[%s1166 + $0x60] sm:$0xf] %v1229
      %1231 = vst [vmem:[%s1166 + $0x64] sm:$0xf] %v997
      %v1232 = vld [vmem:[%s1166 + $0x68] sm:$0x1]
      %v1233 = vsel %vm1175, %v998, %v1232
      %1234 = vst [vmem:[%s1166 + $0x68] sm:$0x1] %v1233
      %v1235 = vld [vmem:[%s1166 + $0x6c] sm:$0xf]
      %v1236 = vsel %vm1169, %v1005, %v1235
      %1237 = vst [vmem:[%s1166 + $0x6c] sm:$0xf] %v1236
      %1238 = vst [vmem:[%s1166 + $0x70] sm:$0xf] %v1014
      %v1239 = vld [vmem:[%s1166 + $0x74] sm:$0x1]
      %v1240 = vsel %vm1175, %v1015, %v1239
      %1241 = vst [vmem:[%s1166 + $0x74] sm:$0x1] %v1240
      %v1242 = vld [vmem:[%s1166 + $0x78] sm:$0xf]
      %v1243 = vsel %vm1169, %v1022, %v1242
      %1244 = vst [vmem:[%s1166 + $0x78] sm:$0xf] %v1243
      %1245 = vst [vmem:[%s1166 + $0x7c] sm:$0xf] %v1031
      %v1246 = vld [vmem:[%s1166 + $0x80] sm:$0x1]
      %v1247 = vsel %vm1175, %v1032, %v1246
      %1248 = vst [vmem:[%s1166 + $0x80] sm:$0x1] %v1247
      %v1249 = vld [vmem:[%s1166 + $0x84] sm:$0xf]
      %v1250 = vsel %vm1169, %v1039, %v1249
      %1251 = vst [vmem:[%s1166 + $0x84] sm:$0xf] %v1250
      %1252 = vst [vmem:[%s1166 + $0x88] sm:$0xf] %v1048
      %v1253 = vld [vmem:[%s1166 + $0x8c] sm:$0x1]
      %v1254 = vsel %vm1175, %v1049, %v1253
      %1255 = vst [vmem:[%s1166 + $0x8c] sm:$0x1] %v1254
      %v1256 = vld [vmem:[%s1166 + $0x90] sm:$0xf]
      %v1257 = vsel %vm1169, %v1056, %v1256
      %1258 = vst [vmem:[%s1166 + $0x90] sm:$0xf] %v1257
      %1259 = vst [vmem:[%s1166 + $0x94] sm:$0xf] %v1065
      %v1260 = vld [vmem:[%s1166 + $0x98] sm:$0x1]
      %v1261 = vsel %vm1175, %v1066, %v1260
      %1262 = vst [vmem:[%s1166 + $0x98] sm:$0x1] %v1261
      %v1263 = vld [vmem:[%s1166 + $0x9c] sm:$0xf]
      %v1264 = vsel %vm1169, %v1073, %v1263
      %1265 = vst [vmem:[%s1166 + $0x9c] sm:$0xf] %v1264
      %1266 = vst [vmem:[%s1166 + $0xa0] sm:$0xf] %v1082
      %v1267 = vld [vmem:[%s1166 + $0xa4] sm:$0x1]
      %v1268 = vsel %vm1175, %v1083, %v1267
      %1269 = vst [vmem:[%s1166 + $0xa4] sm:$0x1] %v1268
      %v1270 = vld [vmem:[%s1166 + $0xa8] sm:$0xf]
      %v1271 = vsel %vm1169, %v1090, %v1270
      %1272 = vst [vmem:[%s1166 + $0xa8] sm:$0xf] %v1271
      %1273 = vst [vmem:[%s1166 + $0xac] sm:$0xf] %v1099
      %v1274 = vld [vmem:[%s1166 + $0xb0] sm:$0x1]
      %v1275 = vsel %vm1175, %v1100, %v1274
      %1276 = vst [vmem:[%s1166 + $0xb0] sm:$0x1] %v1275
      %v1277 = vld [vmem:[%s1166 + $0xb4] sm:$0xf]
      %v1278 = vsel %vm1169, %v1107, %v1277
      %1279 = vst [vmem:[%s1166 + $0xb4] sm:$0xf] %v1278
      %1280 = vst [vmem:[%s1166 + $0xb8] sm:$0xf] %v1116
      %v1281 = vld [vmem:[%s1166 + $0xbc] sm:$0x1]
      %v1282 = vsel %vm1175, %v1117, %v1281
      %1283 = vst [vmem:[%s1166 + $0xbc] sm:$0x1] %v1282
      %v1284 = vld [vmem:[#allocation2] sm:$0xf]
      %v1285 = vld [vmem:[#allocation2 + $0x4] sm:$0xf]
      %v1286 = vld [vmem:[#allocation2 + $0xc] sm:$0xf]
      %v1287 = vld [vmem:[#allocation2 + $0x10] sm:$0xf]
      %v1288 = vld [vmem:[#allocation2 + $0x18] sm:$0xf]
      %v1289 = vld [vmem:[#allocation2 + $0x1c] sm:$0xf]
      %v1290 = vld [vmem:[#allocation2 + $0x24] sm:$0xf]
      %v1291 = vld [vmem:[#allocation2 + $0x28] sm:$0xf]
      %v1292 = vld [vmem:[#allocation2 + $0x30] sm:$0xf]
      %v1293 = vld [vmem:[#allocation2 + $0x34] sm:$0xf]
      %v1294 = vld [vmem:[#allocation2 + $0x3c] sm:$0xf]
      %v1295 = vld [vmem:[#allocation2 + $0x40] sm:$0xf]
      %v1296 = vld [vmem:[#allocation2 + $0x48] sm:$0xf]
      %v1297 = vld [vmem:[#allocation2 + $0x4c] sm:$0xf]
      %v1298 = vld [vmem:[#allocation2 + $0x54] sm:$0xf]
      %v1299 = vld [vmem:[#allocation2 + $0x58] sm:$0xf]
      %v1300 = vld [vmem:[#allocation2 + $0x60] sm:$0xf]
      %v1301 = vld [vmem:[#allocation2 + $0x64] sm:$0xf]
      %v1302 = vld [vmem:[#allocation2 + $0x6c] sm:$0xf]
      %v1303 = vld [vmem:[#allocation2 + $0x70] sm:$0xf]
      %v1304 = vld [vmem:[#allocation2 + $0x78] sm:$0xf]
      %v1305 = vld [vmem:[#allocation2 + $0x7c] sm:$0xf]
      %v1306 = vld [vmem:[#allocation2 + $0x84] sm:$0xf]
      %v1307 = vld [vmem:[#allocation2 + $0x88] sm:$0xf]
      %v1308 = vld [vmem:[#allocation2 + $0x90] sm:$0xf]
      %v1309 = vld [vmem:[#allocation2 + $0x94] sm:$0xf]
      %v1310 = vld [vmem:[#allocation2 + $0x9c] sm:$0xf]
      %v1311 = vld [vmem:[#allocation2 + $0xa0] sm:$0xf]
      %v1312 = vld [vmem:[#allocation2 + $0xa8] sm:$0xf]
      %v1313 = vld [vmem:[#allocation2 + $0xac] sm:$0xf]
      %v1314 = vld [vmem:[#allocation2 + $0xb4] sm:$0xf]
      %v1315 = vld [vmem:[#allocation2 + $0xb8] sm:$0xf]
      %v1316 = vld [vmem:[%s3] sm:$0xf]
      %v1317 = vld [vmem:[%s3 + $0x4] sm:$0xf]
      %v1318 = vld [vmem:[%s3 + $0x8] sm:$0xf]
      %v1319 = vld [vmem:[%s3 + $0xc] sm:$0xf]
      %v1320 = vld [vmem:[%s3 + $0x10] sm:$0xf]
      %v1321 = vld [vmem:[%s3 + $0x14] sm:$0xf]
      %v1322 = vld [vmem:[%s3 + $0x18] sm:$0xf]
      %v1323 = vld [vmem:[%s3 + $0x1c] sm:$0xf]
      %v1324 = vld [vmem:[%s3 + $0x20] sm:$0xf]
      %v1325 = vld [vmem:[%s3 + $0x24] sm:$0xf]
      %v1326 = vld [vmem:[%s3 + $0x28] sm:$0xf]
      %v1327 = vld [vmem:[%s3 + $0x2c] sm:$0xf]
      %v1328 = vld [vmem:[%s3 + $0x30] sm:$0xf]
      %v1329 = vld [vmem:[%s3 + $0x34] sm:$0xf]
      %v1330 = vld [vmem:[%s3 + $0x38] sm:$0xf]
      %v1331 = vld [vmem:[%s3 + $0x3c] sm:$0xf]
      %v1332 = vld [vmem:[#allocation2 + $0x8] sm:$0x1]
      %v1333 = vld [vmem:[#allocation2 + $0x14] sm:$0x1]
      %v1334 = vld [vmem:[#allocation2 + $0x20] sm:$0x1]
      %v1335 = vld [vmem:[#allocation2 + $0x2c] sm:$0x1]
      %v1336 = vld [vmem:[#allocation2 + $0x38] sm:$0x1]
      %v1337 = vld [vmem:[#allocation2 + $0x44] sm:$0x1]
      %v1338 = vld [vmem:[#allocation2 + $0x50] sm:$0x1]
      %v1339 = vld [vmem:[#allocation2 + $0x5c] sm:$0x1]
      %v1340 = vld [vmem:[#allocation2 + $0x68] sm:$0x1]
      %v1341 = vld [vmem:[#allocation2 + $0x74] sm:$0x1]
      %v1342 = vld [vmem:[#allocation2 + $0x80] sm:$0x1]
      %v1343 = vld [vmem:[#allocation2 + $0x8c] sm:$0x1]
      %v1344 = vld [vmem:[#allocation2 + $0x98] sm:$0x1]
      %v1345 = vld [vmem:[#allocation2 + $0xa4] sm:$0x1]
      %v1346 = vld [vmem:[#allocation2 + $0xb0] sm:$0x1]
      %v1347 = vld [vmem:[#allocation2 + $0xbc] sm:$0x1]
      %vm1348 = vsmask.f32 3328
      %vm1349 = vsmask.f32 7440
      %vm1350 = vmor %vm1348, %vm1349
      %v1352 = vshrl.u32 %v1284, 16
      %v1354 = vrot.slane %v1352, 4
      %v1355 = vshll.u32 %v1284, 16
      %v1357 = vrot.slane %v1355, 5
      %v1358 = vor.u32 %v1354, %v1357
      %v1359 = vrot.slane %v1358, 4
      %v1361 = vshll.u32 %v1285, 16
      %v1363 = vrot.slane %v1361, 5
      %v1364 = vsel %vm1350, %v1359, %v1363
      %v1365 = vshrl.u32 %v1285, 16
      %v1367 = vrot.slane %v1365, 4
      %v1368 = vor.u32 %v1367, %v1363
      %v1369 = vrot.slane %v1368, 4
      %v1371 = vshll.u32 %v1332, 16
      %v1373 = vrot.slane %v1371, 5
      %v1374 = vsel %vm1350, %v1369, %v1373
      %v1376 = vshrl.u32 %v1286, 16
      %v1378 = vrot.slane %v1376, 4
      %v1379 = vshll.u32 %v1286, 16
      %v1381 = vrot.slane %v1379, 5
      %v1382 = vor.u32 %v1378, %v1381
      %v1383 = vrot.slane %v1382, 4
      %v1385 = vshll.u32 %v1287, 16
      %v1387 = vrot.slane %v1385, 5
      %v1388 = vsel %vm1350, %v1383, %v1387
      %v1389 = vshrl.u32 %v1287, 16
      %v1391 = vrot.slane %v1389, 4
      %v1392 = vor.u32 %v1391, %v1387
      %v1393 = vrot.slane %v1392, 4
      %v1395 = vshll.u32 %v1333, 16
      %v1397 = vrot.slane %v1395, 5
      %v1398 = vsel %vm1350, %v1393, %v1397
      %v1400 = vshrl.u32 %v1288, 16
      %v1402 = vrot.slane %v1400, 4
      %v1403 = vshll.u32 %v1288, 16
      %v1405 = vrot.slane %v1403, 5
      %v1406 = vor.u32 %v1402, %v1405
      %v1407 = vrot.slane %v1406, 4
      %v1409 = vshll.u32 %v1289, 16
      %v1411 = vrot.slane %v1409, 5
      %v1412 = vsel %vm1350, %v1407, %v1411
      %v1413 = vshrl.u32 %v1289, 16
      %v1415 = vrot.slane %v1413, 4
      %v1416 = vor.u32 %v1415, %v1411
      %v1417 = vrot.slane %v1416, 4
      %v1419 = vshll.u32 %v1334, 16
      %v1421 = vrot.slane %v1419, 5
      %v1422 = vsel %vm1350, %v1417, %v1421
      %v1424 = vshrl.u32 %v1290, 16
      %v1426 = vrot.slane %v1424, 4
      %v1427 = vshll.u32 %v1290, 16
      %v1429 = vrot.slane %v1427, 5
      %v1430 = vor.u32 %v1426, %v1429
      %v1431 = vrot.slane %v1430, 4
      %v1433 = vshll.u32 %v1291, 16
      %v1435 = vrot.slane %v1433, 5
      %v1436 = vsel %vm1350, %v1431, %v1435
      %v1437 = vshrl.u32 %v1291, 16
      %v1439 = vrot.slane %v1437, 4
      %v1440 = vor.u32 %v1439, %v1435
      %v1441 = vrot.slane %v1440, 4
      %v1443 = vshll.u32 %v1335, 16
      %v1445 = vrot.slane %v1443, 5
      %v1446 = vsel %vm1350, %v1441, %v1445
      %v1448 = vshrl.u32 %v1292, 16
      %v1450 = vrot.slane %v1448, 4
      %v1451 = vshll.u32 %v1292, 16
      %v1453 = vrot.slane %v1451, 5
      %v1454 = vor.u32 %v1450, %v1453
      %v1455 = vrot.slane %v1454, 4
      %v1457 = vshll.u32 %v1293, 16
      %v1459 = vrot.slane %v1457, 5
      %v1460 = vsel %vm1350, %v1455, %v1459
      %v1461 = vshrl.u32 %v1293, 16
      %v1463 = vrot.slane %v1461, 4
      %v1464 = vor.u32 %v1463, %v1459
      %v1465 = vrot.slane %v1464, 4
      %v1467 = vshll.u32 %v1336, 16
      %v1469 = vrot.slane %v1467, 5
      %v1470 = vsel %vm1350, %v1465, %v1469
      %v1472 = vshrl.u32 %v1294, 16
      %v1474 = vrot.slane %v1472, 4
      %v1475 = vshll.u32 %v1294, 16
      %v1477 = vrot.slane %v1475, 5
      %v1478 = vor.u32 %v1474, %v1477
      %v1479 = vrot.slane %v1478, 4
      %v1481 = vshll.u32 %v1295, 16
      %v1483 = vrot.slane %v1481, 5
      %v1484 = vsel %vm1350, %v1479, %v1483
      %v1485 = vshrl.u32 %v1295, 16
      %v1487 = vrot.slane %v1485, 4
      %v1488 = vor.u32 %v1487, %v1483
      %v1489 = vrot.slane %v1488, 4
      %v1491 = vshll.u32 %v1337, 16
      %v1493 = vrot.slane %v1491, 5
      %v1494 = vsel %vm1350, %v1489, %v1493
      %v1496 = vshrl.u32 %v1296, 16
      %v1498 = vrot.slane %v1496, 4
      %v1499 = vshll.u32 %v1296, 16
      %v1501 = vrot.slane %v1499, 5
      %v1502 = vor.u32 %v1498, %v1501
      %v1503 = vrot.slane %v1502, 4
      %v1505 = vshll.u32 %v1297, 16
      %v1507 = vrot.slane %v1505, 5
      %v1508 = vsel %vm1350, %v1503, %v1507
      %v1509 = vshrl.u32 %v1297, 16
      %v1511 = vrot.slane %v1509, 4
      %v1512 = vor.u32 %v1511, %v1507
      %v1513 = vrot.slane %v1512, 4
      %v1515 = vshll.u32 %v1338, 16
      %v1517 = vrot.slane %v1515, 5
      %v1518 = vsel %vm1350, %v1513, %v1517
      %v1520 = vshrl.u32 %v1298, 16
      %v1522 = vrot.slane %v1520, 4
      %v1523 = vshll.u32 %v1298, 16
      %v1525 = vrot.slane %v1523, 5
      %v1526 = vor.u32 %v1522, %v1525
      %v1527 = vrot.slane %v1526, 4
      %v1529 = vshll.u32 %v1299, 16
      %v1531 = vrot.slane %v1529, 5
      %v1532 = vsel %vm1350, %v1527, %v1531
      %v1533 = vshrl.u32 %v1299, 16
      %v1535 = vrot.slane %v1533, 4
      %v1536 = vor.u32 %v1535, %v1531
      %v1537 = vrot.slane %v1536, 4
      %v1539 = vshll.u32 %v1339, 16
      %v1541 = vrot.slane %v1539, 5
      %v1542 = vsel %vm1350, %v1537, %v1541
      %v1544 = vshrl.u32 %v1300, 16
      %v1546 = vrot.slane %v1544, 4
      %v1547 = vshll.u32 %v1300, 16
      %v1549 = vrot.slane %v1547, 5
      %v1550 = vor.u32 %v1546, %v1549
      %v1551 = vrot.slane %v1550, 4
      %v1553 = vshll.u32 %v1301, 16
      %v1555 = vrot.slane %v1553, 5
      %v1556 = vsel %vm1350, %v1551, %v1555
      %v1557 = vshrl.u32 %v1301, 16
      %v1559 = vrot.slane %v1557, 4
      %v1560 = vor.u32 %v1559, %v1555
      %v1561 = vrot.slane %v1560, 4
      %v1563 = vshll.u32 %v1340, 16
      %v1565 = vrot.slane %v1563, 5
      %v1566 = vsel %vm1350, %v1561, %v1565
      %v1568 = vshrl.u32 %v1302, 16
      %v1570 = vrot.slane %v1568, 4
      %v1571 = vshll.u32 %v1302, 16
      %v1573 = vrot.slane %v1571, 5
      %v1574 = vor.u32 %v1570, %v1573
      %v1575 = vrot.slane %v1574, 4
      %v1577 = vshll.u32 %v1303, 16
      %v1579 = vrot.slane %v1577, 5
      %v1580 = vsel %vm1350, %v1575, %v1579
      %v1581 = vshrl.u32 %v1303, 16
      %v1583 = vrot.slane %v1581, 4
      %v1584 = vor.u32 %v1583, %v1579
      %v1585 = vrot.slane %v1584, 4
      %v1587 = vshll.u32 %v1341, 16
      %v1589 = vrot.slane %v1587, 5
      %v1590 = vsel %vm1350, %v1585, %v1589
      %v1592 = vshrl.u32 %v1304, 16
      %v1594 = vrot.slane %v1592, 4
      %v1595 = vshll.u32 %v1304, 16
      %v1597 = vrot.slane %v1595, 5
      %v1598 = vor.u32 %v1594, %v1597
      %v1599 = vrot.slane %v1598, 4
      %v1601 = vshll.u32 %v1305, 16
      %v1603 = vrot.slane %v1601, 5
      %v1604 = vsel %vm1350, %v1599, %v1603
      %v1605 = vshrl.u32 %v1305, 16
      %v1607 = vrot.slane %v1605, 4
      %v1608 = vor.u32 %v1607, %v1603
      %v1609 = vrot.slane %v1608, 4
      %v1611 = vshll.u32 %v1342, 16
      %v1613 = vrot.slane %v1611, 5
      %v1614 = vsel %vm1350, %v1609, %v1613
      %v1616 = vshrl.u32 %v1306, 16
      %v1618 = vrot.slane %v1616, 4
      %v1619 = vshll.u32 %v1306, 16
      %v1621 = vrot.slane %v1619, 5
      %v1622 = vor.u32 %v1618, %v1621
      %v1623 = vrot.slane %v1622, 4
      %v1625 = vshll.u32 %v1307, 16
      %v1627 = vrot.slane %v1625, 5
      %v1628 = vsel %vm1350, %v1623, %v1627
      %v1629 = vshrl.u32 %v1307, 16
      %v1631 = vrot.slane %v1629, 4
      %v1632 = vor.u32 %v1631, %v1627
      %v1633 = vrot.slane %v1632, 4
      %v1635 = vshll.u32 %v1343, 16
      %v1637 = vrot.slane %v1635, 5
      %v1638 = vsel %vm1350, %v1633, %v1637
      %v1640 = vshrl.u32 %v1308, 16
      %v1642 = vrot.slane %v1640, 4
      %v1643 = vshll.u32 %v1308, 16
      %v1645 = vrot.slane %v1643, 5
      %v1646 = vor.u32 %v1642, %v1645
      %v1647 = vrot.slane %v1646, 4
      %v1649 = vshll.u32 %v1309, 16
      %v1651 = vrot.slane %v1649, 5
      %v1652 = vsel %vm1350, %v1647, %v1651
      %v1653 = vshrl.u32 %v1309, 16
      %v1655 = vrot.slane %v1653, 4
      %v1656 = vor.u32 %v1655, %v1651
      %v1657 = vrot.slane %v1656, 4
      %v1659 = vshll.u32 %v1344, 16
      %v1661 = vrot.slane %v1659, 5
      %v1662 = vsel %vm1350, %v1657, %v1661
      %v1664 = vshrl.u32 %v1310, 16
      %v1666 = vrot.slane %v1664, 4
      %v1667 = vshll.u32 %v1310, 16
      %v1669 = vrot.slane %v1667, 5
      %v1670 = vor.u32 %v1666, %v1669
      %v1671 = vrot.slane %v1670, 4
      %v1673 = vshll.u32 %v1311, 16
      %v1675 = vrot.slane %v1673, 5
      %v1676 = vsel %vm1350, %v1671, %v1675
      %v1677 = vshrl.u32 %v1311, 16
      %v1679 = vrot.slane %v1677, 4
      %v1680 = vor.u32 %v1679, %v1675
      %v1681 = vrot.slane %v1680, 4
      %v1683 = vshll.u32 %v1345, 16
      %v1685 = vrot.slane %v1683, 5
      %v1686 = vsel %vm1350, %v1681, %v1685
      %v1688 = vshrl.u32 %v1312, 16
      %v1690 = vrot.slane %v1688, 4
      %v1691 = vshll.u32 %v1312, 16
      %v1693 = vrot.slane %v1691, 5
      %v1694 = vor.u32 %v1690, %v1693
      %v1695 = vrot.slane %v1694, 4
      %v1697 = vshll.u32 %v1313, 16
      %v1699 = vrot.slane %v1697, 5
      %v1700 = vsel %vm1350, %v1695, %v1699
      %v1701 = vshrl.u32 %v1313, 16
      %v1703 = vrot.slane %v1701, 4
      %v1704 = vor.u32 %v1703, %v1699
      %v1705 = vrot.slane %v1704, 4
      %v1707 = vshll.u32 %v1346, 16
      %v1709 = vrot.slane %v1707, 5
      %v1710 = vsel %vm1350, %v1705, %v1709
      %v1712 = vshrl.u32 %v1314, 16
      %v1714 = vrot.slane %v1712, 4
      %v1715 = vshll.u32 %v1314, 16
      %v1717 = vrot.slane %v1715, 5
      %v1718 = vor.u32 %v1714, %v1717
      %v1719 = vrot.slane %v1718, 4
      %v1721 = vshll.u32 %v1315, 16
      %v1723 = vrot.slane %v1721, 5
      %v1724 = vsel %vm1350, %v1719, %v1723
      %v1725 = vshrl.u32 %v1315, 16
      %v1727 = vrot.slane %v1725, 4
      %v1728 = vor.u32 %v1727, %v1723
      %v1729 = vrot.slane %v1728, 4
      %v1731 = vshll.u32 %v1347, 16
      %v1733 = vrot.slane %v1731, 5
      %v1734 = vsel %vm1350, %v1729, %v1733
      %s1735 = scalar_lea.vmem %s3, 64
      %v1736 = vld [vmem:[%s1735] sm:$0xf]
      %v1737 = vld [vmem:[%s1735 + $0x4] sm:$0xf]
      %v1738 = vld [vmem:[%s1735 + $0x8] sm:$0xf]
      %v1739 = vld [vmem:[%s1735 + $0xc] sm:$0xf]
      %v1740 = vld [vmem:[%s1735 + $0x10] sm:$0xf]
      %v1741 = vld [vmem:[%s1735 + $0x14] sm:$0xf]
      %v1742 = vld [vmem:[%s1735 + $0x18] sm:$0xf]
      %v1743 = vld [vmem:[%s1735 + $0x1c] sm:$0xf]
      %v1744 = vld [vmem:[%s1735 + $0x20] sm:$0xf]
      %v1745 = vld [vmem:[%s1735 + $0x24] sm:$0xf]
      %v1746 = vld [vmem:[%s1735 + $0x28] sm:$0xf]
      %v1747 = vld [vmem:[%s1735 + $0x2c] sm:$0xf]
      %v1748 = vld [vmem:[%s1735 + $0x30] sm:$0xf]
      %v1749 = vld [vmem:[%s1735 + $0x34] sm:$0xf]
      %v1750 = vld [vmem:[%s1735 + $0x38] sm:$0xf]
      %v1751 = vld [vmem:[%s1735 + $0x3c] sm:$0xf]
      %v1752 = vunpack.c.l.b16 %v1364
      %v1753 = vunpack.c.l.b16 %v1374
      %v1754 = vunpack.c.l.b16 %v1388
      %v1755 = vunpack.c.l.b16 %v1398
      %v1756 = vunpack.c.l.b16 %v1412
      %v1757 = vunpack.c.l.b16 %v1422
      %v1758 = vunpack.c.l.b16 %v1436
      %v1759 = vunpack.c.l.b16 %v1446
      %v1760 = vunpack.c.l.b16 %v1460
      %v1761 = vunpack.c.l.b16 %v1470
      %v1762 = vunpack.c.l.b16 %v1484
      %v1763 = vunpack.c.l.b16 %v1494
      %v1764 = vunpack.c.l.b16 %v1508
      %v1765 = vunpack.c.l.b16 %v1518
      %v1766 = vunpack.c.l.b16 %v1532
      %v1767 = vunpack.c.l.b16 %v1542
      %v1768 = vunpack.c.l.b16 %v1556
      %v1769 = vunpack.c.l.b16 %v1566
      %v1770 = vunpack.c.l.b16 %v1580
      %v1771 = vunpack.c.l.b16 %v1590
      %v1772 = vunpack.c.l.b16 %v1604
      %v1773 = vunpack.c.l.b16 %v1614
      %v1774 = vunpack.c.l.b16 %v1628
      %v1775 = vunpack.c.l.b16 %v1638
      %v1776 = vunpack.c.l.b16 %v1652
      %v1777 = vunpack.c.l.b16 %v1662
      %v1778 = vunpack.c.l.b16 %v1676
      %v1779 = vunpack.c.l.b16 %v1686
      %v1780 = vunpack.c.l.b16 %v1700
      %v1781 = vunpack.c.l.b16 %v1710
      %v1782 = vunpack.c.l.b16 %v1724
      %v1783 = vunpack.c.l.b16 %v1734
      %v1784 = vpack.c.b16 %v1753, %v1752
      %v1785 = vpack.c.b16 %v1755, %v1754
      %v1786 = vpack.c.b16 %v1757, %v1756
      %v1787 = vpack.c.b16 %v1759, %v1758
      %v1788 = vpack.c.b16 %v1761, %v1760
      %v1789 = vpack.c.b16 %v1763, %v1762
      %v1790 = vpack.c.b16 %v1765, %v1764
      %v1791 = vpack.c.b16 %v1767, %v1766
      %v1792 = vpack.c.b16 %v1769, %v1768
      %v1793 = vpack.c.b16 %v1771, %v1770
      %v1794 = vpack.c.b16 %v1773, %v1772
      %v1795 = vpack.c.b16 %v1775, %v1774
      %v1796 = vpack.c.b16 %v1777, %v1776
      %v1797 = vpack.c.b16 %v1779, %v1778
      %v1798 = vpack.c.b16 %v1781, %v1780
      %v1799 = vpack.c.b16 %v1783, %v1782
      %v1832 = vunpack.c.l.b16 %v1736
      %v1833 = vunpack.c.l.b16 %v1737
      %v1834 = vunpack.c.l.b16 %v1738
      %v1835 = vunpack.c.l.b16 %v1739
      %v1836 = vunpack.c.l.b16 %v1740
      %v1837 = vunpack.c.l.b16 %v1741
      %v1838 = vunpack.c.l.b16 %v1742
      %v1839 = vunpack.c.l.b16 %v1743
      %v1840 = vunpack.c.l.b16 %v1744
      %v1841 = vunpack.c.l.b16 %v1745
      %v1842 = vunpack.c.l.b16 %v1746
      %v1843 = vunpack.c.l.b16 %v1747
      %v1844 = vunpack.c.l.b16 %v1748
      %v1845 = vunpack.c.l.b16 %v1749
      %v1846 = vunpack.c.l.b16 %v1750
      %v1847 = vunpack.c.l.b16 %v1751
      %v1848 = vpack.c.b16 %v1833, %v1832
      %v1849 = vpack.c.b16 %v1835, %v1834
      %v1850 = vpack.c.b16 %v1837, %v1836
      %v1851 = vpack.c.b16 %v1839, %v1838
      %v1852 = vpack.c.b16 %v1841, %v1840
      %v1853 = vpack.c.b16 %v1843, %v1842
      %v1854 = vpack.c.b16 %v1845, %v1844
      %v1855 = vpack.c.b16 %v1847, %v1846
      %1864 = vmatpush.bf16.msra.mxu0 %v1855
      %1865 = vmatpush.bf16.msra.mxu0 %v1854
      %1866 = vmatpush.bf16.msra.mxu0 %v1853
      %1867 = vmatpush.bf16.msra.mxu0 %v1852
      %1868 = vmatpush.bf16.msra.mxu0 %v1851
      %1869 = vmatpush.bf16.msra.mxu0 %v1850
      %1870 = vmatpush.bf16.msra.mxu0 %v1849
      %1871 = vmatpush.bf16.msra.mxu0 %v1848
      %1872 = vmatmul.bf16.gmra.mxu0 %v1784
      %v1873 = vpop.f32.mrf.mxu0
      %v1874 = vadd.f32 0.0, %v1873
      %v1875 = vpop.f32.mrf.mxu0
      %v1876 = vadd.f32 0.0, %v1875
      %1877 = vmatmul.bf16.gmra.mxu0 %v1785
      %v1878 = vpop.f32.mrf.mxu0
      %v1879 = vadd.f32 0.0, %v1878
      %v1880 = vpop.f32.mrf.mxu0
      %v1881 = vadd.f32 0.0, %v1880
      %1882 = vmatmul.bf16.gmra.mxu0 %v1786
      %v1883 = vpop.f32.mrf.mxu0
      %v1884 = vadd.f32 0.0, %v1883
      %v1885 = vpop.f32.mrf.mxu0
      %v1886 = vadd.f32 0.0, %v1885
      %1887 = vmatmul.bf16.gmra.mxu0 %v1787
      %v1888 = vpop.f32.mrf.mxu0
      %v1889 = vadd.f32 0.0, %v1888
      %v1890 = vpop.f32.mrf.mxu0
      %v1891 = vadd.f32 0.0, %v1890
      %1892 = vmatmul.bf16.gmra.mxu0 %v1788
      %v1893 = vpop.f32.mrf.mxu0
      %v1894 = vadd.f32 0.0, %v1893
      %v1895 = vpop.f32.mrf.mxu0
      %v1896 = vadd.f32 0.0, %v1895
      %1897 = vmatmul.bf16.gmra.mxu0 %v1789
      %v1898 = vpop.f32.mrf.mxu0
      %v1899 = vadd.f32 0.0, %v1898
      %v1900 = vpop.f32.mrf.mxu0
      %v1901 = vadd.f32 0.0, %v1900
      %1902 = vmatmul.bf16.gmra.mxu0 %v1790
      %v1903 = vpop.f32.mrf.mxu0
      %v1904 = vadd.f32 0.0, %v1903
      %v1905 = vpop.f32.mrf.mxu0
      %v1906 = vadd.f32 0.0, %v1905
      %1907 = vmatmul.bf16.gmra.mxu0 %v1791
      %v1908 = vpop.f32.mrf.mxu0
      %v1909 = vadd.f32 0.0, %v1908
      %v1910 = vpop.f32.mrf.mxu0
      %v1911 = vadd.f32 0.0, %v1910
      %1912 = vmatmul.bf16.gmra.mxu0 %v1792
      %v1913 = vpop.f32.mrf.mxu0
      %v1914 = vadd.f32 0.0, %v1913
      %v1915 = vpop.f32.mrf.mxu0
      %v1916 = vadd.f32 0.0, %v1915
      %1917 = vmatmul.bf16.gmra.mxu0 %v1793
      %v1918 = vpop.f32.mrf.mxu0
      %v1919 = vadd.f32 0.0, %v1918
      %v1920 = vpop.f32.mrf.mxu0
      %v1921 = vadd.f32 0.0, %v1920
      %1922 = vmatmul.bf16.gmra.mxu0 %v1794
      %v1923 = vpop.f32.mrf.mxu0
      %v1924 = vadd.f32 0.0, %v1923
      %v1925 = vpop.f32.mrf.mxu0
      %v1926 = vadd.f32 0.0, %v1925
      %1927 = vmatmul.bf16.gmra.mxu0 %v1795
      %v1928 = vpop.f32.mrf.mxu0
      %v1929 = vadd.f32 0.0, %v1928
      %v1930 = vpop.f32.mrf.mxu0
      %v1931 = vadd.f32 0.0, %v1930
      %1932 = vmatmul.bf16.gmra.mxu0 %v1796
      %v1933 = vpop.f32.mrf.mxu0
      %v1934 = vadd.f32 0.0, %v1933
      %v1935 = vpop.f32.mrf.mxu0
      %v1936 = vadd.f32 0.0, %v1935
      %1937 = vmatmul.bf16.gmra.mxu0 %v1797
      %v1938 = vpop.f32.mrf.mxu0
      %v1939 = vadd.f32 0.0, %v1938
      %v1940 = vpop.f32.mrf.mxu0
      %v1941 = vadd.f32 0.0, %v1940
      %1942 = vmatmul.bf16.gmra.mxu0 %v1798
      %v1943 = vpop.f32.mrf.mxu0
      %v1944 = vadd.f32 0.0, %v1943
      %v1945 = vpop.f32.mrf.mxu0
      %v1946 = vadd.f32 0.0, %v1945
      %1947 = vmatmul.bf16.gmra.mxu0 %v1799
      %v1948 = vpop.f32.mrf.mxu0
      %v1949 = vadd.f32 0.0, %v1948
      %v1950 = vpop.f32.mrf.mxu0
      %v1951 = vadd.f32 0.0, %v1950
      %1952 = vdwg.mxu0
      %v1985 = vunpack.c.l.b16 %v1284
      %v1986 = vunpack.c.l.b16 %v1285
      %v1987 = vunpack.c.l.b16 %v1286
      %v1988 = vunpack.c.l.b16 %v1287
      %v1989 = vunpack.c.l.b16 %v1288
      %v1990 = vunpack.c.l.b16 %v1289
      %v1991 = vunpack.c.l.b16 %v1290
      %v1992 = vunpack.c.l.b16 %v1291
      %v1993 = vunpack.c.l.b16 %v1292
      %v1994 = vunpack.c.l.b16 %v1293
      %v1995 = vunpack.c.l.b16 %v1294
      %v1996 = vunpack.c.l.b16 %v1295
      %v1997 = vunpack.c.l.b16 %v1296
      %v1998 = vunpack.c.l.b16 %v1297
      %v1999 = vunpack.c.l.b16 %v1298
      %v2000 = vunpack.c.l.b16 %v1299
      %v2001 = vunpack.c.l.b16 %v1300
      %v2002 = vunpack.c.l.b16 %v1301
      %v2003 = vunpack.c.l.b16 %v1302
      %v2004 = vunpack.c.l.b16 %v1303
      %v2005 = vunpack.c.l.b16 %v1304
      %v2006 = vunpack.c.l.b16 %v1305
      %v2007 = vunpack.c.l.b16 %v1306
      %v2008 = vunpack.c.l.b16 %v1307
      %v2009 = vunpack.c.l.b16 %v1308
      %v2010 = vunpack.c.l.b16 %v1309
      %v2011 = vunpack.c.l.b16 %v1310
      %v2012 = vunpack.c.l.b16 %v1311
      %v2013 = vunpack.c.l.b16 %v1312
      %v2014 = vunpack.c.l.b16 %v1313
      %v2015 = vunpack.c.l.b16 %v1314
      %v2016 = vunpack.c.l.b16 %v1315
      %v2017 = vpack.c.b16 %v1986, %v1985
      %v2018 = vpack.c.b16 %v1988, %v1987
      %v2019 = vpack.c.b16 %v1990, %v1989
      %v2020 = vpack.c.b16 %v1992, %v1991
      %v2021 = vpack.c.b16 %v1994, %v1993
      %v2022 = vpack.c.b16 %v1996, %v1995
      %v2023 = vpack.c.b16 %v1998, %v1997
      %v2024 = vpack.c.b16 %v2000, %v1999
      %v2025 = vpack.c.b16 %v2002, %v2001
      %v2026 = vpack.c.b16 %v2004, %v2003
      %v2027 = vpack.c.b16 %v2006, %v2005
      %v2028 = vpack.c.b16 %v2008, %v2007
      %v2029 = vpack.c.b16 %v2010, %v2009
      %v2030 = vpack.c.b16 %v2012, %v2011
      %v2031 = vpack.c.b16 %v2014, %v2013
      %v2032 = vpack.c.b16 %v2016, %v2015
      %v2065 = vunpack.c.l.b16 %v1316
      %v2066 = vunpack.c.l.b16 %v1317
      %v2067 = vunpack.c.l.b16 %v1318
      %v2068 = vunpack.c.l.b16 %v1319
      %v2069 = vunpack.c.l.b16 %v1320
      %v2070 = vunpack.c.l.b16 %v1321
      %v2071 = vunpack.c.l.b16 %v1322
      %v2072 = vunpack.c.l.b16 %v1323
      %v2073 = vunpack.c.l.b16 %v1324
      %v2074 = vunpack.c.l.b16 %v1325
      %v2075 = vunpack.c.l.b16 %v1326
      %v2076 = vunpack.c.l.b16 %v1327
      %v2077 = vunpack.c.l.b16 %v1328
      %v2078 = vunpack.c.l.b16 %v1329
      %v2079 = vunpack.c.l.b16 %v1330
      %v2080 = vunpack.c.l.b16 %v1331
      %v2081 = vpack.c.b16 %v2066, %v2065
      %v2082 = vpack.c.b16 %v2068, %v2067
      %v2083 = vpack.c.b16 %v2070, %v2069
      %v2084 = vpack.c.b16 %v2072, %v2071
      %v2085 = vpack.c.b16 %v2074, %v2073
      %v2086 = vpack.c.b16 %v2076, %v2075
      %v2087 = vpack.c.b16 %v2078, %v2077
      %v2088 = vpack.c.b16 %v2080, %v2079
      %2097 = vmatpush.bf16.msra.mxu0 %v2088
      %2098 = vmatpush.bf16.msra.mxu0 %v2087
      %2099 = vmatpush.bf16.msra.mxu0 %v2086
      %2100 = vmatpush.bf16.msra.mxu0 %v2085
      %2101 = vmatpush.bf16.msra.mxu0 %v2084
      %2102 = vmatpush.bf16.msra.mxu0 %v2083
      %2103 = vmatpush.bf16.msra.mxu0 %v2082
      %2104 = vmatpush.bf16.msra.mxu0 %v2081
      %2105 = vmatmul.bf16.gmra.mxu0 %v2017
      %v2106 = vpop.f32.mrf.mxu0
      %v2107 = vadd.f32 %v1874, %v2106
      %v2108 = vpop.f32.mrf.mxu0
      %v2109 = vadd.f32 %v1876, %v2108
      %2110 = vmatmul.bf16.gmra.mxu0 %v2018
      %v2111 = vpop.f32.mrf.mxu0
      %v2112 = vadd.f32 %v1879, %v2111
      %v2113 = vpop.f32.mrf.mxu0
      %v2114 = vadd.f32 %v1881, %v2113
      %2115 = vmatmul.bf16.gmra.mxu0 %v2019
      %v2116 = vpop.f32.mrf.mxu0
      %v2117 = vadd.f32 %v1884, %v2116
      %v2118 = vpop.f32.mrf.mxu0
      %v2119 = vadd.f32 %v1886, %v2118
      %2120 = vmatmul.bf16.gmra.mxu0 %v2020
      %v2121 = vpop.f32.mrf.mxu0
      %v2122 = vadd.f32 %v1889, %v2121
      %v2123 = vpop.f32.mrf.mxu0
      %v2124 = vadd.f32 %v1891, %v2123
      %2125 = vmatmul.bf16.gmra.mxu0 %v2021
      %v2126 = vpop.f32.mrf.mxu0
      %v2127 = vadd.f32 %v1894, %v2126
      %v2128 = vpop.f32.mrf.mxu0
      %v2129 = vadd.f32 %v1896, %v2128
      %2130 = vmatmul.bf16.gmra.mxu0 %v2022
      %v2131 = vpop.f32.mrf.mxu0
      %v2132 = vadd.f32 %v1899, %v2131
      %v2133 = vpop.f32.mrf.mxu0
      %v2134 = vadd.f32 %v1901, %v2133
      %2135 = vmatmul.bf16.gmra.mxu0 %v2023
      %v2136 = vpop.f32.mrf.mxu0
      %v2137 = vadd.f32 %v1904, %v2136
      %v2138 = vpop.f32.mrf.mxu0
      %v2139 = vadd.f32 %v1906, %v2138
      %2140 = vmatmul.bf16.gmra.mxu0 %v2024
      %v2141 = vpop.f32.mrf.mxu0
      %v2142 = vadd.f32 %v1909, %v2141
      %v2143 = vpop.f32.mrf.mxu0
      %v2144 = vadd.f32 %v1911, %v2143
      %2145 = vmatmul.bf16.gmra.mxu0 %v2025
      %v2146 = vpop.f32.mrf.mxu0
      %v2147 = vadd.f32 %v1914, %v2146
      %v2148 = vpop.f32.mrf.mxu0
      %v2149 = vadd.f32 %v1916, %v2148
      %2150 = vmatmul.bf16.gmra.mxu0 %v2026
      %v2151 = vpop.f32.mrf.mxu0
      %v2152 = vadd.f32 %v1919, %v2151
      %v2153 = vpop.f32.mrf.mxu0
      %v2154 = vadd.f32 %v1921, %v2153
      %2155 = vmatmul.bf16.gmra.mxu0 %v2027
      %v2156 = vpop.f32.mrf.mxu0
      %v2157 = vadd.f32 %v1924, %v2156
      %v2158 = vpop.f32.mrf.mxu0
      %v2159 = vadd.f32 %v1926, %v2158
      %2160 = vmatmul.bf16.gmra.mxu0 %v2028
      %v2161 = vpop.f32.mrf.mxu0
      %v2162 = vadd.f32 %v1929, %v2161
      %v2163 = vpop.f32.mrf.mxu0
      %v2164 = vadd.f32 %v1931, %v2163
      %2165 = vmatmul.bf16.gmra.mxu0 %v2029
      %v2166 = vpop.f32.mrf.mxu0
      %v2167 = vadd.f32 %v1934, %v2166
      %v2168 = vpop.f32.mrf.mxu0
      %v2169 = vadd.f32 %v1936, %v2168
      %2170 = vmatmul.bf16.gmra.mxu0 %v2030
      %v2171 = vpop.f32.mrf.mxu0
      %v2172 = vadd.f32 %v1939, %v2171
      %v2173 = vpop.f32.mrf.mxu0
      %v2174 = vadd.f32 %v1941, %v2173
      %2175 = vmatmul.bf16.gmra.mxu0 %v2031
      %v2176 = vpop.f32.mrf.mxu0
      %v2177 = vadd.f32 %v1944, %v2176
      %v2178 = vpop.f32.mrf.mxu0
      %v2179 = vadd.f32 %v1946, %v2178
      %2180 = vmatmul.bf16.gmra.mxu0 %v2032
      %v2181 = vpop.f32.mrf.mxu0
      %v2182 = vadd.f32 %v1949, %v2181
      %v2183 = vpop.f32.mrf.mxu0
      %v2184 = vadd.f32 %v1951, %v2183
      %2185 = vdwg.mxu0
      %v2186 = vld [vmem:[#allocation2] sm:$0xe]
      %v2187 = vld [vmem:[#allocation2 + $0xc] sm:$0xe]
      %v2188 = vld [vmem:[#allocation2 + $0x18] sm:$0xe]
      %v2189 = vld [vmem:[#allocation2 + $0x24] sm:$0xe]
      %v2190 = vld [vmem:[#allocation2 + $0x30] sm:$0xe]
      %v2191 = vld [vmem:[#allocation2 + $0x3c] sm:$0xe]
      %v2192 = vld [vmem:[#allocation2 + $0x48] sm:$0xe]
      %v2193 = vld [vmem:[#allocation2 + $0x54] sm:$0xe]
      %v2194 = vld [vmem:[#allocation2 + $0x60] sm:$0xe]
      %v2195 = vld [vmem:[#allocation2 + $0x6c] sm:$0xe]
      %v2196 = vld [vmem:[#allocation2 + $0x78] sm:$0xe]
      %v2197 = vld [vmem:[#allocation2 + $0x84] sm:$0xe]
      %v2198 = vld [vmem:[#allocation2 + $0x90] sm:$0xe]
      %v2199 = vld [vmem:[#allocation2 + $0x9c] sm:$0xe]
      %v2200 = vld [vmem:[#allocation2 + $0xa8] sm:$0xe]
      %v2201 = vld [vmem:[#allocation2 + $0xb4] sm:$0xe]
      %vm2234 = vcmask 1042432
      %vm2235 = vcmask 1046532
      %vm2236 = vmor %vm2234, %vm2235
      %v2237 = vrot.slane %v2186, 5
      %v2238 = vrot.slane %v2237, 4
      %v2239 = vrot.slane %v1285, 5
      %v2240 = vsel %vm2236, %v2238, %v2239
      %v2241 = vrot.slane %v2239, 4
      %v2242 = vrot.slane %v1332, 5
      %v2243 = vsel %vm2236, %v2241, %v2242
      %v2244 = vrot.slane %v2187, 5
      %v2245 = vrot.slane %v2244, 4
      %v2246 = vrot.slane %v1287, 5
      %v2247 = vsel %vm2236, %v2245, %v2246
      %v2248 = vrot.slane %v2246, 4
      %v2249 = vrot.slane %v1333, 5
      %v2250 = vsel %vm2236, %v2248, %v2249
      %v2251 = vrot.slane %v2188, 5
      %v2252 = vrot.slane %v2251, 4
      %v2253 = vrot.slane %v1289, 5
      %v2254 = vsel %vm2236, %v2252, %v2253
      %v2255 = vrot.slane %v2253, 4
      %v2256 = vrot.slane %v1334, 5
      %v2257 = vsel %vm2236, %v2255, %v2256
      %v2258 = vrot.slane %v2189, 5
      %v2259 = vrot.slane %v2258, 4
      %v2260 = vrot.slane %v1291, 5
      %v2261 = vsel %vm2236, %v2259, %v2260
      %v2262 = vrot.slane %v2260, 4
      %v2263 = vrot.slane %v1335, 5
      %v2264 = vsel %vm2236, %v2262, %v2263
      %v2265 = vrot.slane %v2190, 5
      %v2266 = vrot.slane %v2265, 4
      %v2267 = vrot.slane %v1293, 5
      %v2268 = vsel %vm2236, %v2266, %v2267
      %v2269 = vrot.slane %v2267, 4
      %v2270 = vrot.slane %v1336, 5
      %v2271 = vsel %vm2236, %v2269, %v2270
      %v2272 = vrot.slane %v2191, 5
      %v2273 = vrot.slane %v2272, 4
      %v2274 = vrot.slane %v1295, 5
      %v2275 = vsel %vm2236, %v2273, %v2274
      %v2276 = vrot.slane %v2274, 4
      %v2277 = vrot.slane %v1337, 5
      %v2278 = vsel %vm2236, %v2276, %v2277
      %v2279 = vrot.slane %v2192, 5
      %v2280 = vrot.slane %v2279, 4
      %v2281 = vrot.slane %v1297, 5
      %v2282 = vsel %vm2236, %v2280, %v2281
      %v2283 = vrot.slane %v2281, 4
      %v2284 = vrot.slane %v1338, 5
      %v2285 = vsel %vm2236, %v2283, %v2284
      %v2286 = vrot.slane %v2193, 5
      %v2287 = vrot.slane %v2286, 4
      %v2288 = vrot.slane %v1299, 5
      %v2289 = vsel %vm2236, %v2287, %v2288
      %v2290 = vrot.slane %v2288, 4
      %v2291 = vrot.slane %v1339, 5
      %v2292 = vsel %vm2236, %v2290, %v2291
      %v2293 = vrot.slane %v2194, 5
      %v2294 = vrot.slane %v2293, 4
      %v2295 = vrot.slane %v1301, 5
      %v2296 = vsel %vm2236, %v2294, %v2295
      %v2297 = vrot.slane %v2295, 4
      %v2298 = vrot.slane %v1340, 5
      %v2299 = vsel %vm2236, %v2297, %v2298
      %v2300 = vrot.slane %v2195, 5
      %v2301 = vrot.slane %v2300, 4
      %v2302 = vrot.slane %v1303, 5
      %v2303 = vsel %vm2236, %v2301, %v2302
      %v2304 = vrot.slane %v2302, 4
      %v2305 = vrot.slane %v1341, 5
      %v2306 = vsel %vm2236, %v2304, %v2305
      %v2307 = vrot.slane %v2196, 5
      %v2308 = vrot.slane %v2307, 4
      %v2309 = vrot.slane %v1305, 5
      %v2310 = vsel %vm2236, %v2308, %v2309
      %v2311 = vrot.slane %v2309, 4
      %v2312 = vrot.slane %v1342, 5
      %v2313 = vsel %vm2236, %v2311, %v2312
      %v2314 = vrot.slane %v2197, 5
      %v2315 = vrot.slane %v2314, 4
      %v2316 = vrot.slane %v1307, 5
      %v2317 = vsel %vm2236, %v2315, %v2316
      %v2318 = vrot.slane %v2316, 4
      %v2319 = vrot.slane %v1343, 5
      %v2320 = vsel %vm2236, %v2318, %v2319
      %v2321 = vrot.slane %v2198, 5
      %v2322 = vrot.slane %v2321, 4
      %v2323 = vrot.slane %v1309, 5
      %v2324 = vsel %vm2236, %v2322, %v2323
      %v2325 = vrot.slane %v2323, 4
      %v2326 = vrot.slane %v1344, 5
      %v2327 = vsel %vm2236, %v2325, %v2326
      %v2328 = vrot.slane %v2199, 5
      %v2329 = vrot.slane %v2328, 4
      %v2330 = vrot.slane %v1311, 5
      %v2331 = vsel %vm2236, %v2329, %v2330
      %v2332 = vrot.slane %v2330, 4
      %v2333 = vrot.slane %v1345, 5
      %v2334 = vsel %vm2236, %v2332, %v2333
      %v2335 = vrot.slane %v2200, 5
      %v2336 = vrot.slane %v2335, 4
      %v2337 = vrot.slane %v1313, 5
      %v2338 = vsel %vm2236, %v2336, %v2337
      %v2339 = vrot.slane %v2337, 4
      %v2340 = vrot.slane %v1346, 5
      %v2341 = vsel %vm2236, %v2339, %v2340
      %v2342 = vrot.slane %v2201, 5
      %v2343 = vrot.slane %v2342, 4
      %v2344 = vrot.slane %v1315, 5
      %v2345 = vsel %vm2236, %v2343, %v2344
      %v2346 = vrot.slane %v2344, 4
      %v2347 = vrot.slane %v1347, 5
      %v2348 = vsel %vm2236, %v2346, %v2347
      %s2349 = scalar_lea.vmem %s3, 128
      %v2350 = vld [vmem:[%s2349] sm:$0xf]
      %v2351 = vld [vmem:[%s2349 + $0x4] sm:$0xf]
      %v2352 = vld [vmem:[%s2349 + $0x8] sm:$0xf]
      %v2353 = vld [vmem:[%s2349 + $0xc] sm:$0xf]
      %v2354 = vld [vmem:[%s2349 + $0x10] sm:$0xf]
      %v2355 = vld [vmem:[%s2349 + $0x14] sm:$0xf]
      %v2356 = vld [vmem:[%s2349 + $0x18] sm:$0xf]
      %v2357 = vld [vmem:[%s2349 + $0x1c] sm:$0xf]
      %v2358 = vld [vmem:[%s2349 + $0x20] sm:$0xf]
      %v2359 = vld [vmem:[%s2349 + $0x24] sm:$0xf]
      %v2360 = vld [vmem:[%s2349 + $0x28] sm:$0xf]
      %v2361 = vld [vmem:[%s2349 + $0x2c] sm:$0xf]
      %v2362 = vld [vmem:[%s2349 + $0x30] sm:$0xf]
      %v2363 = vld [vmem:[%s2349 + $0x34] sm:$0xf]
      %v2364 = vld [vmem:[%s2349 + $0x38] sm:$0xf]
      %v2365 = vld [vmem:[%s2349 + $0x3c] sm:$0xf]
      %v2366 = vunpack.c.l.b16 %v2240
      %v2367 = vunpack.c.l.b16 %v2243
      %v2368 = vunpack.c.l.b16 %v2247
      %v2369 = vunpack.c.l.b16 %v2250
      %v2370 = vunpack.c.l.b16 %v2254
      %v2371 = vunpack.c.l.b16 %v2257
      %v2372 = vunpack.c.l.b16 %v2261
      %v2373 = vunpack.c.l.b16 %v2264
      %v2374 = vunpack.c.l.b16 %v2268
      %v2375 = vunpack.c.l.b16 %v2271
      %v2376 = vunpack.c.l.b16 %v2275
      %v2377 = vunpack.c.l.b16 %v2278
      %v2378 = vunpack.c.l.b16 %v2282
      %v2379 = vunpack.c.l.b16 %v2285
      %v2380 = vunpack.c.l.b16 %v2289
      %v2381 = vunpack.c.l.b16 %v2292
      %v2382 = vunpack.c.l.b16 %v2296
      %v2383 = vunpack.c.l.b16 %v2299
      %v2384 = vunpack.c.l.b16 %v2303
      %v2385 = vunpack.c.l.b16 %v2306
      %v2386 = vunpack.c.l.b16 %v2310
      %v2387 = vunpack.c.l.b16 %v2313
      %v2388 = vunpack.c.l.b16 %v2317
      %v2389 = vunpack.c.l.b16 %v2320
      %v2390 = vunpack.c.l.b16 %v2324
      %v2391 = vunpack.c.l.b16 %v2327
      %v2392 = vunpack.c.l.b16 %v2331
      %v2393 = vunpack.c.l.b16 %v2334
      %v2394 = vunpack.c.l.b16 %v2338
      %v2395 = vunpack.c.l.b16 %v2341
      %v2396 = vunpack.c.l.b16 %v2345
      %v2397 = vunpack.c.l.b16 %v2348
      %v2398 = vpack.c.b16 %v2367, %v2366
      %v2399 = vpack.c.b16 %v2369, %v2368
      %v2400 = vpack.c.b16 %v2371, %v2370
      %v2401 = vpack.c.b16 %v2373, %v2372
      %v2402 = vpack.c.b16 %v2375, %v2374
      %v2403 = vpack.c.b16 %v2377, %v2376
      %v2404 = vpack.c.b16 %v2379, %v2378
      %v2405 = vpack.c.b16 %v2381, %v2380
      %v2406 = vpack.c.b16 %v2383, %v2382
      %v2407 = vpack.c.b16 %v2385, %v2384
      %v2408 = vpack.c.b16 %v2387, %v2386
      %v2409 = vpack.c.b16 %v2389, %v2388
      %v2410 = vpack.c.b16 %v2391, %v2390
      %v2411 = vpack.c.b16 %v2393, %v2392
      %v2412 = vpack.c.b16 %v2395, %v2394
      %v2413 = vpack.c.b16 %v2397, %v2396
      %v2446 = vunpack.c.l.b16 %v2350
      %v2447 = vunpack.c.l.b16 %v2351
      %v2448 = vunpack.c.l.b16 %v2352
      %v2449 = vunpack.c.l.b16 %v2353
      %v2450 = vunpack.c.l.b16 %v2354
      %v2451 = vunpack.c.l.b16 %v2355
      %v2452 = vunpack.c.l.b16 %v2356
      %v2453 = vunpack.c.l.b16 %v2357
      %v2454 = vunpack.c.l.b16 %v2358
      %v2455 = vunpack.c.l.b16 %v2359
      %v2456 = vunpack.c.l.b16 %v2360
      %v2457 = vunpack.c.l.b16 %v2361
      %v2458 = vunpack.c.l.b16 %v2362
      %v2459 = vunpack.c.l.b16 %v2363
      %v2460 = vunpack.c.l.b16 %v2364
      %v2461 = vunpack.c.l.b16 %v2365
      %v2462 = vpack.c.b16 %v2447, %v2446
      %v2463 = vpack.c.b16 %v2449, %v2448
      %v2464 = vpack.c.b16 %v2451, %v2450
      %v2465 = vpack.c.b16 %v2453, %v2452
      %v2466 = vpack.c.b16 %v2455, %v2454
      %v2467 = vpack.c.b16 %v2457, %v2456
      %v2468 = vpack.c.b16 %v2459, %v2458
      %v2469 = vpack.c.b16 %v2461, %v2460
      %2478 = vmatpush.bf16.msra.mxu0 %v2469
      %2479 = vmatpush.bf16.msra.mxu0 %v2468
      %2480 = vmatpush.bf16.msra.mxu0 %v2467
      %2481 = vmatpush.bf16.msra.mxu0 %v2466
      %2482 = vmatpush.bf16.msra.mxu0 %v2465
      %2483 = vmatpush.bf16.msra.mxu0 %v2464
      %2484 = vmatpush.bf16.msra.mxu0 %v2463
      %2485 = vmatpush.bf16.msra.mxu0 %v2462
      %2486 = vmatmul.bf16.gmra.mxu0 %v2398
      %v2487 = vpop.f32.mrf.mxu0
      %v2488 = vadd.f32 0.0, %v2487
      %v2489 = vpop.f32.mrf.mxu0
      %v2490 = vadd.f32 0.0, %v2489
      %2491 = vmatmul.bf16.gmra.mxu0 %v2399
      %v2492 = vpop.f32.mrf.mxu0
      %v2493 = vadd.f32 0.0, %v2492
      %v2494 = vpop.f32.mrf.mxu0
      %v2495 = vadd.f32 0.0, %v2494
      %2496 = vmatmul.bf16.gmra.mxu0 %v2400
      %v2497 = vpop.f32.mrf.mxu0
      %v2498 = vadd.f32 0.0, %v2497
      %v2499 = vpop.f32.mrf.mxu0
      %v2500 = vadd.f32 0.0, %v2499
      %2501 = vmatmul.bf16.gmra.mxu0 %v2401
      %v2502 = vpop.f32.mrf.mxu0
      %v2503 = vadd.f32 0.0, %v2502
      %v2504 = vpop.f32.mrf.mxu0
      %v2505 = vadd.f32 0.0, %v2504
      %2506 = vmatmul.bf16.gmra.mxu0 %v2402
      %v2507 = vpop.f32.mrf.mxu0
      %v2508 = vadd.f32 0.0, %v2507
      %v2509 = vpop.f32.mrf.mxu0
      %v2510 = vadd.f32 0.0, %v2509
      %2511 = vmatmul.bf16.gmra.mxu0 %v2403
      %v2512 = vpop.f32.mrf.mxu0
      %v2513 = vadd.f32 0.0, %v2512
      %v2514 = vpop.f32.mrf.mxu0
      %v2515 = vadd.f32 0.0, %v2514
      %2516 = vmatmul.bf16.gmra.mxu0 %v2404
      %v2517 = vpop.f32.mrf.mxu0
      %v2518 = vadd.f32 0.0, %v2517
      %v2519 = vpop.f32.mrf.mxu0
      %v2520 = vadd.f32 0.0, %v2519
      %2521 = vmatmul.bf16.gmra.mxu0 %v2405
      %v2522 = vpop.f32.mrf.mxu0
      %v2523 = vadd.f32 0.0, %v2522
      %v2524 = vpop.f32.mrf.mxu0
      %v2525 = vadd.f32 0.0, %v2524
      %2526 = vmatmul.bf16.gmra.mxu0 %v2406
      %v2527 = vpop.f32.mrf.mxu0
      %v2528 = vadd.f32 0.0, %v2527
      %v2529 = vpop.f32.mrf.mxu0
      %v2530 = vadd.f32 0.0, %v2529
      %2531 = vmatmul.bf16.gmra.mxu0 %v2407
      %v2532 = vpop.f32.mrf.mxu0
      %v2533 = vadd.f32 0.0, %v2532
      %v2534 = vpop.f32.mrf.mxu0
      %v2535 = vadd.f32 0.0, %v2534
      %2536 = vmatmul.bf16.gmra.mxu0 %v2408
      %v2537 = vpop.f32.mrf.mxu0
      %v2538 = vadd.f32 0.0, %v2537
      %v2539 = vpop.f32.mrf.mxu0
      %v2540 = vadd.f32 0.0, %v2539
      %2541 = vmatmul.bf16.gmra.mxu0 %v2409
      %v2542 = vpop.f32.mrf.mxu0
      %v2543 = vadd.f32 0.0, %v2542
      %v2544 = vpop.f32.mrf.mxu0
      %v2545 = vadd.f32 0.0, %v2544
      %2546 = vmatmul.bf16.gmra.mxu0 %v2410
      %v2547 = vpop.f32.mrf.mxu0
      %v2548 = vadd.f32 0.0, %v2547
      %v2549 = vpop.f32.mrf.mxu0
      %v2550 = vadd.f32 0.0, %v2549
      %2551 = vmatmul.bf16.gmra.mxu0 %v2411
      %v2552 = vpop.f32.mrf.mxu0
      %v2553 = vadd.f32 0.0, %v2552
      %v2554 = vpop.f32.mrf.mxu0
      %v2555 = vadd.f32 0.0, %v2554
      %2556 = vmatmul.bf16.gmra.mxu0 %v2412
      %v2557 = vpop.f32.mrf.mxu0
      %v2558 = vadd.f32 0.0, %v2557
      %v2559 = vpop.f32.mrf.mxu0
      %v2560 = vadd.f32 0.0, %v2559
      %2561 = vmatmul.bf16.gmra.mxu0 %v2413
      %v2562 = vpop.f32.mrf.mxu0
      %v2563 = vadd.f32 0.0, %v2562
      %v2564 = vpop.f32.mrf.mxu0
      %v2565 = vadd.f32 0.0, %v2564
      %2566 = vdwg.mxu0
      %v2567 = vadd.f32 %v2107, %v2488
      %v2568 = vadd.f32 %v2109, %v2490
      %v2569 = vadd.f32 %v2112, %v2493
      %v2570 = vadd.f32 %v2114, %v2495
      %v2571 = vadd.f32 %v2117, %v2498
      %v2572 = vadd.f32 %v2119, %v2500
      %v2573 = vadd.f32 %v2122, %v2503
      %v2574 = vadd.f32 %v2124, %v2505
      %v2575 = vadd.f32 %v2127, %v2508
      %v2576 = vadd.f32 %v2129, %v2510
      %v2577 = vadd.f32 %v2132, %v2513
      %v2578 = vadd.f32 %v2134, %v2515
      %v2579 = vadd.f32 %v2137, %v2518
      %v2580 = vadd.f32 %v2139, %v2520
      %v2581 = vadd.f32 %v2142, %v2523
      %v2582 = vadd.f32 %v2144, %v2525
      %v2583 = vadd.f32 %v2147, %v2528
      %v2584 = vadd.f32 %v2149, %v2530
      %v2585 = vadd.f32 %v2152, %v2533
      %v2586 = vadd.f32 %v2154, %v2535
      %v2587 = vadd.f32 %v2157, %v2538
      %v2588 = vadd.f32 %v2159, %v2540
      %v2589 = vadd.f32 %v2162, %v2543
      %v2590 = vadd.f32 %v2164, %v2545
      %v2591 = vadd.f32 %v2167, %v2548
      %v2592 = vadd.f32 %v2169, %v2550
      %v2593 = vadd.f32 %v2172, %v2553
      %v2594 = vadd.f32 %v2174, %v2555
      %v2595 = vadd.f32 %v2177, %v2558
      %v2596 = vadd.f32 %v2179, %v2560
      %v2597 = vadd.f32 %v2182, %v2563
      %v2598 = vadd.f32 %v2184, %v2565
      %v2599 = vld [vmem:[%s1166] sm:$0xf]
      %v2600 = vld [vmem:[%s1166 + $0x4] sm:$0xf]
      %v2601 = vld [vmem:[%s1166 + $0xc] sm:$0xf]
      %v2602 = vld [vmem:[%s1166 + $0x10] sm:$0xf]
      %v2603 = vld [vmem:[%s1166 + $0x18] sm:$0xf]
      %v2604 = vld [vmem:[%s1166 + $0x1c] sm:$0xf]
      %v2605 = vld [vmem:[%s1166 + $0x24] sm:$0xf]
      %v2606 = vld [vmem:[%s1166 + $0x28] sm:$0xf]
      %v2607 = vld [vmem:[%s1166 + $0x30] sm:$0xf]
      %v2608 = vld [vmem:[%s1166 + $0x34] sm:$0xf]
      %v2609 = vld [vmem:[%s1166 + $0x3c] sm:$0xf]
      %v2610 = vld [vmem:[%s1166 + $0x40] sm:$0xf]
      %v2611 = vld [vmem:[%s1166 + $0x48] sm:$0xf]
      %v2612 = vld [vmem:[%s1166 + $0x4c] sm:$0xf]
      %v2613 = vld [vmem:[%s1166 + $0x54] sm:$0xf]
      %v2614 = vld [vmem:[%s1166 + $0x58] sm:$0xf]
      %v2615 = vld [vmem:[%s1166 + $0x60] sm:$0xf]
      %v2616 = vld [vmem:[%s1166 + $0x64] sm:$0xf]
      %v2617 = vld [vmem:[%s1166 + $0x6c] sm:$0xf]
      %v2618 = vld [vmem:[%s1166 + $0x70] sm:$0xf]
      %v2619 = vld [vmem:[%s1166 + $0x78] sm:$0xf]
      %v2620 = vld [vmem:[%s1166 + $0x7c] sm:$0xf]
      %v2621 = vld [vmem:[%s1166 + $0x84] sm:$0xf]
      %v2622 = vld [vmem:[%s1166 + $0x88] sm:$0xf]
      %v2623 = vld [vmem:[%s1166 + $0x90] sm:$0xf]
      %v2624 = vld [vmem:[%s1166 + $0x94] sm:$0xf]
      %v2625 = vld [vmem:[%s1166 + $0x9c] sm:$0xf]
      %v2626 = vld [vmem:[%s1166 + $0xa0] sm:$0xf]
      %v2627 = vld [vmem:[%s1166 + $0xa8] sm:$0xf]
      %v2628 = vld [vmem:[%s1166 + $0xac] sm:$0xf]
      %v2629 = vld [vmem:[%s1166 + $0xb4] sm:$0xf]
      %v2630 = vld [vmem:[%s1166 + $0xb8] sm:$0xf]
      %s2631 = scalar_lea.vmem %s3, 192
      %v2632 = vld [vmem:[%s2631] sm:$0xf]
      %v2633 = vld [vmem:[%s2631 + $0x4] sm:$0xf]
      %v2634 = vld [vmem:[%s2631 + $0x8] sm:$0xf]
      %v2635 = vld [vmem:[%s2631 + $0xc] sm:$0xf]
      %v2636 = vld [vmem:[%s2631 + $0x10] sm:$0xf]
      %v2637 = vld [vmem:[%s2631 + $0x14] sm:$0xf]
      %v2638 = vld [vmem:[%s2631 + $0x18] sm:$0xf]
      %v2639 = vld [vmem:[%s2631 + $0x1c] sm:$0xf]
      %v2640 = vld [vmem:[%s2631 + $0x20] sm:$0xf]
      %v2641 = vld [vmem:[%s2631 + $0x24] sm:$0xf]
      %v2642 = vld [vmem:[%s2631 + $0x28] sm:$0xf]
      %v2643 = vld [vmem:[%s2631 + $0x2c] sm:$0xf]
      %v2644 = vld [vmem:[%s2631 + $0x30] sm:$0xf]
      %v2645 = vld [vmem:[%s2631 + $0x34] sm:$0xf]
      %v2646 = vld [vmem:[%s2631 + $0x38] sm:$0xf]
      %v2647 = vld [vmem:[%s2631 + $0x3c] sm:$0xf]
      %v2680 = vunpack.c.l.b16 %v2599
      %v2681 = vunpack.c.l.b16 %v2600
      %v2682 = vunpack.c.l.b16 %v2601
      %v2683 = vunpack.c.l.b16 %v2602
      %v2684 = vunpack.c.l.b16 %v2603
      %v2685 = vunpack.c.l.b16 %v2604
      %v2686 = vunpack.c.l.b16 %v2605
      %v2687 = vunpack.c.l.b16 %v2606
      %v2688 = vunpack.c.l.b16 %v2607
      %v2689 = vunpack.c.l.b16 %v2608
      %v2690 = vunpack.c.l.b16 %v2609
      %v2691 = vunpack.c.l.b16 %v2610
      %v2692 = vunpack.c.l.b16 %v2611
      %v2693 = vunpack.c.l.b16 %v2612
      %v2694 = vunpack.c.l.b16 %v2613
      %v2695 = vunpack.c.l.b16 %v2614
      %v2696 = vunpack.c.l.b16 %v2615
      %v2697 = vunpack.c.l.b16 %v2616
      %v2698 = vunpack.c.l.b16 %v2617
      %v2699 = vunpack.c.l.b16 %v2618
      %v2700 = vunpack.c.l.b16 %v2619
      %v2701 = vunpack.c.l.b16 %v2620
      %v2702 = vunpack.c.l.b16 %v2621
      %v2703 = vunpack.c.l.b16 %v2622
      %v2704 = vunpack.c.l.b16 %v2623
      %v2705 = vunpack.c.l.b16 %v2624
      %v2706 = vunpack.c.l.b16 %v2625
      %v2707 = vunpack.c.l.b16 %v2626
      %v2708 = vunpack.c.l.b16 %v2627
      %v2709 = vunpack.c.l.b16 %v2628
      %v2710 = vunpack.c.l.b16 %v2629
      %v2711 = vunpack.c.l.b16 %v2630
      %v2712 = vpack.c.b16 %v2681, %v2680
      %v2713 = vpack.c.b16 %v2683, %v2682
      %v2714 = vpack.c.b16 %v2685, %v2684
      %v2715 = vpack.c.b16 %v2687, %v2686
      %v2716 = vpack.c.b16 %v2689, %v2688
      %v2717 = vpack.c.b16 %v2691, %v2690
      %v2718 = vpack.c.b16 %v2693, %v2692
      %v2719 = vpack.c.b16 %v2695, %v2694
      %v2720 = vpack.c.b16 %v2697, %v2696
      %v2721 = vpack.c.b16 %v2699, %v2698
      %v2722 = vpack.c.b16 %v2701, %v2700
      %v2723 = vpack.c.b16 %v2703, %v2702
      %v2724 = vpack.c.b16 %v2705, %v2704
      %v2725 = vpack.c.b16 %v2707, %v2706
      %v2726 = vpack.c.b16 %v2709, %v2708
      %v2727 = vpack.c.b16 %v2711, %v2710
      %v2760 = vunpack.c.l.b16 %v2632
      %v2761 = vunpack.c.l.b16 %v2633
      %v2762 = vunpack.c.l.b16 %v2634
      %v2763 = vunpack.c.l.b16 %v2635
      %v2764 = vunpack.c.l.b16 %v2636
      %v2765 = vunpack.c.l.b16 %v2637
      %v2766 = vunpack.c.l.b16 %v2638
      %v2767 = vunpack.c.l.b16 %v2639
      %v2768 = vunpack.c.l.b16 %v2640
      %v2769 = vunpack.c.l.b16 %v2641
      %v2770 = vunpack.c.l.b16 %v2642
      %v2771 = vunpack.c.l.b16 %v2643
      %v2772 = vunpack.c.l.b16 %v2644
      %v2773 = vunpack.c.l.b16 %v2645
      %v2774 = vunpack.c.l.b16 %v2646
      %v2775 = vunpack.c.l.b16 %v2647
      %v2776 = vpack.c.b16 %v2761, %v2760
      %v2777 = vpack.c.b16 %v2763, %v2762
      %v2778 = vpack.c.b16 %v2765, %v2764
      %v2779 = vpack.c.b16 %v2767, %v2766
      %v2780 = vpack.c.b16 %v2769, %v2768
      %v2781 = vpack.c.b16 %v2771, %v2770
      %v2782 = vpack.c.b16 %v2773, %v2772
      %v2783 = vpack.c.b16 %v2775, %v2774
      %2792 = vmatpush.bf16.msra.mxu0 %v2783
      %2793 = vmatpush.bf16.msra.mxu0 %v2782
      %2794 = vmatpush.bf16.msra.mxu0 %v2781
      %2795 = vmatpush.bf16.msra.mxu0 %v2780
      %2796 = vmatpush.bf16.msra.mxu0 %v2779
      %2797 = vmatpush.bf16.msra.mxu0 %v2778
      %2798 = vmatpush.bf16.msra.mxu0 %v2777
      %2799 = vmatpush.bf16.msra.mxu0 %v2776
      %2800 = vmatmul.bf16.gmra.mxu0 %v2712
      %v2801 = vpop.f32.mrf.mxu0
      %v2802 = vadd.f32 0.0, %v2801
      %v2803 = vpop.f32.mrf.mxu0
      %v2804 = vadd.f32 0.0, %v2803
      %2805 = vmatmul.bf16.gmra.mxu0 %v2713
      %v2806 = vpop.f32.mrf.mxu0
      %v2807 = vadd.f32 0.0, %v2806
      %v2808 = vpop.f32.mrf.mxu0
      %v2809 = vadd.f32 0.0, %v2808
      %2810 = vmatmul.bf16.gmra.mxu0 %v2714
      %v2811 = vpop.f32.mrf.mxu0
      %v2812 = vadd.f32 0.0, %v2811
      %v2813 = vpop.f32.mrf.mxu0
      %v2814 = vadd.f32 0.0, %v2813
      %2815 = vmatmul.bf16.gmra.mxu0 %v2715
      %v2816 = vpop.f32.mrf.mxu0
      %v2817 = vadd.f32 0.0, %v2816
      %v2818 = vpop.f32.mrf.mxu0
      %v2819 = vadd.f32 0.0, %v2818
      %2820 = vmatmul.bf16.gmra.mxu0 %v2716
      %v2821 = vpop.f32.mrf.mxu0
      %v2822 = vadd.f32 0.0, %v2821
      %v2823 = vpop.f32.mrf.mxu0
      %v2824 = vadd.f32 0.0, %v2823
      %2825 = vmatmul.bf16.gmra.mxu0 %v2717
      %v2826 = vpop.f32.mrf.mxu0
      %v2827 = vadd.f32 0.0, %v2826
      %v2828 = vpop.f32.mrf.mxu0
      %v2829 = vadd.f32 0.0, %v2828
      %2830 = vmatmul.bf16.gmra.mxu0 %v2718
      %v2831 = vpop.f32.mrf.mxu0
      %v2832 = vadd.f32 0.0, %v2831
      %v2833 = vpop.f32.mrf.mxu0
      %v2834 = vadd.f32 0.0, %v2833
      %2835 = vmatmul.bf16.gmra.mxu0 %v2719
      %v2836 = vpop.f32.mrf.mxu0
      %v2837 = vadd.f32 0.0, %v2836
      %v2838 = vpop.f32.mrf.mxu0
      %v2839 = vadd.f32 0.0, %v2838
      %2840 = vmatmul.bf16.gmra.mxu0 %v2720
      %v2841 = vpop.f32.mrf.mxu0
      %v2842 = vadd.f32 0.0, %v2841
      %v2843 = vpop.f32.mrf.mxu0
      %v2844 = vadd.f32 0.0, %v2843
      %2845 = vmatmul.bf16.gmra.mxu0 %v2721
      %v2846 = vpop.f32.mrf.mxu0
      %v2847 = vadd.f32 0.0, %v2846
      %v2848 = vpop.f32.mrf.mxu0
      %v2849 = vadd.f32 0.0, %v2848
      %2850 = vmatmul.bf16.gmra.mxu0 %v2722
      %v2851 = vpop.f32.mrf.mxu0
      %v2852 = vadd.f32 0.0, %v2851
      %v2853 = vpop.f32.mrf.mxu0
      %v2854 = vadd.f32 0.0, %v2853
      %2855 = vmatmul.bf16.gmra.mxu0 %v2723
      %v2856 = vpop.f32.mrf.mxu0
      %v2857 = vadd.f32 0.0, %v2856
      %v2858 = vpop.f32.mrf.mxu0
      %v2859 = vadd.f32 0.0, %v2858
      %2860 = vmatmul.bf16.gmra.mxu0 %v2724
      %v2861 = vpop.f32.mrf.mxu0
      %v2862 = vadd.f32 0.0, %v2861
      %v2863 = vpop.f32.mrf.mxu0
      %v2864 = vadd.f32 0.0, %v2863
      %2865 = vmatmul.bf16.gmra.mxu0 %v2725
      %v2866 = vpop.f32.mrf.mxu0
      %v2867 = vadd.f32 0.0, %v2866
      %v2868 = vpop.f32.mrf.mxu0
      %v2869 = vadd.f32 0.0, %v2868
      %2870 = vmatmul.bf16.gmra.mxu0 %v2726
      %v2871 = vpop.f32.mrf.mxu0
      %v2872 = vadd.f32 0.0, %v2871
      %v2873 = vpop.f32.mrf.mxu0
      %v2874 = vadd.f32 0.0, %v2873
      %2875 = vmatmul.bf16.gmra.mxu0 %v2727
      %v2876 = vpop.f32.mrf.mxu0
      %v2877 = vadd.f32 0.0, %v2876
      %v2878 = vpop.f32.mrf.mxu0
      %v2879 = vadd.f32 0.0, %v2878
      %2880 = vdwg.mxu0
      %v2881 = vadd.f32 %v2567, %v2802
      %v2882 = vadd.f32 %v2568, %v2804
      %v2883 = vadd.f32 %v2569, %v2807
      %v2884 = vadd.f32 %v2570, %v2809
      %v2885 = vadd.f32 %v2571, %v2812
      %v2886 = vadd.f32 %v2572, %v2814
      %v2887 = vadd.f32 %v2573, %v2817
      %v2888 = vadd.f32 %v2574, %v2819
      %v2889 = vadd.f32 %v2575, %v2822
      %v2890 = vadd.f32 %v2576, %v2824
      %v2891 = vadd.f32 %v2577, %v2827
      %v2892 = vadd.f32 %v2578, %v2829
      %v2893 = vadd.f32 %v2579, %v2832
      %v2894 = vadd.f32 %v2580, %v2834
      %v2895 = vadd.f32 %v2581, %v2837
      %v2896 = vadd.f32 %v2582, %v2839
      %v2897 = vadd.f32 %v2583, %v2842
      %v2898 = vadd.f32 %v2584, %v2844
      %v2899 = vadd.f32 %v2585, %v2847
      %v2900 = vadd.f32 %v2586, %v2849
      %v2901 = vadd.f32 %v2587, %v2852
      %v2902 = vadd.f32 %v2588, %v2854
      %v2903 = vadd.f32 %v2589, %v2857
      %v2904 = vadd.f32 %v2590, %v2859
      %v2905 = vadd.f32 %v2591, %v2862
      %v2906 = vadd.f32 %v2592, %v2864
      %v2907 = vadd.f32 %v2593, %v2867
      %v2908 = vadd.f32 %v2594, %v2869
      %v2909 = vadd.f32 %v2595, %v2872
      %v2910 = vadd.f32 %v2596, %v2874
      %v2911 = vadd.f32 %v2597, %v2877
      %v2912 = vadd.f32 %v2598, %v2879
      %v2913 = vld [vmem:[%s1166] sm:$0xf]
      %v2914 = vld [vmem:[%s1166 + $0x4] sm:$0xf]
      %v2915 = vld [vmem:[%s1166 + $0x8] sm:$0x1]
      %v2916 = vld [vmem:[%s1166 + $0xc] sm:$0xf]
      %v2917 = vld [vmem:[%s1166 + $0x10] sm:$0xf]
      %v2918 = vld [vmem:[%s1166 + $0x14] sm:$0x1]
      %v2919 = vld [vmem:[%s1166 + $0x18] sm:$0xf]
      %v2920 = vld [vmem:[%s1166 + $0x1c] sm:$0xf]
      %v2921 = vld [vmem:[%s1166 + $0x20] sm:$0x1]
      %v2922 = vld [vmem:[%s1166 + $0x24] sm:$0xf]
      %v2923 = vld [vmem:[%s1166 + $0x28] sm:$0xf]
      %v2924 = vld [vmem:[%s1166 + $0x2c] sm:$0x1]
      %v2925 = vld [vmem:[%s1166 + $0x30] sm:$0xf]
      %v2926 = vld [vmem:[%s1166 + $0x34] sm:$0xf]
      %v2927 = vld [vmem:[%s1166 + $0x38] sm:$0x1]
      %v2928 = vld [vmem:[%s1166 + $0x3c] sm:$0xf]
      %v2929 = vld [vmem:[%s1166 + $0x40] sm:$0xf]
      %v2930 = vld [vmem:[%s1166 + $0x44] sm:$0x1]
      %v2931 = vld [vmem:[%s1166 + $0x48] sm:$0xf]
      %v2932 = vld [vmem:[%s1166 + $0x4c] sm:$0xf]
      %v2933 = vld [vmem:[%s1166 + $0x50] sm:$0x1]
      %v2934 = vld [vmem:[%s1166 + $0x54] sm:$0xf]
      %v2935 = vld [vmem:[%s1166 + $0x58] sm:$0xf]
      %v2936 = vld [vmem:[%s1166 + $0x5c] sm:$0x1]
      %v2937 = vld [vmem:[%s1166 + $0x60] sm:$0xf]
      %v2938 = vld [vmem:[%s1166 + $0x64] sm:$0xf]
      %v2939 = vld [vmem:[%s1166 + $0x68] sm:$0x1]
      %v2940 = vld [vmem:[%s1166 + $0x6c] sm:$0xf]
      %v2941 = vld [vmem:[%s1166 + $0x70] sm:$0xf]
      %v2942 = vld [vmem:[%s1166 + $0x74] sm:$0x1]
      %v2943 = vld [vmem:[%s1166 + $0x78] sm:$0xf]
      %v2944 = vld [vmem:[%s1166 + $0x7c] sm:$0xf]
      %v2945 = vld [vmem:[%s1166 + $0x80] sm:$0x1]
      %v2946 = vld [vmem:[%s1166 + $0x84] sm:$0xf]
      %v2947 = vld [vmem:[%s1166 + $0x88] sm:$0xf]
      %v2948 = vld [vmem:[%s1166 + $0x8c] sm:$0x1]
      %v2949 = vld [vmem:[%s1166 + $0x90] sm:$0xf]
      %v2950 = vld [vmem:[%s1166 + $0x94] sm:$0xf]
      %v2951 = vld [vmem:[%s1166 + $0x98] sm:$0x1]
      %v2952 = vld [vmem:[%s1166 + $0x9c] sm:$0xf]
      %v2953 = vld [vmem:[%s1166 + $0xa0] sm:$0xf]
      %v2954 = vld [vmem:[%s1166 + $0xa4] sm:$0x1]
      %v2955 = vld [vmem:[%s1166 + $0xa8] sm:$0xf]
      %v2956 = vld [vmem:[%s1166 + $0xac] sm:$0xf]
      %v2957 = vld [vmem:[%s1166 + $0xb0] sm:$0x1]
      %v2958 = vld [vmem:[%s1166 + $0xb4] sm:$0xf]
      %v2959 = vld [vmem:[%s1166 + $0xb8] sm:$0xf]
      %v2960 = vld [vmem:[%s1166 + $0xbc] sm:$0x1]
      %v2962 = vshrl.u32 %v2913, 16
      %v2964 = vrot.slane %v2962, 4
      %v2965 = vshll.u32 %v2913, 16
      %v2967 = vrot.slane %v2965, 5
      %v2968 = vor.u32 %v2964, %v2967
      %v2969 = vrot.slane %v2968, 4
      %v2971 = vshll.u32 %v2914, 16
      %v2973 = vrot.slane %v2971, 5
      %v2974 = vsel %vm1350, %v2969, %v2973
      %v2975 = vshrl.u32 %v2914, 16
      %v2977 = vrot.slane %v2975, 4
      %v2978 = vor.u32 %v2977, %v2973
      %v2979 = vrot.slane %v2978, 4
      %v2981 = vshll.u32 %v2915, 16
      %v2983 = vrot.slane %v2981, 5
      %v2984 = vsel %vm1350, %v2979, %v2983
      %v2986 = vshrl.u32 %v2916, 16
      %v2988 = vrot.slane %v2986, 4
      %v2989 = vshll.u32 %v2916, 16
      %v2991 = vrot.slane %v2989, 5
      %v2992 = vor.u32 %v2988, %v2991
      %v2993 = vrot.slane %v2992, 4
      %v2995 = vshll.u32 %v2917, 16
      %v2997 = vrot.slane %v2995, 5
      %v2998 = vsel %vm1350, %v2993, %v2997
      %v2999 = vshrl.u32 %v2917, 16
      %v3001 = vrot.slane %v2999, 4
      %v3002 = vor.u32 %v3001, %v2997
      %v3003 = vrot.slane %v3002, 4
      %v3005 = vshll.u32 %v2918, 16
      %v3007 = vrot.slane %v3005, 5
      %v3008 = vsel %vm1350, %v3003, %v3007
      %v3010 = vshrl.u32 %v2919, 16
      %v3012 = vrot.slane %v3010, 4
      %v3013 = vshll.u32 %v2919, 16
      %v3015 = vrot.slane %v3013, 5
      %v3016 = vor.u32 %v3012, %v3015
      %v3017 = vrot.slane %v3016, 4
      %v3019 = vshll.u32 %v2920, 16
      %v3021 = vrot.slane %v3019, 5
      %v3022 = vsel %vm1350, %v3017, %v3021
      %v3023 = vshrl.u32 %v2920, 16
      %v3025 = vrot.slane %v3023, 4
      %v3026 = vor.u32 %v3025, %v3021
      %v3027 = vrot.slane %v3026, 4
      %v3029 = vshll.u32 %v2921, 16
      %v3031 = vrot.slane %v3029, 5
      %v3032 = vsel %vm1350, %v3027, %v3031
      %v3034 = vshrl.u32 %v2922, 16
      %v3036 = vrot.slane %v3034, 4
      %v3037 = vshll.u32 %v2922, 16
      %v3039 = vrot.slane %v3037, 5
      %v3040 = vor.u32 %v3036, %v3039
      %v3041 = vrot.slane %v3040, 4
      %v3043 = vshll.u32 %v2923, 16
      %v3045 = vrot.slane %v3043, 5
      %v3046 = vsel %vm1350, %v3041, %v3045
      %v3047 = vshrl.u32 %v2923, 16
      %v3049 = vrot.slane %v3047, 4
      %v3050 = vor.u32 %v3049, %v3045
      %v3051 = vrot.slane %v3050, 4
      %v3053 = vshll.u32 %v2924, 16
      %v3055 = vrot.slane %v3053, 5
      %v3056 = vsel %vm1350, %v3051, %v3055
      %v3058 = vshrl.u32 %v2925, 16
      %v3060 = vrot.slane %v3058, 4
      %v3061 = vshll.u32 %v2925, 16
      %v3063 = vrot.slane %v3061, 5
      %v3064 = vor.u32 %v3060, %v3063
      %v3065 = vrot.slane %v3064, 4
      %v3067 = vshll.u32 %v2926, 16
      %v3069 = vrot.slane %v3067, 5
      %v3070 = vsel %vm1350, %v3065, %v3069
      %v3071 = vshrl.u32 %v2926, 16
      %v3073 = vrot.slane %v3071, 4
      %v3074 = vor.u32 %v3073, %v3069
      %v3075 = vrot.slane %v3074, 4
      %v3077 = vshll.u32 %v2927, 16
      %v3079 = vrot.slane %v3077, 5
      %v3080 = vsel %vm1350, %v3075, %v3079
      %v3082 = vshrl.u32 %v2928, 16
      %v3084 = vrot.slane %v3082, 4
      %v3085 = vshll.u32 %v2928, 16
      %v3087 = vrot.slane %v3085, 5
      %v3088 = vor.u32 %v3084, %v3087
      %v3089 = vrot.slane %v3088, 4
      %v3091 = vshll.u32 %v2929, 16
      %v3093 = vrot.slane %v3091, 5
      %v3094 = vsel %vm1350, %v3089, %v3093
      %v3095 = vshrl.u32 %v2929, 16
      %v3097 = vrot.slane %v3095, 4
      %v3098 = vor.u32 %v3097, %v3093
      %v3099 = vrot.slane %v3098, 4
      %v3101 = vshll.u32 %v2930, 16
      %v3103 = vrot.slane %v3101, 5
      %v3104 = vsel %vm1350, %v3099, %v3103
      %v3106 = vshrl.u32 %v2931, 16
      %v3108 = vrot.slane %v3106, 4
      %v3109 = vshll.u32 %v2931, 16
      %v3111 = vrot.slane %v3109, 5
      %v3112 = vor.u32 %v3108, %v3111
      %v3113 = vrot.slane %v3112, 4
      %v3115 = vshll.u32 %v2932, 16
      %v3117 = vrot.slane %v3115, 5
      %v3118 = vsel %vm1350, %v3113, %v3117
      %v3119 = vshrl.u32 %v2932, 16
      %v3121 = vrot.slane %v3119, 4
      %v3122 = vor.u32 %v3121, %v3117
      %v3123 = vrot.slane %v3122, 4
      %v3125 = vshll.u32 %v2933, 16
      %v3127 = vrot.slane %v3125, 5
      %v3128 = vsel %vm1350, %v3123, %v3127
      %v3130 = vshrl.u32 %v2934, 16
      %v3132 = vrot.slane %v3130, 4
      %v3133 = vshll.u32 %v2934, 16
      %v3135 = vrot.slane %v3133, 5
      %v3136 = vor.u32 %v3132, %v3135
      %v3137 = vrot.slane %v3136, 4
      %v3139 = vshll.u32 %v2935, 16
      %v3141 = vrot.slane %v3139, 5
      %v3142 = vsel %vm1350, %v3137, %v3141
      %v3143 = vshrl.u32 %v2935, 16
      %v3145 = vrot.slane %v3143, 4
      %v3146 = vor.u32 %v3145, %v3141
      %v3147 = vrot.slane %v3146, 4
      %v3149 = vshll.u32 %v2936, 16
      %v3151 = vrot.slane %v3149, 5
      %v3152 = vsel %vm1350, %v3147, %v3151
      %v3154 = vshrl.u32 %v2937, 16
      %v3156 = vrot.slane %v3154, 4
      %v3157 = vshll.u32 %v2937, 16
      %v3159 = vrot.slane %v3157, 5
      %v3160 = vor.u32 %v3156, %v3159
      %v3161 = vrot.slane %v3160, 4
      %v3163 = vshll.u32 %v2938, 16
      %v3165 = vrot.slane %v3163, 5
      %v3166 = vsel %vm1350, %v3161, %v3165
      %v3167 = vshrl.u32 %v2938, 16
      %v3169 = vrot.slane %v3167, 4
      %v3170 = vor.u32 %v3169, %v3165
      %v3171 = vrot.slane %v3170, 4
      %v3173 = vshll.u32 %v2939, 16
      %v3175 = vrot.slane %v3173, 5
      %v3176 = vsel %vm1350, %v3171, %v3175
      %v3178 = vshrl.u32 %v2940, 16
      %v3180 = vrot.slane %v3178, 4
      %v3181 = vshll.u32 %v2940, 16
      %v3183 = vrot.slane %v3181, 5
      %v3184 = vor.u32 %v3180, %v3183
      %v3185 = vrot.slane %v3184, 4
      %v3187 = vshll.u32 %v2941, 16
      %v3189 = vrot.slane %v3187, 5
      %v3190 = vsel %vm1350, %v3185, %v3189
      %v3191 = vshrl.u32 %v2941, 16
      %v3193 = vrot.slane %v3191, 4
      %v3194 = vor.u32 %v3193, %v3189
      %v3195 = vrot.slane %v3194, 4
      %v3197 = vshll.u32 %v2942, 16
      %v3199 = vrot.slane %v3197, 5
      %v3200 = vsel %vm1350, %v3195, %v3199
      %v3202 = vshrl.u32 %v2943, 16
      %v3204 = vrot.slane %v3202, 4
      %v3205 = vshll.u32 %v2943, 16
      %v3207 = vrot.slane %v3205, 5
      %v3208 = vor.u32 %v3204, %v3207
      %v3209 = vrot.slane %v3208, 4
      %v3211 = vshll.u32 %v2944, 16
      %v3213 = vrot.slane %v3211, 5
      %v3214 = vsel %vm1350, %v3209, %v3213
      %v3215 = vshrl.u32 %v2944, 16
      %v3217 = vrot.slane %v3215, 4
      %v3218 = vor.u32 %v3217, %v3213
      %v3219 = vrot.slane %v3218, 4
      %v3221 = vshll.u32 %v2945, 16
      %v3223 = vrot.slane %v3221, 5
      %v3224 = vsel %vm1350, %v3219, %v3223
      %v3226 = vshrl.u32 %v2946, 16
      %v3228 = vrot.slane %v3226, 4
      %v3229 = vshll.u32 %v2946, 16
      %v3231 = vrot.slane %v3229, 5
      %v3232 = vor.u32 %v3228, %v3231
      %v3233 = vrot.slane %v3232, 4
      %v3235 = vshll.u32 %v2947, 16
      %v3237 = vrot.slane %v3235, 5
      %v3238 = vsel %vm1350, %v3233, %v3237
      %v3239 = vshrl.u32 %v2947, 16
      %v3241 = vrot.slane %v3239, 4
      %v3242 = vor.u32 %v3241, %v3237
      %v3243 = vrot.slane %v3242, 4
      %v3245 = vshll.u32 %v2948, 16
      %v3247 = vrot.slane %v3245, 5
      %v3248 = vsel %vm1350, %v3243, %v3247
      %v3250 = vshrl.u32 %v2949, 16
      %v3252 = vrot.slane %v3250, 4
      %v3253 = vshll.u32 %v2949, 16
      %v3255 = vrot.slane %v3253, 5
      %v3256 = vor.u32 %v3252, %v3255
      %v3257 = vrot.slane %v3256, 4
      %v3259 = vshll.u32 %v2950, 16
      %v3261 = vrot.slane %v3259, 5
      %v3262 = vsel %vm1350, %v3257, %v3261
      %v3263 = vshrl.u32 %v2950, 16
      %v3265 = vrot.slane %v3263, 4
      %v3266 = vor.u32 %v3265, %v3261
      %v3267 = vrot.slane %v3266, 4
      %v3269 = vshll.u32 %v2951, 16
      %v3271 = vrot.slane %v3269, 5
      %v3272 = vsel %vm1350, %v3267, %v3271
      %v3274 = vshrl.u32 %v2952, 16
      %v3276 = vrot.slane %v3274, 4
      %v3277 = vshll.u32 %v2952, 16
      %v3279 = vrot.slane %v3277, 5
      %v3280 = vor.u32 %v3276, %v3279
      %v3281 = vrot.slane %v3280, 4
      %v3283 = vshll.u32 %v2953, 16
      %v3285 = vrot.slane %v3283, 5
      %v3286 = vsel %vm1350, %v3281, %v3285
      %v3287 = vshrl.u32 %v2953, 16
      %v3289 = vrot.slane %v3287, 4
      %v3290 = vor.u32 %v3289, %v3285
      %v3291 = vrot.slane %v3290, 4
      %v3293 = vshll.u32 %v2954, 16
      %v3295 = vrot.slane %v3293, 5
      %v3296 = vsel %vm1350, %v3291, %v3295
      %v3298 = vshrl.u32 %v2955, 16
      %v3300 = vrot.slane %v3298, 4
      %v3301 = vshll.u32 %v2955, 16
      %v3303 = vrot.slane %v3301, 5
      %v3304 = vor.u32 %v3300, %v3303
      %v3305 = vrot.slane %v3304, 4
      %v3307 = vshll.u32 %v2956, 16
      %v3309 = vrot.slane %v3307, 5
      %v3310 = vsel %vm1350, %v3305, %v3309
      %v3311 = vshrl.u32 %v2956, 16
      %v3313 = vrot.slane %v3311, 4
      %v3314 = vor.u32 %v3313, %v3309
      %v3315 = vrot.slane %v3314, 4
      %v3317 = vshll.u32 %v2957, 16
      %v3319 = vrot.slane %v3317, 5
      %v3320 = vsel %vm1350, %v3315, %v3319
      %v3322 = vshrl.u32 %v2958, 16
      %v3324 = vrot.slane %v3322, 4
      %v3325 = vshll.u32 %v2958, 16
      %v3327 = vrot.slane %v3325, 5
      %v3328 = vor.u32 %v3324, %v3327
      %v3329 = vrot.slane %v3328, 4
      %v3331 = vshll.u32 %v2959, 16
      %v3333 = vrot.slane %v3331, 5
      %v3334 = vsel %vm1350, %v3329, %v3333
      %v3335 = vshrl.u32 %v2959, 16
      %v3337 = vrot.slane %v3335, 4
      %v3338 = vor.u32 %v3337, %v3333
      %v3339 = vrot.slane %v3338, 4
      %v3341 = vshll.u32 %v2960, 16
      %v3343 = vrot.slane %v3341, 5
      %v3344 = vsel %vm1350, %v3339, %v3343
      %s3345 = scalar_lea.vmem %s3, 256
      %v3346 = vld [vmem:[%s3345] sm:$0xf]
      %v3347 = vld [vmem:[%s3345 + $0x4] sm:$0xf]
      %v3348 = vld [vmem:[%s3345 + $0x8] sm:$0xf]
      %v3349 = vld [vmem:[%s3345 + $0xc] sm:$0xf]
      %v3350 = vld [vmem:[%s3345 + $0x10] sm:$0xf]
      %v3351 = vld [vmem:[%s3345 + $0x14] sm:$0xf]
      %v3352 = vld [vmem:[%s3345 + $0x18] sm:$0xf]
      %v3353 = vld [vmem:[%s3345 + $0x1c] sm:$0xf]
      %v3354 = vld [vmem:[%s3345 + $0x20] sm:$0xf]
      %v3355 = vld [vmem:[%s3345 + $0x24] sm:$0xf]
      %v3356 = vld [vmem:[%s3345 + $0x28] sm:$0xf]
      %v3357 = vld [vmem:[%s3345 + $0x2c] sm:$0xf]
      %v3358 = vld [vmem:[%s3345 + $0x30] sm:$0xf]
      %v3359 = vld [vmem:[%s3345 + $0x34] sm:$0xf]
      %v3360 = vld [vmem:[%s3345 + $0x38] sm:$0xf]
      %v3361 = vld [vmem:[%s3345 + $0x3c] sm:$0xf]
      %v3362 = vunpack.c.l.b16 %v2974
      %v3363 = vunpack.c.l.b16 %v2984
      %v3364 = vunpack.c.l.b16 %v2998
      %v3365 = vunpack.c.l.b16 %v3008
      %v3366 = vunpack.c.l.b16 %v3022
      %v3367 = vunpack.c.l.b16 %v3032
      %v3368 = vunpack.c.l.b16 %v3046
      %v3369 = vunpack.c.l.b16 %v3056
      %v3370 = vunpack.c.l.b16 %v3070
      %v3371 = vunpack.c.l.b16 %v3080
      %v3372 = vunpack.c.l.b16 %v3094
      %v3373 = vunpack.c.l.b16 %v3104
      %v3374 = vunpack.c.l.b16 %v3118
      %v3375 = vunpack.c.l.b16 %v3128
      %v3376 = vunpack.c.l.b16 %v3142
      %v3377 = vunpack.c.l.b16 %v3152
      %v3378 = vunpack.c.l.b16 %v3166
      %v3379 = vunpack.c.l.b16 %v3176
      %v3380 = vunpack.c.l.b16 %v3190
      %v3381 = vunpack.c.l.b16 %v3200
      %v3382 = vunpack.c.l.b16 %v3214
      %v3383 = vunpack.c.l.b16 %v3224
      %v3384 = vunpack.c.l.b16 %v3238
      %v3385 = vunpack.c.l.b16 %v3248
      %v3386 = vunpack.c.l.b16 %v3262
      %v3387 = vunpack.c.l.b16 %v3272
      %v3388 = vunpack.c.l.b16 %v3286
      %v3389 = vunpack.c.l.b16 %v3296
      %v3390 = vunpack.c.l.b16 %v3310
      %v3391 = vunpack.c.l.b16 %v3320
      %v3392 = vunpack.c.l.b16 %v3334
      %v3393 = vunpack.c.l.b16 %v3344
      %v3394 = vpack.c.b16 %v3363, %v3362
      %v3395 = vpack.c.b16 %v3365, %v3364
      %v3396 = vpack.c.b16 %v3367, %v3366
      %v3397 = vpack.c.b16 %v3369, %v3368
      %v3398 = vpack.c.b16 %v3371, %v3370
      %v3399 = vpack.c.b16 %v3373, %v3372
      %v3400 = vpack.c.b16 %v3375, %v3374
      %v3401 = vpack.c.b16 %v3377, %v3376
      %v3402 = vpack.c.b16 %v3379, %v3378
      %v3403 = vpack.c.b16 %v3381, %v3380
      %v3404 = vpack.c.b16 %v3383, %v3382
      %v3405 = vpack.c.b16 %v3385, %v3384
      %v3406 = vpack.c.b16 %v3387, %v3386
      %v3407 = vpack.c.b16 %v3389, %v3388
      %v3408 = vpack.c.b16 %v3391, %v3390
      %v3409 = vpack.c.b16 %v3393, %v3392
      %v3442 = vunpack.c.l.b16 %v3346
      %v3443 = vunpack.c.l.b16 %v3347
      %v3444 = vunpack.c.l.b16 %v3348
      %v3445 = vunpack.c.l.b16 %v3349
      %v3446 = vunpack.c.l.b16 %v3350
      %v3447 = vunpack.c.l.b16 %v3351
      %v3448 = vunpack.c.l.b16 %v3352
      %v3449 = vunpack.c.l.b16 %v3353
      %v3450 = vunpack.c.l.b16 %v3354
      %v3451 = vunpack.c.l.b16 %v3355
      %v3452 = vunpack.c.l.b16 %v3356
      %v3453 = vunpack.c.l.b16 %v3357
      %v3454 = vunpack.c.l.b16 %v3358
      %v3455 = vunpack.c.l.b16 %v3359
      %v3456 = vunpack.c.l.b16 %v3360
      %v3457 = vunpack.c.l.b16 %v3361
      %v3458 = vpack.c.b16 %v3443, %v3442
      %v3459 = vpack.c.b16 %v3445, %v3444
      %v3460 = vpack.c.b16 %v3447, %v3446
      %v3461 = vpack.c.b16 %v3449, %v3448
      %v3462 = vpack.c.b16 %v3451, %v3450
      %v3463 = vpack.c.b16 %v3453, %v3452
      %v3464 = vpack.c.b16 %v3455, %v3454
      %v3465 = vpack.c.b16 %v3457, %v3456
      %3474 = vmatpush.bf16.msra.mxu0 %v3465
      %3475 = vmatpush.bf16.msra.mxu0 %v3464
      %3476 = vmatpush.bf16.msra.mxu0 %v3463
      %3477 = vmatpush.bf16.msra.mxu0 %v3462
      %3478 = vmatpush.bf16.msra.mxu0 %v3461
      %3479 = vmatpush.bf16.msra.mxu0 %v3460
      %3480 = vmatpush.bf16.msra.mxu0 %v3459
      %3481 = vmatpush.bf16.msra.mxu0 %v3458
      %3482 = vmatmul.bf16.gmra.mxu0 %v3394
      %v3483 = vpop.f32.mrf.mxu0
      %v3484 = vadd.f32 0.0, %v3483
      %v3485 = vpop.f32.mrf.mxu0
      %v3486 = vadd.f32 0.0, %v3485
      %3487 = vmatmul.bf16.gmra.mxu0 %v3395
      %v3488 = vpop.f32.mrf.mxu0
      %v3489 = vadd.f32 0.0, %v3488
      %v3490 = vpop.f32.mrf.mxu0
      %v3491 = vadd.f32 0.0, %v3490
      %3492 = vmatmul.bf16.gmra.mxu0 %v3396
      %v3493 = vpop.f32.mrf.mxu0
      %v3494 = vadd.f32 0.0, %v3493
      %v3495 = vpop.f32.mrf.mxu0
      %v3496 = vadd.f32 0.0, %v3495
      %3497 = vmatmul.bf16.gmra.mxu0 %v3397
      %v3498 = vpop.f32.mrf.mxu0
      %v3499 = vadd.f32 0.0, %v3498
      %v3500 = vpop.f32.mrf.mxu0
      %v3501 = vadd.f32 0.0, %v3500
      %3502 = vmatmul.bf16.gmra.mxu0 %v3398
      %v3503 = vpop.f32.mrf.mxu0
      %v3504 = vadd.f32 0.0, %v3503
      %v3505 = vpop.f32.mrf.mxu0
      %v3506 = vadd.f32 0.0, %v3505
      %3507 = vmatmul.bf16.gmra.mxu0 %v3399
      %v3508 = vpop.f32.mrf.mxu0
      %v3509 = vadd.f32 0.0, %v3508
      %v3510 = vpop.f32.mrf.mxu0
      %v3511 = vadd.f32 0.0, %v3510
      %3512 = vmatmul.bf16.gmra.mxu0 %v3400
      %v3513 = vpop.f32.mrf.mxu0
      %v3514 = vadd.f32 0.0, %v3513
      %v3515 = vpop.f32.mrf.mxu0
      %v3516 = vadd.f32 0.0, %v3515
      %3517 = vmatmul.bf16.gmra.mxu0 %v3401
      %v3518 = vpop.f32.mrf.mxu0
      %v3519 = vadd.f32 0.0, %v3518
      %v3520 = vpop.f32.mrf.mxu0
      %v3521 = vadd.f32 0.0, %v3520
      %3522 = vmatmul.bf16.gmra.mxu0 %v3402
      %v3523 = vpop.f32.mrf.mxu0
      %v3524 = vadd.f32 0.0, %v3523
      %v3525 = vpop.f32.mrf.mxu0
      %v3526 = vadd.f32 0.0, %v3525
      %3527 = vmatmul.bf16.gmra.mxu0 %v3403
      %v3528 = vpop.f32.mrf.mxu0
      %v3529 = vadd.f32 0.0, %v3528
      %v3530 = vpop.f32.mrf.mxu0
      %v3531 = vadd.f32 0.0, %v3530
      %3532 = vmatmul.bf16.gmra.mxu0 %v3404
      %v3533 = vpop.f32.mrf.mxu0
      %v3534 = vadd.f32 0.0, %v3533
      %v3535 = vpop.f32.mrf.mxu0
      %v3536 = vadd.f32 0.0, %v3535
      %3537 = vmatmul.bf16.gmra.mxu0 %v3405
      %v3538 = vpop.f32.mrf.mxu0
      %v3539 = vadd.f32 0.0, %v3538
      %v3540 = vpop.f32.mrf.mxu0
      %v3541 = vadd.f32 0.0, %v3540
      %3542 = vmatmul.bf16.gmra.mxu0 %v3406
      %v3543 = vpop.f32.mrf.mxu0
      %v3544 = vadd.f32 0.0, %v3543
      %v3545 = vpop.f32.mrf.mxu0
      %v3546 = vadd.f32 0.0, %v3545
      %3547 = vmatmul.bf16.gmra.mxu0 %v3407
      %v3548 = vpop.f32.mrf.mxu0
      %v3549 = vadd.f32 0.0, %v3548
      %v3550 = vpop.f32.mrf.mxu0
      %v3551 = vadd.f32 0.0, %v3550
      %3552 = vmatmul.bf16.gmra.mxu0 %v3408
      %v3553 = vpop.f32.mrf.mxu0
      %v3554 = vadd.f32 0.0, %v3553
      %v3555 = vpop.f32.mrf.mxu0
      %v3556 = vadd.f32 0.0, %v3555
      %3557 = vmatmul.bf16.gmra.mxu0 %v3409
      %v3558 = vpop.f32.mrf.mxu0
      %v3559 = vadd.f32 0.0, %v3558
      %v3560 = vpop.f32.mrf.mxu0
      %v3561 = vadd.f32 0.0, %v3560
      %3562 = vdwg.mxu0
      %v3563 = vadd.f32 %v2881, %v3484
      %v3564 = vadd.f32 %v2882, %v3486
      %v3565 = vadd.f32 %v2883, %v3489
      %v3566 = vadd.f32 %v2884, %v3491
      %v3567 = vadd.f32 %v2885, %v3494
      %v3568 = vadd.f32 %v2886, %v3496
      %v3569 = vadd.f32 %v2887, %v3499
      %v3570 = vadd.f32 %v2888, %v3501
      %v3571 = vadd.f32 %v2889, %v3504
      %v3572 = vadd.f32 %v2890, %v3506
      %v3573 = vadd.f32 %v2891, %v3509
      %v3574 = vadd.f32 %v2892, %v3511
      %v3575 = vadd.f32 %v2893, %v3514
      %v3576 = vadd.f32 %v2894, %v3516
      %v3577 = vadd.f32 %v2895, %v3519
      %v3578 = vadd.f32 %v2896, %v3521
      %v3579 = vadd.f32 %v2897, %v3524
      %v3580 = vadd.f32 %v2898, %v3526
      %v3581 = vadd.f32 %v2899, %v3529
      %v3582 = vadd.f32 %v2900, %v3531
      %v3583 = vadd.f32 %v2901, %v3534
      %v3584 = vadd.f32 %v2902, %v3536
      %v3585 = vadd.f32 %v2903, %v3539
      %v3586 = vadd.f32 %v2904, %v3541
      %v3587 = vadd.f32 %v2905, %v3544
      %v3588 = vadd.f32 %v2906, %v3546
      %v3589 = vadd.f32 %v2907, %v3549
      %v3590 = vadd.f32 %v2908, %v3551
      %v3591 = vadd.f32 %v2909, %v3554
      %v3592 = vadd.f32 %v2910, %v3556
      %v3593 = vadd.f32 %v2911, %v3559
      %v3594 = vadd.f32 %v2912, %v3561
      %v3595 = vld [vmem:[%s1166] sm:$0xe]
      %v3596 = vld [vmem:[%s1166 + $0xc] sm:$0xe]
      %v3597 = vld [vmem:[%s1166 + $0x18] sm:$0xe]
      %v3598 = vld [vmem:[%s1166 + $0x24] sm:$0xe]
      %v3599 = vld [vmem:[%s1166 + $0x30] sm:$0xe]
      %v3600 = vld [vmem:[%s1166 + $0x3c] sm:$0xe]
      %v3601 = vld [vmem:[%s1166 + $0x48] sm:$0xe]
      %v3602 = vld [vmem:[%s1166 + $0x54] sm:$0xe]
      %v3603 = vld [vmem:[%s1166 + $0x60] sm:$0xe]
      %v3604 = vld [vmem:[%s1166 + $0x6c] sm:$0xe]
      %v3605 = vld [vmem:[%s1166 + $0x78] sm:$0xe]
      %v3606 = vld [vmem:[%s1166 + $0x84] sm:$0xe]
      %v3607 = vld [vmem:[%s1166 + $0x90] sm:$0xe]
      %v3608 = vld [vmem:[%s1166 + $0x9c] sm:$0xe]
      %v3609 = vld [vmem:[%s1166 + $0xa8] sm:$0xe]
      %v3610 = vld [vmem:[%s1166 + $0xb4] sm:$0xe]
      %v3659 = vrot.slane %v3595, 5
      %v3660 = vrot.slane %v3659, 4
      %v3661 = vrot.slane %v2914, 5
      %v3662 = vsel %vm2236, %v3660, %v3661
      %v3663 = vrot.slane %v3661, 4
      %v3664 = vrot.slane %v2915, 5
      %v3665 = vsel %vm2236, %v3663, %v3664
      %v3666 = vrot.slane %v3596, 5
      %v3667 = vrot.slane %v3666, 4
      %v3668 = vrot.slane %v2917, 5
      %v3669 = vsel %vm2236, %v3667, %v3668
      %v3670 = vrot.slane %v3668, 4
      %v3671 = vrot.slane %v2918, 5
      %v3672 = vsel %vm2236, %v3670, %v3671
      %v3673 = vrot.slane %v3597, 5
      %v3674 = vrot.slane %v3673, 4
      %v3675 = vrot.slane %v2920, 5
      %v3676 = vsel %vm2236, %v3674, %v3675
      %v3677 = vrot.slane %v3675, 4
      %v3678 = vrot.slane %v2921, 5
      %v3679 = vsel %vm2236, %v3677, %v3678
      %v3680 = vrot.slane %v3598, 5
      %v3681 = vrot.slane %v3680, 4
      %v3682 = vrot.slane %v2923, 5
      %v3683 = vsel %vm2236, %v3681, %v3682
      %v3684 = vrot.slane %v3682, 4
      %v3685 = vrot.slane %v2924, 5
      %v3686 = vsel %vm2236, %v3684, %v3685
      %v3687 = vrot.slane %v3599, 5
      %v3688 = vrot.slane %v3687, 4
      %v3689 = vrot.slane %v2926, 5
      %v3690 = vsel %vm2236, %v3688, %v3689
      %v3691 = vrot.slane %v3689, 4
      %v3692 = vrot.slane %v2927, 5
      %v3693 = vsel %vm2236, %v3691, %v3692
      %v3694 = vrot.slane %v3600, 5
      %v3695 = vrot.slane %v3694, 4
      %v3696 = vrot.slane %v2929, 5
      %v3697 = vsel %vm2236, %v3695, %v3696
      %v3698 = vrot.slane %v3696, 4
      %v3699 = vrot.slane %v2930, 5
      %v3700 = vsel %vm2236, %v3698, %v3699
      %v3701 = vrot.slane %v3601, 5
      %v3702 = vrot.slane %v3701, 4
      %v3703 = vrot.slane %v2932, 5
      %v3704 = vsel %vm2236, %v3702, %v3703
      %v3705 = vrot.slane %v3703, 4
      %v3706 = vrot.slane %v2933, 5
      %v3707 = vsel %vm2236, %v3705, %v3706
      %v3708 = vrot.slane %v3602, 5
      %v3709 = vrot.slane %v3708, 4
      %v3710 = vrot.slane %v2935, 5
      %v3711 = vsel %vm2236, %v3709, %v3710
      %v3712 = vrot.slane %v3710, 4
      %v3713 = vrot.slane %v2936, 5
      %v3714 = vsel %vm2236, %v3712, %v3713
      %v3715 = vrot.slane %v3603, 5
      %v3716 = vrot.slane %v3715, 4
      %v3717 = vrot.slane %v2938, 5
      %v3718 = vsel %vm2236, %v3716, %v3717
      %v3719 = vrot.slane %v3717, 4
      %v3720 = vrot.slane %v2939, 5
      %v3721 = vsel %vm2236, %v3719, %v3720
      %v3722 = vrot.slane %v3604, 5
      %v3723 = vrot.slane %v3722, 4
      %v3724 = vrot.slane %v2941, 5
      %v3725 = vsel %vm2236, %v3723, %v3724
      %v3726 = vrot.slane %v3724, 4
      %v3727 = vrot.slane %v2942, 5
      %v3728 = vsel %vm2236, %v3726, %v3727
      %v3729 = vrot.slane %v3605, 5
      %v3730 = vrot.slane %v3729, 4
      %v3731 = vrot.slane %v2944, 5
      %v3732 = vsel %vm2236, %v3730, %v3731
      %v3733 = vrot.slane %v3731, 4
      %v3734 = vrot.slane %v2945, 5
      %v3735 = vsel %vm2236, %v3733, %v3734
      %v3736 = vrot.slane %v3606, 5
      %v3737 = vrot.slane %v3736, 4
      %v3738 = vrot.slane %v2947, 5
      %v3739 = vsel %vm2236, %v3737, %v3738
      %v3740 = vrot.slane %v3738, 4
      %v3741 = vrot.slane %v2948, 5
      %v3742 = vsel %vm2236, %v3740, %v3741
      %v3743 = vrot.slane %v3607, 5
      %v3744 = vrot.slane %v3743, 4
      %v3745 = vrot.slane %v2950, 5
      %v3746 = vsel %vm2236, %v3744, %v3745
      %v3747 = vrot.slane %v3745, 4
      %v3748 = vrot.slane %v2951, 5
      %v3749 = vsel %vm2236, %v3747, %v3748
      %v3750 = vrot.slane %v3608, 5
      %v3751 = vrot.slane %v3750, 4
      %v3752 = vrot.slane %v2953, 5
      %v3753 = vsel %vm2236, %v3751, %v3752
      %v3754 = vrot.slane %v3752, 4
      %v3755 = vrot.slane %v2954, 5
      %v3756 = vsel %vm2236, %v3754, %v3755
      %v3757 = vrot.slane %v3609, 5
      %v3758 = vrot.slane %v3757, 4
      %v3759 = vrot.slane %v2956, 5
      %v3760 = vsel %vm2236, %v3758, %v3759
      %v3761 = vrot.slane %v3759, 4
      %v3762 = vrot.slane %v2957, 5
      %v3763 = vsel %vm2236, %v3761, %v3762
      %v3764 = vrot.slane %v3610, 5
      %v3765 = vrot.slane %v3764, 4
      %v3766 = vrot.slane %v2959, 5
      %v3767 = vsel %vm2236, %v3765, %v3766
      %v3768 = vrot.slane %v3766, 4
      %v3769 = vrot.slane %v2960, 5
      %v3770 = vsel %vm2236, %v3768, %v3769
      %s3771 = scalar_lea.vmem %s3, 320
      %v3772 = vld [vmem:[%s3771] sm:$0xf]
      %v3773 = vld [vmem:[%s3771 + $0x4] sm:$0xf]
      %v3774 = vld [vmem:[%s3771 + $0x8] sm:$0xf]
      %v3775 = vld [vmem:[%s3771 + $0xc] sm:$0xf]
      %v3776 = vld [vmem:[%s3771 + $0x10] sm:$0xf]
      %v3777 = vld [vmem:[%s3771 + $0x14] sm:$0xf]
      %v3778 = vld [vmem:[%s3771 + $0x18] sm:$0xf]
      %v3779 = vld [vmem:[%s3771 + $0x1c] sm:$0xf]
      %v3780 = vld [vmem:[%s3771 + $0x20] sm:$0xf]
      %v3781 = vld [vmem:[%s3771 + $0x24] sm:$0xf]
      %v3782 = vld [vmem:[%s3771 + $0x28] sm:$0xf]
      %v3783 = vld [vmem:[%s3771 + $0x2c] sm:$0xf]
      %v3784 = vld [vmem:[%s3771 + $0x30] sm:$0xf]
      %v3785 = vld [vmem:[%s3771 + $0x34] sm:$0xf]
      %v3786 = vld [vmem:[%s3771 + $0x38] sm:$0xf]
      %v3787 = vld [vmem:[%s3771 + $0x3c] sm:$0xf]
      %v3788 = vunpack.c.l.b16 %v3662
      %v3789 = vunpack.c.l.b16 %v3665
      %v3790 = vunpack.c.l.b16 %v3669
      %v3791 = vunpack.c.l.b16 %v3672
      %v3792 = vunpack.c.l.b16 %v3676
      %v3793 = vunpack.c.l.b16 %v3679
      %v3794 = vunpack.c.l.b16 %v3683
      %v3795 = vunpack.c.l.b16 %v3686
      %v3796 = vunpack.c.l.b16 %v3690
      %v3797 = vunpack.c.l.b16 %v3693
      %v3798 = vunpack.c.l.b16 %v3697
      %v3799 = vunpack.c.l.b16 %v3700
      %v3800 = vunpack.c.l.b16 %v3704
      %v3801 = vunpack.c.l.b16 %v3707
      %v3802 = vunpack.c.l.b16 %v3711
      %v3803 = vunpack.c.l.b16 %v3714
      %v3804 = vunpack.c.l.b16 %v3718
      %v3805 = vunpack.c.l.b16 %v3721
      %v3806 = vunpack.c.l.b16 %v3725
      %v3807 = vunpack.c.l.b16 %v3728
      %v3808 = vunpack.c.l.b16 %v3732
      %v3809 = vunpack.c.l.b16 %v3735
      %v3810 = vunpack.c.l.b16 %v3739
      %v3811 = vunpack.c.l.b16 %v3742
      %v3812 = vunpack.c.l.b16 %v3746
      %v3813 = vunpack.c.l.b16 %v3749
      %v3814 = vunpack.c.l.b16 %v3753
      %v3815 = vunpack.c.l.b16 %v3756
      %v3816 = vunpack.c.l.b16 %v3760
      %v3817 = vunpack.c.l.b16 %v3763
      %v3818 = vunpack.c.l.b16 %v3767
      %v3819 = vunpack.c.l.b16 %v3770
      %v3820 = vpack.c.b16 %v3789, %v3788
      %v3821 = vpack.c.b16 %v3791, %v3790
      %v3822 = vpack.c.b16 %v3793, %v3792
      %v3823 = vpack.c.b16 %v3795, %v3794
      %v3824 = vpack.c.b16 %v3797, %v3796
      %v3825 = vpack.c.b16 %v3799, %v3798
      %v3826 = vpack.c.b16 %v3801, %v3800
      %v3827 = vpack.c.b16 %v3803, %v3802
      %v3828 = vpack.c.b16 %v3805, %v3804
      %v3829 = vpack.c.b16 %v3807, %v3806
      %v3830 = vpack.c.b16 %v3809, %v3808
      %v3831 = vpack.c.b16 %v3811, %v3810
      %v3832 = vpack.c.b16 %v3813, %v3812
      %v3833 = vpack.c.b16 %v3815, %v3814
      %v3834 = vpack.c.b16 %v3817, %v3816
      %v3835 = vpack.c.b16 %v3819, %v3818
      %v3868 = vunpack.c.l.b16 %v3772
      %v3869 = vunpack.c.l.b16 %v3773
      %v3870 = vunpack.c.l.b16 %v3774
      %v3871 = vunpack.c.l.b16 %v3775
      %v3872 = vunpack.c.l.b16 %v3776
      %v3873 = vunpack.c.l.b16 %v3777
      %v3874 = vunpack.c.l.b16 %v3778
      %v3875 = vunpack.c.l.b16 %v3779
      %v3876 = vunpack.c.l.b16 %v3780
      %v3877 = vunpack.c.l.b16 %v3781
      %v3878 = vunpack.c.l.b16 %v3782
      %v3879 = vunpack.c.l.b16 %v3783
      %v3880 = vunpack.c.l.b16 %v3784
      %v3881 = vunpack.c.l.b16 %v3785
      %v3882 = vunpack.c.l.b16 %v3786
      %v3883 = vunpack.c.l.b16 %v3787
      %v3884 = vpack.c.b16 %v3869, %v3868
      %v3885 = vpack.c.b16 %v3871, %v3870
      %v3886 = vpack.c.b16 %v3873, %v3872
      %v3887 = vpack.c.b16 %v3875, %v3874
      %v3888 = vpack.c.b16 %v3877, %v3876
      %v3889 = vpack.c.b16 %v3879, %v3878
      %v3890 = vpack.c.b16 %v3881, %v3880
      %v3891 = vpack.c.b16 %v3883, %v3882
      %3900 = vmatpush.bf16.msra.mxu0 %v3891
      %3901 = vmatpush.bf16.msra.mxu0 %v3890
      %3902 = vmatpush.bf16.msra.mxu0 %v3889
      %3903 = vmatpush.bf16.msra.mxu0 %v3888
      %3904 = vmatpush.bf16.msra.mxu0 %v3887
      %3905 = vmatpush.bf16.msra.mxu0 %v3886
      %3906 = vmatpush.bf16.msra.mxu0 %v3885
      %3907 = vmatpush.bf16.msra.mxu0 %v3884
      %3908 = vmatmul.bf16.gmra.mxu0 %v3820
      %v3909 = vpop.f32.mrf.mxu0
      %v3910 = vadd.f32 0.0, %v3909
      %v3911 = vpop.f32.mrf.mxu0
      %v3912 = vadd.f32 0.0, %v3911
      %3913 = vmatmul.bf16.gmra.mxu0 %v3821
      %v3914 = vpop.f32.mrf.mxu0
      %v3915 = vadd.f32 0.0, %v3914
      %v3916 = vpop.f32.mrf.mxu0
      %v3917 = vadd.f32 0.0, %v3916
      %3918 = vmatmul.bf16.gmra.mxu0 %v3822
      %v3919 = vpop.f32.mrf.mxu0
      %v3920 = vadd.f32 0.0, %v3919
      %v3921 = vpop.f32.mrf.mxu0
      %v3922 = vadd.f32 0.0, %v3921
      %3923 = vmatmul.bf16.gmra.mxu0 %v3823
      %v3924 = vpop.f32.mrf.mxu0
      %v3925 = vadd.f32 0.0, %v3924
      %v3926 = vpop.f32.mrf.mxu0
      %v3927 = vadd.f32 0.0, %v3926
      %3928 = vmatmul.bf16.gmra.mxu0 %v3824
      %v3929 = vpop.f32.mrf.mxu0
      %v3930 = vadd.f32 0.0, %v3929
      %v3931 = vpop.f32.mrf.mxu0
      %v3932 = vadd.f32 0.0, %v3931
      %3933 = vmatmul.bf16.gmra.mxu0 %v3825
      %v3934 = vpop.f32.mrf.mxu0
      %v3935 = vadd.f32 0.0, %v3934
      %v3936 = vpop.f32.mrf.mxu0
      %v3937 = vadd.f32 0.0, %v3936
      %3938 = vmatmul.bf16.gmra.mxu0 %v3826
      %v3939 = vpop.f32.mrf.mxu0
      %v3940 = vadd.f32 0.0, %v3939
      %v3941 = vpop.f32.mrf.mxu0
      %v3942 = vadd.f32 0.0, %v3941
      %3943 = vmatmul.bf16.gmra.mxu0 %v3827
      %v3944 = vpop.f32.mrf.mxu0
      %v3945 = vadd.f32 0.0, %v3944
      %v3946 = vpop.f32.mrf.mxu0
      %v3947 = vadd.f32 0.0, %v3946
      %3948 = vmatmul.bf16.gmra.mxu0 %v3828
      %v3949 = vpop.f32.mrf.mxu0
      %v3950 = vadd.f32 0.0, %v3949
      %v3951 = vpop.f32.mrf.mxu0
      %v3952 = vadd.f32 0.0, %v3951
      %3953 = vmatmul.bf16.gmra.mxu0 %v3829
      %v3954 = vpop.f32.mrf.mxu0
      %v3955 = vadd.f32 0.0, %v3954
      %v3956 = vpop.f32.mrf.mxu0
      %v3957 = vadd.f32 0.0, %v3956
      %3958 = vmatmul.bf16.gmra.mxu0 %v3830
      %v3959 = vpop.f32.mrf.mxu0
      %v3960 = vadd.f32 0.0, %v3959
      %v3961 = vpop.f32.mrf.mxu0
      %v3962 = vadd.f32 0.0, %v3961
      %3963 = vmatmul.bf16.gmra.mxu0 %v3831
      %v3964 = vpop.f32.mrf.mxu0
      %v3965 = vadd.f32 0.0, %v3964
      %v3966 = vpop.f32.mrf.mxu0
      %v3967 = vadd.f32 0.0, %v3966
      %3968 = vmatmul.bf16.gmra.mxu0 %v3832
      %v3969 = vpop.f32.mrf.mxu0
      %v3970 = vadd.f32 0.0, %v3969
      %v3971 = vpop.f32.mrf.mxu0
      %v3972 = vadd.f32 0.0, %v3971
      %3973 = vmatmul.bf16.gmra.mxu0 %v3833
      %v3974 = vpop.f32.mrf.mxu0
      %v3975 = vadd.f32 0.0, %v3974
      %v3976 = vpop.f32.mrf.mxu0
      %v3977 = vadd.f32 0.0, %v3976
      %3978 = vmatmul.bf16.gmra.mxu0 %v3834
      %v3979 = vpop.f32.mrf.mxu0
      %v3980 = vadd.f32 0.0, %v3979
      %v3981 = vpop.f32.mrf.mxu0
      %v3982 = vadd.f32 0.0, %v3981
      %3983 = vmatmul.bf16.gmra.mxu0 %v3835
      %v3984 = vpop.f32.mrf.mxu0
      %v3985 = vadd.f32 0.0, %v3984
      %v3986 = vpop.f32.mrf.mxu0
      %v3987 = vadd.f32 0.0, %v3986
      %3988 = vdwg.mxu0
      %v3989 = vadd.f32 %v3563, %v3910
      %v3990 = vadd.f32 %v3564, %v3912
      %v3991 = vadd.f32 %v3565, %v3915
      %v3992 = vadd.f32 %v3566, %v3917
      %v3993 = vadd.f32 %v3567, %v3920
      %v3994 = vadd.f32 %v3568, %v3922
      %v3995 = vadd.f32 %v3569, %v3925
      %v3996 = vadd.f32 %v3570, %v3927
      %v3997 = vadd.f32 %v3571, %v3930
      %v3998 = vadd.f32 %v3572, %v3932
      %v3999 = vadd.f32 %v3573, %v3935
      %v4000 = vadd.f32 %v3574, %v3937
      %v4001 = vadd.f32 %v3575, %v3940
      %v4002 = vadd.f32 %v3576, %v3942
      %v4003 = vadd.f32 %v3577, %v3945
      %v4004 = vadd.f32 %v3578, %v3947
      %v4005 = vadd.f32 %v3579, %v3950
      %v4006 = vadd.f32 %v3580, %v3952
      %v4007 = vadd.f32 %v3581, %v3955
      %v4008 = vadd.f32 %v3582, %v3957
      %v4009 = vadd.f32 %v3583, %v3960
      %v4010 = vadd.f32 %v3584, %v3962
      %v4011 = vadd.f32 %v3585, %v3965
      %v4012 = vadd.f32 %v3586, %v3967
      %v4013 = vadd.f32 %v3587, %v3970
      %v4014 = vadd.f32 %v3588, %v3972
      %v4015 = vadd.f32 %v3589, %v3975
      %v4016 = vadd.f32 %v3590, %v3977
      %v4017 = vadd.f32 %v3591, %v3980
      %v4018 = vadd.f32 %v3592, %v3982
      %v4019 = vadd.f32 %v3593, %v3985
      %v4020 = vadd.f32 %v3594, %v3987
      %s4021 = scalar_lea.vmem [#allocation2], 24
      %v4022 = vld [vmem:[%s4021] sm:$0xf]
      %v4023 = vld [vmem:[%s4021 + $0x4] sm:$0xf]
      %v4024 = vld [vmem:[%s4021 + $0xc] sm:$0xf]
      %v4025 = vld [vmem:[%s4021 + $0x10] sm:$0xf]
      %v4026 = vld [vmem:[%s4021 + $0x18] sm:$0xf]
      %v4027 = vld [vmem:[%s4021 + $0x1c] sm:$0xf]
      %v4028 = vld [vmem:[%s4021 + $0x24] sm:$0xf]
      %v4029 = vld [vmem:[%s4021 + $0x28] sm:$0xf]
      %v4030 = vld [vmem:[%s4021 + $0x30] sm:$0xf]
      %v4031 = vld [vmem:[%s4021 + $0x34] sm:$0xf]
      %v4032 = vld [vmem:[%s4021 + $0x3c] sm:$0xf]
      %v4033 = vld [vmem:[%s4021 + $0x40] sm:$0xf]
      %v4034 = vld [vmem:[%s4021 + $0x48] sm:$0xf]
      %v4035 = vld [vmem:[%s4021 + $0x4c] sm:$0xf]
      %v4036 = vld [vmem:[%s4021 + $0x54] sm:$0xf]
      %v4037 = vld [vmem:[%s4021 + $0x58] sm:$0xf]
      %v4038 = vld [vmem:[%s4021 + $0x60] sm:$0xf]
      %v4039 = vld [vmem:[%s4021 + $0x64] sm:$0xf]
      %v4040 = vld [vmem:[%s4021 + $0x6c] sm:$0xf]
      %v4041 = vld [vmem:[%s4021 + $0x70] sm:$0xf]
      %v4042 = vld [vmem:[%s4021 + $0x78] sm:$0xf]
      %v4043 = vld [vmem:[%s4021 + $0x7c] sm:$0xf]
      %v4044 = vld [vmem:[%s4021 + $0x84] sm:$0xf]
      %v4045 = vld [vmem:[%s4021 + $0x88] sm:$0xf]
      %v4046 = vld [vmem:[%s4021 + $0x90] sm:$0xf]
      %v4047 = vld [vmem:[%s4021 + $0x94] sm:$0xf]
      %v4048 = vld [vmem:[%s4021 + $0x9c] sm:$0xf]
      %v4049 = vld [vmem:[%s4021 + $0xa0] sm:$0xf]
      %v4050 = vld [vmem:[%s4021 + $0xa8] sm:$0xf]
      %v4051 = vld [vmem:[%s4021 + $0xac] sm:$0xf]
      %v4052 = vld [vmem:[%s4021 + $0xb4] sm:$0xf]
      %v4053 = vld [vmem:[%s4021 + $0xb8] sm:$0xf]
      %s4054 = scalar_lea.vmem %s3, 384
      %v4055 = vld [vmem:[%s4054] sm:$0xf]
      %v4056 = vld [vmem:[%s4054 + $0x4] sm:$0xf]
      %v4057 = vld [vmem:[%s4054 + $0x8] sm:$0xf]
      %v4058 = vld [vmem:[%s4054 + $0xc] sm:$0xf]
      %v4059 = vld [vmem:[%s4054 + $0x10] sm:$0xf]
      %v4060 = vld [vmem:[%s4054 + $0x14] sm:$0xf]
      %v4061 = vld [vmem:[%s4054 + $0x18] sm:$0xf]
      %v4062 = vld [vmem:[%s4054 + $0x1c] sm:$0xf]
      %v4063 = vld [vmem:[%s4054 + $0x20] sm:$0xf]
      %v4064 = vld [vmem:[%s4054 + $0x24] sm:$0xf]
      %v4065 = vld [vmem:[%s4054 + $0x28] sm:$0xf]
      %v4066 = vld [vmem:[%s4054 + $0x2c] sm:$0xf]
      %v4067 = vld [vmem:[%s4054 + $0x30] sm:$0xf]
      %v4068 = vld [vmem:[%s4054 + $0x34] sm:$0xf]
      %v4069 = vld [vmem:[%s4054 + $0x38] sm:$0xf]
      %v4070 = vld [vmem:[%s4054 + $0x3c] sm:$0xf]
      %v4103 = vunpack.c.l.b16 %v4022
      %v4104 = vunpack.c.l.b16 %v4023
      %v4105 = vunpack.c.l.b16 %v4024
      %v4106 = vunpack.c.l.b16 %v4025
      %v4107 = vunpack.c.l.b16 %v4026
      %v4108 = vunpack.c.l.b16 %v4027
      %v4109 = vunpack.c.l.b16 %v4028
      %v4110 = vunpack.c.l.b16 %v4029
      %v4111 = vunpack.c.l.b16 %v4030
      %v4112 = vunpack.c.l.b16 %v4031
      %v4113 = vunpack.c.l.b16 %v4032
      %v4114 = vunpack.c.l.b16 %v4033
      %v4115 = vunpack.c.l.b16 %v4034
      %v4116 = vunpack.c.l.b16 %v4035
      %v4117 = vunpack.c.l.b16 %v4036
      %v4118 = vunpack.c.l.b16 %v4037
      %v4119 = vunpack.c.l.b16 %v4038
      %v4120 = vunpack.c.l.b16 %v4039
      %v4121 = vunpack.c.l.b16 %v4040
      %v4122 = vunpack.c.l.b16 %v4041
      %v4123 = vunpack.c.l.b16 %v4042
      %v4124 = vunpack.c.l.b16 %v4043
      %v4125 = vunpack.c.l.b16 %v4044
      %v4126 = vunpack.c.l.b16 %v4045
      %v4127 = vunpack.c.l.b16 %v4046
      %v4128 = vunpack.c.l.b16 %v4047
      %v4129 = vunpack.c.l.b16 %v4048
      %v4130 = vunpack.c.l.b16 %v4049
      %v4131 = vunpack.c.l.b16 %v4050
      %v4132 = vunpack.c.l.b16 %v4051
      %v4133 = vunpack.c.l.b16 %v4052
      %v4134 = vunpack.c.l.b16 %v4053
      %v4135 = vpack.c.b16 %v4104, %v4103
      %v4136 = vpack.c.b16 %v4106, %v4105
      %v4137 = vpack.c.b16 %v4108, %v4107
      %v4138 = vpack.c.b16 %v4110, %v4109
      %v4139 = vpack.c.b16 %v4112, %v4111
      %v4140 = vpack.c.b16 %v4114, %v4113
      %v4141 = vpack.c.b16 %v4116, %v4115
      %v4142 = vpack.c.b16 %v4118, %v4117
      %v4143 = vpack.c.b16 %v4120, %v4119
      %v4144 = vpack.c.b16 %v4122, %v4121
      %v4145 = vpack.c.b16 %v4124, %v4123
      %v4146 = vpack.c.b16 %v4126, %v4125
      %v4147 = vpack.c.b16 %v4128, %v4127
      %v4148 = vpack.c.b16 %v4130, %v4129
      %v4149 = vpack.c.b16 %v4132, %v4131
      %v4150 = vpack.c.b16 %v4134, %v4133
      %v4183 = vunpack.c.l.b16 %v4055
      %v4184 = vunpack.c.l.b16 %v4056
      %v4185 = vunpack.c.l.b16 %v4057
      %v4186 = vunpack.c.l.b16 %v4058
      %v4187 = vunpack.c.l.b16 %v4059
      %v4188 = vunpack.c.l.b16 %v4060
      %v4189 = vunpack.c.l.b16 %v4061
      %v4190 = vunpack.c.l.b16 %v4062
      %v4191 = vunpack.c.l.b16 %v4063
      %v4192 = vunpack.c.l.b16 %v4064
      %v4193 = vunpack.c.l.b16 %v4065
      %v4194 = vunpack.c.l.b16 %v4066
      %v4195 = vunpack.c.l.b16 %v4067
      %v4196 = vunpack.c.l.b16 %v4068
      %v4197 = vunpack.c.l.b16 %v4069
      %v4198 = vunpack.c.l.b16 %v4070
      %v4199 = vpack.c.b16 %v4184, %v4183
      %v4200 = vpack.c.b16 %v4186, %v4185
      %v4201 = vpack.c.b16 %v4188, %v4187
      %v4202 = vpack.c.b16 %v4190, %v4189
      %v4203 = vpack.c.b16 %v4192, %v4191
      %v4204 = vpack.c.b16 %v4194, %v4193
      %v4205 = vpack.c.b16 %v4196, %v4195
      %v4206 = vpack.c.b16 %v4198, %v4197
      %4215 = vmatpush.bf16.msra.mxu0 %v4206
      %4216 = vmatpush.bf16.msra.mxu0 %v4205
      %4217 = vmatpush.bf16.msra.mxu0 %v4204
      %4218 = vmatpush.bf16.msra.mxu0 %v4203
      %4219 = vmatpush.bf16.msra.mxu0 %v4202
      %4220 = vmatpush.bf16.msra.mxu0 %v4201
      %4221 = vmatpush.bf16.msra.mxu0 %v4200
      %4222 = vmatpush.bf16.msra.mxu0 %v4199
      %4223 = vmatmul.bf16.gmra.mxu0 %v4135
      %v4224 = vpop.f32.mrf.mxu0
      %v4225 = vadd.f32 0.0, %v4224
      %v4226 = vpop.f32.mrf.mxu0
      %v4227 = vadd.f32 0.0, %v4226
      %4228 = vmatmul.bf16.gmra.mxu0 %v4136
      %v4229 = vpop.f32.mrf.mxu0
      %v4230 = vadd.f32 0.0, %v4229
      %v4231 = vpop.f32.mrf.mxu0
      %v4232 = vadd.f32 0.0, %v4231
      %4233 = vmatmul.bf16.gmra.mxu0 %v4137
      %v4234 = vpop.f32.mrf.mxu0
      %v4235 = vadd.f32 0.0, %v4234
      %v4236 = vpop.f32.mrf.mxu0
      %v4237 = vadd.f32 0.0, %v4236
      %4238 = vmatmul.bf16.gmra.mxu0 %v4138
      %v4239 = vpop.f32.mrf.mxu0
      %v4240 = vadd.f32 0.0, %v4239
      %v4241 = vpop.f32.mrf.mxu0
      %v4242 = vadd.f32 0.0, %v4241
      %4243 = vmatmul.bf16.gmra.mxu0 %v4139
      %v4244 = vpop.f32.mrf.mxu0
      %v4245 = vadd.f32 0.0, %v4244
      %v4246 = vpop.f32.mrf.mxu0
      %v4247 = vadd.f32 0.0, %v4246
      %4248 = vmatmul.bf16.gmra.mxu0 %v4140
      %v4249 = vpop.f32.mrf.mxu0
      %v4250 = vadd.f32 0.0, %v4249
      %v4251 = vpop.f32.mrf.mxu0
      %v4252 = vadd.f32 0.0, %v4251
      %4253 = vmatmul.bf16.gmra.mxu0 %v4141
      %v4254 = vpop.f32.mrf.mxu0
      %v4255 = vadd.f32 0.0, %v4254
      %v4256 = vpop.f32.mrf.mxu0
      %v4257 = vadd.f32 0.0, %v4256
      %4258 = vmatmul.bf16.gmra.mxu0 %v4142
      %v4259 = vpop.f32.mrf.mxu0
      %v4260 = vadd.f32 0.0, %v4259
      %v4261 = vpop.f32.mrf.mxu0
      %v4262 = vadd.f32 0.0, %v4261
      %4263 = vmatmul.bf16.gmra.mxu0 %v4143
      %v4264 = vpop.f32.mrf.mxu0
      %v4265 = vadd.f32 0.0, %v4264
      %v4266 = vpop.f32.mrf.mxu0
      %v4267 = vadd.f32 0.0, %v4266
      %4268 = vmatmul.bf16.gmra.mxu0 %v4144
      %v4269 = vpop.f32.mrf.mxu0
      %v4270 = vadd.f32 0.0, %v4269
      %v4271 = vpop.f32.mrf.mxu0
      %v4272 = vadd.f32 0.0, %v4271
      %4273 = vmatmul.bf16.gmra.mxu0 %v4145
      %v4274 = vpop.f32.mrf.mxu0
      %v4275 = vadd.f32 0.0, %v4274
      %v4276 = vpop.f32.mrf.mxu0
      %v4277 = vadd.f32 0.0, %v4276
      %4278 = vmatmul.bf16.gmra.mxu0 %v4146
      %v4279 = vpop.f32.mrf.mxu0
      %v4280 = vadd.f32 0.0, %v4279
      %v4281 = vpop.f32.mrf.mxu0
      %v4282 = vadd.f32 0.0, %v4281
      %4283 = vmatmul.bf16.gmra.mxu0 %v4147
      %v4284 = vpop.f32.mrf.mxu0
      %v4285 = vadd.f32 0.0, %v4284
      %v4286 = vpop.f32.mrf.mxu0
      %v4287 = vadd.f32 0.0, %v4286
      %4288 = vmatmul.bf16.gmra.mxu0 %v4148
      %v4289 = vpop.f32.mrf.mxu0
      %v4290 = vadd.f32 0.0, %v4289
      %v4291 = vpop.f32.mrf.mxu0
      %v4292 = vadd.f32 0.0, %v4291
      %4293 = vmatmul.bf16.gmra.mxu0 %v4149
      %v4294 = vpop.f32.mrf.mxu0
      %v4295 = vadd.f32 0.0, %v4294
      %v4296 = vpop.f32.mrf.mxu0
      %v4297 = vadd.f32 0.0, %v4296
      %4298 = vmatmul.bf16.gmra.mxu0 %v4150
      %v4299 = vpop.f32.mrf.mxu0
      %v4300 = vadd.f32 0.0, %v4299
      %v4301 = vpop.f32.mrf.mxu0
      %v4302 = vadd.f32 0.0, %v4301
      %4303 = vdwg.mxu0
      %v4304 = vadd.f32 %v3989, %v4225
      %v4305 = vadd.f32 %v3990, %v4227
      %v4306 = vadd.f32 %v3991, %v4230
      %v4307 = vadd.f32 %v3992, %v4232
      %v4308 = vadd.f32 %v3993, %v4235
      %v4309 = vadd.f32 %v3994, %v4237
      %v4310 = vadd.f32 %v3995, %v4240
      %v4311 = vadd.f32 %v3996, %v4242
      %v4312 = vadd.f32 %v3997, %v4245
      %v4313 = vadd.f32 %v3998, %v4247
      %v4314 = vadd.f32 %v3999, %v4250
      %v4315 = vadd.f32 %v4000, %v4252
      %v4316 = vadd.f32 %v4001, %v4255
      %v4317 = vadd.f32 %v4002, %v4257
      %v4318 = vadd.f32 %v4003, %v4260
      %v4319 = vadd.f32 %v4004, %v4262
      %v4320 = vadd.f32 %v4005, %v4265
      %v4321 = vadd.f32 %v4006, %v4267
      %v4322 = vadd.f32 %v4007, %v4270
      %v4323 = vadd.f32 %v4008, %v4272
      %v4324 = vadd.f32 %v4009, %v4275
      %v4325 = vadd.f32 %v4010, %v4277
      %v4326 = vadd.f32 %v4011, %v4280
      %v4327 = vadd.f32 %v4012, %v4282
      %v4328 = vadd.f32 %v4013, %v4285
      %v4329 = vadd.f32 %v4014, %v4287
      %v4330 = vadd.f32 %v4015, %v4290
      %v4331 = vadd.f32 %v4016, %v4292
      %v4332 = vadd.f32 %v4017, %v4295
      %v4333 = vadd.f32 %v4018, %v4297
      %v4334 = vadd.f32 %v4019, %v4300
      %v4335 = vadd.f32 %v4020, %v4302
      %v4336 = vld [vmem:[%s4021] sm:$0xf]
      %v4337 = vld [vmem:[%s4021 + $0x4] sm:$0xf]
      %v4338 = vld [vmem:[%s4021 + $0x8] sm:$0x1]
      %v4339 = vld [vmem:[%s4021 + $0xc] sm:$0xf]
      %v4340 = vld [vmem:[%s4021 + $0x10] sm:$0xf]
      %v4341 = vld [vmem:[%s4021 + $0x14] sm:$0x1]
      %v4342 = vld [vmem:[%s4021 + $0x18] sm:$0xf]
      %v4343 = vld [vmem:[%s4021 + $0x1c] sm:$0xf]
      %v4344 = vld [vmem:[%s4021 + $0x20] sm:$0x1]
      %v4345 = vld [vmem:[%s4021 + $0x24] sm:$0xf]
      %v4346 = vld [vmem:[%s4021 + $0x28] sm:$0xf]
      %v4347 = vld [vmem:[%s4021 + $0x2c] sm:$0x1]
      %v4348 = vld [vmem:[%s4021 + $0x30] sm:$0xf]
      %v4349 = vld [vmem:[%s4021 + $0x34] sm:$0xf]
      %v4350 = vld [vmem:[%s4021 + $0x38] sm:$0x1]
      %v4351 = vld [vmem:[%s4021 + $0x3c] sm:$0xf]
      %v4352 = vld [vmem:[%s4021 + $0x40] sm:$0xf]
      %v4353 = vld [vmem:[%s4021 + $0x44] sm:$0x1]
      %v4354 = vld [vmem:[%s4021 + $0x48] sm:$0xf]
      %v4355 = vld [vmem:[%s4021 + $0x4c] sm:$0xf]
      %v4356 = vld [vmem:[%s4021 + $0x50] sm:$0x1]
      %v4357 = vld [vmem:[%s4021 + $0x54] sm:$0xf]
      %v4358 = vld [vmem:[%s4021 + $0x58] sm:$0xf]
      %v4359 = vld [vmem:[%s4021 + $0x5c] sm:$0x1]
      %v4360 = vld [vmem:[%s4021 + $0x60] sm:$0xf]
      %v4361 = vld [vmem:[%s4021 + $0x64] sm:$0xf]
      %v4362 = vld [vmem:[%s4021 + $0x68] sm:$0x1]
      %v4363 = vld [vmem:[%s4021 + $0x6c] sm:$0xf]
      %v4364 = vld [vmem:[%s4021 + $0x70] sm:$0xf]
      %v4365 = vld [vmem:[%s4021 + $0x74] sm:$0x1]
      %v4366 = vld [vmem:[%s4021 + $0x78] sm:$0xf]
      %v4367 = vld [vmem:[%s4021 + $0x7c] sm:$0xf]
      %v4368 = vld [vmem:[%s4021 + $0x80] sm:$0x1]
      %v4369 = vld [vmem:[%s4021 + $0x84] sm:$0xf]
      %v4370 = vld [vmem:[%s4021 + $0x88] sm:$0xf]
      %v4371 = vld [vmem:[%s4021 + $0x8c] sm:$0x1]
      %v4372 = vld [vmem:[%s4021 + $0x90] sm:$0xf]
      %v4373 = vld [vmem:[%s4021 + $0x94] sm:$0xf]
      %v4374 = vld [vmem:[%s4021 + $0x98] sm:$0x1]
      %v4375 = vld [vmem:[%s4021 + $0x9c] sm:$0xf]
      %v4376 = vld [vmem:[%s4021 + $0xa0] sm:$0xf]
      %v4377 = vld [vmem:[%s4021 + $0xa4] sm:$0x1]
      %v4378 = vld [vmem:[%s4021 + $0xa8] sm:$0xf]
      %v4379 = vld [vmem:[%s4021 + $0xac] sm:$0xf]
      %v4380 = vld [vmem:[%s4021 + $0xb0] sm:$0x1]
      %v4381 = vld [vmem:[%s4021 + $0xb4] sm:$0xf]
      %v4382 = vld [vmem:[%s4021 + $0xb8] sm:$0xf]
      %v4383 = vld [vmem:[%s4021 + $0xbc] sm:$0x1]
      %v4385 = vshrl.u32 %v4336, 16
      %v4387 = vrot.slane %v4385, 4
      %v4388 = vshll.u32 %v4336, 16
      %v4390 = vrot.slane %v4388, 5
      %v4391 = vor.u32 %v4387, %v4390
      %v4392 = vrot.slane %v4391, 4
      %v4394 = vshll.u32 %v4337, 16
      %v4396 = vrot.slane %v4394, 5
      %v4397 = vsel %vm1350, %v4392, %v4396
      %v4398 = vshrl.u32 %v4337, 16
      %v4400 = vrot.slane %v4398, 4
      %v4401 = vor.u32 %v4400, %v4396
      %v4402 = vrot.slane %v4401, 4
      %v4404 = vshll.u32 %v4338, 16
      %v4406 = vrot.slane %v4404, 5
      %v4407 = vsel %vm1350, %v4402, %v4406
      %v4409 = vshrl.u32 %v4339, 16
      %v4411 = vrot.slane %v4409, 4
      %v4412 = vshll.u32 %v4339, 16
      %v4414 = vrot.slane %v4412, 5
      %v4415 = vor.u32 %v4411, %v4414
      %v4416 = vrot.slane %v4415, 4
      %v4418 = vshll.u32 %v4340, 16
      %v4420 = vrot.slane %v4418, 5
      %v4421 = vsel %vm1350, %v4416, %v4420
      %v4422 = vshrl.u32 %v4340, 16
      %v4424 = vrot.slane %v4422, 4
      %v4425 = vor.u32 %v4424, %v4420
      %v4426 = vrot.slane %v4425, 4
      %v4428 = vshll.u32 %v4341, 16
      %v4430 = vrot.slane %v4428, 5
      %v4431 = vsel %vm1350, %v4426, %v4430
      %v4433 = vshrl.u32 %v4342, 16
      %v4435 = vrot.slane %v4433, 4
      %v4436 = vshll.u32 %v4342, 16
      %v4438 = vrot.slane %v4436, 5
      %v4439 = vor.u32 %v4435, %v4438
      %v4440 = vrot.slane %v4439, 4
      %v4442 = vshll.u32 %v4343, 16
      %v4444 = vrot.slane %v4442, 5
      %v4445 = vsel %vm1350, %v4440, %v4444
      %v4446 = vshrl.u32 %v4343, 16
      %v4448 = vrot.slane %v4446, 4
      %v4449 = vor.u32 %v4448, %v4444
      %v4450 = vrot.slane %v4449, 4
      %v4452 = vshll.u32 %v4344, 16
      %v4454 = vrot.slane %v4452, 5
      %v4455 = vsel %vm1350, %v4450, %v4454
      %v4457 = vshrl.u32 %v4345, 16
      %v4459 = vrot.slane %v4457, 4
      %v4460 = vshll.u32 %v4345, 16
      %v4462 = vrot.slane %v4460, 5
      %v4463 = vor.u32 %v4459, %v4462
      %v4464 = vrot.slane %v4463, 4
      %v4466 = vshll.u32 %v4346, 16
      %v4468 = vrot.slane %v4466, 5
      %v4469 = vsel %vm1350, %v4464, %v4468
      %v4470 = vshrl.u32 %v4346, 16
      %v4472 = vrot.slane %v4470, 4
      %v4473 = vor.u32 %v4472, %v4468
      %v4474 = vrot.slane %v4473, 4
      %v4476 = vshll.u32 %v4347, 16
      %v4478 = vrot.slane %v4476, 5
      %v4479 = vsel %vm1350, %v4474, %v4478
      %v4481 = vshrl.u32 %v4348, 16
      %v4483 = vrot.slane %v4481, 4
      %v4484 = vshll.u32 %v4348, 16
      %v4486 = vrot.slane %v4484, 5
      %v4487 = vor.u32 %v4483, %v4486
      %v4488 = vrot.slane %v4487, 4
      %v4490 = vshll.u32 %v4349, 16
      %v4492 = vrot.slane %v4490, 5
      %v4493 = vsel %vm1350, %v4488, %v4492
      %v4494 = vshrl.u32 %v4349, 16
      %v4496 = vrot.slane %v4494, 4
      %v4497 = vor.u32 %v4496, %v4492
      %v4498 = vrot.slane %v4497, 4
      %v4500 = vshll.u32 %v4350, 16
      %v4502 = vrot.slane %v4500, 5
      %v4503 = vsel %vm1350, %v4498, %v4502
      %v4505 = vshrl.u32 %v4351, 16
      %v4507 = vrot.slane %v4505, 4
      %v4508 = vshll.u32 %v4351, 16
      %v4510 = vrot.slane %v4508, 5
      %v4511 = vor.u32 %v4507, %v4510
      %v4512 = vrot.slane %v4511, 4
      %v4514 = vshll.u32 %v4352, 16
      %v4516 = vrot.slane %v4514, 5
      %v4517 = vsel %vm1350, %v4512, %v4516
      %v4518 = vshrl.u32 %v4352, 16
      %v4520 = vrot.slane %v4518, 4
      %v4521 = vor.u32 %v4520, %v4516
      %v4522 = vrot.slane %v4521, 4
      %v4524 = vshll.u32 %v4353, 16
      %v4526 = vrot.slane %v4524, 5
      %v4527 = vsel %vm1350, %v4522, %v4526
      %v4529 = vshrl.u32 %v4354, 16
      %v4531 = vrot.slane %v4529, 4
      %v4532 = vshll.u32 %v4354, 16
      %v4534 = vrot.slane %v4532, 5
      %v4535 = vor.u32 %v4531, %v4534
      %v4536 = vrot.slane %v4535, 4
      %v4538 = vshll.u32 %v4355, 16
      %v4540 = vrot.slane %v4538, 5
      %v4541 = vsel %vm1350, %v4536, %v4540
      %v4542 = vshrl.u32 %v4355, 16
      %v4544 = vrot.slane %v4542, 4
      %v4545 = vor.u32 %v4544, %v4540
      %v4546 = vrot.slane %v4545, 4
      %v4548 = vshll.u32 %v4356, 16
      %v4550 = vrot.slane %v4548, 5
      %v4551 = vsel %vm1350, %v4546, %v4550
      %v4553 = vshrl.u32 %v4357, 16
      %v4555 = vrot.slane %v4553, 4
      %v4556 = vshll.u32 %v4357, 16
      %v4558 = vrot.slane %v4556, 5
      %v4559 = vor.u32 %v4555, %v4558
      %v4560 = vrot.slane %v4559, 4
      %v4562 = vshll.u32 %v4358, 16
      %v4564 = vrot.slane %v4562, 5
      %v4565 = vsel %vm1350, %v4560, %v4564
      %v4566 = vshrl.u32 %v4358, 16
      %v4568 = vrot.slane %v4566, 4
      %v4569 = vor.u32 %v4568, %v4564
      %v4570 = vrot.slane %v4569, 4
      %v4572 = vshll.u32 %v4359, 16
      %v4574 = vrot.slane %v4572, 5
      %v4575 = vsel %vm1350, %v4570, %v4574
      %v4577 = vshrl.u32 %v4360, 16
      %v4579 = vrot.slane %v4577, 4
      %v4580 = vshll.u32 %v4360, 16
      %v4582 = vrot.slane %v4580, 5
      %v4583 = vor.u32 %v4579, %v4582
      %v4584 = vrot.slane %v4583, 4
      %v4586 = vshll.u32 %v4361, 16
      %v4588 = vrot.slane %v4586, 5
      %v4589 = vsel %vm1350, %v4584, %v4588
      %v4590 = vshrl.u32 %v4361, 16
      %v4592 = vrot.slane %v4590, 4
      %v4593 = vor.u32 %v4592, %v4588
      %v4594 = vrot.slane %v4593, 4
      %v4596 = vshll.u32 %v4362, 16
      %v4598 = vrot.slane %v4596, 5
      %v4599 = vsel %vm1350, %v4594, %v4598
      %v4601 = vshrl.u32 %v4363, 16
      %v4603 = vrot.slane %v4601, 4
      %v4604 = vshll.u32 %v4363, 16
      %v4606 = vrot.slane %v4604, 5
      %v4607 = vor.u32 %v4603, %v4606
      %v4608 = vrot.slane %v4607, 4
      %v4610 = vshll.u32 %v4364, 16
      %v4612 = vrot.slane %v4610, 5
      %v4613 = vsel %vm1350, %v4608, %v4612
      %v4614 = vshrl.u32 %v4364, 16
      %v4616 = vrot.slane %v4614, 4
      %v4617 = vor.u32 %v4616, %v4612
      %v4618 = vrot.slane %v4617, 4
      %v4620 = vshll.u32 %v4365, 16
      %v4622 = vrot.slane %v4620, 5
      %v4623 = vsel %vm1350, %v4618, %v4622
      %v4625 = vshrl.u32 %v4366, 16
      %v4627 = vrot.slane %v4625, 4
      %v4628 = vshll.u32 %v4366, 16
      %v4630 = vrot.slane %v4628, 5
      %v4631 = vor.u32 %v4627, %v4630
      %v4632 = vrot.slane %v4631, 4
      %v4634 = vshll.u32 %v4367, 16
      %v4636 = vrot.slane %v4634, 5
      %v4637 = vsel %vm1350, %v4632, %v4636
      %v4638 = vshrl.u32 %v4367, 16
      %v4640 = vrot.slane %v4638, 4
      %v4641 = vor.u32 %v4640, %v4636
      %v4642 = vrot.slane %v4641, 4
      %v4644 = vshll.u32 %v4368, 16
      %v4646 = vrot.slane %v4644, 5
      %v4647 = vsel %vm1350, %v4642, %v4646
      %v4649 = vshrl.u32 %v4369, 16
      %v4651 = vrot.slane %v4649, 4
      %v4652 = vshll.u32 %v4369, 16
      %v4654 = vrot.slane %v4652, 5
      %v4655 = vor.u32 %v4651, %v4654
      %v4656 = vrot.slane %v4655, 4
      %v4658 = vshll.u32 %v4370, 16
      %v4660 = vrot.slane %v4658, 5
      %v4661 = vsel %vm1350, %v4656, %v4660
      %v4662 = vshrl.u32 %v4370, 16
      %v4664 = vrot.slane %v4662, 4
      %v4665 = vor.u32 %v4664, %v4660
      %v4666 = vrot.slane %v4665, 4
      %v4668 = vshll.u32 %v4371, 16
      %v4670 = vrot.slane %v4668, 5
      %v4671 = vsel %vm1350, %v4666, %v4670
      %v4673 = vshrl.u32 %v4372, 16
      %v4675 = vrot.slane %v4673, 4
      %v4676 = vshll.u32 %v4372, 16
      %v4678 = vrot.slane %v4676, 5
      %v4679 = vor.u32 %v4675, %v4678
      %v4680 = vrot.slane %v4679, 4
      %v4682 = vshll.u32 %v4373, 16
      %v4684 = vrot.slane %v4682, 5
      %v4685 = vsel %vm1350, %v4680, %v4684
      %v4686 = vshrl.u32 %v4373, 16
      %v4688 = vrot.slane %v4686, 4
      %v4689 = vor.u32 %v4688, %v4684
      %v4690 = vrot.slane %v4689, 4
      %v4692 = vshll.u32 %v4374, 16
      %v4694 = vrot.slane %v4692, 5
      %v4695 = vsel %vm1350, %v4690, %v4694
      %v4697 = vshrl.u32 %v4375, 16
      %v4699 = vrot.slane %v4697, 4
      %v4700 = vshll.u32 %v4375, 16
      %v4702 = vrot.slane %v4700, 5
      %v4703 = vor.u32 %v4699, %v4702
      %v4704 = vrot.slane %v4703, 4
      %v4706 = vshll.u32 %v4376, 16
      %v4708 = vrot.slane %v4706, 5
      %v4709 = vsel %vm1350, %v4704, %v4708
      %v4710 = vshrl.u32 %v4376, 16
      %v4712 = vrot.slane %v4710, 4
      %v4713 = vor.u32 %v4712, %v4708
      %v4714 = vrot.slane %v4713, 4
      %v4716 = vshll.u32 %v4377, 16
      %v4718 = vrot.slane %v4716, 5
      %v4719 = vsel %vm1350, %v4714, %v4718
      %v4721 = vshrl.u32 %v4378, 16
      %v4723 = vrot.slane %v4721, 4
      %v4724 = vshll.u32 %v4378, 16
      %v4726 = vrot.slane %v4724, 5
      %v4727 = vor.u32 %v4723, %v4726
      %v4728 = vrot.slane %v4727, 4
      %v4730 = vshll.u32 %v4379, 16
      %v4732 = vrot.slane %v4730, 5
      %v4733 = vsel %vm1350, %v4728, %v4732
      %v4734 = vshrl.u32 %v4379, 16
      %v4736 = vrot.slane %v4734, 4
      %v4737 = vor.u32 %v4736, %v4732
      %v4738 = vrot.slane %v4737, 4
      %v4740 = vshll.u32 %v4380, 16
      %v4742 = vrot.slane %v4740, 5
      %v4743 = vsel %vm1350, %v4738, %v4742
      %v4745 = vshrl.u32 %v4381, 16
      %v4747 = vrot.slane %v4745, 4
      %v4748 = vshll.u32 %v4381, 16
      %v4750 = vrot.slane %v4748, 5
      %v4751 = vor.u32 %v4747, %v4750
      %v4752 = vrot.slane %v4751, 4
      %v4754 = vshll.u32 %v4382, 16
      %v4756 = vrot.slane %v4754, 5
      %v4757 = vsel %vm1350, %v4752, %v4756
      %v4758 = vshrl.u32 %v4382, 16
      %v4760 = vrot.slane %v4758, 4
      %v4761 = vor.u32 %v4760, %v4756
      %v4762 = vrot.slane %v4761, 4
      %v4764 = vshll.u32 %v4383, 16
      %v4766 = vrot.slane %v4764, 5
      %v4767 = vsel %vm1350, %v4762, %v4766
      %s4768 = scalar_lea.vmem %s3, 448
      %v4769 = vld [vmem:[%s4768] sm:$0xf]
      %v4770 = vld [vmem:[%s4768 + $0x4] sm:$0xf]
      %v4771 = vld [vmem:[%s4768 + $0x8] sm:$0xf]
      %v4772 = vld [vmem:[%s4768 + $0xc] sm:$0xf]
      %v4773 = vld [vmem:[%s4768 + $0x10] sm:$0xf]
      %v4774 = vld [vmem:[%s4768 + $0x14] sm:$0xf]
      %v4775 = vld [vmem:[%s4768 + $0x18] sm:$0xf]
      %v4776 = vld [vmem:[%s4768 + $0x1c] sm:$0xf]
      %v4777 = vld [vmem:[%s4768 + $0x20] sm:$0xf]
      %v4778 = vld [vmem:[%s4768 + $0x24] sm:$0xf]
      %v4779 = vld [vmem:[%s4768 + $0x28] sm:$0xf]
      %v4780 = vld [vmem:[%s4768 + $0x2c] sm:$0xf]
      %v4781 = vld [vmem:[%s4768 + $0x30] sm:$0xf]
      %v4782 = vld [vmem:[%s4768 + $0x34] sm:$0xf]
      %v4783 = vld [vmem:[%s4768 + $0x38] sm:$0xf]
      %v4784 = vld [vmem:[%s4768 + $0x3c] sm:$0xf]
      %v4785 = vunpack.c.l.b16 %v4397
      %v4786 = vunpack.c.l.b16 %v4407
      %v4787 = vunpack.c.l.b16 %v4421
      %v4788 = vunpack.c.l.b16 %v4431
      %v4789 = vunpack.c.l.b16 %v4445
      %v4790 = vunpack.c.l.b16 %v4455
      %v4791 = vunpack.c.l.b16 %v4469
      %v4792 = vunpack.c.l.b16 %v4479
      %v4793 = vunpack.c.l.b16 %v4493
      %v4794 = vunpack.c.l.b16 %v4503
      %v4795 = vunpack.c.l.b16 %v4517
      %v4796 = vunpack.c.l.b16 %v4527
      %v4797 = vunpack.c.l.b16 %v4541
      %v4798 = vunpack.c.l.b16 %v4551
      %v4799 = vunpack.c.l.b16 %v4565
      %v4800 = vunpack.c.l.b16 %v4575
      %v4801 = vunpack.c.l.b16 %v4589
      %v4802 = vunpack.c.l.b16 %v4599
      %v4803 = vunpack.c.l.b16 %v4613
      %v4804 = vunpack.c.l.b16 %v4623
      %v4805 = vunpack.c.l.b16 %v4637
      %v4806 = vunpack.c.l.b16 %v4647
      %v4807 = vunpack.c.l.b16 %v4661
      %v4808 = vunpack.c.l.b16 %v4671
      %v4809 = vunpack.c.l.b16 %v4685
      %v4810 = vunpack.c.l.b16 %v4695
      %v4811 = vunpack.c.l.b16 %v4709
      %v4812 = vunpack.c.l.b16 %v4719
      %v4813 = vunpack.c.l.b16 %v4733
      %v4814 = vunpack.c.l.b16 %v4743
      %v4815 = vunpack.c.l.b16 %v4757
      %v4816 = vunpack.c.l.b16 %v4767
      %v4817 = vpack.c.b16 %v4786, %v4785
      %v4818 = vpack.c.b16 %v4788, %v4787
      %v4819 = vpack.c.b16 %v4790, %v4789
      %v4820 = vpack.c.b16 %v4792, %v4791
      %v4821 = vpack.c.b16 %v4794, %v4793
      %v4822 = vpack.c.b16 %v4796, %v4795
      %v4823 = vpack.c.b16 %v4798, %v4797
      %v4824 = vpack.c.b16 %v4800, %v4799
      %v4825 = vpack.c.b16 %v4802, %v4801
      %v4826 = vpack.c.b16 %v4804, %v4803
      %v4827 = vpack.c.b16 %v4806, %v4805
      %v4828 = vpack.c.b16 %v4808, %v4807
      %v4829 = vpack.c.b16 %v4810, %v4809
      %v4830 = vpack.c.b16 %v4812, %v4811
      %v4831 = vpack.c.b16 %v4814, %v4813
      %v4832 = vpack.c.b16 %v4816, %v4815
      %v4865 = vunpack.c.l.b16 %v4769
      %v4866 = vunpack.c.l.b16 %v4770
      %v4867 = vunpack.c.l.b16 %v4771
      %v4868 = vunpack.c.l.b16 %v4772
      %v4869 = vunpack.c.l.b16 %v4773
      %v4870 = vunpack.c.l.b16 %v4774
      %v4871 = vunpack.c.l.b16 %v4775
      %v4872 = vunpack.c.l.b16 %v4776
      %v4873 = vunpack.c.l.b16 %v4777
      %v4874 = vunpack.c.l.b16 %v4778
      %v4875 = vunpack.c.l.b16 %v4779
      %v4876 = vunpack.c.l.b16 %v4780
      %v4877 = vunpack.c.l.b16 %v4781
      %v4878 = vunpack.c.l.b16 %v4782
      %v4879 = vunpack.c.l.b16 %v4783
      %v4880 = vunpack.c.l.b16 %v4784
      %v4881 = vpack.c.b16 %v4866, %v4865
      %v4882 = vpack.c.b16 %v4868, %v4867
      %v4883 = vpack.c.b16 %v4870, %v4869
      %v4884 = vpack.c.b16 %v4872, %v4871
      %v4885 = vpack.c.b16 %v4874, %v4873
      %v4886 = vpack.c.b16 %v4876, %v4875
      %v4887 = vpack.c.b16 %v4878, %v4877
      %v4888 = vpack.c.b16 %v4880, %v4879
      %4897 = vmatpush.bf16.msra.mxu0 %v4888
      %4898 = vmatpush.bf16.msra.mxu0 %v4887
      %4899 = vmatpush.bf16.msra.mxu0 %v4886
      %4900 = vmatpush.bf16.msra.mxu0 %v4885
      %4901 = vmatpush.bf16.msra.mxu0 %v4884
      %4902 = vmatpush.bf16.msra.mxu0 %v4883
      %4903 = vmatpush.bf16.msra.mxu0 %v4882
      %4904 = vmatpush.bf16.msra.mxu0 %v4881
      %4905 = vmatmul.bf16.gmra.mxu0 %v4817
      %v4906 = vpop.f32.mrf.mxu0
      %v4907 = vadd.f32 0.0, %v4906
      %v4908 = vpop.f32.mrf.mxu0
      %v4909 = vadd.f32 0.0, %v4908
      %4910 = vmatmul.bf16.gmra.mxu0 %v4818
      %v4911 = vpop.f32.mrf.mxu0
      %v4912 = vadd.f32 0.0, %v4911
      %v4913 = vpop.f32.mrf.mxu0
      %v4914 = vadd.f32 0.0, %v4913
      %4915 = vmatmul.bf16.gmra.mxu0 %v4819
      %v4916 = vpop.f32.mrf.mxu0
      %v4917 = vadd.f32 0.0, %v4916
      %v4918 = vpop.f32.mrf.mxu0
      %v4919 = vadd.f32 0.0, %v4918
      %4920 = vmatmul.bf16.gmra.mxu0 %v4820
      %v4921 = vpop.f32.mrf.mxu0
      %v4922 = vadd.f32 0.0, %v4921
      %v4923 = vpop.f32.mrf.mxu0
      %v4924 = vadd.f32 0.0, %v4923
      %4925 = vmatmul.bf16.gmra.mxu0 %v4821
      %v4926 = vpop.f32.mrf.mxu0
      %v4927 = vadd.f32 0.0, %v4926
      %v4928 = vpop.f32.mrf.mxu0
      %v4929 = vadd.f32 0.0, %v4928
      %4930 = vmatmul.bf16.gmra.mxu0 %v4822
      %v4931 = vpop.f32.mrf.mxu0
      %v4932 = vadd.f32 0.0, %v4931
      %v4933 = vpop.f32.mrf.mxu0
      %v4934 = vadd.f32 0.0, %v4933
      %4935 = vmatmul.bf16.gmra.mxu0 %v4823
      %v4936 = vpop.f32.mrf.mxu0
      %v4937 = vadd.f32 0.0, %v4936
      %v4938 = vpop.f32.mrf.mxu0
      %v4939 = vadd.f32 0.0, %v4938
      %4940 = vmatmul.bf16.gmra.mxu0 %v4824
      %v4941 = vpop.f32.mrf.mxu0
      %v4942 = vadd.f32 0.0, %v4941
      %v4943 = vpop.f32.mrf.mxu0
      %v4944 = vadd.f32 0.0, %v4943
      %4945 = vmatmul.bf16.gmra.mxu0 %v4825
      %v4946 = vpop.f32.mrf.mxu0
      %v4947 = vadd.f32 0.0, %v4946
      %v4948 = vpop.f32.mrf.mxu0
      %v4949 = vadd.f32 0.0, %v4948
      %4950 = vmatmul.bf16.gmra.mxu0 %v4826
      %v4951 = vpop.f32.mrf.mxu0
      %v4952 = vadd.f32 0.0, %v4951
      %v4953 = vpop.f32.mrf.mxu0
      %v4954 = vadd.f32 0.0, %v4953
      %4955 = vmatmul.bf16.gmra.mxu0 %v4827
      %v4956 = vpop.f32.mrf.mxu0
      %v4957 = vadd.f32 0.0, %v4956
      %v4958 = vpop.f32.mrf.mxu0
      %v4959 = vadd.f32 0.0, %v4958
      %4960 = vmatmul.bf16.gmra.mxu0 %v4828
      %v4961 = vpop.f32.mrf.mxu0
      %v4962 = vadd.f32 0.0, %v4961
      %v4963 = vpop.f32.mrf.mxu0
      %v4964 = vadd.f32 0.0, %v4963
      %4965 = vmatmul.bf16.gmra.mxu0 %v4829
      %v4966 = vpop.f32.mrf.mxu0
      %v4967 = vadd.f32 0.0, %v4966
      %v4968 = vpop.f32.mrf.mxu0
      %v4969 = vadd.f32 0.0, %v4968
      %4970 = vmatmul.bf16.gmra.mxu0 %v4830
      %v4971 = vpop.f32.mrf.mxu0
      %v4972 = vadd.f32 0.0, %v4971
      %v4973 = vpop.f32.mrf.mxu0
      %v4974 = vadd.f32 0.0, %v4973
      %4975 = vmatmul.bf16.gmra.mxu0 %v4831
      %v4976 = vpop.f32.mrf.mxu0
      %v4977 = vadd.f32 0.0, %v4976
      %v4978 = vpop.f32.mrf.mxu0
      %v4979 = vadd.f32 0.0, %v4978
      %4980 = vmatmul.bf16.gmra.mxu0 %v4832
      %v4981 = vpop.f32.mrf.mxu0
      %v4982 = vadd.f32 0.0, %v4981
      %v4983 = vpop.f32.mrf.mxu0
      %v4984 = vadd.f32 0.0, %v4983
      %4985 = vdwg.mxu0
      %v4986 = vadd.f32 %v4304, %v4907
      %v4987 = vadd.f32 %v4305, %v4909
      %v4988 = vadd.f32 %v4306, %v4912
      %v4989 = vadd.f32 %v4307, %v4914
      %v4990 = vadd.f32 %v4308, %v4917
      %v4991 = vadd.f32 %v4309, %v4919
      %v4992 = vadd.f32 %v4310, %v4922
      %v4993 = vadd.f32 %v4311, %v4924
      %v4994 = vadd.f32 %v4312, %v4927
      %v4995 = vadd.f32 %v4313, %v4929
      %v4996 = vadd.f32 %v4314, %v4932
      %v4997 = vadd.f32 %v4315, %v4934
      %v4998 = vadd.f32 %v4316, %v4937
      %v4999 = vadd.f32 %v4317, %v4939
      %v5000 = vadd.f32 %v4318, %v4942
      %v5001 = vadd.f32 %v4319, %v4944
      %v5002 = vadd.f32 %v4320, %v4947
      %v5003 = vadd.f32 %v4321, %v4949
      %v5004 = vadd.f32 %v4322, %v4952
      %v5005 = vadd.f32 %v4323, %v4954
      %v5006 = vadd.f32 %v4324, %v4957
      %v5007 = vadd.f32 %v4325, %v4959
      %v5008 = vadd.f32 %v4326, %v4962
      %v5009 = vadd.f32 %v4327, %v4964
      %v5010 = vadd.f32 %v4328, %v4967
      %v5011 = vadd.f32 %v4329, %v4969
      %v5012 = vadd.f32 %v4330, %v4972
      %v5013 = vadd.f32 %v4331, %v4974
      %v5014 = vadd.f32 %v4332, %v4977
      %v5015 = vadd.f32 %v4333, %v4979
      %v5016 = vadd.f32 %v4334, %v4982
      %v5017 = vadd.f32 %v4335, %v4984
      %v5018 = vld [vmem:[%s4021] sm:$0xe]
      %v5019 = vld [vmem:[%s4021 + $0xc] sm:$0xe]
      %v5020 = vld [vmem:[%s4021 + $0x18] sm:$0xe]
      %v5021 = vld [vmem:[%s4021 + $0x24] sm:$0xe]
      %v5022 = vld [vmem:[%s4021 + $0x30] sm:$0xe]
      %v5023 = vld [vmem:[%s4021 + $0x3c] sm:$0xe]
      %v5024 = vld [vmem:[%s4021 + $0x48] sm:$0xe]
      %v5025 = vld [vmem:[%s4021 + $0x54] sm:$0xe]
      %v5026 = vld [vmem:[%s4021 + $0x60] sm:$0xe]
      %v5027 = vld [vmem:[%s4021 + $0x6c] sm:$0xe]
      %v5028 = vld [vmem:[%s4021 + $0x78] sm:$0xe]
      %v5029 = vld [vmem:[%s4021 + $0x84] sm:$0xe]
      %v5030 = vld [vmem:[%s4021 + $0x90] sm:$0xe]
      %v5031 = vld [vmem:[%s4021 + $0x9c] sm:$0xe]
      %v5032 = vld [vmem:[%s4021 + $0xa8] sm:$0xe]
      %v5033 = vld [vmem:[%s4021 + $0xb4] sm:$0xe]
      %v5082 = vrot.slane %v5018, 5
      %v5083 = vrot.slane %v5082, 4
      %v5084 = vrot.slane %v4337, 5
      %v5085 = vsel %vm2236, %v5083, %v5084
      %v5086 = vrot.slane %v5084, 4
      %v5087 = vrot.slane %v4338, 5
      %v5088 = vsel %vm2236, %v5086, %v5087
      %v5089 = vrot.slane %v5019, 5
      %v5090 = vrot.slane %v5089, 4
      %v5091 = vrot.slane %v4340, 5
      %v5092 = vsel %vm2236, %v5090, %v5091
      %v5093 = vrot.slane %v5091, 4
      %v5094 = vrot.slane %v4341, 5
      %v5095 = vsel %vm2236, %v5093, %v5094
      %v5096 = vrot.slane %v5020, 5
      %v5097 = vrot.slane %v5096, 4
      %v5098 = vrot.slane %v4343, 5
      %v5099 = vsel %vm2236, %v5097, %v5098
      %v5100 = vrot.slane %v5098, 4
      %v5101 = vrot.slane %v4344, 5
      %v5102 = vsel %vm2236, %v5100, %v5101
      %v5103 = vrot.slane %v5021, 5
      %v5104 = vrot.slane %v5103, 4
      %v5105 = vrot.slane %v4346, 5
      %v5106 = vsel %vm2236, %v5104, %v5105
      %v5107 = vrot.slane %v5105, 4
      %v5108 = vrot.slane %v4347, 5
      %v5109 = vsel %vm2236, %v5107, %v5108
      %v5110 = vrot.slane %v5022, 5
      %v5111 = vrot.slane %v5110, 4
      %v5112 = vrot.slane %v4349, 5
      %v5113 = vsel %vm2236, %v5111, %v5112
      %v5114 = vrot.slane %v5112, 4
      %v5115 = vrot.slane %v4350, 5
      %v5116 = vsel %vm2236, %v5114, %v5115
      %v5117 = vrot.slane %v5023, 5
      %v5118 = vrot.slane %v5117, 4
      %v5119 = vrot.slane %v4352, 5
      %v5120 = vsel %vm2236, %v5118, %v5119
      %v5121 = vrot.slane %v5119, 4
      %v5122 = vrot.slane %v4353, 5
      %v5123 = vsel %vm2236, %v5121, %v5122
      %v5124 = vrot.slane %v5024, 5
      %v5125 = vrot.slane %v5124, 4
      %v5126 = vrot.slane %v4355, 5
      %v5127 = vsel %vm2236, %v5125, %v5126
      %v5128 = vrot.slane %v5126, 4
      %v5129 = vrot.slane %v4356, 5
      %v5130 = vsel %vm2236, %v5128, %v5129
      %v5131 = vrot.slane %v5025, 5
      %v5132 = vrot.slane %v5131, 4
      %v5133 = vrot.slane %v4358, 5
      %v5134 = vsel %vm2236, %v5132, %v5133
      %v5135 = vrot.slane %v5133, 4
      %v5136 = vrot.slane %v4359, 5
      %v5137 = vsel %vm2236, %v5135, %v5136
      %v5138 = vrot.slane %v5026, 5
      %v5139 = vrot.slane %v5138, 4
      %v5140 = vrot.slane %v4361, 5
      %v5141 = vsel %vm2236, %v5139, %v5140
      %v5142 = vrot.slane %v5140, 4
      %v5143 = vrot.slane %v4362, 5
      %v5144 = vsel %vm2236, %v5142, %v5143
      %v5145 = vrot.slane %v5027, 5
      %v5146 = vrot.slane %v5145, 4
      %v5147 = vrot.slane %v4364, 5
      %v5148 = vsel %vm2236, %v5146, %v5147
      %v5149 = vrot.slane %v5147, 4
      %v5150 = vrot.slane %v4365, 5
      %v5151 = vsel %vm2236, %v5149, %v5150
      %v5152 = vrot.slane %v5028, 5
      %v5153 = vrot.slane %v5152, 4
      %v5154 = vrot.slane %v4367, 5
      %v5155 = vsel %vm2236, %v5153, %v5154
      %v5156 = vrot.slane %v5154, 4
      %v5157 = vrot.slane %v4368, 5
      %v5158 = vsel %vm2236, %v5156, %v5157
      %v5159 = vrot.slane %v5029, 5
      %v5160 = vrot.slane %v5159, 4
      %v5161 = vrot.slane %v4370, 5
      %v5162 = vsel %vm2236, %v5160, %v5161
      %v5163 = vrot.slane %v5161, 4
      %v5164 = vrot.slane %v4371, 5
      %v5165 = vsel %vm2236, %v5163, %v5164
      %v5166 = vrot.slane %v5030, 5
      %v5167 = vrot.slane %v5166, 4
      %v5168 = vrot.slane %v4373, 5
      %v5169 = vsel %vm2236, %v5167, %v5168
      %v5170 = vrot.slane %v5168, 4
      %v5171 = vrot.slane %v4374, 5
      %v5172 = vsel %vm2236, %v5170, %v5171
      %v5173 = vrot.slane %v5031, 5
      %v5174 = vrot.slane %v5173, 4
      %v5175 = vrot.slane %v4376, 5
      %v5176 = vsel %vm2236, %v5174, %v5175
      %v5177 = vrot.slane %v5175, 4
      %v5178 = vrot.slane %v4377, 5
      %v5179 = vsel %vm2236, %v5177, %v5178
      %v5180 = vrot.slane %v5032, 5
      %v5181 = vrot.slane %v5180, 4
      %v5182 = vrot.slane %v4379, 5
      %v5183 = vsel %vm2236, %v5181, %v5182
      %v5184 = vrot.slane %v5182, 4
      %v5185 = vrot.slane %v4380, 5
      %v5186 = vsel %vm2236, %v5184, %v5185
      %v5187 = vrot.slane %v5033, 5
      %v5188 = vrot.slane %v5187, 4
      %v5189 = vrot.slane %v4382, 5
      %v5190 = vsel %vm2236, %v5188, %v5189
      %v5191 = vrot.slane %v5189, 4
      %v5192 = vrot.slane %v4383, 5
      %v5193 = vsel %vm2236, %v5191, %v5192
      %s5194 = scalar_lea.vmem %s3, 512
      %v5195 = vld [vmem:[%s5194] sm:$0xf]
      %v5196 = vld [vmem:[%s5194 + $0x4] sm:$0xf]
      %v5197 = vld [vmem:[%s5194 + $0x8] sm:$0xf]
      %v5198 = vld [vmem:[%s5194 + $0xc] sm:$0xf]
      %v5199 = vld [vmem:[%s5194 + $0x10] sm:$0xf]
      %v5200 = vld [vmem:[%s5194 + $0x14] sm:$0xf]
      %v5201 = vld [vmem:[%s5194 + $0x18] sm:$0xf]
      %v5202 = vld [vmem:[%s5194 + $0x1c] sm:$0xf]
      %v5203 = vld [vmem:[%s5194 + $0x20] sm:$0xf]
      %v5204 = vld [vmem:[%s5194 + $0x24] sm:$0xf]
      %v5205 = vld [vmem:[%s5194 + $0x28] sm:$0xf]
      %v5206 = vld [vmem:[%s5194 + $0x2c] sm:$0xf]
      %v5207 = vld [vmem:[%s5194 + $0x30] sm:$0xf]
      %v5208 = vld [vmem:[%s5194 + $0x34] sm:$0xf]
      %v5209 = vld [vmem:[%s5194 + $0x38] sm:$0xf]
      %v5210 = vld [vmem:[%s5194 + $0x3c] sm:$0xf]
      %v5211 = vunpack.c.l.b16 %v5085
      %v5212 = vunpack.c.l.b16 %v5088
      %v5213 = vunpack.c.l.b16 %v5092
      %v5214 = vunpack.c.l.b16 %v5095
      %v5215 = vunpack.c.l.b16 %v5099
      %v5216 = vunpack.c.l.b16 %v5102
      %v5217 = vunpack.c.l.b16 %v5106
      %v5218 = vunpack.c.l.b16 %v5109
      %v5219 = vunpack.c.l.b16 %v5113
      %v5220 = vunpack.c.l.b16 %v5116
      %v5221 = vunpack.c.l.b16 %v5120
      %v5222 = vunpack.c.l.b16 %v5123
      %v5223 = vunpack.c.l.b16 %v5127
      %v5224 = vunpack.c.l.b16 %v5130
      %v5225 = vunpack.c.l.b16 %v5134
      %v5226 = vunpack.c.l.b16 %v5137
      %v5227 = vunpack.c.l.b16 %v5141
      %v5228 = vunpack.c.l.b16 %v5144
      %v5229 = vunpack.c.l.b16 %v5148
      %v5230 = vunpack.c.l.b16 %v5151
      %v5231 = vunpack.c.l.b16 %v5155
      %v5232 = vunpack.c.l.b16 %v5158
      %v5233 = vunpack.c.l.b16 %v5162
      %v5234 = vunpack.c.l.b16 %v5165
      %v5235 = vunpack.c.l.b16 %v5169
      %v5236 = vunpack.c.l.b16 %v5172
      %v5237 = vunpack.c.l.b16 %v5176
      %v5238 = vunpack.c.l.b16 %v5179
      %v5239 = vunpack.c.l.b16 %v5183
      %v5240 = vunpack.c.l.b16 %v5186
      %v5241 = vunpack.c.l.b16 %v5190
      %v5242 = vunpack.c.l.b16 %v5193
      %v5243 = vpack.c.b16 %v5212, %v5211
      %v5244 = vpack.c.b16 %v5214, %v5213
      %v5245 = vpack.c.b16 %v5216, %v5215
      %v5246 = vpack.c.b16 %v5218, %v5217
      %v5247 = vpack.c.b16 %v5220, %v5219
      %v5248 = vpack.c.b16 %v5222, %v5221
      %v5249 = vpack.c.b16 %v5224, %v5223
      %v5250 = vpack.c.b16 %v5226, %v5225
      %v5251 = vpack.c.b16 %v5228, %v5227
      %v5252 = vpack.c.b16 %v5230, %v5229
      %v5253 = vpack.c.b16 %v5232, %v5231
      %v5254 = vpack.c.b16 %v5234, %v5233
      %v5255 = vpack.c.b16 %v5236, %v5235
      %v5256 = vpack.c.b16 %v5238, %v5237
      %v5257 = vpack.c.b16 %v5240, %v5239
      %v5258 = vpack.c.b16 %v5242, %v5241
      %v5291 = vunpack.c.l.b16 %v5195
      %v5292 = vunpack.c.l.b16 %v5196
      %v5293 = vunpack.c.l.b16 %v5197
      %v5294 = vunpack.c.l.b16 %v5198
      %v5295 = vunpack.c.l.b16 %v5199
      %v5296 = vunpack.c.l.b16 %v5200
      %v5297 = vunpack.c.l.b16 %v5201
      %v5298 = vunpack.c.l.b16 %v5202
      %v5299 = vunpack.c.l.b16 %v5203
      %v5300 = vunpack.c.l.b16 %v5204
      %v5301 = vunpack.c.l.b16 %v5205
      %v5302 = vunpack.c.l.b16 %v5206
      %v5303 = vunpack.c.l.b16 %v5207
      %v5304 = vunpack.c.l.b16 %v5208
      %v5305 = vunpack.c.l.b16 %v5209
      %v5306 = vunpack.c.l.b16 %v5210
      %v5307 = vpack.c.b16 %v5292, %v5291
      %v5308 = vpack.c.b16 %v5294, %v5293
      %v5309 = vpack.c.b16 %v5296, %v5295
      %v5310 = vpack.c.b16 %v5298, %v5297
      %v5311 = vpack.c.b16 %v5300, %v5299
      %v5312 = vpack.c.b16 %v5302, %v5301
      %v5313 = vpack.c.b16 %v5304, %v5303
      %v5314 = vpack.c.b16 %v5306, %v5305
      %5323 = vmatpush.bf16.msra.mxu0 %v5314
      %5324 = vmatpush.bf16.msra.mxu0 %v5313
      %5325 = vmatpush.bf16.msra.mxu0 %v5312
      %5326 = vmatpush.bf16.msra.mxu0 %v5311
      %5327 = vmatpush.bf16.msra.mxu0 %v5310
      %5328 = vmatpush.bf16.msra.mxu0 %v5309
      %5329 = vmatpush.bf16.msra.mxu0 %v5308
      %5330 = vmatpush.bf16.msra.mxu0 %v5307
      %5331 = vmatmul.bf16.gmra.mxu0 %v5243
      %v5332 = vpop.f32.mrf.mxu0
      %v5333 = vadd.f32 0.0, %v5332
      %v5334 = vpop.f32.mrf.mxu0
      %v5335 = vadd.f32 0.0, %v5334
      %5336 = vmatmul.bf16.gmra.mxu0 %v5244
      %v5337 = vpop.f32.mrf.mxu0
      %v5338 = vadd.f32 0.0, %v5337
      %v5339 = vpop.f32.mrf.mxu0
      %v5340 = vadd.f32 0.0, %v5339
      %5341 = vmatmul.bf16.gmra.mxu0 %v5245
      %v5342 = vpop.f32.mrf.mxu0
      %v5343 = vadd.f32 0.0, %v5342
      %v5344 = vpop.f32.mrf.mxu0
      %v5345 = vadd.f32 0.0, %v5344
      %5346 = vmatmul.bf16.gmra.mxu0 %v5246
      %v5347 = vpop.f32.mrf.mxu0
      %v5348 = vadd.f32 0.0, %v5347
      %v5349 = vpop.f32.mrf.mxu0
      %v5350 = vadd.f32 0.0, %v5349
      %5351 = vmatmul.bf16.gmra.mxu0 %v5247
      %v5352 = vpop.f32.mrf.mxu0
      %v5353 = vadd.f32 0.0, %v5352
      %v5354 = vpop.f32.mrf.mxu0
      %v5355 = vadd.f32 0.0, %v5354
      %5356 = vmatmul.bf16.gmra.mxu0 %v5248
      %v5357 = vpop.f32.mrf.mxu0
      %v5358 = vadd.f32 0.0, %v5357
      %v5359 = vpop.f32.mrf.mxu0
      %v5360 = vadd.f32 0.0, %v5359
      %5361 = vmatmul.bf16.gmra.mxu0 %v5249
      %v5362 = vpop.f32.mrf.mxu0
      %v5363 = vadd.f32 0.0, %v5362
      %v5364 = vpop.f32.mrf.mxu0
      %v5365 = vadd.f32 0.0, %v5364
      %5366 = vmatmul.bf16.gmra.mxu0 %v5250
      %v5367 = vpop.f32.mrf.mxu0
      %v5368 = vadd.f32 0.0, %v5367
      %v5369 = vpop.f32.mrf.mxu0
      %v5370 = vadd.f32 0.0, %v5369
      %5371 = vmatmul.bf16.gmra.mxu0 %v5251
      %v5372 = vpop.f32.mrf.mxu0
      %v5373 = vadd.f32 0.0, %v5372
      %v5374 = vpop.f32.mrf.mxu0
      %v5375 = vadd.f32 0.0, %v5374
      %5376 = vmatmul.bf16.gmra.mxu0 %v5252
      %v5377 = vpop.f32.mrf.mxu0
      %v5378 = vadd.f32 0.0, %v5377
      %v5379 = vpop.f32.mrf.mxu0
      %v5380 = vadd.f32 0.0, %v5379
      %5381 = vmatmul.bf16.gmra.mxu0 %v5253
      %v5382 = vpop.f32.mrf.mxu0
      %v5383 = vadd.f32 0.0, %v5382
      %v5384 = vpop.f32.mrf.mxu0
      %v5385 = vadd.f32 0.0, %v5384
      %5386 = vmatmul.bf16.gmra.mxu0 %v5254
      %v5387 = vpop.f32.mrf.mxu0
      %v5388 = vadd.f32 0.0, %v5387
      %v5389 = vpop.f32.mrf.mxu0
      %v5390 = vadd.f32 0.0, %v5389
      %5391 = vmatmul.bf16.gmra.mxu0 %v5255
      %v5392 = vpop.f32.mrf.mxu0
      %v5393 = vadd.f32 0.0, %v5392
      %v5394 = vpop.f32.mrf.mxu0
      %v5395 = vadd.f32 0.0, %v5394
      %5396 = vmatmul.bf16.gmra.mxu0 %v5256
      %v5397 = vpop.f32.mrf.mxu0
      %v5398 = vadd.f32 0.0, %v5397
      %v5399 = vpop.f32.mrf.mxu0
      %v5400 = vadd.f32 0.0, %v5399
      %5401 = vmatmul.bf16.gmra.mxu0 %v5257
      %v5402 = vpop.f32.mrf.mxu0
      %v5403 = vadd.f32 0.0, %v5402
      %v5404 = vpop.f32.mrf.mxu0
      %v5405 = vadd.f32 0.0, %v5404
      %5406 = vmatmul.bf16.gmra.mxu0 %v5258
      %v5407 = vpop.f32.mrf.mxu0
      %v5408 = vadd.f32 0.0, %v5407
      %v5409 = vpop.f32.mrf.mxu0
      %v5410 = vadd.f32 0.0, %v5409
      %5411 = vdwg.mxu0
      %v5412 = vadd.f32 %v4986, %v5333
      %v5413 = vadd.f32 %v4987, %v5335
      %v5414 = vadd.f32 %v4988, %v5338
      %v5415 = vadd.f32 %v4989, %v5340
      %v5416 = vadd.f32 %v4990, %v5343
      %v5417 = vadd.f32 %v4991, %v5345
      %v5418 = vadd.f32 %v4992, %v5348
      %v5419 = vadd.f32 %v4993, %v5350
      %v5420 = vadd.f32 %v4994, %v5353
      %v5421 = vadd.f32 %v4995, %v5355
      %v5422 = vadd.f32 %v4996, %v5358
      %v5423 = vadd.f32 %v4997, %v5360
      %v5424 = vadd.f32 %v4998, %v5363
      %v5425 = vadd.f32 %v4999, %v5365
      %v5426 = vadd.f32 %v5000, %v5368
      %v5427 = vadd.f32 %v5001, %v5370
      %v5428 = vadd.f32 %v5002, %v5373
      %v5429 = vadd.f32 %v5003, %v5375
      %v5430 = vadd.f32 %v5004, %v5378
      %v5431 = vadd.f32 %v5005, %v5380
      %v5432 = vadd.f32 %v5006, %v5383
      %v5433 = vadd.f32 %v5007, %v5385
      %v5434 = vadd.f32 %v5008, %v5388
      %v5435 = vadd.f32 %v5009, %v5390
      %v5436 = vadd.f32 %v5010, %v5393
      %v5437 = vadd.f32 %v5011, %v5395
      %v5438 = vadd.f32 %v5012, %v5398
      %v5439 = vadd.f32 %v5013, %v5400
      %v5440 = vadd.f32 %v5014, %v5403
      %v5441 = vadd.f32 %v5015, %v5405
      %v5442 = vadd.f32 %v5016, %v5408
      %v5443 = vadd.f32 %v5017, %v5410
      %v5444 = vpack.c.bf16 %v5412, %v5412
      %v5445 = vpack.c.bf16 %v5413, %v5413
      %v5446 = vpack.c.bf16 %v5414, %v5414
      %v5447 = vpack.c.bf16 %v5415, %v5415
      %v5448 = vpack.c.bf16 %v5416, %v5416
      %v5449 = vpack.c.bf16 %v5417, %v5417
      %v5450 = vpack.c.bf16 %v5418, %v5418
      %v5451 = vpack.c.bf16 %v5419, %v5419
      %v5452 = vpack.c.bf16 %v5420, %v5420
      %v5453 = vpack.c.bf16 %v5421, %v5421
      %v5454 = vpack.c.bf16 %v5422, %v5422
      %v5455 = vpack.c.bf16 %v5423, %v5423
      %v5456 = vpack.c.bf16 %v5424, %v5424
      %v5457 = vpack.c.bf16 %v5425, %v5425
      %v5458 = vpack.c.bf16 %v5426, %v5426
      %v5459 = vpack.c.bf16 %v5427, %v5427
      %v5460 = vpack.c.bf16 %v5428, %v5428
      %v5461 = vpack.c.bf16 %v5429, %v5429
      %v5462 = vpack.c.bf16 %v5430, %v5430
      %v5463 = vpack.c.bf16 %v5431, %v5431
      %v5464 = vpack.c.bf16 %v5432, %v5432
      %v5465 = vpack.c.bf16 %v5433, %v5433
      %v5466 = vpack.c.bf16 %v5434, %v5434
      %v5467 = vpack.c.bf16 %v5435, %v5435
      %v5468 = vpack.c.bf16 %v5436, %v5436
      %v5469 = vpack.c.bf16 %v5437, %v5437
      %v5470 = vpack.c.bf16 %v5438, %v5438
      %v5471 = vpack.c.bf16 %v5439, %v5439
      %v5472 = vpack.c.bf16 %v5440, %v5440
      %v5473 = vpack.c.bf16 %v5441, %v5441
      %v5474 = vpack.c.bf16 %v5442, %v5442
      %v5475 = vpack.c.bf16 %v5443, %v5443
      %5476 = vst [vmem:[%s231] sm:$0xf] %v5444
      %5477 = vst [vmem:[%s231 + $0x4] sm:$0xf] %v5445
      %5478 = vst [vmem:[%s231 + $0x8] sm:$0xf] %v5446
      %5479 = vst [vmem:[%s231 + $0xc] sm:$0xf] %v5447
      %5480 = vst [vmem:[%s231 + $0x10] sm:$0xf] %v5448
      %5481 = vst [vmem:[%s231 + $0x14] sm:$0xf] %v5449
      %5482 = vst [vmem:[%s231 + $0x18] sm:$0xf] %v5450
      %5483 = vst [vmem:[%s231 + $0x1c] sm:$0xf] %v5451
      %5484 = vst [vmem:[%s231 + $0x20] sm:$0xf] %v5452
      %5485 = vst [vmem:[%s231 + $0x24] sm:$0xf] %v5453
      %5486 = vst [vmem:[%s231 + $0x28] sm:$0xf] %v5454
      %5487 = vst [vmem:[%s231 + $0x2c] sm:$0xf] %v5455
      %5488 = vst [vmem:[%s231 + $0x30] sm:$0xf] %v5456
      %5489 = vst [vmem:[%s231 + $0x34] sm:$0xf] %v5457
      %5490 = vst [vmem:[%s231 + $0x38] sm:$0xf] %v5458
      %5491 = vst [vmem:[%s231 + $0x3c] sm:$0xf] %v5459
      %5492 = vst [vmem:[%s231 + $0x40] sm:$0xf] %v5460
      %5493 = vst [vmem:[%s231 + $0x44] sm:$0xf] %v5461
      %5494 = vst [vmem:[%s231 + $0x48] sm:$0xf] %v5462
      %5495 = vst [vmem:[%s231 + $0x4c] sm:$0xf] %v5463
      %5496 = vst [vmem:[%s231 + $0x50] sm:$0xf] %v5464
      %5497 = vst [vmem:[%s231 + $0x54] sm:$0xf] %v5465
      %5498 = vst [vmem:[%s231 + $0x58] sm:$0xf] %v5466
      %5499 = vst [vmem:[%s231 + $0x5c] sm:$0xf] %v5467
      %5500 = vst [vmem:[%s231 + $0x60] sm:$0xf] %v5468
      %5501 = vst [vmem:[%s231 + $0x64] sm:$0xf] %v5469
      %5502 = vst [vmem:[%s231 + $0x68] sm:$0xf] %v5470
      %5503 = vst [vmem:[%s231 + $0x6c] sm:$0xf] %v5471
      %5504 = vst [vmem:[%s231 + $0x70] sm:$0xf] %v5472
      %5505 = vst [vmem:[%s231 + $0x74] sm:$0xf] %v5473
      %5506 = vst [vmem:[%s231 + $0x78] sm:$0xf] %v5474
      %5507 = vst [vmem:[%s231 + $0x7c] sm:$0xf] %v5475
      %v5508 = vadd.f32 %v5412, %v5413
      %v5509 = vadd.f32 %v5508, %v5414
      %v5510 = vadd.f32 %v5509, %v5415
      %v5511 = vadd.f32 %v5510, %v5416
      %v5512 = vadd.f32 %v5511, %v5417
      %v5513 = vadd.f32 %v5512, %v5418
      %v5514 = vadd.f32 %v5513, %v5419
      %v5515 = vadd.f32 %v5514, %v5420
      %v5516 = vadd.f32 %v5515, %v5421
      %v5517 = vadd.f32 %v5516, %v5422
      %v5518 = vadd.f32 %v5517, %v5423
      %v5519 = vadd.f32 %v5518, %v5424
      %v5520 = vadd.f32 %v5519, %v5425
      %v5521 = vadd.f32 %v5520, %v5426
      %v5522 = vadd.f32 %v5521, %v5427
      %v5523 = vadd.f32 %v5522, %v5428
      %v5524 = vadd.f32 %v5523, %v5429
      %v5525 = vadd.f32 %v5524, %v5430
      %v5526 = vadd.f32 %v5525, %v5431
      %v5527 = vadd.f32 %v5526, %v5432
      %v5528 = vadd.f32 %v5527, %v5433
      %v5529 = vadd.f32 %v5528, %v5434
      %v5530 = vadd.f32 %v5529, %v5435
      %v5531 = vadd.f32 %v5530, %v5436
      %v5532 = vadd.f32 %v5531, %v5437
      %v5533 = vadd.f32 %v5532, %v5438
      %v5534 = vadd.f32 %v5533, %v5439
      %v5535 = vadd.f32 %v5534, %v5440
      %v5536 = vadd.f32 %v5535, %v5441
      %v5537 = vadd.f32 %v5536, %v5442
      %v5538 = vadd.f32 %v5537, %v5443
      %v5539 = vrot.slane %v5538, 4
      %v5540 = vadd.f32 %v5538, %v5539
      %v5541 = vrot.slane %v5540, 2
      %v5542 = vadd.f32 %v5540, %v5541
      %v5543 = vrot.slane %v5542, 1
      %v5544 = vadd.f32 %v5542, %v5543
      %v5545 = vmul.f32 %v5544, 0.00390625
      %v5546 = vsub.f32 %v5412, %v5545
      %v5547 = vsub.f32 %v5413, %v5545
      %v5548 = vsub.f32 %v5414, %v5545
      %v5549 = vsub.f32 %v5415, %v5545
      %v5550 = vsub.f32 %v5416, %v5545
      %v5551 = vsub.f32 %v5417, %v5545
      %v5552 = vsub.f32 %v5418, %v5545
      %v5553 = vsub.f32 %v5419, %v5545
      %v5554 = vsub.f32 %v5420, %v5545
      %v5555 = vsub.f32 %v5421, %v5545
      %v5556 = vsub.f32 %v5422, %v5545
      %v5557 = vsub.f32 %v5423, %v5545
      %v5558 = vsub.f32 %v5424, %v5545
      %v5559 = vsub.f32 %v5425, %v5545
      %v5560 = vsub.f32 %v5426, %v5545
      %v5561 = vsub.f32 %v5427, %v5545
      %v5562 = vsub.f32 %v5428, %v5545
      %v5563 = vsub.f32 %v5429, %v5545
      %v5564 = vsub.f32 %v5430, %v5545
      %v5565 = vsub.f32 %v5431, %v5545
      %v5566 = vsub.f32 %v5432, %v5545
      %v5567 = vsub.f32 %v5433, %v5545
      %v5568 = vsub.f32 %v5434, %v5545
      %v5569 = vsub.f32 %v5435, %v5545
      %v5570 = vsub.f32 %v5436, %v5545
      %v5571 = vsub.f32 %v5437, %v5545
      %v5572 = vsub.f32 %v5438, %v5545
      %v5573 = vsub.f32 %v5439, %v5545
      %v5574 = vsub.f32 %v5440, %v5545
      %v5575 = vsub.f32 %v5441, %v5545
      %v5576 = vsub.f32 %v5442, %v5545
      %v5577 = vsub.f32 %v5443, %v5545
      %5578 = vst [vmem:[%s235] sm:$0x1] %v5544
      %v5579 = vmul.f32 %v5546, %v5546
      %v5580 = vmul.f32 %v5547, %v5547
      %v5581 = vmul.f32 %v5548, %v5548
      %v5582 = vmul.f32 %v5549, %v5549
      %v5583 = vmul.f32 %v5550, %v5550
      %v5584 = vmul.f32 %v5551, %v5551
      %v5585 = vmul.f32 %v5552, %v5552
      %v5586 = vmul.f32 %v5553, %v5553
      %v5587 = vmul.f32 %v5554, %v5554
      %v5588 = vmul.f32 %v5555, %v5555
      %v5589 = vmul.f32 %v5556, %v5556
      %v5590 = vmul.f32 %v5557, %v5557
      %v5591 = vmul.f32 %v5558, %v5558
      %v5592 = vmul.f32 %v5559, %v5559
      %v5593 = vmul.f32 %v5560, %v5560
      %v5594 = vmul.f32 %v5561, %v5561
      %v5595 = vmul.f32 %v5562, %v5562
      %v5596 = vmul.f32 %v5563, %v5563
      %v5597 = vmul.f32 %v5564, %v5564
      %v5598 = vmul.f32 %v5565, %v5565
      %v5599 = vmul.f32 %v5566, %v5566
      %v5600 = vmul.f32 %v5567, %v5567
      %v5601 = vmul.f32 %v5568, %v5568
      %v5602 = vmul.f32 %v5569, %v5569
      %v5603 = vmul.f32 %v5570, %v5570
      %v5604 = vmul.f32 %v5571, %v5571
      %v5605 = vmul.f32 %v5572, %v5572
      %v5606 = vmul.f32 %v5573, %v5573
      %v5607 = vmul.f32 %v5574, %v5574
      %v5608 = vmul.f32 %v5575, %v5575
      %v5609 = vmul.f32 %v5576, %v5576
      %v5610 = vmul.f32 %v5577, %v5577
      %v5611 = vadd.f32 %v5579, %v5580
      %v5612 = vadd.f32 %v5611, %v5581
      %v5613 = vadd.f32 %v5612, %v5582
      %v5614 = vadd.f32 %v5613, %v5583
      %v5615 = vadd.f32 %v5614, %v5584
      %v5616 = vadd.f32 %v5615, %v5585
      %v5617 = vadd.f32 %v5616, %v5586
      %v5618 = vadd.f32 %v5617, %v5587
      %v5619 = vadd.f32 %v5618, %v5588
      %v5620 = vadd.f32 %v5619, %v5589
      %v5621 = vadd.f32 %v5620, %v5590
      %v5622 = vadd.f32 %v5621, %v5591
      %v5623 = vadd.f32 %v5622, %v5592
      %v5624 = vadd.f32 %v5623, %v5593
      %v5625 = vadd.f32 %v5624, %v5594
      %v5626 = vadd.f32 %v5625, %v5595
      %v5627 = vadd.f32 %v5626, %v5596
      %v5628 = vadd.f32 %v5627, %v5597
      %v5629 = vadd.f32 %v5628, %v5598
      %v5630 = vadd.f32 %v5629, %v5599
      %v5631 = vadd.f32 %v5630, %v5600
      %v5632 = vadd.f32 %v5631, %v5601
      %v5633 = vadd.f32 %v5632, %v5602
      %v5634 = vadd.f32 %v5633, %v5603
      %v5635 = vadd.f32 %v5634, %v5604
      %v5636 = vadd.f32 %v5635, %v5605
      %v5637 = vadd.f32 %v5636, %v5606
      %v5638 = vadd.f32 %v5637, %v5607
      %v5639 = vadd.f32 %v5638, %v5608
      %v5640 = vadd.f32 %v5639, %v5609
      %v5641 = vadd.f32 %v5640, %v5610
      %v5642 = vrot.slane %v5641, 4
      %v5643 = vadd.f32 %v5641, %v5642
      %v5644 = vrot.slane %v5643, 2
      %v5645 = vadd.f32 %v5643, %v5644
      %v5646 = vrot.slane %v5645, 1
      %v5647 = vadd.f32 %v5645, %v5646
      %5648 = vst [vmem:[%s235 + $0x1] sm:$0x1] %v5647
      %p5649 = scmp.lt.s32.totalorder %s17, 1
      %s5650 = scalar_select %p5649, %s17, 1
      %s5651 = smul.addr %s5650, 32
      %s5652 = smul.addr %s5651, 4
      %s5653 = scalar_lea.vmem %s4, %s5652
      %p5654 = scmp.lt.s32.totalorder %s17, 1
      %s5655 = scalar_select %p5654, %s17, 1
      %s5656 = smul.addr %s5655, 2
      %s5657 = scalar_lea.vmem %s5, %s5656
      // Predicated region
      $region37: #{tucker_forward.5} parent=35 // pred_check
        %p5658 = pneg %p124
      $region38: #{tucker_forward.5} parent=35 // pred_check_branch
        %5660 = sbr.rel (%p5658) target = $region40
      $region39: #{tucker_forward.5} parent=35 // pred_region
        _
      $region40: #{tucker_forward.5} parent=35 // pred_fallthru
        _
      // Predicated region
      $region41: #{tucker_forward.5} parent=35 // pred_check
        %p5661 = pneg %p150
      $region42: #{tucker_forward.5} parent=35 // pred_check_branch
        %5663 = sbr.rel (%p5661) target = $region44
      $region43: #{tucker_forward.5} parent=35 // pred_region
        _
      $region44: #{tucker_forward.5} parent=35 // pred_fallthru
        _
    $region36: #{tucker_forward.5} parent=5 // pred_fallthru
      _
    %p5664 = scmp.le.s32.totalorder 2, %s12
    // Predicated region
    $region45: #{tucker_forward.5} parent=5 // pred_check
      %p5665 = pneg %p5664
    $region46: #{tucker_forward.5} parent=5 // pred_check_branch
      %5667 = sbr.rel (%p5665) target = $region48
    $region47: #{tucker_forward.5} parent=5 // pred_region
      %s5668 = ssub.s32 %s12, 2
      // Predicated region
      $region49: #{tucker_forward.5} parent=47 // pred_check
        %p5669 = pneg %p130
      $region50: #{tucker_forward.5} parent=47 // pred_check_branch
        %5671 = sbr.rel (%p5669) target = $region52
      $region51: #{tucker_forward.5} parent=47 // pred_region
        %p5672 = scmp.lt.s32.totalorder %s18, 1
        %s5673 = scalar_select %p5672, %s18, 1
        %s5674 = smul.addr %s5673, 32
        %s5675 = smul.addr %s5674, 4
        %s5676 = scalar_lea.vmem %s4, %s5675
      $region52: #{tucker_forward.5} parent=47 // pred_fallthru
        _
      // Predicated region
      $region53: #{tucker_forward.5} parent=47 // pred_check
        %p5677 = pneg %p156
      $region54: #{tucker_forward.5} parent=47 // pred_check_branch
        %5679 = sbr.rel (%p5677) target = $region56
      $region55: #{tucker_forward.5} parent=47 // pred_region
        %p5680 = scmp.lt.s32.totalorder %s18, 1
        %s5681 = scalar_select %p5680, %s18, 1
        %s5682 = smul.addr %s5681, 2
        %s5683 = scalar_lea.vmem %s5, %s5682
      $region56: #{tucker_forward.5} parent=47 // pred_fallthru
        _
    $region48: #{tucker_forward.5} parent=5 // pred_fallthru
      _
  $region6: #{tucker_forward.5} parent=0 // loop_footer
    %s16 = sadd.s32 1, %s12
  $region7: #{tucker_forward.5} parent=0 // loop_footer_branch
    %11 = sbr.rel target = $region3
  $region8: #{tucker_forward.5} parent=0 // loop_exit
    _

</llo_original>
